<compile_context>
chip_gen: v7x
topology: tpu7x:2x2x1
jax: 0.10.0
libtpu: 0.0.40
codegen_flags: <defaults>
</compile_context>

<pallas_src>
import math

import jax
import jax.numpy as jnp
import numpy as np
from jax.experimental import pallas as pl
from jax.experimental.pallas import tpu as pltpu

# ---------------- config (plays the role of gc.config) ----------------
CONFIG = dict(n_head=2, conv_dims=[8], ff_dim_final=64)
EPS = 1e-6
PREC = jax.lax.Precision.DEFAULT        # kernel matmuls: single bf16 MXU pass, f32 accum
REF_PREC = jax.lax.Precision.HIGHEST    # pure-JAX reference

MODS = ["l", "a", "v"]
COMBOS = ["l", "a", "v", "l_a", "l_v", "a_v", "l_a_v"]

# For each (modality, combo) the position of that combo in the modality's stack of 4.
LIST_INDEX = {}
_counters = {m: 0 for m in MODS}
for _c in COMBOS:
    for _m in _c.split("_"):
        LIST_INDEX[(_m, _c)] = _counters[_m]
        _counters[_m] += 1
N_ENTRIES = _counters[MODS[0]]          # == 4 == conv_in_d

VMEM_SPEC = pl.BlockSpec(memory_space=pltpu.MemorySpace.VMEM)
SMEM_SPEC = pl.BlockSpec(memory_space=pltpu.MemorySpace.SMEM)


# ---------------- fused decoder-layer kernel ----------------
def make_fused_kernel(B, S, d_model, n_head):
    dims = dict(zip(MODS, d_model))
    T = sum(d_model)
    N = B * S
    H = n_head

    col_off, off = {}, 0
    for m in MODS:
        col_off[m] = off
        off += dims[m]

    def layer_norm_full(z, alpha, bias):
        n = z.shape[-1]
        mu = jnp.mean(z, axis=-1, keepdims=True)
        var = jnp.sum((z - mu) ** 2, axis=-1, keepdims=True) * (1.0 / (n - 1))
        inv = pl.reciprocal(jnp.sqrt(var) + EPS, approx=True)
        return alpha * (z - mu) * inv + bias

    def kernel(x_ref, masks_ref, n1a_ref, n1b_ref, n2a_ref, n2b_ref,
               fw1_ref, fb1_ref, fw2_ref, fb2_ref, cw_ref, cb_ref, *rest):
        attn_refs = rest[:-1]          # 4 refs per combo: wqkv, bqkv, wo, bo
        out_ref = rest[-1]

        x = x_ref[...]                                            # (N, T) residual stream
        xn = layer_norm_full(x, n1a_ref[...], n1b_ref[...])       # norm1

        # folded head-conv accumulators, one per modality
        acc = {m: jnp.zeros((N, dims[m]), jnp.float32) for m in MODS}

        for ci, combo in enumerate(COMBOS):
            mods = combo.split("_")
            D = sum(dims[m] for m in mods)
            d_k = D // H
            scale = 1.0 / math.sqrt(d_k)

            wqkv = attn_refs[4 * ci][...]          # (D, 3D)
            bqkv = attn_refs[4 * ci + 1][...]      # (1, 3D)
            wo_ref = attn_refs[4 * ci + 2]         # (H, d_k, D)
            bo_ref = attn_refs[4 * ci + 3]         # (H, 1, D)

            # Fused Q/K/V projection over all B*S rows, accumulated per modality slice
            # (avoids materializing a lane-concatenated copy of the normed input).
            qkv = None
            roff = 0
            for m in mods:
                d = dims[m]
                xm = xn[:, col_off[m]:col_off[m] + d]             # (N, d)
                contrib = jnp.dot(xm, wqkv[roff:roff + d, :],
                                  precision=PREC,
                                  preferred_element_type=jnp.float32)
                qkv = contrib if qkv is None else qkv + contrib
                roff += d
            qkv = qkv + bqkv                                      # (N, 3D)
            q = qkv[:, 0:D]
            k = qkv[:, D:2 * D]
            v = qkv[:, 2 * D:3 * D]

            # residual stream for this combo, kept per modality
            cum = {m: x[:, col_off[m]:col_off[m] + dims[m]] for m in mods}

            for h in range(H):
                hs = slice(h * d_k, (h + 1) * d_k)
                oh_rows = []
                for b in range(B):
                    rs = slice(b * S, (b + 1) * S)
                    qh, kh, vh = q[rs, hs], k[rs, hs], v[rs, hs]  # (S, d_k)
                    s = jax.lax.dot_general(
                        qh, kh, (((1,), (1,)), ((), ())),
                        precision=PREC,
                        preferred_element_type=jnp.float32) * scale
                    mb = masks_ref[ci * B + b]                    # (S, S)
                    s = jnp.where(mb == 0.0, -1e9, s)
                    s = s - jnp.max(s, axis=-1, keepdims=True)
                    e = jnp.exp(s)
                    p = e * pl.reciprocal(jnp.sum(e, axis=-1, keepdims=True),
                                          approx=True)
                    oh_rows.append(jnp.dot(p, vh, precision=PREC,
                                           preferred_element_type=jnp.float32))
                oh = oh_rows[0] if B == 1 else jnp.concatenate(oh_rows, axis=0)  # (N, d_k)
                head_out = jnp.dot(oh, wo_ref[h], precision=PREC,
                                   preferred_element_type=jnp.float32) + bo_ref[h]  # (N, D)

                # cumulative residual (x + sum of heads so far), then the folded
                # "conv" contribution:  acc_m += w_eff[m, h, j_combo] * residual_slice
                coff = 0
                for m in mods:
                    d = dims[m]
                    cum[m] = cum[m] + head_out[:, coff:coff + d]
                    mi = MODS.index(m)
                    j = LIST_INDEX[(m, combo)]
                    w = cw_ref[(mi * H + h) * N_ENTRIES + j]      # SMEM scalar
                    acc[m] = acc[m] + cum[m] * w
                    coff += d

        # ---- norm2 over the full feature dim, computed from per-modality parts ----
        parts = [acc[m] + cb_ref[mi] for mi, m in enumerate(MODS)]
        row_sum = jnp.sum(parts[0], axis=-1, keepdims=True)
        for pt in parts[1:]:
            row_sum = row_sum + jnp.sum(pt, axis=-1, keepdims=True)
        mu2 = row_sum * (1.0 / T)
        sq = jnp.sum((parts[0] - mu2) ** 2, axis=-1, keepdims=True)
        for pt in parts[1:]:
            sq = sq + jnp.sum((pt - mu2) ** 2, axis=-1, keepdims=True)
        inv2 = pl.reciprocal(jnp.sqrt(sq * (1.0 / (T - 1))) + EPS, approx=True)

        # ---- FeedForward: Linear(T->F) -> ReLU -> Linear(F->T), then residual ----
        n2a, n2b = n2a_ref[...], n2b_ref[...]
        fw1 = fw1_ref[...]
        h1 = None
        coff = 0
        for mi, m in enumerate(MODS):
            d = dims[m]
            xnp_ = n2a[:, coff:coff + d] * (parts[mi] - mu2) * inv2 \
                 + n2b[:, coff:coff + d]
            contrib = jnp.dot(xnp_, fw1[coff:coff + d, :], precision=PREC,
                              preferred_element_type=jnp.float32)
            h1 = contrib if h1 is None else h1 + contrib
            coff += d
        h1 = jnp.maximum(h1 + fb1_ref[...], 0.0)
        ff = jnp.dot(h1, fw2_ref[...], precision=PREC,
                     preferred_element_type=jnp.float32) + fb2_ref[...]

        out_ref[...] = x + ff        # single lane-dense residual write

    return kernel


# ---------------- DecoderLayer forward (single fused pallas_call) ----------------
def decoder_layer_forward(x_concat, mask_dict, params, d_model):
    B, S, T = x_concat.shape
    H = CONFIG["n_head"]

    # Fold the per-head conv chain Linear(4->C) -> Linear(C->1) (no nonlinearity)
    # into per-head scalars.  Tiny weight-only ops, folded once by XLA.
    cw_list, cb_list = [], []
    for m in MODS:
        cp = params["conv"][m]
        w_eff = jnp.einsum("hjc,hck->hjk", cp["w1"], cp["w2"])[..., 0]          # (H, 4)
        b_eff = jnp.einsum("hic,hck->hik", cp["b1"], cp["w2"])[..., 0, 0] \
              + cp["b2"][:, 0, 0]                                               # (H,)
        cw_list.append(w_eff)
        cb_list.append(jnp.sum(b_eff))
    cw = jnp.stack(cw_list, axis=0).reshape(-1)       # (3*H*4,)  -> SMEM scalars
    cb = jnp.stack(cb_list, axis=0)                   # (3,)      -> SMEM scalars

    masks = jnp.stack([mask_dict[c] for c in COMBOS], axis=0)
    masks = masks.reshape(len(COMBOS) * B, S, S)

    attn_args = []
    for c in COMBOS:
        p = params["attn"][c]
        wqkv = jnp.concatenate([p["wq"], p["wk"], p["wv"]], axis=1)   # (D, 3D)
        bqkv = jnp.concatenate([p["bq"], p["bk"], p["bv"]], axis=1)   # (1, 3D)
        attn_args += [wqkv, bqkv, p["wo"], p["bo"]]

    kernel = make_fused_kernel(B, S, tuple(d_model), H)
    in_specs = ([VMEM_SPEC] * 10 + [SMEM_SPEC] * 2
                + [VMEM_SPEC] * (4 * len(COMBOS)))

    out = pl.pallas_call(
        kernel,
        out_shape=jax.ShapeDtypeStruct((B * S, T), jnp.float32),
        in_specs=in_specs,
        out_specs=VMEM_SPEC,
    )(x_concat.reshape(B * S, T), masks,
      params["norm1"]["alpha"], params["norm1"]["bias"],
      params["norm2"]["alpha"], params["norm2"]["bias"],
      params["ff"]["w1"], params["ff"]["b1"],
      params["ff"]["w2"], params["ff"]["b2"],
      cw, cb, *attn_args)
    return out.reshape(B, S, T)


# ---------------- deterministic parameter init ----------------
def _linear_params(key, fan_in, fan_out):
    k1, k2 = jax.random.split(key)
    bound = 1.0 / math.sqrt(fan_in)
    w = jax.random.uniform(k1, (fan_in, fan_out), jnp.float32, -bound, bound)
    b = jax.random.uniform(k2, (1, fan_out), jnp.float32, -bound, bound)
    return w, b


def init_params(key, d_model):
    dims = dict(zip(MODS, d_model))
    for combo in COMBOS[3:]:
        dims[combo] = sum(dims[m] for m in combo.split("_"))
    H = CONFIG["n_head"]
    C = CONFIG["conv_dims"][0]
    total = sum(d_model)
    keys = iter(jax.random.split(key, 256))

    params = {"attn": {}, "conv": {}}
    for combo in COMBOS:
        D = dims[combo]
        d_k = D // H
        wq, bq = _linear_params(next(keys), D, D)
        wk, bk = _linear_params(next(keys), D, D)
        wv, bv = _linear_params(next(keys), D, D)
        wo, bo = [], []
        for _ in range(H):
            w, b = _linear_params(next(keys), d_k, D)
            wo.append(w); bo.append(b)
        params["attn"][combo] = dict(wq=wq, bq=bq, wk=wk, bk=bk, wv=wv, bv=bv,
                                     wo=jnp.stack(wo), bo=jnp.stack(bo))
    for m in MODS:
        w1, b1, w2, b2 = [], [], [], []
        for _ in range(H):
            w, b = _linear_params(next(keys), 4, C)   # conv_{m}_head_{h}_0
            w1.append(w); b1.append(b)
            w, b = _linear_params(next(keys), C, 1)   # conv_{m}_out_{h}
            w2.append(w); b2.append(b)
        params["conv"][m] = dict(w1=jnp.stack(w1), b1=jnp.stack(b1),
                                 w2=jnp.stack(w2), b2=jnp.stack(b2))
    F = CONFIG["ff_dim_final"]
    fw1, fb1 = _linear_params(next(keys), total, F)
    fw2, fb2 = _linear_params(next(keys), F, total)
    params["ff"] = dict(w1=fw1, b1=fb1, w2=fw2, b2=fb2)
    params["norm1"] = dict(alpha=jnp.ones((1, total), jnp.float32),
                           bias=jnp.zeros((1, total), jnp.float32))
    params["norm2"] = dict(alpha=jnp.ones((1, total), jnp.float32),
                           bias=jnp.zeros((1, total), jnp.float32))
    return params


# ---------------- pure-JAX reference (for correctness check) ----------------
def _ref_norm(x, alpha, bias):
    mu = jnp.mean(x, -1, keepdims=True)
    var = jnp.sum((x - mu) ** 2, -1, keepdims=True) / (x.shape[-1] - 1)
    return alpha * (x - mu) / (jnp.sqrt(var) + EPS) + bias


def _ref_mha(x, mask, p):
    H, d_k, D = p["wo"].shape
    q = jnp.dot(x, p["wq"], precision=REF_PREC) + p["bq"]
    k = jnp.dot(x, p["wk"], precision=REF_PREC) + p["bk"]
    v = jnp.dot(x, p["wv"], precision=REF_PREC) + p["bv"]
    scale = 1.0 / math.sqrt(d_k)
    outs = []
    for h in range(H):
        sl = slice(h * d_k, (h + 1) * d_k)
        qh, kh, vh = q[..., sl], k[..., sl], v[..., sl]
        s = jnp.einsum("bqd,bkd->bqk", qh, kh, precision=REF_PREC) * scale
        s = jnp.where(mask == 0.0, -1e9, s)
        pr = jax.nn.softmax(s, axis=-1)
        oh = jnp.einsum("bqk,bkd->bqd", pr, vh, precision=REF_PREC)
        outs.append(jnp.dot(oh, p["wo"][h], precision=REF_PREC) + p["bo"][h])
    return jnp.stack(outs, 0)


def reference_forward(x_concat, mask_dict, params, d_model):
    B, S, T = x_concat.shape
    dims = dict(zip(MODS, d_model))
    H = CONFIG["n_head"]
    xcn = _ref_norm(x_concat, params["norm1"]["alpha"], params["norm1"]["bias"])
    x_parts, xn_parts = {}, {}
    cum = 0
    for m in MODS:
        d = dims[m]
        x_parts[m] = x_concat[..., cum:cum + d]
        xn_parts[m] = xcn[..., cum:cum + d]
        cum += d
    x_lists = {(m, h): [] for m in MODS for h in range(H)}
    for combo in COMBOS:
        ml = combo.split("_")
        x = jnp.concatenate([x_parts[m] for m in ml], -1)
        x2 = jnp.concatenate([xn_parts[m] for m in ml], -1)
        attn = _ref_mha(x2, mask_dict[combo], params["attn"][combo])
        for h in range(H):
            x = x + attn[h]
            cum = 0
            for m in ml:
                d = dims[m]
                x_lists[(m, h)].append(x[..., cum:cum + d])
                cum += d
    outs = []
    for m in MODS:
        cp = params["conv"][m]
        total = 0.0
        for h in range(H):
            st = jnp.stack(x_lists[(m, h)], axis=3)                        # (B,S,d,4)
            y = jnp.dot(st, cp["w1"][h], precision=REF_PREC) + cp["b1"][h][0]
            z = jnp.dot(y, cp["w2"][h], precision=REF_PREC) + cp["b2"][h][0]
            total = total + z[..., 0]
        outs.append(total)
    x2 = jnp.concatenate(outs, -1)
    x2 = _ref_norm(x2, params["norm2"]["alpha"], params["norm2"]["bias"])
    fp = params["ff"]
    hh = jnp.maximum(jnp.dot(x2, fp["w1"], precision=REF_PREC) + fp["b1"], 0.0)
    ff_out = jnp.dot(hh, fp["w2"], precision=REF_PREC) + fp["b2"]
    return x_concat + ff_out


# ---------------- main ----------------
if __name__ == "__main__":
    d_model = (16, 8, 8)          # (dim_l, dim_a, dim_v); each divisible by n_head
    B, S = 2, 8
    T = sum(d_model)

    key = jax.random.PRNGKey(0)
    kx, kp = jax.random.split(key)
    x_concat = jax.random.normal(kx, (B, S, T), jnp.float32)

    # mask_list order in the torch forward: l, a, v, l_a, l_v, a_v, l_a_v
    causal = jnp.tril(jnp.ones((S, S), jnp.float32))
    mask = jnp.broadcast_to(causal, (B, S, S)) + 0.0
    mask_dict = {c: mask for c in COMBOS}

    params = init_params(kp, d_model)

    fwd = jax.jit(lambda xc, md, prm: decoder_layer_forward(xc, md, prm, d_model))
    out = jax.block_until_ready(fwd(x_concat, mask_dict, params))

    ref = jax.block_until_ready(reference_forward(x_concat, mask_dict, params, d_model))

    assert out.shape == (B, S, T)
    assert bool(jnp.all(jnp.isfinite(out)))
    # Tolerance 2e-2: kernel uses default (bf16-MXU) matmul precision + approx-EUP
    # reciprocals; reference uses HIGHEST-precision f32.  Measured error ~1e-3.
    np.testing.assert_allclose(np.asarray(out), np.asarray(ref), rtol=2e-2, atol=2e-2)

    print("KERNEL_OK")
</pallas_src>

<mosaic_0001>
module attributes {stable_mosaic.version = 11 : i64} {
  func.func @kernel(%arg0: memref<16x32xf32, #tpu.memory_space<vmem>>, %arg1: memref<14x8x8xf32, #tpu.memory_space<vmem>>, %arg2: memref<1x32xf32, #tpu.memory_space<vmem>>, %arg3: memref<1x32xf32, #tpu.memory_space<vmem>>, %arg4: memref<1x32xf32, #tpu.memory_space<vmem>>, %arg5: memref<1x32xf32, #tpu.memory_space<vmem>>, %arg6: memref<32x64xf32, #tpu.memory_space<vmem>>, %arg7: memref<1x64xf32, #tpu.memory_space<vmem>>, %arg8: memref<64x32xf32, #tpu.memory_space<vmem>>, %arg9: memref<1x32xf32, #tpu.memory_space<vmem>>, %arg10: memref<24xf32, #tpu.memory_space<smem>>, %arg11: memref<3xf32, #tpu.memory_space<smem>>, %arg12: memref<16x48xf32, #tpu.memory_space<vmem>>, %arg13: memref<1x48xf32, #tpu.memory_space<vmem>>, %arg14: memref<2x8x16xf32, #tpu.memory_space<vmem>>, %arg15: memref<2x1x16xf32, #tpu.memory_space<vmem>>, %arg16: memref<8x24xf32, #tpu.memory_space<vmem>>, %arg17: memref<1x24xf32, #tpu.memory_space<vmem>>, %arg18: memref<2x4x8xf32, #tpu.memory_space<vmem>>, %arg19: memref<2x1x8xf32, #tpu.memory_space<vmem>>, %arg20: memref<8x24xf32, #tpu.memory_space<vmem>>, %arg21: memref<1x24xf32, #tpu.memory_space<vmem>>, %arg22: memref<2x4x8xf32, #tpu.memory_space<vmem>>, %arg23: memref<2x1x8xf32, #tpu.memory_space<vmem>>, %arg24: memref<24x72xf32, #tpu.memory_space<vmem>>, %arg25: memref<1x72xf32, #tpu.memory_space<vmem>>, %arg26: memref<2x12x24xf32, #tpu.memory_space<vmem>>, %arg27: memref<2x1x24xf32, #tpu.memory_space<vmem>>, %arg28: memref<24x72xf32, #tpu.memory_space<vmem>>, %arg29: memref<1x72xf32, #tpu.memory_space<vmem>>, %arg30: memref<2x12x24xf32, #tpu.memory_space<vmem>>, %arg31: memref<2x1x24xf32, #tpu.memory_space<vmem>>, %arg32: memref<16x48xf32, #tpu.memory_space<vmem>>, %arg33: memref<1x48xf32, #tpu.memory_space<vmem>>, %arg34: memref<2x8x16xf32, #tpu.memory_space<vmem>>, %arg35: memref<2x1x16xf32, #tpu.memory_space<vmem>>, %arg36: memref<32x96xf32, #tpu.memory_space<vmem>>, %arg37: memref<1x96xf32, #tpu.memory_space<vmem>>, %arg38: memref<2x16x32xf32, #tpu.memory_space<vmem>>, %arg39: memref<2x1x32xf32, #tpu.memory_space<vmem>>, %arg40: memref<16x32xf32, #tpu.memory_space<vmem>>) attributes {dimension_semantics = [], scalar_prefetch = 0 : i64, scratch_operands = 0 : i64, tpu.core_type = #tpu.core_type<tc>} {
    %c0 = arith.constant 0 : index
    %c0_0 = arith.constant 0 : index
    %0 = vector.load %arg0[%c0, %c0_0] : memref<16x32xf32, #tpu.memory_space<vmem>>, vector<16x32xf32>
    %c0_1 = arith.constant 0 : index
    %c0_2 = arith.constant 0 : index
    %1 = vector.load %arg2[%c0_1, %c0_2] : memref<1x32xf32, #tpu.memory_space<vmem>>, vector<1x32xf32>
    %c0_3 = arith.constant 0 : index
    %c0_4 = arith.constant 0 : index
    %2 = vector.load %arg3[%c0_3, %c0_4] : memref<1x32xf32, #tpu.memory_space<vmem>>, vector<1x32xf32>
    %cst = arith.constant dense<0.000000e+00> : vector<16xf32>
    %3 = vector.multi_reduction <add>, %0, %cst [1] : vector<16x32xf32> to vector<16xf32>
    %4 = vector.shape_cast %3 : vector<16xf32> to vector<16x1xf32>
    %cst_5 = arith.constant 3.200000e+01 : f32
    %5 = vector.broadcast %cst_5 : f32 to vector<16x1xf32>
    %6 = arith.divf %4, %5 : vector<16x1xf32>
    %7 = vector.broadcast %6 : vector<16x1xf32> to vector<16x32xf32>
    %8 = arith.subf %0, %7 : vector<16x32xf32>
    %9 = arith.mulf %8, %8 : vector<16x32xf32>
    %cst_6 = arith.constant dense<0.000000e+00> : vector<16xf32>
    %10 = vector.multi_reduction <add>, %9, %cst_6 [1] : vector<16x32xf32> to vector<16xf32>
    %11 = vector.shape_cast %10 : vector<16xf32> to vector<16x1xf32>
    %cst_7 = arith.constant 0.0322580636 : f32
    %12 = vector.broadcast %cst_7 : f32 to vector<16x1xf32>
    %13 = arith.mulf %11, %12 : vector<16x1xf32>
    %14 = math.sqrt %13 : vector<16x1xf32>
    %cst_8 = arith.constant 9.99999997E-7 : f32
    %15 = vector.broadcast %cst_8 : f32 to vector<16x1xf32>
    %16 = arith.addf %14, %15 : vector<16x1xf32>
    %17 = tpu.reciprocal %16 {approx = true} : vector<16x1xf32> -> vector<16x1xf32>
    %18 = vector.broadcast %6 : vector<16x1xf32> to vector<16x32xf32>
    %19 = arith.subf %0, %18 : vector<16x32xf32>
    %20 = vector.broadcast %1 : vector<1x32xf32> to vector<16x32xf32>
    %21 = arith.mulf %20, %19 : vector<16x32xf32>
    %22 = vector.broadcast %17 : vector<16x1xf32> to vector<16x32xf32>
    %23 = arith.mulf %21, %22 : vector<16x32xf32>
    %24 = vector.broadcast %2 : vector<1x32xf32> to vector<16x32xf32>
    %25 = arith.addf %23, %24 : vector<16x32xf32>
    %cst_9 = arith.constant 0.000000e+00 : f32
    %26 = vector.broadcast %cst_9 : f32 to vector<16x16xf32>
    %cst_10 = arith.constant 0.000000e+00 : f32
    %27 = vector.broadcast %cst_10 : f32 to vector<16x8xf32>
    %cst_11 = arith.constant 0.000000e+00 : f32
    %28 = vector.broadcast %cst_11 : f32 to vector<16x8xf32>
    %c0_12 = arith.constant 0 : index
    %c0_13 = arith.constant 0 : index
    %29 = vector.load %arg12[%c0_12, %c0_13] : memref<16x48xf32, #tpu.memory_space<vmem>>, vector<16x48xf32>
    %c0_14 = arith.constant 0 : index
    %c0_15 = arith.constant 0 : index
    %30 = vector.load %arg13[%c0_14, %c0_15] : memref<1x48xf32, #tpu.memory_space<vmem>>, vector<1x48xf32>
    %31 = vector.extract_strided_slice %25 {offsets = [0, 0], sizes = [16, 16], strides = [1, 1]} : vector<16x32xf32> to vector<16x16xf32>
    %cst_16 = arith.constant dense<0.000000e+00> : vector<16x48xf32>
    %32 = tpu.matmul %31, %29, %cst_16 {dimension_numbers = #tpu.dot_dimension_numbers<[1], [0], [0], [1], [0, 0, 1, 1], [], []>} : vector<16x16xf32>, vector<16x48xf32>, vector<16x48xf32> -> vector<16x48xf32>
    %33 = vector.broadcast %30 : vector<1x48xf32> to vector<16x48xf32>
    %34 = arith.addf %32, %33 : vector<16x48xf32>
    %35 = vector.extract_strided_slice %34 {offsets = [0, 0], sizes = [16, 16], strides = [1, 1]} : vector<16x48xf32> to vector<16x16xf32>
    %36 = vector.extract_strided_slice %34 {offsets = [0, 16], sizes = [16, 16], strides = [1, 1]} : vector<16x48xf32> to vector<16x16xf32>
    %37 = vector.extract_strided_slice %34 {offsets = [0, 32], sizes = [16, 16], strides = [1, 1]} : vector<16x48xf32> to vector<16x16xf32>
    %38 = vector.extract_strided_slice %0 {offsets = [0, 0], sizes = [16, 16], strides = [1, 1]} : vector<16x32xf32> to vector<16x16xf32>
    %39 = vector.extract_strided_slice %35 {offsets = [0, 0], sizes = [8, 8], strides = [1, 1]} : vector<16x16xf32> to vector<8x8xf32>
    %40 = vector.extract_strided_slice %36 {offsets = [0, 0], sizes = [8, 8], strides = [1, 1]} : vector<16x16xf32> to vector<8x8xf32>
    %41 = vector.extract_strided_slice %37 {offsets = [0, 0], sizes = [8, 8], strides = [1, 1]} : vector<16x16xf32> to vector<8x8xf32>
    %cst_17 = arith.constant dense<0.000000e+00> : vector<8x8xf32>
    %42 = tpu.matmul %39, %40, %cst_17 {dimension_numbers = #tpu.dot_dimension_numbers<[1], [1], [0], [0], [0, 0, 1, 0], [], []>} : vector<8x8xf32>, vector<8x8xf32>, vector<8x8xf32> -> vector<8x8xf32>
    %cst_18 = arith.constant 0.353553385 : f32
    %43 = vector.broadcast %cst_18 : f32 to vector<8x8xf32>
    %44 = arith.mulf %42, %43 : vector<8x8xf32>
    %c0_19 = arith.constant 0 : index
    %c0_20 = arith.constant 0 : index
    %c0_21 = arith.constant 0 : index
    %45 = vector.load %arg1[%c0_19, %c0_20, %c0_21] : memref<14x8x8xf32, #tpu.memory_space<vmem>>, vector<1x8x8xf32>
    %46 = vector.shape_cast %45 : vector<1x8x8xf32> to vector<8x8xf32>
    %cst_22 = arith.constant 0.000000e+00 : f32
    %47 = vector.broadcast %cst_22 : f32 to vector<8x8xf32>
    %48 = arith.cmpf oeq, %46, %47 : vector<8x8xf32>
    %cst_23 = arith.constant -1.000000e+09 : f32
    %49 = vector.broadcast %cst_23 : f32 to vector<8x8xf32>
    %50 = arith.select %48, %49, %44 : vector<8x8xi1>, vector<8x8xf32>
    %cst_24 = arith.constant dense<0xFF800000> : vector<8xf32>
    %51 = vector.multi_reduction <maximumf>, %50, %cst_24 [1] : vector<8x8xf32> to vector<8xf32>
    %52 = vector.shape_cast %51 : vector<8xf32> to vector<8x1xf32>
    %53 = vector.broadcast %52 : vector<8x1xf32> to vector<8x8xf32>
    %54 = arith.subf %50, %53 : vector<8x8xf32>
    %55 = math.exp %54 : vector<8x8xf32>
    %cst_25 = arith.constant dense<0.000000e+00> : vector<8xf32>
    %56 = vector.multi_reduction <add>, %55, %cst_25 [1] : vector<8x8xf32> to vector<8xf32>
    %57 = vector.shape_cast %56 : vector<8xf32> to vector<8x1xf32>
    %58 = tpu.reciprocal %57 {approx = true} : vector<8x1xf32> -> vector<8x1xf32>
    %59 = vector.broadcast %58 : vector<8x1xf32> to vector<8x8xf32>
    %60 = arith.mulf %55, %59 : vector<8x8xf32>
    %cst_26 = arith.constant dense<0.000000e+00> : vector<8x8xf32>
    %61 = tpu.matmul %60, %41, %cst_26 {dimension_numbers = #tpu.dot_dimension_numbers<[1], [0], [0], [1], [0, 0, 1, 1], [], []>} : vector<8x8xf32>, vector<8x8xf32>, vector<8x8xf32> -> vector<8x8xf32>
    %62 = vector.extract_strided_slice %35 {offsets = [8, 0], sizes = [8, 8], strides = [1, 1]} : vector<16x16xf32> to vector<8x8xf32>
    %63 = vector.extract_strided_slice %36 {offsets = [8, 0], sizes = [8, 8], strides = [1, 1]} : vector<16x16xf32> to vector<8x8xf32>
    %64 = vector.extract_strided_slice %37 {offsets = [8, 0], sizes = [8, 8], strides = [1, 1]} : vector<16x16xf32> to vector<8x8xf32>
    %cst_27 = arith.constant dense<0.000000e+00> : vector<8x8xf32>
    %65 = tpu.matmul %62, %63, %cst_27 {dimension_numbers = #tpu.dot_dimension_numbers<[1], [1], [0], [0], [0, 0, 1, 0], [], []>} : vector<8x8xf32>, vector<8x8xf32>, vector<8x8xf32> -> vector<8x8xf32>
    %cst_28 = arith.constant 0.353553385 : f32
    %66 = vector.broadcast %cst_28 : f32 to vector<8x8xf32>
    %67 = arith.mulf %65, %66 : vector<8x8xf32>
    %c1 = arith.constant 1 : index
    %c0_29 = arith.constant 0 : index
    %c0_30 = arith.constant 0 : index
    %68 = vector.load %arg1[%c1, %c0_29, %c0_30] : memref<14x8x8xf32, #tpu.memory_space<vmem>>, vector<1x8x8xf32>
    %69 = vector.shape_cast %68 : vector<1x8x8xf32> to vector<8x8xf32>
    %cst_31 = arith.constant 0.000000e+00 : f32
    %70 = vector.broadcast %cst_31 : f32 to vector<8x8xf32>
    %71 = arith.cmpf oeq, %69, %70 : vector<8x8xf32>
    %cst_32 = arith.constant -1.000000e+09 : f32
    %72 = vector.broadcast %cst_32 : f32 to vector<8x8xf32>
    %73 = arith.select %71, %72, %67 : vector<8x8xi1>, vector<8x8xf32>
    %cst_33 = arith.constant dense<0xFF800000> : vector<8xf32>
    %74 = vector.multi_reduction <maximumf>, %73, %cst_33 [1] : vector<8x8xf32> to vector<8xf32>
    %75 = vector.shape_cast %74 : vector<8xf32> to vector<8x1xf32>
    %76 = vector.broadcast %75 : vector<8x1xf32> to vector<8x8xf32>
    %77 = arith.subf %73, %76 : vector<8x8xf32>
    %78 = math.exp %77 : vector<8x8xf32>
    %cst_34 = arith.constant dense<0.000000e+00> : vector<8xf32>
    %79 = vector.multi_reduction <add>, %78, %cst_34 [1] : vector<8x8xf32> to vector<8xf32>
    %80 = vector.shape_cast %79 : vector<8xf32> to vector<8x1xf32>
    %81 = tpu.reciprocal %80 {approx = true} : vector<8x1xf32> -> vector<8x1xf32>
    %82 = vector.broadcast %81 : vector<8x1xf32> to vector<8x8xf32>
    %83 = arith.mulf %78, %82 : vector<8x8xf32>
    %cst_35 = arith.constant dense<0.000000e+00> : vector<8x8xf32>
    %84 = tpu.matmul %83, %64, %cst_35 {dimension_numbers = #tpu.dot_dimension_numbers<[1], [0], [0], [1], [0, 0, 1, 1], [], []>} : vector<8x8xf32>, vector<8x8xf32>, vector<8x8xf32> -> vector<8x8xf32>
    %85 = tpu.concatenate %61, %84 in 0 : vector<8x8xf32>, vector<8x8xf32> -> vector<16x8xf32>
    %c0_36 = arith.constant 0 : index
    %c0_37 = arith.constant 0 : index
    %c0_38 = arith.constant 0 : index
    %86 = vector.load %arg14[%c0_36, %c0_37, %c0_38] : memref<2x8x16xf32, #tpu.memory_space<vmem>>, vector<1x8x16xf32>
    %87 = vector.shape_cast %86 : vector<1x8x16xf32> to vector<8x16xf32>
    %cst_39 = arith.constant dense<0.000000e+00> : vector<16x16xf32>
    %88 = tpu.matmul %85, %87, %cst_39 {dimension_numbers = #tpu.dot_dimension_numbers<[1], [0], [0], [1], [0, 0, 1, 1], [], []>} : vector<16x8xf32>, vector<8x16xf32>, vector<16x16xf32> -> vector<16x16xf32>
    %c0_40 = arith.constant 0 : index
    %c0_41 = arith.constant 0 : index
    %c0_42 = arith.constant 0 : index
    %89 = vector.load %arg15[%c0_40, %c0_41, %c0_42] : memref<2x1x16xf32, #tpu.memory_space<vmem>>, vector<1x1x16xf32>
    %90 = vector.shape_cast %89 : vector<1x1x16xf32> to vector<1x16xf32>
    %91 = vector.broadcast %90 : vector<1x16xf32> to vector<16x16xf32>
    %92 = arith.addf %88, %91 : vector<16x16xf32>
    %93 = arith.addf %38, %92 : vector<16x16xf32>
    %c0_43 = arith.constant 0 : index
    %94 = memref.load %arg10[%c0_43] : memref<24xf32, #tpu.memory_space<smem>>
    %95 = vector.broadcast %94 : f32 to vector<16x16xf32>
    %96 = arith.mulf %93, %95 : vector<16x16xf32>
    %97 = arith.addf %26, %96 : vector<16x16xf32>
    %98 = vector.extract_strided_slice %35 {offsets = [0, 8], sizes = [8, 8], strides = [1, 1]} : vector<16x16xf32> to vector<8x8xf32>
    %99 = vector.extract_strided_slice %36 {offsets = [0, 8], sizes = [8, 8], strides = [1, 1]} : vector<16x16xf32> to vector<8x8xf32>
    %100 = vector.extract_strided_slice %37 {offsets = [0, 8], sizes = [8, 8], strides = [1, 1]} : vector<16x16xf32> to vector<8x8xf32>
    %cst_44 = arith.constant dense<0.000000e+00> : vector<8x8xf32>
    %101 = tpu.matmul %98, %99, %cst_44 {dimension_numbers = #tpu.dot_dimension_numbers<[1], [1], [0], [0], [0, 0, 1, 0], [], []>} : vector<8x8xf32>, vector<8x8xf32>, vector<8x8xf32> -> vector<8x8xf32>
    %cst_45 = arith.constant 0.353553385 : f32
    %102 = vector.broadcast %cst_45 : f32 to vector<8x8xf32>
    %103 = arith.mulf %101, %102 : vector<8x8xf32>
    %c0_46 = arith.constant 0 : index
    %c0_47 = arith.constant 0 : index
    %c0_48 = arith.constant 0 : index
    %104 = vector.load %arg1[%c0_46, %c0_47, %c0_48] : memref<14x8x8xf32, #tpu.memory_space<vmem>>, vector<1x8x8xf32>
    %105 = vector.shape_cast %104 : vector<1x8x8xf32> to vector<8x8xf32>
    %cst_49 = arith.constant 0.000000e+00 : f32
    %106 = vector.broadcast %cst_49 : f32 to vector<8x8xf32>
    %107 = arith.cmpf oeq, %105, %106 : vector<8x8xf32>
    %cst_50 = arith.constant -1.000000e+09 : f32
    %108 = vector.broadcast %cst_50 : f32 to vector<8x8xf32>
    %109 = arith.select %107, %108, %103 : vector<8x8xi1>, vector<8x8xf32>
    %cst_51 = arith.constant dense<0xFF800000> : vector<8xf32>
    %110 = vector.multi_reduction <maximumf>, %109, %cst_51 [1] : vector<8x8xf32> to vector<8xf32>
    %111 = vector.shape_cast %110 : vector<8xf32> to vector<8x1xf32>
    %112 = vector.broadcast %111 : vector<8x1xf32> to vector<8x8xf32>
    %113 = arith.subf %109, %112 : vector<8x8xf32>
    %114 = math.exp %113 : vector<8x8xf32>
    %cst_52 = arith.constant dense<0.000000e+00> : vector<8xf32>
    %115 = vector.multi_reduction <add>, %114, %cst_52 [1] : vector<8x8xf32> to vector<8xf32>
    %116 = vector.shape_cast %115 : vector<8xf32> to vector<8x1xf32>
    %117 = tpu.reciprocal %116 {approx = true} : vector<8x1xf32> -> vector<8x1xf32>
    %118 = vector.broadcast %117 : vector<8x1xf32> to vector<8x8xf32>
    %119 = arith.mulf %114, %118 : vector<8x8xf32>
    %cst_53 = arith.constant dense<0.000000e+00> : vector<8x8xf32>
    %120 = tpu.matmul %119, %100, %cst_53 {dimension_numbers = #tpu.dot_dimension_numbers<[1], [0], [0], [1], [0, 0, 1, 1], [], []>} : vector<8x8xf32>, vector<8x8xf32>, vector<8x8xf32> -> vector<8x8xf32>
    %121 = vector.extract_strided_slice %35 {offsets = [8, 8], sizes = [8, 8], strides = [1, 1]} : vector<16x16xf32> to vector<8x8xf32>
    %122 = vector.extract_strided_slice %36 {offsets = [8, 8], sizes = [8, 8], strides = [1, 1]} : vector<16x16xf32> to vector<8x8xf32>
    %123 = vector.extract_strided_slice %37 {offsets = [8, 8], sizes = [8, 8], strides = [1, 1]} : vector<16x16xf32> to vector<8x8xf32>
    %cst_54 = arith.constant dense<0.000000e+00> : vector<8x8xf32>
    %124 = tpu.matmul %121, %122, %cst_54 {dimension_numbers = #tpu.dot_dimension_numbers<[1], [1], [0], [0], [0, 0, 1, 0], [], []>} : vector<8x8xf32>, vector<8x8xf32>, vector<8x8xf32> -> vector<8x8xf32>
    %cst_55 = arith.constant 0.353553385 : f32
    %125 = vector.broadcast %cst_55 : f32 to vector<8x8xf32>
    %126 = arith.mulf %124, %125 : vector<8x8xf32>
    %c1_56 = arith.constant 1 : index
    %c0_57 = arith.constant 0 : index
    %c0_58 = arith.constant 0 : index
    %127 = vector.load %arg1[%c1_56, %c0_57, %c0_58] : memref<14x8x8xf32, #tpu.memory_space<vmem>>, vector<1x8x8xf32>
    %128 = vector.shape_cast %127 : vector<1x8x8xf32> to vector<8x8xf32>
    %cst_59 = arith.constant 0.000000e+00 : f32
    %129 = vector.broadcast %cst_59 : f32 to vector<8x8xf32>
    %130 = arith.cmpf oeq, %128, %129 : vector<8x8xf32>
    %cst_60 = arith.constant -1.000000e+09 : f32
    %131 = vector.broadcast %cst_60 : f32 to vector<8x8xf32>
    %132 = arith.select %130, %131, %126 : vector<8x8xi1>, vector<8x8xf32>
    %cst_61 = arith.constant dense<0xFF800000> : vector<8xf32>
    %133 = vector.multi_reduction <maximumf>, %132, %cst_61 [1] : vector<8x8xf32> to vector<8xf32>
    %134 = vector.shape_cast %133 : vector<8xf32> to vector<8x1xf32>
    %135 = vector.broadcast %134 : vector<8x1xf32> to vector<8x8xf32>
    %136 = arith.subf %132, %135 : vector<8x8xf32>
    %137 = math.exp %136 : vector<8x8xf32>
    %cst_62 = arith.constant dense<0.000000e+00> : vector<8xf32>
    %138 = vector.multi_reduction <add>, %137, %cst_62 [1] : vector<8x8xf32> to vector<8xf32>
    %139 = vector.shape_cast %138 : vector<8xf32> to vector<8x1xf32>
    %140 = tpu.reciprocal %139 {approx = true} : vector<8x1xf32> -> vector<8x1xf32>
    %141 = vector.broadcast %140 : vector<8x1xf32> to vector<8x8xf32>
    %142 = arith.mulf %137, %141 : vector<8x8xf32>
    %cst_63 = arith.constant dense<0.000000e+00> : vector<8x8xf32>
    %143 = tpu.matmul %142, %123, %cst_63 {dimension_numbers = #tpu.dot_dimension_numbers<[1], [0], [0], [1], [0, 0, 1, 1], [], []>} : vector<8x8xf32>, vector<8x8xf32>, vector<8x8xf32> -> vector<8x8xf32>
    %144 = tpu.concatenate %120, %143 in 0 : vector<8x8xf32>, vector<8x8xf32> -> vector<16x8xf32>
    %c1_64 = arith.constant 1 : index
    %c0_65 = arith.constant 0 : index
    %c0_66 = arith.constant 0 : index
    %145 = vector.load %arg14[%c1_64, %c0_65, %c0_66] : memref<2x8x16xf32, #tpu.memory_space<vmem>>, vector<1x8x16xf32>
    %146 = vector.shape_cast %145 : vector<1x8x16xf32> to vector<8x16xf32>
    %cst_67 = arith.constant dense<0.000000e+00> : vector<16x16xf32>
    %147 = tpu.matmul %144, %146, %cst_67 {dimension_numbers = #tpu.dot_dimension_numbers<[1], [0], [0], [1], [0, 0, 1, 1], [], []>} : vector<16x8xf32>, vector<8x16xf32>, vector<16x16xf32> -> vector<16x16xf32>
    %c1_68 = arith.constant 1 : index
    %c0_69 = arith.constant 0 : index
    %c0_70 = arith.constant 0 : index
    %148 = vector.load %arg15[%c1_68, %c0_69, %c0_70] : memref<2x1x16xf32, #tpu.memory_space<vmem>>, vector<1x1x16xf32>
    %149 = vector.shape_cast %148 : vector<1x1x16xf32> to vector<1x16xf32>
    %150 = vector.broadcast %149 : vector<1x16xf32> to vector<16x16xf32>
    %151 = arith.addf %147, %150 : vector<16x16xf32>
    %152 = arith.addf %93, %151 : vector<16x16xf32>
    %c4 = arith.constant 4 : index
    %153 = memref.load %arg10[%c4] : memref<24xf32, #tpu.memory_space<smem>>
    %154 = vector.broadcast %153 : f32 to vector<16x16xf32>
    %155 = arith.mulf %152, %154 : vector<16x16xf32>
    %156 = arith.addf %97, %155 : vector<16x16xf32>
    %c0_71 = arith.constant 0 : index
    %c0_72 = arith.constant 0 : index
    %157 = vector.load %arg16[%c0_71, %c0_72] : memref<8x24xf32, #tpu.memory_space<vmem>>, vector<8x24xf32>
    %c0_73 = arith.constant 0 : index
    %c0_74 = arith.constant 0 : index
    %158 = vector.load %arg17[%c0_73, %c0_74] : memref<1x24xf32, #tpu.memory_space<vmem>>, vector<1x24xf32>
    %159 = vector.extract_strided_slice %25 {offsets = [0, 16], sizes = [16, 8], strides = [1, 1]} : vector<16x32xf32> to vector<16x8xf32>
    %cst_75 = arith.constant dense<0.000000e+00> : vector<16x24xf32>
    %160 = tpu.matmul %159, %157, %cst_75 {dimension_numbers = #tpu.dot_dimension_numbers<[1], [0], [0], [1], [0, 0, 1, 1], [], []>} : vector<16x8xf32>, vector<8x24xf32>, vector<16x24xf32> -> vector<16x24xf32>
    %161 = vector.broadcast %158 : vector<1x24xf32> to vector<16x24xf32>
    %162 = arith.addf %160, %161 : vector<16x24xf32>
    %163 = vector.extract_strided_slice %162 {offsets = [0, 0], sizes = [16, 8], strides = [1, 1]} : vector<16x24xf32> to vector<16x8xf32>
    %164 = vector.extract_strided_slice %162 {offsets = [0, 8], sizes = [16, 8], strides = [1, 1]} : vector<16x24xf32> to vector<16x8xf32>
    %165 = vector.extract_strided_slice %162 {offsets = [0, 16], sizes = [16, 8], strides = [1, 1]} : vector<16x24xf32> to vector<16x8xf32>
    %166 = vector.extract_strided_slice %0 {offsets = [0, 16], sizes = [16, 8], strides = [1, 1]} : vector<16x32xf32> to vector<16x8xf32>
    %167 = vector.extract_strided_slice %163 {offsets = [0, 0], sizes = [8, 4], strides = [1, 1]} : vector<16x8xf32> to vector<8x4xf32>
    %168 = vector.extract_strided_slice %164 {offsets = [0, 0], sizes = [8, 4], strides = [1, 1]} : vector<16x8xf32> to vector<8x4xf32>
    %169 = vector.extract_strided_slice %165 {offsets = [0, 0], sizes = [8, 4], strides = [1, 1]} : vector<16x8xf32> to vector<8x4xf32>
    %cst_76 = arith.constant dense<0.000000e+00> : vector<8x8xf32>
    %170 = tpu.matmul %167, %168, %cst_76 {dimension_numbers = #tpu.dot_dimension_numbers<[1], [1], [0], [0], [0, 0, 1, 0], [], []>} : vector<8x4xf32>, vector<8x4xf32>, vector<8x8xf32> -> vector<8x8xf32>
    %cst_77 = arith.constant 5.000000e-01 : f32
    %171 = vector.broadcast %cst_77 : f32 to vector<8x8xf32>
    %172 = arith.mulf %170, %171 : vector<8x8xf32>
    %c2 = arith.constant 2 : index
    %c0_78 = arith.constant 0 : index
    %c0_79 = arith.constant 0 : index
    %173 = vector.load %arg1[%c2, %c0_78, %c0_79] : memref<14x8x8xf32, #tpu.memory_space<vmem>>, vector<1x8x8xf32>
    %174 = vector.shape_cast %173 : vector<1x8x8xf32> to vector<8x8xf32>
    %cst_80 = arith.constant 0.000000e+00 : f32
    %175 = vector.broadcast %cst_80 : f32 to vector<8x8xf32>
    %176 = arith.cmpf oeq, %174, %175 : vector<8x8xf32>
    %cst_81 = arith.constant -1.000000e+09 : f32
    %177 = vector.broadcast %cst_81 : f32 to vector<8x8xf32>
    %178 = arith.select %176, %177, %172 : vector<8x8xi1>, vector<8x8xf32>
    %cst_82 = arith.constant dense<0xFF800000> : vector<8xf32>
    %179 = vector.multi_reduction <maximumf>, %178, %cst_82 [1] : vector<8x8xf32> to vector<8xf32>
    %180 = vector.shape_cast %179 : vector<8xf32> to vector<8x1xf32>
    %181 = vector.broadcast %180 : vector<8x1xf32> to vector<8x8xf32>
    %182 = arith.subf %178, %181 : vector<8x8xf32>
    %183 = math.exp %182 : vector<8x8xf32>
    %cst_83 = arith.constant dense<0.000000e+00> : vector<8xf32>
    %184 = vector.multi_reduction <add>, %183, %cst_83 [1] : vector<8x8xf32> to vector<8xf32>
    %185 = vector.shape_cast %184 : vector<8xf32> to vector<8x1xf32>
    %186 = tpu.reciprocal %185 {approx = true} : vector<8x1xf32> -> vector<8x1xf32>
    %187 = vector.broadcast %186 : vector<8x1xf32> to vector<8x8xf32>
    %188 = arith.mulf %183, %187 : vector<8x8xf32>
    %cst_84 = arith.constant dense<0.000000e+00> : vector<8x4xf32>
    %189 = tpu.matmul %188, %169, %cst_84 {dimension_numbers = #tpu.dot_dimension_numbers<[1], [0], [0], [1], [0, 0, 1, 1], [], []>} : vector<8x8xf32>, vector<8x4xf32>, vector<8x4xf32> -> vector<8x4xf32>
    %190 = vector.extract_strided_slice %163 {offsets = [8, 0], sizes = [8, 4], strides = [1, 1]} : vector<16x8xf32> to vector<8x4xf32>
    %191 = vector.extract_strided_slice %164 {offsets = [8, 0], sizes = [8, 4], strides = [1, 1]} : vector<16x8xf32> to vector<8x4xf32>
    %192 = vector.extract_strided_slice %165 {offsets = [8, 0], sizes = [8, 4], strides = [1, 1]} : vector<16x8xf32> to vector<8x4xf32>
    %cst_85 = arith.constant dense<0.000000e+00> : vector<8x8xf32>
    %193 = tpu.matmul %190, %191, %cst_85 {dimension_numbers = #tpu.dot_dimension_numbers<[1], [1], [0], [0], [0, 0, 1, 0], [], []>} : vector<8x4xf32>, vector<8x4xf32>, vector<8x8xf32> -> vector<8x8xf32>
    %cst_86 = arith.constant 5.000000e-01 : f32
    %194 = vector.broadcast %cst_86 : f32 to vector<8x8xf32>
    %195 = arith.mulf %193, %194 : vector<8x8xf32>
    %c3 = arith.constant 3 : index
    %c0_87 = arith.constant 0 : index
    %c0_88 = arith.constant 0 : index
    %196 = vector.load %arg1[%c3, %c0_87, %c0_88] : memref<14x8x8xf32, #tpu.memory_space<vmem>>, vector<1x8x8xf32>
    %197 = vector.shape_cast %196 : vector<1x8x8xf32> to vector<8x8xf32>
    %cst_89 = arith.constant 0.000000e+00 : f32
    %198 = vector.broadcast %cst_89 : f32 to vector<8x8xf32>
    %199 = arith.cmpf oeq, %197, %198 : vector<8x8xf32>
    %cst_90 = arith.constant -1.000000e+09 : f32
    %200 = vector.broadcast %cst_90 : f32 to vector<8x8xf32>
    %201 = arith.select %199, %200, %195 : vector<8x8xi1>, vector<8x8xf32>
    %cst_91 = arith.constant dense<0xFF800000> : vector<8xf32>
    %202 = vector.multi_reduction <maximumf>, %201, %cst_91 [1] : vector<8x8xf32> to vector<8xf32>
    %203 = vector.shape_cast %202 : vector<8xf32> to vector<8x1xf32>
    %204 = vector.broadcast %203 : vector<8x1xf32> to vector<8x8xf32>
    %205 = arith.subf %201, %204 : vector<8x8xf32>
    %206 = math.exp %205 : vector<8x8xf32>
    %cst_92 = arith.constant dense<0.000000e+00> : vector<8xf32>
    %207 = vector.multi_reduction <add>, %206, %cst_92 [1] : vector<8x8xf32> to vector<8xf32>
    %208 = vector.shape_cast %207 : vector<8xf32> to vector<8x1xf32>
    %209 = tpu.reciprocal %208 {approx = true} : vector<8x1xf32> -> vector<8x1xf32>
    %210 = vector.broadcast %209 : vector<8x1xf32> to vector<8x8xf32>
    %211 = arith.mulf %206, %210 : vector<8x8xf32>
    %cst_93 = arith.constant dense<0.000000e+00> : vector<8x4xf32>
    %212 = tpu.matmul %211, %192, %cst_93 {dimension_numbers = #tpu.dot_dimension_numbers<[1], [0], [0], [1], [0, 0, 1, 1], [], []>} : vector<8x8xf32>, vector<8x4xf32>, vector<8x4xf32> -> vector<8x4xf32>
    %213 = tpu.concatenate %189, %212 in 0 : vector<8x4xf32>, vector<8x4xf32> -> vector<16x4xf32>
    %c0_94 = arith.constant 0 : index
    %c0_95 = arith.constant 0 : index
    %c0_96 = arith.constant 0 : index
    %214 = vector.load %arg18[%c0_94, %c0_95, %c0_96] : memref<2x4x8xf32, #tpu.memory_space<vmem>>, vector<1x4x8xf32>
    %215 = vector.shape_cast %214 : vector<1x4x8xf32> to vector<4x8xf32>
    %cst_97 = arith.constant dense<0.000000e+00> : vector<16x8xf32>
    %216 = tpu.matmul %213, %215, %cst_97 {dimension_numbers = #tpu.dot_dimension_numbers<[1], [0], [0], [1], [0, 0, 1, 1], [], []>} : vector<16x4xf32>, vector<4x8xf32>, vector<16x8xf32> -> vector<16x8xf32>
    %c0_98 = arith.constant 0 : index
    %c0_99 = arith.constant 0 : index
    %c0_100 = arith.constant 0 : index
    %217 = vector.load %arg19[%c0_98, %c0_99, %c0_100] : memref<2x1x8xf32, #tpu.memory_space<vmem>>, vector<1x1x8xf32>
    %218 = vector.shape_cast %217 : vector<1x1x8xf32> to vector<1x8xf32>
    %219 = vector.broadcast %218 : vector<1x8xf32> to vector<16x8xf32>
    %220 = arith.addf %216, %219 : vector<16x8xf32>
    %221 = arith.addf %166, %220 : vector<16x8xf32>
    %c8 = arith.constant 8 : index
    %222 = memref.load %arg10[%c8] : memref<24xf32, #tpu.memory_space<smem>>
    %223 = vector.broadcast %222 : f32 to vector<16x8xf32>
    %224 = arith.mulf %221, %223 : vector<16x8xf32>
    %225 = arith.addf %27, %224 : vector<16x8xf32>
    %226 = vector.extract_strided_slice %163 {offsets = [0, 4], sizes = [8, 4], strides = [1, 1]} : vector<16x8xf32> to vector<8x4xf32>
    %227 = vector.extract_strided_slice %164 {offsets = [0, 4], sizes = [8, 4], strides = [1, 1]} : vector<16x8xf32> to vector<8x4xf32>
    %228 = vector.extract_strided_slice %165 {offsets = [0, 4], sizes = [8, 4], strides = [1, 1]} : vector<16x8xf32> to vector<8x4xf32>
    %cst_101 = arith.constant dense<0.000000e+00> : vector<8x8xf32>
    %229 = tpu.matmul %226, %227, %cst_101 {dimension_numbers = #tpu.dot_dimension_numbers<[1], [1], [0], [0], [0, 0, 1, 0], [], []>} : vector<8x4xf32>, vector<8x4xf32>, vector<8x8xf32> -> vector<8x8xf32>
    %cst_102 = arith.constant 5.000000e-01 : f32
    %230 = vector.broadcast %cst_102 : f32 to vector<8x8xf32>
    %231 = arith.mulf %229, %230 : vector<8x8xf32>
    %c2_103 = arith.constant 2 : index
    %c0_104 = arith.constant 0 : index
    %c0_105 = arith.constant 0 : index
    %232 = vector.load %arg1[%c2_103, %c0_104, %c0_105] : memref<14x8x8xf32, #tpu.memory_space<vmem>>, vector<1x8x8xf32>
    %233 = vector.shape_cast %232 : vector<1x8x8xf32> to vector<8x8xf32>
    %cst_106 = arith.constant 0.000000e+00 : f32
    %234 = vector.broadcast %cst_106 : f32 to vector<8x8xf32>
    %235 = arith.cmpf oeq, %233, %234 : vector<8x8xf32>
    %cst_107 = arith.constant -1.000000e+09 : f32
    %236 = vector.broadcast %cst_107 : f32 to vector<8x8xf32>
    %237 = arith.select %235, %236, %231 : vector<8x8xi1>, vector<8x8xf32>
    %cst_108 = arith.constant dense<0xFF800000> : vector<8xf32>
    %238 = vector.multi_reduction <maximumf>, %237, %cst_108 [1] : vector<8x8xf32> to vector<8xf32>
    %239 = vector.shape_cast %238 : vector<8xf32> to vector<8x1xf32>
    %240 = vector.broadcast %239 : vector<8x1xf32> to vector<8x8xf32>
    %241 = arith.subf %237, %240 : vector<8x8xf32>
    %242 = math.exp %241 : vector<8x8xf32>
    %cst_109 = arith.constant dense<0.000000e+00> : vector<8xf32>
    %243 = vector.multi_reduction <add>, %242, %cst_109 [1] : vector<8x8xf32> to vector<8xf32>
    %244 = vector.shape_cast %243 : vector<8xf32> to vector<8x1xf32>
    %245 = tpu.reciprocal %244 {approx = true} : vector<8x1xf32> -> vector<8x1xf32>
    %246 = vector.broadcast %245 : vector<8x1xf32> to vector<8x8xf32>
    %247 = arith.mulf %242, %246 : vector<8x8xf32>
    %cst_110 = arith.constant dense<0.000000e+00> : vector<8x4xf32>
    %248 = tpu.matmul %247, %228, %cst_110 {dimension_numbers = #tpu.dot_dimension_numbers<[1], [0], [0], [1], [0, 0, 1, 1], [], []>} : vector<8x8xf32>, vector<8x4xf32>, vector<8x4xf32> -> vector<8x4xf32>
    %249 = vector.extract_strided_slice %163 {offsets = [8, 4], sizes = [8, 4], strides = [1, 1]} : vector<16x8xf32> to vector<8x4xf32>
    %250 = vector.extract_strided_slice %164 {offsets = [8, 4], sizes = [8, 4], strides = [1, 1]} : vector<16x8xf32> to vector<8x4xf32>
    %251 = vector.extract_strided_slice %165 {offsets = [8, 4], sizes = [8, 4], strides = [1, 1]} : vector<16x8xf32> to vector<8x4xf32>
    %cst_111 = arith.constant dense<0.000000e+00> : vector<8x8xf32>
    %252 = tpu.matmul %249, %250, %cst_111 {dimension_numbers = #tpu.dot_dimension_numbers<[1], [1], [0], [0], [0, 0, 1, 0], [], []>} : vector<8x4xf32>, vector<8x4xf32>, vector<8x8xf32> -> vector<8x8xf32>
    %cst_112 = arith.constant 5.000000e-01 : f32
    %253 = vector.broadcast %cst_112 : f32 to vector<8x8xf32>
    %254 = arith.mulf %252, %253 : vector<8x8xf32>
    %c3_113 = arith.constant 3 : index
    %c0_114 = arith.constant 0 : index
    %c0_115 = arith.constant 0 : index
    %255 = vector.load %arg1[%c3_113, %c0_114, %c0_115] : memref<14x8x8xf32, #tpu.memory_space<vmem>>, vector<1x8x8xf32>
    %256 = vector.shape_cast %255 : vector<1x8x8xf32> to vector<8x8xf32>
    %cst_116 = arith.constant 0.000000e+00 : f32
    %257 = vector.broadcast %cst_116 : f32 to vector<8x8xf32>
    %258 = arith.cmpf oeq, %256, %257 : vector<8x8xf32>
    %cst_117 = arith.constant -1.000000e+09 : f32
    %259 = vector.broadcast %cst_117 : f32 to vector<8x8xf32>
    %260 = arith.select %258, %259, %254 : vector<8x8xi1>, vector<8x8xf32>
    %cst_118 = arith.constant dense<0xFF800000> : vector<8xf32>
    %261 = vector.multi_reduction <maximumf>, %260, %cst_118 [1] : vector<8x8xf32> to vector<8xf32>
    %262 = vector.shape_cast %261 : vector<8xf32> to vector<8x1xf32>
    %263 = vector.broadcast %262 : vector<8x1xf32> to vector<8x8xf32>
    %264 = arith.subf %260, %263 : vector<8x8xf32>
    %265 = math.exp %264 : vector<8x8xf32>
    %cst_119 = arith.constant dense<0.000000e+00> : vector<8xf32>
    %266 = vector.multi_reduction <add>, %265, %cst_119 [1] : vector<8x8xf32> to vector<8xf32>
    %267 = vector.shape_cast %266 : vector<8xf32> to vector<8x1xf32>
    %268 = tpu.reciprocal %267 {approx = true} : vector<8x1xf32> -> vector<8x1xf32>
    %269 = vector.broadcast %268 : vector<8x1xf32> to vector<8x8xf32>
    %270 = arith.mulf %265, %269 : vector<8x8xf32>
    %cst_120 = arith.constant dense<0.000000e+00> : vector<8x4xf32>
    %271 = tpu.matmul %270, %251, %cst_120 {dimension_numbers = #tpu.dot_dimension_numbers<[1], [0], [0], [1], [0, 0, 1, 1], [], []>} : vector<8x8xf32>, vector<8x4xf32>, vector<8x4xf32> -> vector<8x4xf32>
    %272 = tpu.concatenate %248, %271 in 0 : vector<8x4xf32>, vector<8x4xf32> -> vector<16x4xf32>
    %c1_121 = arith.constant 1 : index
    %c0_122 = arith.constant 0 : index
    %c0_123 = arith.constant 0 : index
    %273 = vector.load %arg18[%c1_121, %c0_122, %c0_123] : memref<2x4x8xf32, #tpu.memory_space<vmem>>, vector<1x4x8xf32>
    %274 = vector.shape_cast %273 : vector<1x4x8xf32> to vector<4x8xf32>
    %cst_124 = arith.constant dense<0.000000e+00> : vector<16x8xf32>
    %275 = tpu.matmul %272, %274, %cst_124 {dimension_numbers = #tpu.dot_dimension_numbers<[1], [0], [0], [1], [0, 0, 1, 1], [], []>} : vector<16x4xf32>, vector<4x8xf32>, vector<16x8xf32> -> vector<16x8xf32>
    %c1_125 = arith.constant 1 : index
    %c0_126 = arith.constant 0 : index
    %c0_127 = arith.constant 0 : index
    %276 = vector.load %arg19[%c1_125, %c0_126, %c0_127] : memref<2x1x8xf32, #tpu.memory_space<vmem>>, vector<1x1x8xf32>
    %277 = vector.shape_cast %276 : vector<1x1x8xf32> to vector<1x8xf32>
    %278 = vector.broadcast %277 : vector<1x8xf32> to vector<16x8xf32>
    %279 = arith.addf %275, %278 : vector<16x8xf32>
    %280 = arith.addf %221, %279 : vector<16x8xf32>
    %c12 = arith.constant 12 : index
    %281 = memref.load %arg10[%c12] : memref<24xf32, #tpu.memory_space<smem>>
    %282 = vector.broadcast %281 : f32 to vector<16x8xf32>
    %283 = arith.mulf %280, %282 : vector<16x8xf32>
    %284 = arith.addf %225, %283 : vector<16x8xf32>
    %c0_128 = arith.constant 0 : index
    %c0_129 = arith.constant 0 : index
    %285 = vector.load %arg20[%c0_128, %c0_129] : memref<8x24xf32, #tpu.memory_space<vmem>>, vector<8x24xf32>
    %c0_130 = arith.constant 0 : index
    %c0_131 = arith.constant 0 : index
    %286 = vector.load %arg21[%c0_130, %c0_131] : memref<1x24xf32, #tpu.memory_space<vmem>>, vector<1x24xf32>
    %287 = vector.extract_strided_slice %25 {offsets = [0, 24], sizes = [16, 8], strides = [1, 1]} : vector<16x32xf32> to vector<16x8xf32>
    %cst_132 = arith.constant dense<0.000000e+00> : vector<16x24xf32>
    %288 = tpu.matmul %287, %285, %cst_132 {dimension_numbers = #tpu.dot_dimension_numbers<[1], [0], [0], [1], [0, 0, 1, 1], [], []>} : vector<16x8xf32>, vector<8x24xf32>, vector<16x24xf32> -> vector<16x24xf32>
    %289 = vector.broadcast %286 : vector<1x24xf32> to vector<16x24xf32>
    %290 = arith.addf %288, %289 : vector<16x24xf32>
    %291 = vector.extract_strided_slice %290 {offsets = [0, 0], sizes = [16, 8], strides = [1, 1]} : vector<16x24xf32> to vector<16x8xf32>
    %292 = vector.extract_strided_slice %290 {offsets = [0, 8], sizes = [16, 8], strides = [1, 1]} : vector<16x24xf32> to vector<16x8xf32>
    %293 = vector.extract_strided_slice %290 {offsets = [0, 16], sizes = [16, 8], strides = [1, 1]} : vector<16x24xf32> to vector<16x8xf32>
    %294 = vector.extract_strided_slice %0 {offsets = [0, 24], sizes = [16, 8], strides = [1, 1]} : vector<16x32xf32> to vector<16x8xf32>
    %295 = vector.extract_strided_slice %291 {offsets = [0, 0], sizes = [8, 4], strides = [1, 1]} : vector<16x8xf32> to vector<8x4xf32>
    %296 = vector.extract_strided_slice %292 {offsets = [0, 0], sizes = [8, 4], strides = [1, 1]} : vector<16x8xf32> to vector<8x4xf32>
    %297 = vector.extract_strided_slice %293 {offsets = [0, 0], sizes = [8, 4], strides = [1, 1]} : vector<16x8xf32> to vector<8x4xf32>
    %cst_133 = arith.constant dense<0.000000e+00> : vector<8x8xf32>
    %298 = tpu.matmul %295, %296, %cst_133 {dimension_numbers = #tpu.dot_dimension_numbers<[1], [1], [0], [0], [0, 0, 1, 0], [], []>} : vector<8x4xf32>, vector<8x4xf32>, vector<8x8xf32> -> vector<8x8xf32>
    %cst_134 = arith.constant 5.000000e-01 : f32
    %299 = vector.broadcast %cst_134 : f32 to vector<8x8xf32>
    %300 = arith.mulf %298, %299 : vector<8x8xf32>
    %c4_135 = arith.constant 4 : index
    %c0_136 = arith.constant 0 : index
    %c0_137 = arith.constant 0 : index
    %301 = vector.load %arg1[%c4_135, %c0_136, %c0_137] : memref<14x8x8xf32, #tpu.memory_space<vmem>>, vector<1x8x8xf32>
    %302 = vector.shape_cast %301 : vector<1x8x8xf32> to vector<8x8xf32>
    %cst_138 = arith.constant 0.000000e+00 : f32
    %303 = vector.broadcast %cst_138 : f32 to vector<8x8xf32>
    %304 = arith.cmpf oeq, %302, %303 : vector<8x8xf32>
    %cst_139 = arith.constant -1.000000e+09 : f32
    %305 = vector.broadcast %cst_139 : f32 to vector<8x8xf32>
    %306 = arith.select %304, %305, %300 : vector<8x8xi1>, vector<8x8xf32>
    %cst_140 = arith.constant dense<0xFF800000> : vector<8xf32>
    %307 = vector.multi_reduction <maximumf>, %306, %cst_140 [1] : vector<8x8xf32> to vector<8xf32>
    %308 = vector.shape_cast %307 : vector<8xf32> to vector<8x1xf32>
    %309 = vector.broadcast %308 : vector<8x1xf32> to vector<8x8xf32>
    %310 = arith.subf %306, %309 : vector<8x8xf32>
    %311 = math.exp %310 : vector<8x8xf32>
    %cst_141 = arith.constant dense<0.000000e+00> : vector<8xf32>
    %312 = vector.multi_reduction <add>, %311, %cst_141 [1] : vector<8x8xf32> to vector<8xf32>
    %313 = vector.shape_cast %312 : vector<8xf32> to vector<8x1xf32>
    %314 = tpu.reciprocal %313 {approx = true} : vector<8x1xf32> -> vector<8x1xf32>
    %315 = vector.broadcast %314 : vector<8x1xf32> to vector<8x8xf32>
    %316 = arith.mulf %311, %315 : vector<8x8xf32>
    %cst_142 = arith.constant dense<0.000000e+00> : vector<8x4xf32>
    %317 = tpu.matmul %316, %297, %cst_142 {dimension_numbers = #tpu.dot_dimension_numbers<[1], [0], [0], [1], [0, 0, 1, 1], [], []>} : vector<8x8xf32>, vector<8x4xf32>, vector<8x4xf32> -> vector<8x4xf32>
    %318 = vector.extract_strided_slice %291 {offsets = [8, 0], sizes = [8, 4], strides = [1, 1]} : vector<16x8xf32> to vector<8x4xf32>
    %319 = vector.extract_strided_slice %292 {offsets = [8, 0], sizes = [8, 4], strides = [1, 1]} : vector<16x8xf32> to vector<8x4xf32>
    %320 = vector.extract_strided_slice %293 {offsets = [8, 0], sizes = [8, 4], strides = [1, 1]} : vector<16x8xf32> to vector<8x4xf32>
    %cst_143 = arith.constant dense<0.000000e+00> : vector<8x8xf32>
    %321 = tpu.matmul %318, %319, %cst_143 {dimension_numbers = #tpu.dot_dimension_numbers<[1], [1], [0], [0], [0, 0, 1, 0], [], []>} : vector<8x4xf32>, vector<8x4xf32>, vector<8x8xf32> -> vector<8x8xf32>
    %cst_144 = arith.constant 5.000000e-01 : f32
    %322 = vector.broadcast %cst_144 : f32 to vector<8x8xf32>
    %323 = arith.mulf %321, %322 : vector<8x8xf32>
    %c5 = arith.constant 5 : index
    %c0_145 = arith.constant 0 : index
    %c0_146 = arith.constant 0 : index
    %324 = vector.load %arg1[%c5, %c0_145, %c0_146] : memref<14x8x8xf32, #tpu.memory_space<vmem>>, vector<1x8x8xf32>
    %325 = vector.shape_cast %324 : vector<1x8x8xf32> to vector<8x8xf32>
    %cst_147 = arith.constant 0.000000e+00 : f32
    %326 = vector.broadcast %cst_147 : f32 to vector<8x8xf32>
    %327 = arith.cmpf oeq, %325, %326 : vector<8x8xf32>
    %cst_148 = arith.constant -1.000000e+09 : f32
    %328 = vector.broadcast %cst_148 : f32 to vector<8x8xf32>
    %329 = arith.select %327, %328, %323 : vector<8x8xi1>, vector<8x8xf32>
    %cst_149 = arith.constant dense<0xFF800000> : vector<8xf32>
    %330 = vector.multi_reduction <maximumf>, %329, %cst_149 [1] : vector<8x8xf32> to vector<8xf32>
    %331 = vector.shape_cast %330 : vector<8xf32> to vector<8x1xf32>
    %332 = vector.broadcast %331 : vector<8x1xf32> to vector<8x8xf32>
    %333 = arith.subf %329, %332 : vector<8x8xf32>
    %334 = math.exp %333 : vector<8x8xf32>
    %cst_150 = arith.constant dense<0.000000e+00> : vector<8xf32>
    %335 = vector.multi_reduction <add>, %334, %cst_150 [1] : vector<8x8xf32> to vector<8xf32>
    %336 = vector.shape_cast %335 : vector<8xf32> to vector<8x1xf32>
    %337 = tpu.reciprocal %336 {approx = true} : vector<8x1xf32> -> vector<8x1xf32>
    %338 = vector.broadcast %337 : vector<8x1xf32> to vector<8x8xf32>
    %339 = arith.mulf %334, %338 : vector<8x8xf32>
    %cst_151 = arith.constant dense<0.000000e+00> : vector<8x4xf32>
    %340 = tpu.matmul %339, %320, %cst_151 {dimension_numbers = #tpu.dot_dimension_numbers<[1], [0], [0], [1], [0, 0, 1, 1], [], []>} : vector<8x8xf32>, vector<8x4xf32>, vector<8x4xf32> -> vector<8x4xf32>
    %341 = tpu.concatenate %317, %340 in 0 : vector<8x4xf32>, vector<8x4xf32> -> vector<16x4xf32>
    %c0_152 = arith.constant 0 : index
    %c0_153 = arith.constant 0 : index
    %c0_154 = arith.constant 0 : index
    %342 = vector.load %arg22[%c0_152, %c0_153, %c0_154] : memref<2x4x8xf32, #tpu.memory_space<vmem>>, vector<1x4x8xf32>
    %343 = vector.shape_cast %342 : vector<1x4x8xf32> to vector<4x8xf32>
    %cst_155 = arith.constant dense<0.000000e+00> : vector<16x8xf32>
    %344 = tpu.matmul %341, %343, %cst_155 {dimension_numbers = #tpu.dot_dimension_numbers<[1], [0], [0], [1], [0, 0, 1, 1], [], []>} : vector<16x4xf32>, vector<4x8xf32>, vector<16x8xf32> -> vector<16x8xf32>
    %c0_156 = arith.constant 0 : index
    %c0_157 = arith.constant 0 : index
    %c0_158 = arith.constant 0 : index
    %345 = vector.load %arg23[%c0_156, %c0_157, %c0_158] : memref<2x1x8xf32, #tpu.memory_space<vmem>>, vector<1x1x8xf32>
    %346 = vector.shape_cast %345 : vector<1x1x8xf32> to vector<1x8xf32>
    %347 = vector.broadcast %346 : vector<1x8xf32> to vector<16x8xf32>
    %348 = arith.addf %344, %347 : vector<16x8xf32>
    %349 = arith.addf %294, %348 : vector<16x8xf32>
    %c16 = arith.constant 16 : index
    %350 = memref.load %arg10[%c16] : memref<24xf32, #tpu.memory_space<smem>>
    %351 = vector.broadcast %350 : f32 to vector<16x8xf32>
    %352 = arith.mulf %349, %351 : vector<16x8xf32>
    %353 = arith.addf %28, %352 : vector<16x8xf32>
    %354 = vector.extract_strided_slice %291 {offsets = [0, 4], sizes = [8, 4], strides = [1, 1]} : vector<16x8xf32> to vector<8x4xf32>
    %355 = vector.extract_strided_slice %292 {offsets = [0, 4], sizes = [8, 4], strides = [1, 1]} : vector<16x8xf32> to vector<8x4xf32>
    %356 = vector.extract_strided_slice %293 {offsets = [0, 4], sizes = [8, 4], strides = [1, 1]} : vector<16x8xf32> to vector<8x4xf32>
    %cst_159 = arith.constant dense<0.000000e+00> : vector<8x8xf32>
    %357 = tpu.matmul %354, %355, %cst_159 {dimension_numbers = #tpu.dot_dimension_numbers<[1], [1], [0], [0], [0, 0, 1, 0], [], []>} : vector<8x4xf32>, vector<8x4xf32>, vector<8x8xf32> -> vector<8x8xf32>
    %cst_160 = arith.constant 5.000000e-01 : f32
    %358 = vector.broadcast %cst_160 : f32 to vector<8x8xf32>
    %359 = arith.mulf %357, %358 : vector<8x8xf32>
    %c4_161 = arith.constant 4 : index
    %c0_162 = arith.constant 0 : index
    %c0_163 = arith.constant 0 : index
    %360 = vector.load %arg1[%c4_161, %c0_162, %c0_163] : memref<14x8x8xf32, #tpu.memory_space<vmem>>, vector<1x8x8xf32>
    %361 = vector.shape_cast %360 : vector<1x8x8xf32> to vector<8x8xf32>
    %cst_164 = arith.constant 0.000000e+00 : f32
    %362 = vector.broadcast %cst_164 : f32 to vector<8x8xf32>
    %363 = arith.cmpf oeq, %361, %362 : vector<8x8xf32>
    %cst_165 = arith.constant -1.000000e+09 : f32
    %364 = vector.broadcast %cst_165 : f32 to vector<8x8xf32>
    %365 = arith.select %363, %364, %359 : vector<8x8xi1>, vector<8x8xf32>
    %cst_166 = arith.constant dense<0xFF800000> : vector<8xf32>
    %366 = vector.multi_reduction <maximumf>, %365, %cst_166 [1] : vector<8x8xf32> to vector<8xf32>
    %367 = vector.shape_cast %366 : vector<8xf32> to vector<8x1xf32>
    %368 = vector.broadcast %367 : vector<8x1xf32> to vector<8x8xf32>
    %369 = arith.subf %365, %368 : vector<8x8xf32>
    %370 = math.exp %369 : vector<8x8xf32>
    %cst_167 = arith.constant dense<0.000000e+00> : vector<8xf32>
    %371 = vector.multi_reduction <add>, %370, %cst_167 [1] : vector<8x8xf32> to vector<8xf32>
    %372 = vector.shape_cast %371 : vector<8xf32> to vector<8x1xf32>
    %373 = tpu.reciprocal %372 {approx = true} : vector<8x1xf32> -> vector<8x1xf32>
    %374 = vector.broadcast %373 : vector<8x1xf32> to vector<8x8xf32>
    %375 = arith.mulf %370, %374 : vector<8x8xf32>
    %cst_168 = arith.constant dense<0.000000e+00> : vector<8x4xf32>
    %376 = tpu.matmul %375, %356, %cst_168 {dimension_numbers = #tpu.dot_dimension_numbers<[1], [0], [0], [1], [0, 0, 1, 1], [], []>} : vector<8x8xf32>, vector<8x4xf32>, vector<8x4xf32> -> vector<8x4xf32>
    %377 = vector.extract_strided_slice %291 {offsets = [8, 4], sizes = [8, 4], strides = [1, 1]} : vector<16x8xf32> to vector<8x4xf32>
    %378 = vector.extract_strided_slice %292 {offsets = [8, 4], sizes = [8, 4], strides = [1, 1]} : vector<16x8xf32> to vector<8x4xf32>
    %379 = vector.extract_strided_slice %293 {offsets = [8, 4], sizes = [8, 4], strides = [1, 1]} : vector<16x8xf32> to vector<8x4xf32>
    %cst_169 = arith.constant dense<0.000000e+00> : vector<8x8xf32>
    %380 = tpu.matmul %377, %378, %cst_169 {dimension_numbers = #tpu.dot_dimension_numbers<[1], [1], [0], [0], [0, 0, 1, 0], [], []>} : vector<8x4xf32>, vector<8x4xf32>, vector<8x8xf32> -> vector<8x8xf32>
    %cst_170 = arith.constant 5.000000e-01 : f32
    %381 = vector.broadcast %cst_170 : f32 to vector<8x8xf32>
    %382 = arith.mulf %380, %381 : vector<8x8xf32>
    %c5_171 = arith.constant 5 : index
    %c0_172 = arith.constant 0 : index
    %c0_173 = arith.constant 0 : index
    %383 = vector.load %arg1[%c5_171, %c0_172, %c0_173] : memref<14x8x8xf32, #tpu.memory_space<vmem>>, vector<1x8x8xf32>
    %384 = vector.shape_cast %383 : vector<1x8x8xf32> to vector<8x8xf32>
    %cst_174 = arith.constant 0.000000e+00 : f32
    %385 = vector.broadcast %cst_174 : f32 to vector<8x8xf32>
    %386 = arith.cmpf oeq, %384, %385 : vector<8x8xf32>
    %cst_175 = arith.constant -1.000000e+09 : f32
    %387 = vector.broadcast %cst_175 : f32 to vector<8x8xf32>
    %388 = arith.select %386, %387, %382 : vector<8x8xi1>, vector<8x8xf32>
    %cst_176 = arith.constant dense<0xFF800000> : vector<8xf32>
    %389 = vector.multi_reduction <maximumf>, %388, %cst_176 [1] : vector<8x8xf32> to vector<8xf32>
    %390 = vector.shape_cast %389 : vector<8xf32> to vector<8x1xf32>
    %391 = vector.broadcast %390 : vector<8x1xf32> to vector<8x8xf32>
    %392 = arith.subf %388, %391 : vector<8x8xf32>
    %393 = math.exp %392 : vector<8x8xf32>
    %cst_177 = arith.constant dense<0.000000e+00> : vector<8xf32>
    %394 = vector.multi_reduction <add>, %393, %cst_177 [1] : vector<8x8xf32> to vector<8xf32>
    %395 = vector.shape_cast %394 : vector<8xf32> to vector<8x1xf32>
    %396 = tpu.reciprocal %395 {approx = true} : vector<8x1xf32> -> vector<8x1xf32>
    %397 = vector.broadcast %396 : vector<8x1xf32> to vector<8x8xf32>
    %398 = arith.mulf %393, %397 : vector<8x8xf32>
    %cst_178 = arith.constant dense<0.000000e+00> : vector<8x4xf32>
    %399 = tpu.matmul %398, %379, %cst_178 {dimension_numbers = #tpu.dot_dimension_numbers<[1], [0], [0], [1], [0, 0, 1, 1], [], []>} : vector<8x8xf32>, vector<8x4xf32>, vector<8x4xf32> -> vector<8x4xf32>
    %400 = tpu.concatenate %376, %399 in 0 : vector<8x4xf32>, vector<8x4xf32> -> vector<16x4xf32>
    %c1_179 = arith.constant 1 : index
    %c0_180 = arith.constant 0 : index
    %c0_181 = arith.constant 0 : index
    %401 = vector.load %arg22[%c1_179, %c0_180, %c0_181] : memref<2x4x8xf32, #tpu.memory_space<vmem>>, vector<1x4x8xf32>
    %402 = vector.shape_cast %401 : vector<1x4x8xf32> to vector<4x8xf32>
    %cst_182 = arith.constant dense<0.000000e+00> : vector<16x8xf32>
    %403 = tpu.matmul %400, %402, %cst_182 {dimension_numbers = #tpu.dot_dimension_numbers<[1], [0], [0], [1], [0, 0, 1, 1], [], []>} : vector<16x4xf32>, vector<4x8xf32>, vector<16x8xf32> -> vector<16x8xf32>
    %c1_183 = arith.constant 1 : index
    %c0_184 = arith.constant 0 : index
    %c0_185 = arith.constant 0 : index
    %404 = vector.load %arg23[%c1_183, %c0_184, %c0_185] : memref<2x1x8xf32, #tpu.memory_space<vmem>>, vector<1x1x8xf32>
    %405 = vector.shape_cast %404 : vector<1x1x8xf32> to vector<1x8xf32>
    %406 = vector.broadcast %405 : vector<1x8xf32> to vector<16x8xf32>
    %407 = arith.addf %403, %406 : vector<16x8xf32>
    %408 = arith.addf %349, %407 : vector<16x8xf32>
    %c20 = arith.constant 20 : index
    %409 = memref.load %arg10[%c20] : memref<24xf32, #tpu.memory_space<smem>>
    %410 = vector.broadcast %409 : f32 to vector<16x8xf32>
    %411 = arith.mulf %408, %410 : vector<16x8xf32>
    %412 = arith.addf %353, %411 : vector<16x8xf32>
    %c0_186 = arith.constant 0 : index
    %c0_187 = arith.constant 0 : index
    %413 = vector.load %arg24[%c0_186, %c0_187] : memref<24x72xf32, #tpu.memory_space<vmem>>, vector<24x72xf32>
    %c0_188 = arith.constant 0 : index
    %c0_189 = arith.constant 0 : index
    %414 = vector.load %arg25[%c0_188, %c0_189] : memref<1x72xf32, #tpu.memory_space<vmem>>, vector<1x72xf32>
    %415 = vector.extract_strided_slice %25 {offsets = [0, 0], sizes = [16, 16], strides = [1, 1]} : vector<16x32xf32> to vector<16x16xf32>
    %416 = vector.extract_strided_slice %413 {offsets = [0, 0], sizes = [16, 72], strides = [1, 1]} : vector<24x72xf32> to vector<16x72xf32>
    %cst_190 = arith.constant dense<0.000000e+00> : vector<16x72xf32>
    %417 = tpu.matmul %415, %416, %cst_190 {dimension_numbers = #tpu.dot_dimension_numbers<[1], [0], [0], [1], [0, 0, 1, 1], [], []>} : vector<16x16xf32>, vector<16x72xf32>, vector<16x72xf32> -> vector<16x72xf32>
    %418 = vector.extract_strided_slice %25 {offsets = [0, 16], sizes = [16, 8], strides = [1, 1]} : vector<16x32xf32> to vector<16x8xf32>
    %419 = vector.extract_strided_slice %413 {offsets = [16, 0], sizes = [8, 72], strides = [1, 1]} : vector<24x72xf32> to vector<8x72xf32>
    %cst_191 = arith.constant dense<0.000000e+00> : vector<16x72xf32>
    %420 = tpu.matmul %418, %419, %cst_191 {dimension_numbers = #tpu.dot_dimension_numbers<[1], [0], [0], [1], [0, 0, 1, 1], [], []>} : vector<16x8xf32>, vector<8x72xf32>, vector<16x72xf32> -> vector<16x72xf32>
    %421 = arith.addf %417, %420 : vector<16x72xf32>
    %422 = vector.broadcast %414 : vector<1x72xf32> to vector<16x72xf32>
    %423 = arith.addf %421, %422 : vector<16x72xf32>
    %424 = vector.extract_strided_slice %423 {offsets = [0, 0], sizes = [16, 24], strides = [1, 1]} : vector<16x72xf32> to vector<16x24xf32>
    %425 = vector.extract_strided_slice %423 {offsets = [0, 24], sizes = [16, 24], strides = [1, 1]} : vector<16x72xf32> to vector<16x24xf32>
    %426 = vector.extract_strided_slice %423 {offsets = [0, 48], sizes = [16, 24], strides = [1, 1]} : vector<16x72xf32> to vector<16x24xf32>
    %427 = vector.extract_strided_slice %0 {offsets = [0, 0], sizes = [16, 16], strides = [1, 1]} : vector<16x32xf32> to vector<16x16xf32>
    %428 = vector.extract_strided_slice %0 {offsets = [0, 16], sizes = [16, 8], strides = [1, 1]} : vector<16x32xf32> to vector<16x8xf32>
    %429 = vector.extract_strided_slice %424 {offsets = [0, 0], sizes = [8, 12], strides = [1, 1]} : vector<16x24xf32> to vector<8x12xf32>
    %430 = vector.extract_strided_slice %425 {offsets = [0, 0], sizes = [8, 12], strides = [1, 1]} : vector<16x24xf32> to vector<8x12xf32>
    %431 = vector.extract_strided_slice %426 {offsets = [0, 0], sizes = [8, 12], strides = [1, 1]} : vector<16x24xf32> to vector<8x12xf32>
    %cst_192 = arith.constant dense<0.000000e+00> : vector<8x8xf32>
    %432 = tpu.matmul %429, %430, %cst_192 {dimension_numbers = #tpu.dot_dimension_numbers<[1], [1], [0], [0], [0, 0, 1, 0], [], []>} : vector<8x12xf32>, vector<8x12xf32>, vector<8x8xf32> -> vector<8x8xf32>
    %cst_193 = arith.constant 0.288675129 : f32
    %433 = vector.broadcast %cst_193 : f32 to vector<8x8xf32>
    %434 = arith.mulf %432, %433 : vector<8x8xf32>
    %c6 = arith.constant 6 : index
    %c0_194 = arith.constant 0 : index
    %c0_195 = arith.constant 0 : index
    %435 = vector.load %arg1[%c6, %c0_194, %c0_195] : memref<14x8x8xf32, #tpu.memory_space<vmem>>, vector<1x8x8xf32>
    %436 = vector.shape_cast %435 : vector<1x8x8xf32> to vector<8x8xf32>
    %cst_196 = arith.constant 0.000000e+00 : f32
    %437 = vector.broadcast %cst_196 : f32 to vector<8x8xf32>
    %438 = arith.cmpf oeq, %436, %437 : vector<8x8xf32>
    %cst_197 = arith.constant -1.000000e+09 : f32
    %439 = vector.broadcast %cst_197 : f32 to vector<8x8xf32>
    %440 = arith.select %438, %439, %434 : vector<8x8xi1>, vector<8x8xf32>
    %cst_198 = arith.constant dense<0xFF800000> : vector<8xf32>
    %441 = vector.multi_reduction <maximumf>, %440, %cst_198 [1] : vector<8x8xf32> to vector<8xf32>
    %442 = vector.shape_cast %441 : vector<8xf32> to vector<8x1xf32>
    %443 = vector.broadcast %442 : vector<8x1xf32> to vector<8x8xf32>
    %444 = arith.subf %440, %443 : vector<8x8xf32>
    %445 = math.exp %444 : vector<8x8xf32>
    %cst_199 = arith.constant dense<0.000000e+00> : vector<8xf32>
    %446 = vector.multi_reduction <add>, %445, %cst_199 [1] : vector<8x8xf32> to vector<8xf32>
    %447 = vector.shape_cast %446 : vector<8xf32> to vector<8x1xf32>
    %448 = tpu.reciprocal %447 {approx = true} : vector<8x1xf32> -> vector<8x1xf32>
    %449 = vector.broadcast %448 : vector<8x1xf32> to vector<8x8xf32>
    %450 = arith.mulf %445, %449 : vector<8x8xf32>
    %cst_200 = arith.constant dense<0.000000e+00> : vector<8x12xf32>
    %451 = tpu.matmul %450, %431, %cst_200 {dimension_numbers = #tpu.dot_dimension_numbers<[1], [0], [0], [1], [0, 0, 1, 1], [], []>} : vector<8x8xf32>, vector<8x12xf32>, vector<8x12xf32> -> vector<8x12xf32>
    %452 = vector.extract_strided_slice %424 {offsets = [8, 0], sizes = [8, 12], strides = [1, 1]} : vector<16x24xf32> to vector<8x12xf32>
    %453 = vector.extract_strided_slice %425 {offsets = [8, 0], sizes = [8, 12], strides = [1, 1]} : vector<16x24xf32> to vector<8x12xf32>
    %454 = vector.extract_strided_slice %426 {offsets = [8, 0], sizes = [8, 12], strides = [1, 1]} : vector<16x24xf32> to vector<8x12xf32>
    %cst_201 = arith.constant dense<0.000000e+00> : vector<8x8xf32>
    %455 = tpu.matmul %452, %453, %cst_201 {dimension_numbers = #tpu.dot_dimension_numbers<[1], [1], [0], [0], [0, 0, 1, 0], [], []>} : vector<8x12xf32>, vector<8x12xf32>, vector<8x8xf32> -> vector<8x8xf32>
    %cst_202 = arith.constant 0.288675129 : f32
    %456 = vector.broadcast %cst_202 : f32 to vector<8x8xf32>
    %457 = arith.mulf %455, %456 : vector<8x8xf32>
    %c7 = arith.constant 7 : index
    %c0_203 = arith.constant 0 : index
    %c0_204 = arith.constant 0 : index
    %458 = vector.load %arg1[%c7, %c0_203, %c0_204] : memref<14x8x8xf32, #tpu.memory_space<vmem>>, vector<1x8x8xf32>
    %459 = vector.shape_cast %458 : vector<1x8x8xf32> to vector<8x8xf32>
    %cst_205 = arith.constant 0.000000e+00 : f32
    %460 = vector.broadcast %cst_205 : f32 to vector<8x8xf32>
    %461 = arith.cmpf oeq, %459, %460 : vector<8x8xf32>
    %cst_206 = arith.constant -1.000000e+09 : f32
    %462 = vector.broadcast %cst_206 : f32 to vector<8x8xf32>
    %463 = arith.select %461, %462, %457 : vector<8x8xi1>, vector<8x8xf32>
    %cst_207 = arith.constant dense<0xFF800000> : vector<8xf32>
    %464 = vector.multi_reduction <maximumf>, %463, %cst_207 [1] : vector<8x8xf32> to vector<8xf32>
    %465 = vector.shape_cast %464 : vector<8xf32> to vector<8x1xf32>
    %466 = vector.broadcast %465 : vector<8x1xf32> to vector<8x8xf32>
    %467 = arith.subf %463, %466 : vector<8x8xf32>
    %468 = math.exp %467 : vector<8x8xf32>
    %cst_208 = arith.constant dense<0.000000e+00> : vector<8xf32>
    %469 = vector.multi_reduction <add>, %468, %cst_208 [1] : vector<8x8xf32> to vector<8xf32>
    %470 = vector.shape_cast %469 : vector<8xf32> to vector<8x1xf32>
    %471 = tpu.reciprocal %470 {approx = true} : vector<8x1xf32> -> vector<8x1xf32>
    %472 = vector.broadcast %471 : vector<8x1xf32> to vector<8x8xf32>
    %473 = arith.mulf %468, %472 : vector<8x8xf32>
    %cst_209 = arith.constant dense<0.000000e+00> : vector<8x12xf32>
    %474 = tpu.matmul %473, %454, %cst_209 {dimension_numbers = #tpu.dot_dimension_numbers<[1], [0], [0], [1], [0, 0, 1, 1], [], []>} : vector<8x8xf32>, vector<8x12xf32>, vector<8x12xf32> -> vector<8x12xf32>
    %475 = tpu.concatenate %451, %474 in 0 : vector<8x12xf32>, vector<8x12xf32> -> vector<16x12xf32>
    %c0_210 = arith.constant 0 : index
    %c0_211 = arith.constant 0 : index
    %c0_212 = arith.constant 0 : index
    %476 = vector.load %arg26[%c0_210, %c0_211, %c0_212] : memref<2x12x24xf32, #tpu.memory_space<vmem>>, vector<1x12x24xf32>
    %477 = vector.shape_cast %476 : vector<1x12x24xf32> to vector<12x24xf32>
    %cst_213 = arith.constant dense<0.000000e+00> : vector<16x24xf32>
    %478 = tpu.matmul %475, %477, %cst_213 {dimension_numbers = #tpu.dot_dimension_numbers<[1], [0], [0], [1], [0, 0, 1, 1], [], []>} : vector<16x12xf32>, vector<12x24xf32>, vector<16x24xf32> -> vector<16x24xf32>
    %c0_214 = arith.constant 0 : index
    %c0_215 = arith.constant 0 : index
    %c0_216 = arith.constant 0 : index
    %479 = vector.load %arg27[%c0_214, %c0_215, %c0_216] : memref<2x1x24xf32, #tpu.memory_space<vmem>>, vector<1x1x24xf32>
    %480 = vector.shape_cast %479 : vector<1x1x24xf32> to vector<1x24xf32>
    %481 = vector.broadcast %480 : vector<1x24xf32> to vector<16x24xf32>
    %482 = arith.addf %478, %481 : vector<16x24xf32>
    %483 = vector.extract_strided_slice %482 {offsets = [0, 0], sizes = [16, 16], strides = [1, 1]} : vector<16x24xf32> to vector<16x16xf32>
    %484 = arith.addf %427, %483 : vector<16x16xf32>
    %c1_217 = arith.constant 1 : index
    %485 = memref.load %arg10[%c1_217] : memref<24xf32, #tpu.memory_space<smem>>
    %486 = vector.broadcast %485 : f32 to vector<16x16xf32>
    %487 = arith.mulf %484, %486 : vector<16x16xf32>
    %488 = arith.addf %156, %487 : vector<16x16xf32>
    %489 = vector.extract_strided_slice %482 {offsets = [0, 16], sizes = [16, 8], strides = [1, 1]} : vector<16x24xf32> to vector<16x8xf32>
    %490 = arith.addf %428, %489 : vector<16x8xf32>
    %c9 = arith.constant 9 : index
    %491 = memref.load %arg10[%c9] : memref<24xf32, #tpu.memory_space<smem>>
    %492 = vector.broadcast %491 : f32 to vector<16x8xf32>
    %493 = arith.mulf %490, %492 : vector<16x8xf32>
    %494 = arith.addf %284, %493 : vector<16x8xf32>
    %495 = vector.extract_strided_slice %424 {offsets = [0, 12], sizes = [8, 12], strides = [1, 1]} : vector<16x24xf32> to vector<8x12xf32>
    %496 = vector.extract_strided_slice %425 {offsets = [0, 12], sizes = [8, 12], strides = [1, 1]} : vector<16x24xf32> to vector<8x12xf32>
    %497 = vector.extract_strided_slice %426 {offsets = [0, 12], sizes = [8, 12], strides = [1, 1]} : vector<16x24xf32> to vector<8x12xf32>
    %cst_218 = arith.constant dense<0.000000e+00> : vector<8x8xf32>
    %498 = tpu.matmul %495, %496, %cst_218 {dimension_numbers = #tpu.dot_dimension_numbers<[1], [1], [0], [0], [0, 0, 1, 0], [], []>} : vector<8x12xf32>, vector<8x12xf32>, vector<8x8xf32> -> vector<8x8xf32>
    %cst_219 = arith.constant 0.288675129 : f32
    %499 = vector.broadcast %cst_219 : f32 to vector<8x8xf32>
    %500 = arith.mulf %498, %499 : vector<8x8xf32>
    %c6_220 = arith.constant 6 : index
    %c0_221 = arith.constant 0 : index
    %c0_222 = arith.constant 0 : index
    %501 = vector.load %arg1[%c6_220, %c0_221, %c0_222] : memref<14x8x8xf32, #tpu.memory_space<vmem>>, vector<1x8x8xf32>
    %502 = vector.shape_cast %501 : vector<1x8x8xf32> to vector<8x8xf32>
    %cst_223 = arith.constant 0.000000e+00 : f32
    %503 = vector.broadcast %cst_223 : f32 to vector<8x8xf32>
    %504 = arith.cmpf oeq, %502, %503 : vector<8x8xf32>
    %cst_224 = arith.constant -1.000000e+09 : f32
    %505 = vector.broadcast %cst_224 : f32 to vector<8x8xf32>
    %506 = arith.select %504, %505, %500 : vector<8x8xi1>, vector<8x8xf32>
    %cst_225 = arith.constant dense<0xFF800000> : vector<8xf32>
    %507 = vector.multi_reduction <maximumf>, %506, %cst_225 [1] : vector<8x8xf32> to vector<8xf32>
    %508 = vector.shape_cast %507 : vector<8xf32> to vector<8x1xf32>
    %509 = vector.broadcast %508 : vector<8x1xf32> to vector<8x8xf32>
    %510 = arith.subf %506, %509 : vector<8x8xf32>
    %511 = math.exp %510 : vector<8x8xf32>
    %cst_226 = arith.constant dense<0.000000e+00> : vector<8xf32>
    %512 = vector.multi_reduction <add>, %511, %cst_226 [1] : vector<8x8xf32> to vector<8xf32>
    %513 = vector.shape_cast %512 : vector<8xf32> to vector<8x1xf32>
    %514 = tpu.reciprocal %513 {approx = true} : vector<8x1xf32> -> vector<8x1xf32>
    %515 = vector.broadcast %514 : vector<8x1xf32> to vector<8x8xf32>
    %516 = arith.mulf %511, %515 : vector<8x8xf32>
    %cst_227 = arith.constant dense<0.000000e+00> : vector<8x12xf32>
    %517 = tpu.matmul %516, %497, %cst_227 {dimension_numbers = #tpu.dot_dimension_numbers<[1], [0], [0], [1], [0, 0, 1, 1], [], []>} : vector<8x8xf32>, vector<8x12xf32>, vector<8x12xf32> -> vector<8x12xf32>
    %518 = vector.extract_strided_slice %424 {offsets = [8, 12], sizes = [8, 12], strides = [1, 1]} : vector<16x24xf32> to vector<8x12xf32>
    %519 = vector.extract_strided_slice %425 {offsets = [8, 12], sizes = [8, 12], strides = [1, 1]} : vector<16x24xf32> to vector<8x12xf32>
    %520 = vector.extract_strided_slice %426 {offsets = [8, 12], sizes = [8, 12], strides = [1, 1]} : vector<16x24xf32> to vector<8x12xf32>
    %cst_228 = arith.constant dense<0.000000e+00> : vector<8x8xf32>
    %521 = tpu.matmul %518, %519, %cst_228 {dimension_numbers = #tpu.dot_dimension_numbers<[1], [1], [0], [0], [0, 0, 1, 0], [], []>} : vector<8x12xf32>, vector<8x12xf32>, vector<8x8xf32> -> vector<8x8xf32>
    %cst_229 = arith.constant 0.288675129 : f32
    %522 = vector.broadcast %cst_229 : f32 to vector<8x8xf32>
    %523 = arith.mulf %521, %522 : vector<8x8xf32>
    %c7_230 = arith.constant 7 : index
    %c0_231 = arith.constant 0 : index
    %c0_232 = arith.constant 0 : index
    %524 = vector.load %arg1[%c7_230, %c0_231, %c0_232] : memref<14x8x8xf32, #tpu.memory_space<vmem>>, vector<1x8x8xf32>
    %525 = vector.shape_cast %524 : vector<1x8x8xf32> to vector<8x8xf32>
    %cst_233 = arith.constant 0.000000e+00 : f32
    %526 = vector.broadcast %cst_233 : f32 to vector<8x8xf32>
    %527 = arith.cmpf oeq, %525, %526 : vector<8x8xf32>
    %cst_234 = arith.constant -1.000000e+09 : f32
    %528 = vector.broadcast %cst_234 : f32 to vector<8x8xf32>
    %529 = arith.select %527, %528, %523 : vector<8x8xi1>, vector<8x8xf32>
    %cst_235 = arith.constant dense<0xFF800000> : vector<8xf32>
    %530 = vector.multi_reduction <maximumf>, %529, %cst_235 [1] : vector<8x8xf32> to vector<8xf32>
    %531 = vector.shape_cast %530 : vector<8xf32> to vector<8x1xf32>
    %532 = vector.broadcast %531 : vector<8x1xf32> to vector<8x8xf32>
    %533 = arith.subf %529, %532 : vector<8x8xf32>
    %534 = math.exp %533 : vector<8x8xf32>
    %cst_236 = arith.constant dense<0.000000e+00> : vector<8xf32>
    %535 = vector.multi_reduction <add>, %534, %cst_236 [1] : vector<8x8xf32> to vector<8xf32>
    %536 = vector.shape_cast %535 : vector<8xf32> to vector<8x1xf32>
    %537 = tpu.reciprocal %536 {approx = true} : vector<8x1xf32> -> vector<8x1xf32>
    %538 = vector.broadcast %537 : vector<8x1xf32> to vector<8x8xf32>
    %539 = arith.mulf %534, %538 : vector<8x8xf32>
    %cst_237 = arith.constant dense<0.000000e+00> : vector<8x12xf32>
    %540 = tpu.matmul %539, %520, %cst_237 {dimension_numbers = #tpu.dot_dimension_numbers<[1], [0], [0], [1], [0, 0, 1, 1], [], []>} : vector<8x8xf32>, vector<8x12xf32>, vector<8x12xf32> -> vector<8x12xf32>
    %541 = tpu.concatenate %517, %540 in 0 : vector<8x12xf32>, vector<8x12xf32> -> vector<16x12xf32>
    %c1_238 = arith.constant 1 : index
    %c0_239 = arith.constant 0 : index
    %c0_240 = arith.constant 0 : index
    %542 = vector.load %arg26[%c1_238, %c0_239, %c0_240] : memref<2x12x24xf32, #tpu.memory_space<vmem>>, vector<1x12x24xf32>
    %543 = vector.shape_cast %542 : vector<1x12x24xf32> to vector<12x24xf32>
    %cst_241 = arith.constant dense<0.000000e+00> : vector<16x24xf32>
    %544 = tpu.matmul %541, %543, %cst_241 {dimension_numbers = #tpu.dot_dimension_numbers<[1], [0], [0], [1], [0, 0, 1, 1], [], []>} : vector<16x12xf32>, vector<12x24xf32>, vector<16x24xf32> -> vector<16x24xf32>
    %c1_242 = arith.constant 1 : index
    %c0_243 = arith.constant 0 : index
    %c0_244 = arith.constant 0 : index
    %545 = vector.load %arg27[%c1_242, %c0_243, %c0_244] : memref<2x1x24xf32, #tpu.memory_space<vmem>>, vector<1x1x24xf32>
    %546 = vector.shape_cast %545 : vector<1x1x24xf32> to vector<1x24xf32>
    %547 = vector.broadcast %546 : vector<1x24xf32> to vector<16x24xf32>
    %548 = arith.addf %544, %547 : vector<16x24xf32>
    %549 = vector.extract_strided_slice %548 {offsets = [0, 0], sizes = [16, 16], strides = [1, 1]} : vector<16x24xf32> to vector<16x16xf32>
    %550 = arith.addf %484, %549 : vector<16x16xf32>
    %c5_245 = arith.constant 5 : index
    %551 = memref.load %arg10[%c5_245] : memref<24xf32, #tpu.memory_space<smem>>
    %552 = vector.broadcast %551 : f32 to vector<16x16xf32>
    %553 = arith.mulf %550, %552 : vector<16x16xf32>
    %554 = arith.addf %488, %553 : vector<16x16xf32>
    %555 = vector.extract_strided_slice %548 {offsets = [0, 16], sizes = [16, 8], strides = [1, 1]} : vector<16x24xf32> to vector<16x8xf32>
    %556 = arith.addf %490, %555 : vector<16x8xf32>
    %c13 = arith.constant 13 : index
    %557 = memref.load %arg10[%c13] : memref<24xf32, #tpu.memory_space<smem>>
    %558 = vector.broadcast %557 : f32 to vector<16x8xf32>
    %559 = arith.mulf %556, %558 : vector<16x8xf32>
    %560 = arith.addf %494, %559 : vector<16x8xf32>
    %c0_246 = arith.constant 0 : index
    %c0_247 = arith.constant 0 : index
    %561 = vector.load %arg28[%c0_246, %c0_247] : memref<24x72xf32, #tpu.memory_space<vmem>>, vector<24x72xf32>
    %c0_248 = arith.constant 0 : index
    %c0_249 = arith.constant 0 : index
    %562 = vector.load %arg29[%c0_248, %c0_249] : memref<1x72xf32, #tpu.memory_space<vmem>>, vector<1x72xf32>
    %563 = vector.extract_strided_slice %25 {offsets = [0, 0], sizes = [16, 16], strides = [1, 1]} : vector<16x32xf32> to vector<16x16xf32>
    %564 = vector.extract_strided_slice %561 {offsets = [0, 0], sizes = [16, 72], strides = [1, 1]} : vector<24x72xf32> to vector<16x72xf32>
    %cst_250 = arith.constant dense<0.000000e+00> : vector<16x72xf32>
    %565 = tpu.matmul %563, %564, %cst_250 {dimension_numbers = #tpu.dot_dimension_numbers<[1], [0], [0], [1], [0, 0, 1, 1], [], []>} : vector<16x16xf32>, vector<16x72xf32>, vector<16x72xf32> -> vector<16x72xf32>
    %566 = vector.extract_strided_slice %25 {offsets = [0, 24], sizes = [16, 8], strides = [1, 1]} : vector<16x32xf32> to vector<16x8xf32>
    %567 = vector.extract_strided_slice %561 {offsets = [16, 0], sizes = [8, 72], strides = [1, 1]} : vector<24x72xf32> to vector<8x72xf32>
    %cst_251 = arith.constant dense<0.000000e+00> : vector<16x72xf32>
    %568 = tpu.matmul %566, %567, %cst_251 {dimension_numbers = #tpu.dot_dimension_numbers<[1], [0], [0], [1], [0, 0, 1, 1], [], []>} : vector<16x8xf32>, vector<8x72xf32>, vector<16x72xf32> -> vector<16x72xf32>
    %569 = arith.addf %565, %568 : vector<16x72xf32>
    %570 = vector.broadcast %562 : vector<1x72xf32> to vector<16x72xf32>
    %571 = arith.addf %569, %570 : vector<16x72xf32>
    %572 = vector.extract_strided_slice %571 {offsets = [0, 0], sizes = [16, 24], strides = [1, 1]} : vector<16x72xf32> to vector<16x24xf32>
    %573 = vector.extract_strided_slice %571 {offsets = [0, 24], sizes = [16, 24], strides = [1, 1]} : vector<16x72xf32> to vector<16x24xf32>
    %574 = vector.extract_strided_slice %571 {offsets = [0, 48], sizes = [16, 24], strides = [1, 1]} : vector<16x72xf32> to vector<16x24xf32>
    %575 = vector.extract_strided_slice %0 {offsets = [0, 0], sizes = [16, 16], strides = [1, 1]} : vector<16x32xf32> to vector<16x16xf32>
    %576 = vector.extract_strided_slice %0 {offsets = [0, 24], sizes = [16, 8], strides = [1, 1]} : vector<16x32xf32> to vector<16x8xf32>
    %577 = vector.extract_strided_slice %572 {offsets = [0, 0], sizes = [8, 12], strides = [1, 1]} : vector<16x24xf32> to vector<8x12xf32>
    %578 = vector.extract_strided_slice %573 {offsets = [0, 0], sizes = [8, 12], strides = [1, 1]} : vector<16x24xf32> to vector<8x12xf32>
    %579 = vector.extract_strided_slice %574 {offsets = [0, 0], sizes = [8, 12], strides = [1, 1]} : vector<16x24xf32> to vector<8x12xf32>
    %cst_252 = arith.constant dense<0.000000e+00> : vector<8x8xf32>
    %580 = tpu.matmul %577, %578, %cst_252 {dimension_numbers = #tpu.dot_dimension_numbers<[1], [1], [0], [0], [0, 0, 1, 0], [], []>} : vector<8x12xf32>, vector<8x12xf32>, vector<8x8xf32> -> vector<8x8xf32>
    %cst_253 = arith.constant 0.288675129 : f32
    %581 = vector.broadcast %cst_253 : f32 to vector<8x8xf32>
    %582 = arith.mulf %580, %581 : vector<8x8xf32>
    %c8_254 = arith.constant 8 : index
    %c0_255 = arith.constant 0 : index
    %c0_256 = arith.constant 0 : index
    %583 = vector.load %arg1[%c8_254, %c0_255, %c0_256] : memref<14x8x8xf32, #tpu.memory_space<vmem>>, vector<1x8x8xf32>
    %584 = vector.shape_cast %583 : vector<1x8x8xf32> to vector<8x8xf32>
    %cst_257 = arith.constant 0.000000e+00 : f32
    %585 = vector.broadcast %cst_257 : f32 to vector<8x8xf32>
    %586 = arith.cmpf oeq, %584, %585 : vector<8x8xf32>
    %cst_258 = arith.constant -1.000000e+09 : f32
    %587 = vector.broadcast %cst_258 : f32 to vector<8x8xf32>
    %588 = arith.select %586, %587, %582 : vector<8x8xi1>, vector<8x8xf32>
    %cst_259 = arith.constant dense<0xFF800000> : vector<8xf32>
    %589 = vector.multi_reduction <maximumf>, %588, %cst_259 [1] : vector<8x8xf32> to vector<8xf32>
    %590 = vector.shape_cast %589 : vector<8xf32> to vector<8x1xf32>
    %591 = vector.broadcast %590 : vector<8x1xf32> to vector<8x8xf32>
    %592 = arith.subf %588, %591 : vector<8x8xf32>
    %593 = math.exp %592 : vector<8x8xf32>
    %cst_260 = arith.constant dense<0.000000e+00> : vector<8xf32>
    %594 = vector.multi_reduction <add>, %593, %cst_260 [1] : vector<8x8xf32> to vector<8xf32>
    %595 = vector.shape_cast %594 : vector<8xf32> to vector<8x1xf32>
    %596 = tpu.reciprocal %595 {approx = true} : vector<8x1xf32> -> vector<8x1xf32>
    %597 = vector.broadcast %596 : vector<8x1xf32> to vector<8x8xf32>
    %598 = arith.mulf %593, %597 : vector<8x8xf32>
    %cst_261 = arith.constant dense<0.000000e+00> : vector<8x12xf32>
    %599 = tpu.matmul %598, %579, %cst_261 {dimension_numbers = #tpu.dot_dimension_numbers<[1], [0], [0], [1], [0, 0, 1, 1], [], []>} : vector<8x8xf32>, vector<8x12xf32>, vector<8x12xf32> -> vector<8x12xf32>
    %600 = vector.extract_strided_slice %572 {offsets = [8, 0], sizes = [8, 12], strides = [1, 1]} : vector<16x24xf32> to vector<8x12xf32>
    %601 = vector.extract_strided_slice %573 {offsets = [8, 0], sizes = [8, 12], strides = [1, 1]} : vector<16x24xf32> to vector<8x12xf32>
    %602 = vector.extract_strided_slice %574 {offsets = [8, 0], sizes = [8, 12], strides = [1, 1]} : vector<16x24xf32> to vector<8x12xf32>
    %cst_262 = arith.constant dense<0.000000e+00> : vector<8x8xf32>
    %603 = tpu.matmul %600, %601, %cst_262 {dimension_numbers = #tpu.dot_dimension_numbers<[1], [1], [0], [0], [0, 0, 1, 0], [], []>} : vector<8x12xf32>, vector<8x12xf32>, vector<8x8xf32> -> vector<8x8xf32>
    %cst_263 = arith.constant 0.288675129 : f32
    %604 = vector.broadcast %cst_263 : f32 to vector<8x8xf32>
    %605 = arith.mulf %603, %604 : vector<8x8xf32>
    %c9_264 = arith.constant 9 : index
    %c0_265 = arith.constant 0 : index
    %c0_266 = arith.constant 0 : index
    %606 = vector.load %arg1[%c9_264, %c0_265, %c0_266] : memref<14x8x8xf32, #tpu.memory_space<vmem>>, vector<1x8x8xf32>
    %607 = vector.shape_cast %606 : vector<1x8x8xf32> to vector<8x8xf32>
    %cst_267 = arith.constant 0.000000e+00 : f32
    %608 = vector.broadcast %cst_267 : f32 to vector<8x8xf32>
    %609 = arith.cmpf oeq, %607, %608 : vector<8x8xf32>
    %cst_268 = arith.constant -1.000000e+09 : f32
    %610 = vector.broadcast %cst_268 : f32 to vector<8x8xf32>
    %611 = arith.select %609, %610, %605 : vector<8x8xi1>, vector<8x8xf32>
    %cst_269 = arith.constant dense<0xFF800000> : vector<8xf32>
    %612 = vector.multi_reduction <maximumf>, %611, %cst_269 [1] : vector<8x8xf32> to vector<8xf32>
    %613 = vector.shape_cast %612 : vector<8xf32> to vector<8x1xf32>
    %614 = vector.broadcast %613 : vector<8x1xf32> to vector<8x8xf32>
    %615 = arith.subf %611, %614 : vector<8x8xf32>
    %616 = math.exp %615 : vector<8x8xf32>
    %cst_270 = arith.constant dense<0.000000e+00> : vector<8xf32>
    %617 = vector.multi_reduction <add>, %616, %cst_270 [1] : vector<8x8xf32> to vector<8xf32>
    %618 = vector.shape_cast %617 : vector<8xf32> to vector<8x1xf32>
    %619 = tpu.reciprocal %618 {approx = true} : vector<8x1xf32> -> vector<8x1xf32>
    %620 = vector.broadcast %619 : vector<8x1xf32> to vector<8x8xf32>
    %621 = arith.mulf %616, %620 : vector<8x8xf32>
    %cst_271 = arith.constant dense<0.000000e+00> : vector<8x12xf32>
    %622 = tpu.matmul %621, %602, %cst_271 {dimension_numbers = #tpu.dot_dimension_numbers<[1], [0], [0], [1], [0, 0, 1, 1], [], []>} : vector<8x8xf32>, vector<8x12xf32>, vector<8x12xf32> -> vector<8x12xf32>
    %623 = tpu.concatenate %599, %622 in 0 : vector<8x12xf32>, vector<8x12xf32> -> vector<16x12xf32>
    %c0_272 = arith.constant 0 : index
    %c0_273 = arith.constant 0 : index
    %c0_274 = arith.constant 0 : index
    %624 = vector.load %arg30[%c0_272, %c0_273, %c0_274] : memref<2x12x24xf32, #tpu.memory_space<vmem>>, vector<1x12x24xf32>
    %625 = vector.shape_cast %624 : vector<1x12x24xf32> to vector<12x24xf32>
    %cst_275 = arith.constant dense<0.000000e+00> : vector<16x24xf32>
    %626 = tpu.matmul %623, %625, %cst_275 {dimension_numbers = #tpu.dot_dimension_numbers<[1], [0], [0], [1], [0, 0, 1, 1], [], []>} : vector<16x12xf32>, vector<12x24xf32>, vector<16x24xf32> -> vector<16x24xf32>
    %c0_276 = arith.constant 0 : index
    %c0_277 = arith.constant 0 : index
    %c0_278 = arith.constant 0 : index
    %627 = vector.load %arg31[%c0_276, %c0_277, %c0_278] : memref<2x1x24xf32, #tpu.memory_space<vmem>>, vector<1x1x24xf32>
    %628 = vector.shape_cast %627 : vector<1x1x24xf32> to vector<1x24xf32>
    %629 = vector.broadcast %628 : vector<1x24xf32> to vector<16x24xf32>
    %630 = arith.addf %626, %629 : vector<16x24xf32>
    %631 = vector.extract_strided_slice %630 {offsets = [0, 0], sizes = [16, 16], strides = [1, 1]} : vector<16x24xf32> to vector<16x16xf32>
    %632 = arith.addf %575, %631 : vector<16x16xf32>
    %c2_279 = arith.constant 2 : index
    %633 = memref.load %arg10[%c2_279] : memref<24xf32, #tpu.memory_space<smem>>
    %634 = vector.broadcast %633 : f32 to vector<16x16xf32>
    %635 = arith.mulf %632, %634 : vector<16x16xf32>
    %636 = arith.addf %554, %635 : vector<16x16xf32>
    %637 = vector.extract_strided_slice %630 {offsets = [0, 16], sizes = [16, 8], strides = [1, 1]} : vector<16x24xf32> to vector<16x8xf32>
    %638 = arith.addf %576, %637 : vector<16x8xf32>
    %c17 = arith.constant 17 : index
    %639 = memref.load %arg10[%c17] : memref<24xf32, #tpu.memory_space<smem>>
    %640 = vector.broadcast %639 : f32 to vector<16x8xf32>
    %641 = arith.mulf %638, %640 : vector<16x8xf32>
    %642 = arith.addf %412, %641 : vector<16x8xf32>
    %643 = vector.extract_strided_slice %572 {offsets = [0, 12], sizes = [8, 12], strides = [1, 1]} : vector<16x24xf32> to vector<8x12xf32>
    %644 = vector.extract_strided_slice %573 {offsets = [0, 12], sizes = [8, 12], strides = [1, 1]} : vector<16x24xf32> to vector<8x12xf32>
    %645 = vector.extract_strided_slice %574 {offsets = [0, 12], sizes = [8, 12], strides = [1, 1]} : vector<16x24xf32> to vector<8x12xf32>
    %cst_280 = arith.constant dense<0.000000e+00> : vector<8x8xf32>
    %646 = tpu.matmul %643, %644, %cst_280 {dimension_numbers = #tpu.dot_dimension_numbers<[1], [1], [0], [0], [0, 0, 1, 0], [], []>} : vector<8x12xf32>, vector<8x12xf32>, vector<8x8xf32> -> vector<8x8xf32>
    %cst_281 = arith.constant 0.288675129 : f32
    %647 = vector.broadcast %cst_281 : f32 to vector<8x8xf32>
    %648 = arith.mulf %646, %647 : vector<8x8xf32>
    %c8_282 = arith.constant 8 : index
    %c0_283 = arith.constant 0 : index
    %c0_284 = arith.constant 0 : index
    %649 = vector.load %arg1[%c8_282, %c0_283, %c0_284] : memref<14x8x8xf32, #tpu.memory_space<vmem>>, vector<1x8x8xf32>
    %650 = vector.shape_cast %649 : vector<1x8x8xf32> to vector<8x8xf32>
    %cst_285 = arith.constant 0.000000e+00 : f32
    %651 = vector.broadcast %cst_285 : f32 to vector<8x8xf32>
    %652 = arith.cmpf oeq, %650, %651 : vector<8x8xf32>
    %cst_286 = arith.constant -1.000000e+09 : f32
    %653 = vector.broadcast %cst_286 : f32 to vector<8x8xf32>
    %654 = arith.select %652, %653, %648 : vector<8x8xi1>, vector<8x8xf32>
    %cst_287 = arith.constant dense<0xFF800000> : vector<8xf32>
    %655 = vector.multi_reduction <maximumf>, %654, %cst_287 [1] : vector<8x8xf32> to vector<8xf32>
    %656 = vector.shape_cast %655 : vector<8xf32> to vector<8x1xf32>
    %657 = vector.broadcast %656 : vector<8x1xf32> to vector<8x8xf32>
    %658 = arith.subf %654, %657 : vector<8x8xf32>
    %659 = math.exp %658 : vector<8x8xf32>
    %cst_288 = arith.constant dense<0.000000e+00> : vector<8xf32>
    %660 = vector.multi_reduction <add>, %659, %cst_288 [1] : vector<8x8xf32> to vector<8xf32>
    %661 = vector.shape_cast %660 : vector<8xf32> to vector<8x1xf32>
    %662 = tpu.reciprocal %661 {approx = true} : vector<8x1xf32> -> vector<8x1xf32>
    %663 = vector.broadcast %662 : vector<8x1xf32> to vector<8x8xf32>
    %664 = arith.mulf %659, %663 : vector<8x8xf32>
    %cst_289 = arith.constant dense<0.000000e+00> : vector<8x12xf32>
    %665 = tpu.matmul %664, %645, %cst_289 {dimension_numbers = #tpu.dot_dimension_numbers<[1], [0], [0], [1], [0, 0, 1, 1], [], []>} : vector<8x8xf32>, vector<8x12xf32>, vector<8x12xf32> -> vector<8x12xf32>
    %666 = vector.extract_strided_slice %572 {offsets = [8, 12], sizes = [8, 12], strides = [1, 1]} : vector<16x24xf32> to vector<8x12xf32>
    %667 = vector.extract_strided_slice %573 {offsets = [8, 12], sizes = [8, 12], strides = [1, 1]} : vector<16x24xf32> to vector<8x12xf32>
    %668 = vector.extract_strided_slice %574 {offsets = [8, 12], sizes = [8, 12], strides = [1, 1]} : vector<16x24xf32> to vector<8x12xf32>
    %cst_290 = arith.constant dense<0.000000e+00> : vector<8x8xf32>
    %669 = tpu.matmul %666, %667, %cst_290 {dimension_numbers = #tpu.dot_dimension_numbers<[1], [1], [0], [0], [0, 0, 1, 0], [], []>} : vector<8x12xf32>, vector<8x12xf32>, vector<8x8xf32> -> vector<8x8xf32>
    %cst_291 = arith.constant 0.288675129 : f32
    %670 = vector.broadcast %cst_291 : f32 to vector<8x8xf32>
    %671 = arith.mulf %669, %670 : vector<8x8xf32>
    %c9_292 = arith.constant 9 : index
    %c0_293 = arith.constant 0 : index
    %c0_294 = arith.constant 0 : index
    %672 = vector.load %arg1[%c9_292, %c0_293, %c0_294] : memref<14x8x8xf32, #tpu.memory_space<vmem>>, vector<1x8x8xf32>
    %673 = vector.shape_cast %672 : vector<1x8x8xf32> to vector<8x8xf32>
    %cst_295 = arith.constant 0.000000e+00 : f32
    %674 = vector.broadcast %cst_295 : f32 to vector<8x8xf32>
    %675 = arith.cmpf oeq, %673, %674 : vector<8x8xf32>
    %cst_296 = arith.constant -1.000000e+09 : f32
    %676 = vector.broadcast %cst_296 : f32 to vector<8x8xf32>
    %677 = arith.select %675, %676, %671 : vector<8x8xi1>, vector<8x8xf32>
    %cst_297 = arith.constant dense<0xFF800000> : vector<8xf32>
    %678 = vector.multi_reduction <maximumf>, %677, %cst_297 [1] : vector<8x8xf32> to vector<8xf32>
    %679 = vector.shape_cast %678 : vector<8xf32> to vector<8x1xf32>
    %680 = vector.broadcast %679 : vector<8x1xf32> to vector<8x8xf32>
    %681 = arith.subf %677, %680 : vector<8x8xf32>
    %682 = math.exp %681 : vector<8x8xf32>
    %cst_298 = arith.constant dense<0.000000e+00> : vector<8xf32>
    %683 = vector.multi_reduction <add>, %682, %cst_298 [1] : vector<8x8xf32> to vector<8xf32>
    %684 = vector.shape_cast %683 : vector<8xf32> to vector<8x1xf32>
    %685 = tpu.reciprocal %684 {approx = true} : vector<8x1xf32> -> vector<8x1xf32>
    %686 = vector.broadcast %685 : vector<8x1xf32> to vector<8x8xf32>
    %687 = arith.mulf %682, %686 : vector<8x8xf32>
    %cst_299 = arith.constant dense<0.000000e+00> : vector<8x12xf32>
    %688 = tpu.matmul %687, %668, %cst_299 {dimension_numbers = #tpu.dot_dimension_numbers<[1], [0], [0], [1], [0, 0, 1, 1], [], []>} : vector<8x8xf32>, vector<8x12xf32>, vector<8x12xf32> -> vector<8x12xf32>
    %689 = tpu.concatenate %665, %688 in 0 : vector<8x12xf32>, vector<8x12xf32> -> vector<16x12xf32>
    %c1_300 = arith.constant 1 : index
    %c0_301 = arith.constant 0 : index
    %c0_302 = arith.constant 0 : index
    %690 = vector.load %arg30[%c1_300, %c0_301, %c0_302] : memref<2x12x24xf32, #tpu.memory_space<vmem>>, vector<1x12x24xf32>
    %691 = vector.shape_cast %690 : vector<1x12x24xf32> to vector<12x24xf32>
    %cst_303 = arith.constant dense<0.000000e+00> : vector<16x24xf32>
    %692 = tpu.matmul %689, %691, %cst_303 {dimension_numbers = #tpu.dot_dimension_numbers<[1], [0], [0], [1], [0, 0, 1, 1], [], []>} : vector<16x12xf32>, vector<12x24xf32>, vector<16x24xf32> -> vector<16x24xf32>
    %c1_304 = arith.constant 1 : index
    %c0_305 = arith.constant 0 : index
    %c0_306 = arith.constant 0 : index
    %693 = vector.load %arg31[%c1_304, %c0_305, %c0_306] : memref<2x1x24xf32, #tpu.memory_space<vmem>>, vector<1x1x24xf32>
    %694 = vector.shape_cast %693 : vector<1x1x24xf32> to vector<1x24xf32>
    %695 = vector.broadcast %694 : vector<1x24xf32> to vector<16x24xf32>
    %696 = arith.addf %692, %695 : vector<16x24xf32>
    %697 = vector.extract_strided_slice %696 {offsets = [0, 0], sizes = [16, 16], strides = [1, 1]} : vector<16x24xf32> to vector<16x16xf32>
    %698 = arith.addf %632, %697 : vector<16x16xf32>
    %c6_307 = arith.constant 6 : index
    %699 = memref.load %arg10[%c6_307] : memref<24xf32, #tpu.memory_space<smem>>
    %700 = vector.broadcast %699 : f32 to vector<16x16xf32>
    %701 = arith.mulf %698, %700 : vector<16x16xf32>
    %702 = arith.addf %636, %701 : vector<16x16xf32>
    %703 = vector.extract_strided_slice %696 {offsets = [0, 16], sizes = [16, 8], strides = [1, 1]} : vector<16x24xf32> to vector<16x8xf32>
    %704 = arith.addf %638, %703 : vector<16x8xf32>
    %c21 = arith.constant 21 : index
    %705 = memref.load %arg10[%c21] : memref<24xf32, #tpu.memory_space<smem>>
    %706 = vector.broadcast %705 : f32 to vector<16x8xf32>
    %707 = arith.mulf %704, %706 : vector<16x8xf32>
    %708 = arith.addf %642, %707 : vector<16x8xf32>
    %c0_308 = arith.constant 0 : index
    %c0_309 = arith.constant 0 : index
    %709 = vector.load %arg32[%c0_308, %c0_309] : memref<16x48xf32, #tpu.memory_space<vmem>>, vector<16x48xf32>
    %c0_310 = arith.constant 0 : index
    %c0_311 = arith.constant 0 : index
    %710 = vector.load %arg33[%c0_310, %c0_311] : memref<1x48xf32, #tpu.memory_space<vmem>>, vector<1x48xf32>
    %711 = vector.extract_strided_slice %25 {offsets = [0, 16], sizes = [16, 8], strides = [1, 1]} : vector<16x32xf32> to vector<16x8xf32>
    %712 = vector.extract_strided_slice %709 {offsets = [0, 0], sizes = [8, 48], strides = [1, 1]} : vector<16x48xf32> to vector<8x48xf32>
    %cst_312 = arith.constant dense<0.000000e+00> : vector<16x48xf32>
    %713 = tpu.matmul %711, %712, %cst_312 {dimension_numbers = #tpu.dot_dimension_numbers<[1], [0], [0], [1], [0, 0, 1, 1], [], []>} : vector<16x8xf32>, vector<8x48xf32>, vector<16x48xf32> -> vector<16x48xf32>
    %714 = vector.extract_strided_slice %25 {offsets = [0, 24], sizes = [16, 8], strides = [1, 1]} : vector<16x32xf32> to vector<16x8xf32>
    %715 = vector.extract_strided_slice %709 {offsets = [8, 0], sizes = [8, 48], strides = [1, 1]} : vector<16x48xf32> to vector<8x48xf32>
    %cst_313 = arith.constant dense<0.000000e+00> : vector<16x48xf32>
    %716 = tpu.matmul %714, %715, %cst_313 {dimension_numbers = #tpu.dot_dimension_numbers<[1], [0], [0], [1], [0, 0, 1, 1], [], []>} : vector<16x8xf32>, vector<8x48xf32>, vector<16x48xf32> -> vector<16x48xf32>
    %717 = arith.addf %713, %716 : vector<16x48xf32>
    %718 = vector.broadcast %710 : vector<1x48xf32> to vector<16x48xf32>
    %719 = arith.addf %717, %718 : vector<16x48xf32>
    %720 = vector.extract_strided_slice %719 {offsets = [0, 0], sizes = [16, 16], strides = [1, 1]} : vector<16x48xf32> to vector<16x16xf32>
    %721 = vector.extract_strided_slice %719 {offsets = [0, 16], sizes = [16, 16], strides = [1, 1]} : vector<16x48xf32> to vector<16x16xf32>
    %722 = vector.extract_strided_slice %719 {offsets = [0, 32], sizes = [16, 16], strides = [1, 1]} : vector<16x48xf32> to vector<16x16xf32>
    %723 = vector.extract_strided_slice %0 {offsets = [0, 16], sizes = [16, 8], strides = [1, 1]} : vector<16x32xf32> to vector<16x8xf32>
    %724 = vector.extract_strided_slice %0 {offsets = [0, 24], sizes = [16, 8], strides = [1, 1]} : vector<16x32xf32> to vector<16x8xf32>
    %725 = vector.extract_strided_slice %720 {offsets = [0, 0], sizes = [8, 8], strides = [1, 1]} : vector<16x16xf32> to vector<8x8xf32>
    %726 = vector.extract_strided_slice %721 {offsets = [0, 0], sizes = [8, 8], strides = [1, 1]} : vector<16x16xf32> to vector<8x8xf32>
    %727 = vector.extract_strided_slice %722 {offsets = [0, 0], sizes = [8, 8], strides = [1, 1]} : vector<16x16xf32> to vector<8x8xf32>
    %cst_314 = arith.constant dense<0.000000e+00> : vector<8x8xf32>
    %728 = tpu.matmul %725, %726, %cst_314 {dimension_numbers = #tpu.dot_dimension_numbers<[1], [1], [0], [0], [0, 0, 1, 0], [], []>} : vector<8x8xf32>, vector<8x8xf32>, vector<8x8xf32> -> vector<8x8xf32>
    %cst_315 = arith.constant 0.353553385 : f32
    %729 = vector.broadcast %cst_315 : f32 to vector<8x8xf32>
    %730 = arith.mulf %728, %729 : vector<8x8xf32>
    %c10 = arith.constant 10 : index
    %c0_316 = arith.constant 0 : index
    %c0_317 = arith.constant 0 : index
    %731 = vector.load %arg1[%c10, %c0_316, %c0_317] : memref<14x8x8xf32, #tpu.memory_space<vmem>>, vector<1x8x8xf32>
    %732 = vector.shape_cast %731 : vector<1x8x8xf32> to vector<8x8xf32>
    %cst_318 = arith.constant 0.000000e+00 : f32
    %733 = vector.broadcast %cst_318 : f32 to vector<8x8xf32>
    %734 = arith.cmpf oeq, %732, %733 : vector<8x8xf32>
    %cst_319 = arith.constant -1.000000e+09 : f32
    %735 = vector.broadcast %cst_319 : f32 to vector<8x8xf32>
    %736 = arith.select %734, %735, %730 : vector<8x8xi1>, vector<8x8xf32>
    %cst_320 = arith.constant dense<0xFF800000> : vector<8xf32>
    %737 = vector.multi_reduction <maximumf>, %736, %cst_320 [1] : vector<8x8xf32> to vector<8xf32>
    %738 = vector.shape_cast %737 : vector<8xf32> to vector<8x1xf32>
    %739 = vector.broadcast %738 : vector<8x1xf32> to vector<8x8xf32>
    %740 = arith.subf %736, %739 : vector<8x8xf32>
    %741 = math.exp %740 : vector<8x8xf32>
    %cst_321 = arith.constant dense<0.000000e+00> : vector<8xf32>
    %742 = vector.multi_reduction <add>, %741, %cst_321 [1] : vector<8x8xf32> to vector<8xf32>
    %743 = vector.shape_cast %742 : vector<8xf32> to vector<8x1xf32>
    %744 = tpu.reciprocal %743 {approx = true} : vector<8x1xf32> -> vector<8x1xf32>
    %745 = vector.broadcast %744 : vector<8x1xf32> to vector<8x8xf32>
    %746 = arith.mulf %741, %745 : vector<8x8xf32>
    %cst_322 = arith.constant dense<0.000000e+00> : vector<8x8xf32>
    %747 = tpu.matmul %746, %727, %cst_322 {dimension_numbers = #tpu.dot_dimension_numbers<[1], [0], [0], [1], [0, 0, 1, 1], [], []>} : vector<8x8xf32>, vector<8x8xf32>, vector<8x8xf32> -> vector<8x8xf32>
    %748 = vector.extract_strided_slice %720 {offsets = [8, 0], sizes = [8, 8], strides = [1, 1]} : vector<16x16xf32> to vector<8x8xf32>
    %749 = vector.extract_strided_slice %721 {offsets = [8, 0], sizes = [8, 8], strides = [1, 1]} : vector<16x16xf32> to vector<8x8xf32>
    %750 = vector.extract_strided_slice %722 {offsets = [8, 0], sizes = [8, 8], strides = [1, 1]} : vector<16x16xf32> to vector<8x8xf32>
    %cst_323 = arith.constant dense<0.000000e+00> : vector<8x8xf32>
    %751 = tpu.matmul %748, %749, %cst_323 {dimension_numbers = #tpu.dot_dimension_numbers<[1], [1], [0], [0], [0, 0, 1, 0], [], []>} : vector<8x8xf32>, vector<8x8xf32>, vector<8x8xf32> -> vector<8x8xf32>
    %cst_324 = arith.constant 0.353553385 : f32
    %752 = vector.broadcast %cst_324 : f32 to vector<8x8xf32>
    %753 = arith.mulf %751, %752 : vector<8x8xf32>
    %c11 = arith.constant 11 : index
    %c0_325 = arith.constant 0 : index
    %c0_326 = arith.constant 0 : index
    %754 = vector.load %arg1[%c11, %c0_325, %c0_326] : memref<14x8x8xf32, #tpu.memory_space<vmem>>, vector<1x8x8xf32>
    %755 = vector.shape_cast %754 : vector<1x8x8xf32> to vector<8x8xf32>
    %cst_327 = arith.constant 0.000000e+00 : f32
    %756 = vector.broadcast %cst_327 : f32 to vector<8x8xf32>
    %757 = arith.cmpf oeq, %755, %756 : vector<8x8xf32>
    %cst_328 = arith.constant -1.000000e+09 : f32
    %758 = vector.broadcast %cst_328 : f32 to vector<8x8xf32>
    %759 = arith.select %757, %758, %753 : vector<8x8xi1>, vector<8x8xf32>
    %cst_329 = arith.constant dense<0xFF800000> : vector<8xf32>
    %760 = vector.multi_reduction <maximumf>, %759, %cst_329 [1] : vector<8x8xf32> to vector<8xf32>
    %761 = vector.shape_cast %760 : vector<8xf32> to vector<8x1xf32>
    %762 = vector.broadcast %761 : vector<8x1xf32> to vector<8x8xf32>
    %763 = arith.subf %759, %762 : vector<8x8xf32>
    %764 = math.exp %763 : vector<8x8xf32>
    %cst_330 = arith.constant dense<0.000000e+00> : vector<8xf32>
    %765 = vector.multi_reduction <add>, %764, %cst_330 [1] : vector<8x8xf32> to vector<8xf32>
    %766 = vector.shape_cast %765 : vector<8xf32> to vector<8x1xf32>
    %767 = tpu.reciprocal %766 {approx = true} : vector<8x1xf32> -> vector<8x1xf32>
    %768 = vector.broadcast %767 : vector<8x1xf32> to vector<8x8xf32>
    %769 = arith.mulf %764, %768 : vector<8x8xf32>
    %cst_331 = arith.constant dense<0.000000e+00> : vector<8x8xf32>
    %770 = tpu.matmul %769, %750, %cst_331 {dimension_numbers = #tpu.dot_dimension_numbers<[1], [0], [0], [1], [0, 0, 1, 1], [], []>} : vector<8x8xf32>, vector<8x8xf32>, vector<8x8xf32> -> vector<8x8xf32>
    %771 = tpu.concatenate %747, %770 in 0 : vector<8x8xf32>, vector<8x8xf32> -> vector<16x8xf32>
    %c0_332 = arith.constant 0 : index
    %c0_333 = arith.constant 0 : index
    %c0_334 = arith.constant 0 : index
    %772 = vector.load %arg34[%c0_332, %c0_333, %c0_334] : memref<2x8x16xf32, #tpu.memory_space<vmem>>, vector<1x8x16xf32>
    %773 = vector.shape_cast %772 : vector<1x8x16xf32> to vector<8x16xf32>
    %cst_335 = arith.constant dense<0.000000e+00> : vector<16x16xf32>
    %774 = tpu.matmul %771, %773, %cst_335 {dimension_numbers = #tpu.dot_dimension_numbers<[1], [0], [0], [1], [0, 0, 1, 1], [], []>} : vector<16x8xf32>, vector<8x16xf32>, vector<16x16xf32> -> vector<16x16xf32>
    %c0_336 = arith.constant 0 : index
    %c0_337 = arith.constant 0 : index
    %c0_338 = arith.constant 0 : index
    %775 = vector.load %arg35[%c0_336, %c0_337, %c0_338] : memref<2x1x16xf32, #tpu.memory_space<vmem>>, vector<1x1x16xf32>
    %776 = vector.shape_cast %775 : vector<1x1x16xf32> to vector<1x16xf32>
    %777 = vector.broadcast %776 : vector<1x16xf32> to vector<16x16xf32>
    %778 = arith.addf %774, %777 : vector<16x16xf32>
    %779 = vector.extract_strided_slice %778 {offsets = [0, 0], sizes = [16, 8], strides = [1, 1]} : vector<16x16xf32> to vector<16x8xf32>
    %780 = arith.addf %723, %779 : vector<16x8xf32>
    %c10_339 = arith.constant 10 : index
    %781 = memref.load %arg10[%c10_339] : memref<24xf32, #tpu.memory_space<smem>>
    %782 = vector.broadcast %781 : f32 to vector<16x8xf32>
    %783 = arith.mulf %780, %782 : vector<16x8xf32>
    %784 = arith.addf %560, %783 : vector<16x8xf32>
    %785 = vector.extract_strided_slice %778 {offsets = [0, 8], sizes = [16, 8], strides = [1, 1]} : vector<16x16xf32> to vector<16x8xf32>
    %786 = arith.addf %724, %785 : vector<16x8xf32>
    %c18 = arith.constant 18 : index
    %787 = memref.load %arg10[%c18] : memref<24xf32, #tpu.memory_space<smem>>
    %788 = vector.broadcast %787 : f32 to vector<16x8xf32>
    %789 = arith.mulf %786, %788 : vector<16x8xf32>
    %790 = arith.addf %708, %789 : vector<16x8xf32>
    %791 = vector.extract_strided_slice %720 {offsets = [0, 8], sizes = [8, 8], strides = [1, 1]} : vector<16x16xf32> to vector<8x8xf32>
    %792 = vector.extract_strided_slice %721 {offsets = [0, 8], sizes = [8, 8], strides = [1, 1]} : vector<16x16xf32> to vector<8x8xf32>
    %793 = vector.extract_strided_slice %722 {offsets = [0, 8], sizes = [8, 8], strides = [1, 1]} : vector<16x16xf32> to vector<8x8xf32>
    %cst_340 = arith.constant dense<0.000000e+00> : vector<8x8xf32>
    %794 = tpu.matmul %791, %792, %cst_340 {dimension_numbers = #tpu.dot_dimension_numbers<[1], [1], [0], [0], [0, 0, 1, 0], [], []>} : vector<8x8xf32>, vector<8x8xf32>, vector<8x8xf32> -> vector<8x8xf32>
    %cst_341 = arith.constant 0.353553385 : f32
    %795 = vector.broadcast %cst_341 : f32 to vector<8x8xf32>
    %796 = arith.mulf %794, %795 : vector<8x8xf32>
    %c10_342 = arith.constant 10 : index
    %c0_343 = arith.constant 0 : index
    %c0_344 = arith.constant 0 : index
    %797 = vector.load %arg1[%c10_342, %c0_343, %c0_344] : memref<14x8x8xf32, #tpu.memory_space<vmem>>, vector<1x8x8xf32>
    %798 = vector.shape_cast %797 : vector<1x8x8xf32> to vector<8x8xf32>
    %cst_345 = arith.constant 0.000000e+00 : f32
    %799 = vector.broadcast %cst_345 : f32 to vector<8x8xf32>
    %800 = arith.cmpf oeq, %798, %799 : vector<8x8xf32>
    %cst_346 = arith.constant -1.000000e+09 : f32
    %801 = vector.broadcast %cst_346 : f32 to vector<8x8xf32>
    %802 = arith.select %800, %801, %796 : vector<8x8xi1>, vector<8x8xf32>
    %cst_347 = arith.constant dense<0xFF800000> : vector<8xf32>
    %803 = vector.multi_reduction <maximumf>, %802, %cst_347 [1] : vector<8x8xf32> to vector<8xf32>
    %804 = vector.shape_cast %803 : vector<8xf32> to vector<8x1xf32>
    %805 = vector.broadcast %804 : vector<8x1xf32> to vector<8x8xf32>
    %806 = arith.subf %802, %805 : vector<8x8xf32>
    %807 = math.exp %806 : vector<8x8xf32>
    %cst_348 = arith.constant dense<0.000000e+00> : vector<8xf32>
    %808 = vector.multi_reduction <add>, %807, %cst_348 [1] : vector<8x8xf32> to vector<8xf32>
    %809 = vector.shape_cast %808 : vector<8xf32> to vector<8x1xf32>
    %810 = tpu.reciprocal %809 {approx = true} : vector<8x1xf32> -> vector<8x1xf32>
    %811 = vector.broadcast %810 : vector<8x1xf32> to vector<8x8xf32>
    %812 = arith.mulf %807, %811 : vector<8x8xf32>
    %cst_349 = arith.constant dense<0.000000e+00> : vector<8x8xf32>
    %813 = tpu.matmul %812, %793, %cst_349 {dimension_numbers = #tpu.dot_dimension_numbers<[1], [0], [0], [1], [0, 0, 1, 1], [], []>} : vector<8x8xf32>, vector<8x8xf32>, vector<8x8xf32> -> vector<8x8xf32>
    %814 = vector.extract_strided_slice %720 {offsets = [8, 8], sizes = [8, 8], strides = [1, 1]} : vector<16x16xf32> to vector<8x8xf32>
    %815 = vector.extract_strided_slice %721 {offsets = [8, 8], sizes = [8, 8], strides = [1, 1]} : vector<16x16xf32> to vector<8x8xf32>
    %816 = vector.extract_strided_slice %722 {offsets = [8, 8], sizes = [8, 8], strides = [1, 1]} : vector<16x16xf32> to vector<8x8xf32>
    %cst_350 = arith.constant dense<0.000000e+00> : vector<8x8xf32>
    %817 = tpu.matmul %814, %815, %cst_350 {dimension_numbers = #tpu.dot_dimension_numbers<[1], [1], [0], [0], [0, 0, 1, 0], [], []>} : vector<8x8xf32>, vector<8x8xf32>, vector<8x8xf32> -> vector<8x8xf32>
    %cst_351 = arith.constant 0.353553385 : f32
    %818 = vector.broadcast %cst_351 : f32 to vector<8x8xf32>
    %819 = arith.mulf %817, %818 : vector<8x8xf32>
    %c11_352 = arith.constant 11 : index
    %c0_353 = arith.constant 0 : index
    %c0_354 = arith.constant 0 : index
    %820 = vector.load %arg1[%c11_352, %c0_353, %c0_354] : memref<14x8x8xf32, #tpu.memory_space<vmem>>, vector<1x8x8xf32>
    %821 = vector.shape_cast %820 : vector<1x8x8xf32> to vector<8x8xf32>
    %cst_355 = arith.constant 0.000000e+00 : f32
    %822 = vector.broadcast %cst_355 : f32 to vector<8x8xf32>
    %823 = arith.cmpf oeq, %821, %822 : vector<8x8xf32>
    %cst_356 = arith.constant -1.000000e+09 : f32
    %824 = vector.broadcast %cst_356 : f32 to vector<8x8xf32>
    %825 = arith.select %823, %824, %819 : vector<8x8xi1>, vector<8x8xf32>
    %cst_357 = arith.constant dense<0xFF800000> : vector<8xf32>
    %826 = vector.multi_reduction <maximumf>, %825, %cst_357 [1] : vector<8x8xf32> to vector<8xf32>
    %827 = vector.shape_cast %826 : vector<8xf32> to vector<8x1xf32>
    %828 = vector.broadcast %827 : vector<8x1xf32> to vector<8x8xf32>
    %829 = arith.subf %825, %828 : vector<8x8xf32>
    %830 = math.exp %829 : vector<8x8xf32>
    %cst_358 = arith.constant dense<0.000000e+00> : vector<8xf32>
    %831 = vector.multi_reduction <add>, %830, %cst_358 [1] : vector<8x8xf32> to vector<8xf32>
    %832 = vector.shape_cast %831 : vector<8xf32> to vector<8x1xf32>
    %833 = tpu.reciprocal %832 {approx = true} : vector<8x1xf32> -> vector<8x1xf32>
    %834 = vector.broadcast %833 : vector<8x1xf32> to vector<8x8xf32>
    %835 = arith.mulf %830, %834 : vector<8x8xf32>
    %cst_359 = arith.constant dense<0.000000e+00> : vector<8x8xf32>
    %836 = tpu.matmul %835, %816, %cst_359 {dimension_numbers = #tpu.dot_dimension_numbers<[1], [0], [0], [1], [0, 0, 1, 1], [], []>} : vector<8x8xf32>, vector<8x8xf32>, vector<8x8xf32> -> vector<8x8xf32>
    %837 = tpu.concatenate %813, %836 in 0 : vector<8x8xf32>, vector<8x8xf32> -> vector<16x8xf32>
    %c1_360 = arith.constant 1 : index
    %c0_361 = arith.constant 0 : index
    %c0_362 = arith.constant 0 : index
    %838 = vector.load %arg34[%c1_360, %c0_361, %c0_362] : memref<2x8x16xf32, #tpu.memory_space<vmem>>, vector<1x8x16xf32>
    %839 = vector.shape_cast %838 : vector<1x8x16xf32> to vector<8x16xf32>
    %cst_363 = arith.constant dense<0.000000e+00> : vector<16x16xf32>
    %840 = tpu.matmul %837, %839, %cst_363 {dimension_numbers = #tpu.dot_dimension_numbers<[1], [0], [0], [1], [0, 0, 1, 1], [], []>} : vector<16x8xf32>, vector<8x16xf32>, vector<16x16xf32> -> vector<16x16xf32>
    %c1_364 = arith.constant 1 : index
    %c0_365 = arith.constant 0 : index
    %c0_366 = arith.constant 0 : index
    %841 = vector.load %arg35[%c1_364, %c0_365, %c0_366] : memref<2x1x16xf32, #tpu.memory_space<vmem>>, vector<1x1x16xf32>
    %842 = vector.shape_cast %841 : vector<1x1x16xf32> to vector<1x16xf32>
    %843 = vector.broadcast %842 : vector<1x16xf32> to vector<16x16xf32>
    %844 = arith.addf %840, %843 : vector<16x16xf32>
    %845 = vector.extract_strided_slice %844 {offsets = [0, 0], sizes = [16, 8], strides = [1, 1]} : vector<16x16xf32> to vector<16x8xf32>
    %846 = arith.addf %780, %845 : vector<16x8xf32>
    %c14 = arith.constant 14 : index
    %847 = memref.load %arg10[%c14] : memref<24xf32, #tpu.memory_space<smem>>
    %848 = vector.broadcast %847 : f32 to vector<16x8xf32>
    %849 = arith.mulf %846, %848 : vector<16x8xf32>
    %850 = arith.addf %784, %849 : vector<16x8xf32>
    %851 = vector.extract_strided_slice %844 {offsets = [0, 8], sizes = [16, 8], strides = [1, 1]} : vector<16x16xf32> to vector<16x8xf32>
    %852 = arith.addf %786, %851 : vector<16x8xf32>
    %c22 = arith.constant 22 : index
    %853 = memref.load %arg10[%c22] : memref<24xf32, #tpu.memory_space<smem>>
    %854 = vector.broadcast %853 : f32 to vector<16x8xf32>
    %855 = arith.mulf %852, %854 : vector<16x8xf32>
    %856 = arith.addf %790, %855 : vector<16x8xf32>
    %c0_367 = arith.constant 0 : index
    %c0_368 = arith.constant 0 : index
    %857 = vector.load %arg36[%c0_367, %c0_368] : memref<32x96xf32, #tpu.memory_space<vmem>>, vector<32x96xf32>
    %c0_369 = arith.constant 0 : index
    %c0_370 = arith.constant 0 : index
    %858 = vector.load %arg37[%c0_369, %c0_370] : memref<1x96xf32, #tpu.memory_space<vmem>>, vector<1x96xf32>
    %859 = vector.extract_strided_slice %25 {offsets = [0, 0], sizes = [16, 16], strides = [1, 1]} : vector<16x32xf32> to vector<16x16xf32>
    %860 = vector.extract_strided_slice %857 {offsets = [0, 0], sizes = [16, 96], strides = [1, 1]} : vector<32x96xf32> to vector<16x96xf32>
    %cst_371 = arith.constant dense<0.000000e+00> : vector<16x96xf32>
    %861 = tpu.matmul %859, %860, %cst_371 {dimension_numbers = #tpu.dot_dimension_numbers<[1], [0], [0], [1], [0, 0, 1, 1], [], []>} : vector<16x16xf32>, vector<16x96xf32>, vector<16x96xf32> -> vector<16x96xf32>
    %862 = vector.extract_strided_slice %25 {offsets = [0, 16], sizes = [16, 8], strides = [1, 1]} : vector<16x32xf32> to vector<16x8xf32>
    %863 = vector.extract_strided_slice %857 {offsets = [16, 0], sizes = [8, 96], strides = [1, 1]} : vector<32x96xf32> to vector<8x96xf32>
    %cst_372 = arith.constant dense<0.000000e+00> : vector<16x96xf32>
    %864 = tpu.matmul %862, %863, %cst_372 {dimension_numbers = #tpu.dot_dimension_numbers<[1], [0], [0], [1], [0, 0, 1, 1], [], []>} : vector<16x8xf32>, vector<8x96xf32>, vector<16x96xf32> -> vector<16x96xf32>
    %865 = arith.addf %861, %864 : vector<16x96xf32>
    %866 = vector.extract_strided_slice %25 {offsets = [0, 24], sizes = [16, 8], strides = [1, 1]} : vector<16x32xf32> to vector<16x8xf32>
    %867 = vector.extract_strided_slice %857 {offsets = [24, 0], sizes = [8, 96], strides = [1, 1]} : vector<32x96xf32> to vector<8x96xf32>
    %cst_373 = arith.constant dense<0.000000e+00> : vector<16x96xf32>
    %868 = tpu.matmul %866, %867, %cst_373 {dimension_numbers = #tpu.dot_dimension_numbers<[1], [0], [0], [1], [0, 0, 1, 1], [], []>} : vector<16x8xf32>, vector<8x96xf32>, vector<16x96xf32> -> vector<16x96xf32>
    %869 = arith.addf %865, %868 : vector<16x96xf32>
    %870 = vector.broadcast %858 : vector<1x96xf32> to vector<16x96xf32>
    %871 = arith.addf %869, %870 : vector<16x96xf32>
    %872 = vector.extract_strided_slice %871 {offsets = [0, 0], sizes = [16, 32], strides = [1, 1]} : vector<16x96xf32> to vector<16x32xf32>
    %873 = vector.extract_strided_slice %871 {offsets = [0, 32], sizes = [16, 32], strides = [1, 1]} : vector<16x96xf32> to vector<16x32xf32>
    %874 = vector.extract_strided_slice %871 {offsets = [0, 64], sizes = [16, 32], strides = [1, 1]} : vector<16x96xf32> to vector<16x32xf32>
    %875 = vector.extract_strided_slice %0 {offsets = [0, 0], sizes = [16, 16], strides = [1, 1]} : vector<16x32xf32> to vector<16x16xf32>
    %876 = vector.extract_strided_slice %0 {offsets = [0, 16], sizes = [16, 8], strides = [1, 1]} : vector<16x32xf32> to vector<16x8xf32>
    %877 = vector.extract_strided_slice %0 {offsets = [0, 24], sizes = [16, 8], strides = [1, 1]} : vector<16x32xf32> to vector<16x8xf32>
    %878 = vector.extract_strided_slice %872 {offsets = [0, 0], sizes = [8, 16], strides = [1, 1]} : vector<16x32xf32> to vector<8x16xf32>
    %879 = vector.extract_strided_slice %873 {offsets = [0, 0], sizes = [8, 16], strides = [1, 1]} : vector<16x32xf32> to vector<8x16xf32>
    %880 = vector.extract_strided_slice %874 {offsets = [0, 0], sizes = [8, 16], strides = [1, 1]} : vector<16x32xf32> to vector<8x16xf32>
    %cst_374 = arith.constant dense<0.000000e+00> : vector<8x8xf32>
    %881 = tpu.matmul %878, %879, %cst_374 {dimension_numbers = #tpu.dot_dimension_numbers<[1], [1], [0], [0], [0, 0, 1, 0], [], []>} : vector<8x16xf32>, vector<8x16xf32>, vector<8x8xf32> -> vector<8x8xf32>
    %cst_375 = arith.constant 2.500000e-01 : f32
    %882 = vector.broadcast %cst_375 : f32 to vector<8x8xf32>
    %883 = arith.mulf %881, %882 : vector<8x8xf32>
    %c12_376 = arith.constant 12 : index
    %c0_377 = arith.constant 0 : index
    %c0_378 = arith.constant 0 : index
    %884 = vector.load %arg1[%c12_376, %c0_377, %c0_378] : memref<14x8x8xf32, #tpu.memory_space<vmem>>, vector<1x8x8xf32>
    %885 = vector.shape_cast %884 : vector<1x8x8xf32> to vector<8x8xf32>
    %cst_379 = arith.constant 0.000000e+00 : f32
    %886 = vector.broadcast %cst_379 : f32 to vector<8x8xf32>
    %887 = arith.cmpf oeq, %885, %886 : vector<8x8xf32>
    %cst_380 = arith.constant -1.000000e+09 : f32
    %888 = vector.broadcast %cst_380 : f32 to vector<8x8xf32>
    %889 = arith.select %887, %888, %883 : vector<8x8xi1>, vector<8x8xf32>
    %cst_381 = arith.constant dense<0xFF800000> : vector<8xf32>
    %890 = vector.multi_reduction <maximumf>, %889, %cst_381 [1] : vector<8x8xf32> to vector<8xf32>
    %891 = vector.shape_cast %890 : vector<8xf32> to vector<8x1xf32>
    %892 = vector.broadcast %891 : vector<8x1xf32> to vector<8x8xf32>
    %893 = arith.subf %889, %892 : vector<8x8xf32>
    %894 = math.exp %893 : vector<8x8xf32>
    %cst_382 = arith.constant dense<0.000000e+00> : vector<8xf32>
    %895 = vector.multi_reduction <add>, %894, %cst_382 [1] : vector<8x8xf32> to vector<8xf32>
    %896 = vector.shape_cast %895 : vector<8xf32> to vector<8x1xf32>
    %897 = tpu.reciprocal %896 {approx = true} : vector<8x1xf32> -> vector<8x1xf32>
    %898 = vector.broadcast %897 : vector<8x1xf32> to vector<8x8xf32>
    %899 = arith.mulf %894, %898 : vector<8x8xf32>
    %cst_383 = arith.constant dense<0.000000e+00> : vector<8x16xf32>
    %900 = tpu.matmul %899, %880, %cst_383 {dimension_numbers = #tpu.dot_dimension_numbers<[1], [0], [0], [1], [0, 0, 1, 1], [], []>} : vector<8x8xf32>, vector<8x16xf32>, vector<8x16xf32> -> vector<8x16xf32>
    %901 = vector.extract_strided_slice %872 {offsets = [8, 0], sizes = [8, 16], strides = [1, 1]} : vector<16x32xf32> to vector<8x16xf32>
    %902 = vector.extract_strided_slice %873 {offsets = [8, 0], sizes = [8, 16], strides = [1, 1]} : vector<16x32xf32> to vector<8x16xf32>
    %903 = vector.extract_strided_slice %874 {offsets = [8, 0], sizes = [8, 16], strides = [1, 1]} : vector<16x32xf32> to vector<8x16xf32>
    %cst_384 = arith.constant dense<0.000000e+00> : vector<8x8xf32>
    %904 = tpu.matmul %901, %902, %cst_384 {dimension_numbers = #tpu.dot_dimension_numbers<[1], [1], [0], [0], [0, 0, 1, 0], [], []>} : vector<8x16xf32>, vector<8x16xf32>, vector<8x8xf32> -> vector<8x8xf32>
    %cst_385 = arith.constant 2.500000e-01 : f32
    %905 = vector.broadcast %cst_385 : f32 to vector<8x8xf32>
    %906 = arith.mulf %904, %905 : vector<8x8xf32>
    %c13_386 = arith.constant 13 : index
    %c0_387 = arith.constant 0 : index
    %c0_388 = arith.constant 0 : index
    %907 = vector.load %arg1[%c13_386, %c0_387, %c0_388] : memref<14x8x8xf32, #tpu.memory_space<vmem>>, vector<1x8x8xf32>
    %908 = vector.shape_cast %907 : vector<1x8x8xf32> to vector<8x8xf32>
    %cst_389 = arith.constant 0.000000e+00 : f32
    %909 = vector.broadcast %cst_389 : f32 to vector<8x8xf32>
    %910 = arith.cmpf oeq, %908, %909 : vector<8x8xf32>
    %cst_390 = arith.constant -1.000000e+09 : f32
    %911 = vector.broadcast %cst_390 : f32 to vector<8x8xf32>
    %912 = arith.select %910, %911, %906 : vector<8x8xi1>, vector<8x8xf32>
    %cst_391 = arith.constant dense<0xFF800000> : vector<8xf32>
    %913 = vector.multi_reduction <maximumf>, %912, %cst_391 [1] : vector<8x8xf32> to vector<8xf32>
    %914 = vector.shape_cast %913 : vector<8xf32> to vector<8x1xf32>
    %915 = vector.broadcast %914 : vector<8x1xf32> to vector<8x8xf32>
    %916 = arith.subf %912, %915 : vector<8x8xf32>
    %917 = math.exp %916 : vector<8x8xf32>
    %cst_392 = arith.constant dense<0.000000e+00> : vector<8xf32>
    %918 = vector.multi_reduction <add>, %917, %cst_392 [1] : vector<8x8xf32> to vector<8xf32>
    %919 = vector.shape_cast %918 : vector<8xf32> to vector<8x1xf32>
    %920 = tpu.reciprocal %919 {approx = true} : vector<8x1xf32> -> vector<8x1xf32>
    %921 = vector.broadcast %920 : vector<8x1xf32> to vector<8x8xf32>
    %922 = arith.mulf %917, %921 : vector<8x8xf32>
    %cst_393 = arith.constant dense<0.000000e+00> : vector<8x16xf32>
    %923 = tpu.matmul %922, %903, %cst_393 {dimension_numbers = #tpu.dot_dimension_numbers<[1], [0], [0], [1], [0, 0, 1, 1], [], []>} : vector<8x8xf32>, vector<8x16xf32>, vector<8x16xf32> -> vector<8x16xf32>
    %924 = tpu.concatenate %900, %923 in 0 : vector<8x16xf32>, vector<8x16xf32> -> vector<16x16xf32>
    %c0_394 = arith.constant 0 : index
    %c0_395 = arith.constant 0 : index
    %c0_396 = arith.constant 0 : index
    %925 = vector.load %arg38[%c0_394, %c0_395, %c0_396] : memref<2x16x32xf32, #tpu.memory_space<vmem>>, vector<1x16x32xf32>
    %926 = vector.shape_cast %925 : vector<1x16x32xf32> to vector<16x32xf32>
    %cst_397 = arith.constant dense<0.000000e+00> : vector<16x32xf32>
    %927 = tpu.matmul %924, %926, %cst_397 {dimension_numbers = #tpu.dot_dimension_numbers<[1], [0], [0], [1], [0, 0, 1, 1], [], []>} : vector<16x16xf32>, vector<16x32xf32>, vector<16x32xf32> -> vector<16x32xf32>
    %c0_398 = arith.constant 0 : index
    %c0_399 = arith.constant 0 : index
    %c0_400 = arith.constant 0 : index
    %928 = vector.load %arg39[%c0_398, %c0_399, %c0_400] : memref<2x1x32xf32, #tpu.memory_space<vmem>>, vector<1x1x32xf32>
    %929 = vector.shape_cast %928 : vector<1x1x32xf32> to vector<1x32xf32>
    %930 = vector.broadcast %929 : vector<1x32xf32> to vector<16x32xf32>
    %931 = arith.addf %927, %930 : vector<16x32xf32>
    %932 = vector.extract_strided_slice %931 {offsets = [0, 0], sizes = [16, 16], strides = [1, 1]} : vector<16x32xf32> to vector<16x16xf32>
    %933 = arith.addf %875, %932 : vector<16x16xf32>
    %c3_401 = arith.constant 3 : index
    %934 = memref.load %arg10[%c3_401] : memref<24xf32, #tpu.memory_space<smem>>
    %935 = vector.broadcast %934 : f32 to vector<16x16xf32>
    %936 = arith.mulf %933, %935 : vector<16x16xf32>
    %937 = arith.addf %702, %936 : vector<16x16xf32>
    %938 = vector.extract_strided_slice %931 {offsets = [0, 16], sizes = [16, 8], strides = [1, 1]} : vector<16x32xf32> to vector<16x8xf32>
    %939 = arith.addf %876, %938 : vector<16x8xf32>
    %c11_402 = arith.constant 11 : index
    %940 = memref.load %arg10[%c11_402] : memref<24xf32, #tpu.memory_space<smem>>
    %941 = vector.broadcast %940 : f32 to vector<16x8xf32>
    %942 = arith.mulf %939, %941 : vector<16x8xf32>
    %943 = arith.addf %850, %942 : vector<16x8xf32>
    %944 = vector.extract_strided_slice %931 {offsets = [0, 24], sizes = [16, 8], strides = [1, 1]} : vector<16x32xf32> to vector<16x8xf32>
    %945 = arith.addf %877, %944 : vector<16x8xf32>
    %c19 = arith.constant 19 : index
    %946 = memref.load %arg10[%c19] : memref<24xf32, #tpu.memory_space<smem>>
    %947 = vector.broadcast %946 : f32 to vector<16x8xf32>
    %948 = arith.mulf %945, %947 : vector<16x8xf32>
    %949 = arith.addf %856, %948 : vector<16x8xf32>
    %950 = vector.extract_strided_slice %872 {offsets = [0, 16], sizes = [8, 16], strides = [1, 1]} : vector<16x32xf32> to vector<8x16xf32>
    %951 = vector.extract_strided_slice %873 {offsets = [0, 16], sizes = [8, 16], strides = [1, 1]} : vector<16x32xf32> to vector<8x16xf32>
    %952 = vector.extract_strided_slice %874 {offsets = [0, 16], sizes = [8, 16], strides = [1, 1]} : vector<16x32xf32> to vector<8x16xf32>
    %cst_403 = arith.constant dense<0.000000e+00> : vector<8x8xf32>
    %953 = tpu.matmul %950, %951, %cst_403 {dimension_numbers = #tpu.dot_dimension_numbers<[1], [1], [0], [0], [0, 0, 1, 0], [], []>} : vector<8x16xf32>, vector<8x16xf32>, vector<8x8xf32> -> vector<8x8xf32>
    %cst_404 = arith.constant 2.500000e-01 : f32
    %954 = vector.broadcast %cst_404 : f32 to vector<8x8xf32>
    %955 = arith.mulf %953, %954 : vector<8x8xf32>
    %c12_405 = arith.constant 12 : index
    %c0_406 = arith.constant 0 : index
    %c0_407 = arith.constant 0 : index
    %956 = vector.load %arg1[%c12_405, %c0_406, %c0_407] : memref<14x8x8xf32, #tpu.memory_space<vmem>>, vector<1x8x8xf32>
    %957 = vector.shape_cast %956 : vector<1x8x8xf32> to vector<8x8xf32>
    %cst_408 = arith.constant 0.000000e+00 : f32
    %958 = vector.broadcast %cst_408 : f32 to vector<8x8xf32>
    %959 = arith.cmpf oeq, %957, %958 : vector<8x8xf32>
    %cst_409 = arith.constant -1.000000e+09 : f32
    %960 = vector.broadcast %cst_409 : f32 to vector<8x8xf32>
    %961 = arith.select %959, %960, %955 : vector<8x8xi1>, vector<8x8xf32>
    %cst_410 = arith.constant dense<0xFF800000> : vector<8xf32>
    %962 = vector.multi_reduction <maximumf>, %961, %cst_410 [1] : vector<8x8xf32> to vector<8xf32>
    %963 = vector.shape_cast %962 : vector<8xf32> to vector<8x1xf32>
    %964 = vector.broadcast %963 : vector<8x1xf32> to vector<8x8xf32>
    %965 = arith.subf %961, %964 : vector<8x8xf32>
    %966 = math.exp %965 : vector<8x8xf32>
    %cst_411 = arith.constant dense<0.000000e+00> : vector<8xf32>
    %967 = vector.multi_reduction <add>, %966, %cst_411 [1] : vector<8x8xf32> to vector<8xf32>
    %968 = vector.shape_cast %967 : vector<8xf32> to vector<8x1xf32>
    %969 = tpu.reciprocal %968 {approx = true} : vector<8x1xf32> -> vector<8x1xf32>
    %970 = vector.broadcast %969 : vector<8x1xf32> to vector<8x8xf32>
    %971 = arith.mulf %966, %970 : vector<8x8xf32>
    %cst_412 = arith.constant dense<0.000000e+00> : vector<8x16xf32>
    %972 = tpu.matmul %971, %952, %cst_412 {dimension_numbers = #tpu.dot_dimension_numbers<[1], [0], [0], [1], [0, 0, 1, 1], [], []>} : vector<8x8xf32>, vector<8x16xf32>, vector<8x16xf32> -> vector<8x16xf32>
    %973 = vector.extract_strided_slice %872 {offsets = [8, 16], sizes = [8, 16], strides = [1, 1]} : vector<16x32xf32> to vector<8x16xf32>
    %974 = vector.extract_strided_slice %873 {offsets = [8, 16], sizes = [8, 16], strides = [1, 1]} : vector<16x32xf32> to vector<8x16xf32>
    %975 = vector.extract_strided_slice %874 {offsets = [8, 16], sizes = [8, 16], strides = [1, 1]} : vector<16x32xf32> to vector<8x16xf32>
    %cst_413 = arith.constant dense<0.000000e+00> : vector<8x8xf32>
    %976 = tpu.matmul %973, %974, %cst_413 {dimension_numbers = #tpu.dot_dimension_numbers<[1], [1], [0], [0], [0, 0, 1, 0], [], []>} : vector<8x16xf32>, vector<8x16xf32>, vector<8x8xf32> -> vector<8x8xf32>
    %cst_414 = arith.constant 2.500000e-01 : f32
    %977 = vector.broadcast %cst_414 : f32 to vector<8x8xf32>
    %978 = arith.mulf %976, %977 : vector<8x8xf32>
    %c13_415 = arith.constant 13 : index
    %c0_416 = arith.constant 0 : index
    %c0_417 = arith.constant 0 : index
    %979 = vector.load %arg1[%c13_415, %c0_416, %c0_417] : memref<14x8x8xf32, #tpu.memory_space<vmem>>, vector<1x8x8xf32>
    %980 = vector.shape_cast %979 : vector<1x8x8xf32> to vector<8x8xf32>
    %cst_418 = arith.constant 0.000000e+00 : f32
    %981 = vector.broadcast %cst_418 : f32 to vector<8x8xf32>
    %982 = arith.cmpf oeq, %980, %981 : vector<8x8xf32>
    %cst_419 = arith.constant -1.000000e+09 : f32
    %983 = vector.broadcast %cst_419 : f32 to vector<8x8xf32>
    %984 = arith.select %982, %983, %978 : vector<8x8xi1>, vector<8x8xf32>
    %cst_420 = arith.constant dense<0xFF800000> : vector<8xf32>
    %985 = vector.multi_reduction <maximumf>, %984, %cst_420 [1] : vector<8x8xf32> to vector<8xf32>
    %986 = vector.shape_cast %985 : vector<8xf32> to vector<8x1xf32>
    %987 = vector.broadcast %986 : vector<8x1xf32> to vector<8x8xf32>
    %988 = arith.subf %984, %987 : vector<8x8xf32>
    %989 = math.exp %988 : vector<8x8xf32>
    %cst_421 = arith.constant dense<0.000000e+00> : vector<8xf32>
    %990 = vector.multi_reduction <add>, %989, %cst_421 [1] : vector<8x8xf32> to vector<8xf32>
    %991 = vector.shape_cast %990 : vector<8xf32> to vector<8x1xf32>
    %992 = tpu.reciprocal %991 {approx = true} : vector<8x1xf32> -> vector<8x1xf32>
    %993 = vector.broadcast %992 : vector<8x1xf32> to vector<8x8xf32>
    %994 = arith.mulf %989, %993 : vector<8x8xf32>
    %cst_422 = arith.constant dense<0.000000e+00> : vector<8x16xf32>
    %995 = tpu.matmul %994, %975, %cst_422 {dimension_numbers = #tpu.dot_dimension_numbers<[1], [0], [0], [1], [0, 0, 1, 1], [], []>} : vector<8x8xf32>, vector<8x16xf32>, vector<8x16xf32> -> vector<8x16xf32>
    %996 = tpu.concatenate %972, %995 in 0 : vector<8x16xf32>, vector<8x16xf32> -> vector<16x16xf32>
    %c1_423 = arith.constant 1 : index
    %c0_424 = arith.constant 0 : index
    %c0_425 = arith.constant 0 : index
    %997 = vector.load %arg38[%c1_423, %c0_424, %c0_425] : memref<2x16x32xf32, #tpu.memory_space<vmem>>, vector<1x16x32xf32>
    %998 = vector.shape_cast %997 : vector<1x16x32xf32> to vector<16x32xf32>
    %cst_426 = arith.constant dense<0.000000e+00> : vector<16x32xf32>
    %999 = tpu.matmul %996, %998, %cst_426 {dimension_numbers = #tpu.dot_dimension_numbers<[1], [0], [0], [1], [0, 0, 1, 1], [], []>} : vector<16x16xf32>, vector<16x32xf32>, vector<16x32xf32> -> vector<16x32xf32>
    %c1_427 = arith.constant 1 : index
    %c0_428 = arith.constant 0 : index
    %c0_429 = arith.constant 0 : index
    %1000 = vector.load %arg39[%c1_427, %c0_428, %c0_429] : memref<2x1x32xf32, #tpu.memory_space<vmem>>, vector<1x1x32xf32>
    %1001 = vector.shape_cast %1000 : vector<1x1x32xf32> to vector<1x32xf32>
    %1002 = vector.broadcast %1001 : vector<1x32xf32> to vector<16x32xf32>
    %1003 = arith.addf %999, %1002 : vector<16x32xf32>
    %1004 = vector.extract_strided_slice %1003 {offsets = [0, 0], sizes = [16, 16], strides = [1, 1]} : vector<16x32xf32> to vector<16x16xf32>
    %1005 = arith.addf %933, %1004 : vector<16x16xf32>
    %c7_430 = arith.constant 7 : index
    %1006 = memref.load %arg10[%c7_430] : memref<24xf32, #tpu.memory_space<smem>>
    %1007 = vector.broadcast %1006 : f32 to vector<16x16xf32>
    %1008 = arith.mulf %1005, %1007 : vector<16x16xf32>
    %1009 = arith.addf %937, %1008 : vector<16x16xf32>
    %1010 = vector.extract_strided_slice %1003 {offsets = [0, 16], sizes = [16, 8], strides = [1, 1]} : vector<16x32xf32> to vector<16x8xf32>
    %1011 = arith.addf %939, %1010 : vector<16x8xf32>
    %c15 = arith.constant 15 : index
    %1012 = memref.load %arg10[%c15] : memref<24xf32, #tpu.memory_space<smem>>
    %1013 = vector.broadcast %1012 : f32 to vector<16x8xf32>
    %1014 = arith.mulf %1011, %1013 : vector<16x8xf32>
    %1015 = arith.addf %943, %1014 : vector<16x8xf32>
    %1016 = vector.extract_strided_slice %1003 {offsets = [0, 24], sizes = [16, 8], strides = [1, 1]} : vector<16x32xf32> to vector<16x8xf32>
    %1017 = arith.addf %945, %1016 : vector<16x8xf32>
    %c23 = arith.constant 23 : index
    %1018 = memref.load %arg10[%c23] : memref<24xf32, #tpu.memory_space<smem>>
    %1019 = vector.broadcast %1018 : f32 to vector<16x8xf32>
    %1020 = arith.mulf %1017, %1019 : vector<16x8xf32>
    %1021 = arith.addf %949, %1020 : vector<16x8xf32>
    %c0_431 = arith.constant 0 : index
    %1022 = memref.load %arg11[%c0_431] : memref<3xf32, #tpu.memory_space<smem>>
    %1023 = vector.broadcast %1022 : f32 to vector<16x16xf32>
    %1024 = arith.addf %1009, %1023 : vector<16x16xf32>
    %c1_432 = arith.constant 1 : index
    %1025 = memref.load %arg11[%c1_432] : memref<3xf32, #tpu.memory_space<smem>>
    %1026 = vector.broadcast %1025 : f32 to vector<16x8xf32>
    %1027 = arith.addf %1015, %1026 : vector<16x8xf32>
    %c2_433 = arith.constant 2 : index
    %1028 = memref.load %arg11[%c2_433] : memref<3xf32, #tpu.memory_space<smem>>
    %1029 = vector.broadcast %1028 : f32 to vector<16x8xf32>
    %1030 = arith.addf %1021, %1029 : vector<16x8xf32>
    %cst_434 = arith.constant dense<0.000000e+00> : vector<16xf32>
    %1031 = vector.multi_reduction <add>, %1024, %cst_434 [1] : vector<16x16xf32> to vector<16xf32>
    %1032 = vector.shape_cast %1031 : vector<16xf32> to vector<16x1xf32>
    %cst_435 = arith.constant dense<0.000000e+00> : vector<16xf32>
    %1033 = vector.multi_reduction <add>, %1027, %cst_435 [1] : vector<16x8xf32> to vector<16xf32>
    %1034 = vector.shape_cast %1033 : vector<16xf32> to vector<16x1xf32>
    %1035 = arith.addf %1032, %1034 : vector<16x1xf32>
    %cst_436 = arith.constant dense<0.000000e+00> : vector<16xf32>
    %1036 = vector.multi_reduction <add>, %1030, %cst_436 [1] : vector<16x8xf32> to vector<16xf32>
    %1037 = vector.shape_cast %1036 : vector<16xf32> to vector<16x1xf32>
    %1038 = arith.addf %1035, %1037 : vector<16x1xf32>
    %cst_437 = arith.constant 3.125000e-02 : f32
    %1039 = vector.broadcast %cst_437 : f32 to vector<16x1xf32>
    %1040 = arith.mulf %1038, %1039 : vector<16x1xf32>
    %1041 = vector.broadcast %1040 : vector<16x1xf32> to vector<16x16xf32>
    %1042 = arith.subf %1024, %1041 : vector<16x16xf32>
    %1043 = arith.mulf %1042, %1042 : vector<16x16xf32>
    %cst_438 = arith.constant dense<0.000000e+00> : vector<16xf32>
    %1044 = vector.multi_reduction <add>, %1043, %cst_438 [1] : vector<16x16xf32> to vector<16xf32>
    %1045 = vector.shape_cast %1044 : vector<16xf32> to vector<16x1xf32>
    %1046 = vector.broadcast %1040 : vector<16x1xf32> to vector<16x8xf32>
    %1047 = arith.subf %1027, %1046 : vector<16x8xf32>
    %1048 = arith.mulf %1047, %1047 : vector<16x8xf32>
    %cst_439 = arith.constant dense<0.000000e+00> : vector<16xf32>
    %1049 = vector.multi_reduction <add>, %1048, %cst_439 [1] : vector<16x8xf32> to vector<16xf32>
    %1050 = vector.shape_cast %1049 : vector<16xf32> to vector<16x1xf32>
    %1051 = arith.addf %1045, %1050 : vector<16x1xf32>
    %1052 = vector.broadcast %1040 : vector<16x1xf32> to vector<16x8xf32>
    %1053 = arith.subf %1030, %1052 : vector<16x8xf32>
    %1054 = arith.mulf %1053, %1053 : vector<16x8xf32>
    %cst_440 = arith.constant dense<0.000000e+00> : vector<16xf32>
    %1055 = vector.multi_reduction <add>, %1054, %cst_440 [1] : vector<16x8xf32> to vector<16xf32>
    %1056 = vector.shape_cast %1055 : vector<16xf32> to vector<16x1xf32>
    %1057 = arith.addf %1051, %1056 : vector<16x1xf32>
    %cst_441 = arith.constant 0.0322580636 : f32
    %1058 = vector.broadcast %cst_441 : f32 to vector<16x1xf32>
    %1059 = arith.mulf %1057, %1058 : vector<16x1xf32>
    %1060 = math.sqrt %1059 : vector<16x1xf32>
    %cst_442 = arith.constant 9.99999997E-7 : f32
    %1061 = vector.broadcast %cst_442 : f32 to vector<16x1xf32>
    %1062 = arith.addf %1060, %1061 : vector<16x1xf32>
    %1063 = tpu.reciprocal %1062 {approx = true} : vector<16x1xf32> -> vector<16x1xf32>
    %c0_443 = arith.constant 0 : index
    %c0_444 = arith.constant 0 : index
    %1064 = vector.load %arg4[%c0_443, %c0_444] : memref<1x32xf32, #tpu.memory_space<vmem>>, vector<1x32xf32>
    %c0_445 = arith.constant 0 : index
    %c0_446 = arith.constant 0 : index
    %1065 = vector.load %arg5[%c0_445, %c0_446] : memref<1x32xf32, #tpu.memory_space<vmem>>, vector<1x32xf32>
    %c0_447 = arith.constant 0 : index
    %c0_448 = arith.constant 0 : index
    %1066 = vector.load %arg6[%c0_447, %c0_448] : memref<32x64xf32, #tpu.memory_space<vmem>>, vector<32x64xf32>
    %1067 = vector.extract_strided_slice %1064 {offsets = [0, 0], sizes = [1, 16], strides = [1, 1]} : vector<1x32xf32> to vector<1x16xf32>
    %1068 = vector.broadcast %1040 : vector<16x1xf32> to vector<16x16xf32>
    %1069 = arith.subf %1024, %1068 : vector<16x16xf32>
    %1070 = vector.broadcast %1067 : vector<1x16xf32> to vector<16x16xf32>
    %1071 = arith.mulf %1070, %1069 : vector<16x16xf32>
    %1072 = vector.broadcast %1063 : vector<16x1xf32> to vector<16x16xf32>
    %1073 = arith.mulf %1071, %1072 : vector<16x16xf32>
    %1074 = vector.extract_strided_slice %1065 {offsets = [0, 0], sizes = [1, 16], strides = [1, 1]} : vector<1x32xf32> to vector<1x16xf32>
    %1075 = vector.broadcast %1074 : vector<1x16xf32> to vector<16x16xf32>
    %1076 = arith.addf %1073, %1075 : vector<16x16xf32>
    %1077 = vector.extract_strided_slice %1066 {offsets = [0, 0], sizes = [16, 64], strides = [1, 1]} : vector<32x64xf32> to vector<16x64xf32>
    %cst_449 = arith.constant dense<0.000000e+00> : vector<16x64xf32>
    %1078 = tpu.matmul %1076, %1077, %cst_449 {dimension_numbers = #tpu.dot_dimension_numbers<[1], [0], [0], [1], [0, 0, 1, 1], [], []>} : vector<16x16xf32>, vector<16x64xf32>, vector<16x64xf32> -> vector<16x64xf32>
    %1079 = vector.extract_strided_slice %1064 {offsets = [0, 16], sizes = [1, 8], strides = [1, 1]} : vector<1x32xf32> to vector<1x8xf32>
    %1080 = vector.broadcast %1040 : vector<16x1xf32> to vector<16x8xf32>
    %1081 = arith.subf %1027, %1080 : vector<16x8xf32>
    %1082 = vector.broadcast %1079 : vector<1x8xf32> to vector<16x8xf32>
    %1083 = arith.mulf %1082, %1081 : vector<16x8xf32>
    %1084 = vector.broadcast %1063 : vector<16x1xf32> to vector<16x8xf32>
    %1085 = arith.mulf %1083, %1084 : vector<16x8xf32>
    %1086 = vector.extract_strided_slice %1065 {offsets = [0, 16], sizes = [1, 8], strides = [1, 1]} : vector<1x32xf32> to vector<1x8xf32>
    %1087 = vector.broadcast %1086 : vector<1x8xf32> to vector<16x8xf32>
    %1088 = arith.addf %1085, %1087 : vector<16x8xf32>
    %1089 = vector.extract_strided_slice %1066 {offsets = [16, 0], sizes = [8, 64], strides = [1, 1]} : vector<32x64xf32> to vector<8x64xf32>
    %cst_450 = arith.constant dense<0.000000e+00> : vector<16x64xf32>
    %1090 = tpu.matmul %1088, %1089, %cst_450 {dimension_numbers = #tpu.dot_dimension_numbers<[1], [0], [0], [1], [0, 0, 1, 1], [], []>} : vector<16x8xf32>, vector<8x64xf32>, vector<16x64xf32> -> vector<16x64xf32>
    %1091 = arith.addf %1078, %1090 : vector<16x64xf32>
    %1092 = vector.extract_strided_slice %1064 {offsets = [0, 24], sizes = [1, 8], strides = [1, 1]} : vector<1x32xf32> to vector<1x8xf32>
    %1093 = vector.broadcast %1040 : vector<16x1xf32> to vector<16x8xf32>
    %1094 = arith.subf %1030, %1093 : vector<16x8xf32>
    %1095 = vector.broadcast %1092 : vector<1x8xf32> to vector<16x8xf32>
    %1096 = arith.mulf %1095, %1094 : vector<16x8xf32>
    %1097 = vector.broadcast %1063 : vector<16x1xf32> to vector<16x8xf32>
    %1098 = arith.mulf %1096, %1097 : vector<16x8xf32>
    %1099 = vector.extract_strided_slice %1065 {offsets = [0, 24], sizes = [1, 8], strides = [1, 1]} : vector<1x32xf32> to vector<1x8xf32>
    %1100 = vector.broadcast %1099 : vector<1x8xf32> to vector<16x8xf32>
    %1101 = arith.addf %1098, %1100 : vector<16x8xf32>
    %1102 = vector.extract_strided_slice %1066 {offsets = [24, 0], sizes = [8, 64], strides = [1, 1]} : vector<32x64xf32> to vector<8x64xf32>
    %cst_451 = arith.constant dense<0.000000e+00> : vector<16x64xf32>
    %1103 = tpu.matmul %1101, %1102, %cst_451 {dimension_numbers = #tpu.dot_dimension_numbers<[1], [0], [0], [1], [0, 0, 1, 1], [], []>} : vector<16x8xf32>, vector<8x64xf32>, vector<16x64xf32> -> vector<16x64xf32>
    %1104 = arith.addf %1091, %1103 : vector<16x64xf32>
    %c0_452 = arith.constant 0 : index
    %c0_453 = arith.constant 0 : index
    %1105 = vector.load %arg7[%c0_452, %c0_453] : memref<1x64xf32, #tpu.memory_space<vmem>>, vector<1x64xf32>
    %1106 = vector.broadcast %1105 : vector<1x64xf32> to vector<16x64xf32>
    %1107 = arith.addf %1104, %1106 : vector<16x64xf32>
    %cst_454 = arith.constant 0.000000e+00 : f32
    %1108 = vector.broadcast %cst_454 : f32 to vector<16x64xf32>
    %1109 = arith.maximumf %1107, %1108 : vector<16x64xf32>
    %c0_455 = arith.constant 0 : index
    %c0_456 = arith.constant 0 : index
    %1110 = vector.load %arg8[%c0_455, %c0_456] : memref<64x32xf32, #tpu.memory_space<vmem>>, vector<64x32xf32>
    %cst_457 = arith.constant dense<0.000000e+00> : vector<16x32xf32>
    %1111 = tpu.matmul %1109, %1110, %cst_457 {dimension_numbers = #tpu.dot_dimension_numbers<[1], [0], [0], [1], [0, 0, 1, 1], [], []>} : vector<16x64xf32>, vector<64x32xf32>, vector<16x32xf32> -> vector<16x32xf32>
    %c0_458 = arith.constant 0 : index
    %c0_459 = arith.constant 0 : index
    %1112 = vector.load %arg9[%c0_458, %c0_459] : memref<1x32xf32, #tpu.memory_space<vmem>>, vector<1x32xf32>
    %1113 = vector.broadcast %1112 : vector<1x32xf32> to vector<16x32xf32>
    %1114 = arith.addf %1111, %1113 : vector<16x32xf32>
    %1115 = arith.addf %0, %1114 : vector<16x32xf32>
    %c0_460 = arith.constant 0 : index
    %c0_461 = arith.constant 0 : index
    %1116 = vector.load %arg40[%c0_460, %c0_461] : memref<16x32xf32, #tpu.memory_space<vmem>>, vector<16x32xf32>
    tpu.vector_store %arg40[%c0_460, %c0_461], %1115 {strides = array<i32>} : memref<16x32xf32, #tpu.memory_space<vmem>>, vector<16x32xf32>,
    return
  }
}

</mosaic_0001>

<llo_original>
// kernel: _lambda_.1
$region0: #{_lambda_.1}
  #allocation0 [shape = 'u32[]', space=smem, size = 0x4, offset = 0x4, fixed_abs, tag = 'smem constant byte address 0x4 - core index']
  #allocation1 [shape = 'u32[144,128]{1,0:T(1,128)}', space=vmem, size = 0x12000, scoped, tag = 'internal scratch']
  %s0 = inlined_call_operand.smem [shape: u32[41], index: -1, kind: input, shape index: {}]
  %s1 = sld [smem:[%s0]]
  %s2 = scalar_lea.smem %s0, 1
  %s3 = sld [smem:[%s2]]
  %s4 = scalar_lea.smem %s0, 2
  %s5 = sld [smem:[%s4]]
  %s6 = scalar_lea.smem %s0, 3
  %s7 = sld [smem:[%s6]]
  %s8 = scalar_lea.smem %s0, 4
  %s9 = sld [smem:[%s8]]
  %s10 = scalar_lea.smem %s0, 5
  %s11 = sld [smem:[%s10]]
  %s12 = scalar_lea.smem %s0, 6
  %s13 = sld [smem:[%s12]]
  %s14 = scalar_lea.smem %s0, 7
  %s15 = sld [smem:[%s14]]
  %s16 = scalar_lea.smem %s0, 8
  %s17 = sld [smem:[%s16]]
  %s18 = scalar_lea.smem %s0, 9
  %s19 = sld [smem:[%s18]]
  %s20 = scalar_lea.smem %s0, 10
  %s21 = sld [smem:[%s20]]
  %s22 = scalar_lea.smem %s0, 11
  %s23 = sld [smem:[%s22]]
  %s24 = scalar_lea.smem %s0, 12
  %s25 = sld [smem:[%s24]]
  %s26 = scalar_lea.smem %s0, 13
  %s27 = sld [smem:[%s26]]
  %s28 = scalar_lea.smem %s0, 14
  %s29 = sld [smem:[%s28]]
  %s30 = scalar_lea.smem %s0, 15
  %s31 = sld [smem:[%s30]]
  %s32 = scalar_lea.smem %s0, 16
  %s33 = sld [smem:[%s32]]
  %s34 = scalar_lea.smem %s0, 17
  %s35 = sld [smem:[%s34]]
  %s36 = scalar_lea.smem %s0, 18
  %s37 = sld [smem:[%s36]]
  %s38 = scalar_lea.smem %s0, 19
  %s39 = sld [smem:[%s38]]
  %s40 = scalar_lea.smem %s0, 20
  %s41 = sld [smem:[%s40]]
  %s42 = scalar_lea.smem %s0, 21
  %s43 = sld [smem:[%s42]]
  %s44 = scalar_lea.smem %s0, 22
  %s45 = sld [smem:[%s44]]
  %s46 = scalar_lea.smem %s0, 23
  %s47 = sld [smem:[%s46]]
  %s48 = scalar_lea.smem %s0, 24
  %s49 = sld [smem:[%s48]]
  %s50 = scalar_lea.smem %s0, 25
  %s51 = sld [smem:[%s50]]
  %s52 = scalar_lea.smem %s0, 26
  %s53 = sld [smem:[%s52]]
  %s54 = scalar_lea.smem %s0, 27
  %s55 = sld [smem:[%s54]]
  %s56 = scalar_lea.smem %s0, 28
  %s57 = sld [smem:[%s56]]
  %s58 = scalar_lea.smem %s0, 29
  %s59 = sld [smem:[%s58]]
  %s60 = scalar_lea.smem %s0, 30
  %s61 = sld [smem:[%s60]]
  %s62 = scalar_lea.smem %s0, 31
  %s63 = sld [smem:[%s62]]
  %s64 = scalar_lea.smem %s0, 32
  %s65 = sld [smem:[%s64]]
  %s66 = scalar_lea.smem %s0, 33
  %s67 = sld [smem:[%s66]]
  %s68 = scalar_lea.smem %s0, 34
  %s69 = sld [smem:[%s68]]
  %s70 = scalar_lea.smem %s0, 35
  %s71 = sld [smem:[%s70]]
  %s72 = scalar_lea.smem %s0, 36
  %s73 = sld [smem:[%s72]]
  %s74 = scalar_lea.smem %s0, 37
  %s75 = sld [smem:[%s74]]
  %s76 = scalar_lea.smem %s0, 38
  %s77 = sld [smem:[%s76]]
  %s78 = scalar_lea.smem %s0, 39
  %s79 = sld [smem:[%s78]]
  %s80 = scalar_lea.smem %s0, 40
  %s81 = sld [smem:[%s80]]
  %s82 = sld [smem:[#allocation0]]
  $region178: #{_lambda_.1} parent=0
    _
  %s84 = ssub.s32 1, %s82
  %s85 = scalar_select 0, %s84, %s82
  $region1: #{_lambda_.1} parent=0
    #allocation2 [shape = 'u8[512]{0}', space=smem, size = 0x200, scoped, tag = 'input window, operand 10, single buffered']
    #allocation3 [shape = 's32[1]{0}', space=sflag, size = 0x4, scoped, tag = 'scoped memory for _lambda_.1']
    #allocation4 [shape = 's32[1]{0}', space=sflag, size = 0x4, scoped, tag = 'scoped memory for _lambda_.1']
    #allocation5 [shape = 'u8[512]{0}', space=smem, size = 0x200, scoped, tag = 'input window, operand 11, single buffered']
    #allocation6 [shape = 's32[1]{0}', space=sflag, size = 0x4, scoped, tag = 'scoped memory for _lambda_.1']
    #allocation7 [shape = 'u8[8192]{0}', space=vmem, size = 0x2000, scoped, tag = 'output window, operand 0, single buffered']
    %86 = vsyncpa [#allocation4], 0
    %87 = vsyncpa [#allocation6], 0
    %88 = vsyncpa [#allocation3], 0
    // Predicated region
    $region2: #{_lambda_.1} parent=1 // pred_check
      _
    $region3: #{_lambda_.1} parent=1 // pred_check_branch
      %90 = sbr.rel (0) target = $region5
    $region4: #{_lambda_.1} parent=1 // pred_region
      _
    $region5: #{_lambda_.1} parent=1 // pred_fallthru
      _
    // Predicated region
    $region6: #{_lambda_.1} parent=1 // pred_check
      _
    $region7: #{_lambda_.1} parent=1 // pred_check_branch
      %92 = sbr.rel (0) target = $region9
    $region8: #{_lambda_.1} parent=1 // pred_region
      _
    $region9: #{_lambda_.1} parent=1 // pred_fallthru
      _
    // Predicated region
    $region10: #{_lambda_.1} parent=1 // pred_check
      _
    $region11: #{_lambda_.1} parent=1 // pred_check_branch
      %94 = sbr.rel (0) target = $region13
    $region12: #{_lambda_.1} parent=1 // pred_region
      _
    $region13: #{_lambda_.1} parent=1 // pred_fallthru
      _
    // Predicated region
    $region14: #{_lambda_.1} parent=1 // pred_check
      _
    $region15: #{_lambda_.1} parent=1 // pred_check_branch
      %96 = sbr.rel (0) target = $region17
    $region16: #{_lambda_.1} parent=1 // pred_region
      _
    $region17: #{_lambda_.1} parent=1 // pred_fallthru
      _
    // Predicated region
    $region18: #{_lambda_.1} parent=1 // pred_check
      _
    $region19: #{_lambda_.1} parent=1 // pred_check_branch
      %98 = sbr.rel (0) target = $region21
    $region20: #{_lambda_.1} parent=1 // pred_region
      _
    $region21: #{_lambda_.1} parent=1 // pred_fallthru
      _
    // Predicated region
    $region22: #{_lambda_.1} parent=1 // pred_check
      _
    $region23: #{_lambda_.1} parent=1 // pred_check_branch
      %100 = sbr.rel (0) target = $region25
    $region24: #{_lambda_.1} parent=1 // pred_region
      _
    $region25: #{_lambda_.1} parent=1 // pred_fallthru
      _
    // Predicated region
    $region26: #{_lambda_.1} parent=1 // pred_check
      _
    $region27: #{_lambda_.1} parent=1 // pred_check_branch
      %102 = sbr.rel (0) target = $region29
    $region28: #{_lambda_.1} parent=1 // pred_region
      _
    $region29: #{_lambda_.1} parent=1 // pred_fallthru
      _
    // Predicated region
    $region30: #{_lambda_.1} parent=1 // pred_check
      _
    $region31: #{_lambda_.1} parent=1 // pred_check_branch
      %104 = sbr.rel (0) target = $region33
    $region32: #{_lambda_.1} parent=1 // pred_region
      _
    $region33: #{_lambda_.1} parent=1 // pred_fallthru
      _
    // Predicated region
    $region34: #{_lambda_.1} parent=1 // pred_check
      _
    $region35: #{_lambda_.1} parent=1 // pred_check_branch
      %106 = sbr.rel (0) target = $region37
    $region36: #{_lambda_.1} parent=1 // pred_region
      _
    $region37: #{_lambda_.1} parent=1 // pred_fallthru
      _
    // Predicated region
    $region38: #{_lambda_.1} parent=1 // pred_check
      _
    $region39: #{_lambda_.1} parent=1 // pred_check_branch
      %108 = sbr.rel (0) target = $region41
    $region40: #{_lambda_.1} parent=1 // pred_region
      _
    $region41: #{_lambda_.1} parent=1 // pred_fallthru
      _
    // Predicated region
    $region42: #{_lambda_.1} parent=1 // pred_check
      _
    $region43: #{_lambda_.1} parent=1 // pred_check_branch
      %110 = sbr.rel (0) target = $region45
    $region44: #{_lambda_.1} parent=1 // pred_region
      %s112 = ssub.s32 16, 16
      %113 = vsyncadd [#allocation4], %s112
      %s115 = sshll.u32 %s21, 4
      %s116 = int_to_ptr.vmem [resolvable:$true] %s115
      %118 = dma.vmem_to_smem %s116, 16, [#allocation2], [#allocation4]
    $region45: #{_lambda_.1} parent=1 // pred_fallthru
      _
    // Predicated region
    $region46: #{_lambda_.1} parent=1 // pred_check
      _
    $region47: #{_lambda_.1} parent=1 // pred_check_branch
      %120 = sbr.rel (0) target = $region49
    $region48: #{_lambda_.1} parent=1 // pred_region
      %s122 = ssub.s32 16, 16
      %123 = vsyncadd [#allocation6], %s122
      %s125 = sshll.u32 %s23, 4
      %s126 = int_to_ptr.vmem [resolvable:$true] %s125
      %128 = dma.vmem_to_smem %s126, 16, [#allocation5], [#allocation6]
    $region49: #{_lambda_.1} parent=1 // pred_fallthru
      _
    // Predicated region
    $region50: #{_lambda_.1} parent=1 // pred_check
      _
    $region51: #{_lambda_.1} parent=1 // pred_check_branch
      %130 = sbr.rel (0) target = $region53
    $region52: #{_lambda_.1} parent=1 // pred_region
      _
    $region53: #{_lambda_.1} parent=1 // pred_fallthru
      _
    // Predicated region
    $region54: #{_lambda_.1} parent=1 // pred_check
      _
    $region55: #{_lambda_.1} parent=1 // pred_check_branch
      %132 = sbr.rel (0) target = $region57
    $region56: #{_lambda_.1} parent=1 // pred_region
      _
    $region57: #{_lambda_.1} parent=1 // pred_fallthru
      _
    // Predicated region
    $region58: #{_lambda_.1} parent=1 // pred_check
      _
    $region59: #{_lambda_.1} parent=1 // pred_check_branch
      %134 = sbr.rel (0) target = $region61
    $region60: #{_lambda_.1} parent=1 // pred_region
      _
    $region61: #{_lambda_.1} parent=1 // pred_fallthru
      _
    // Predicated region
    $region62: #{_lambda_.1} parent=1 // pred_check
      _
    $region63: #{_lambda_.1} parent=1 // pred_check_branch
      %136 = sbr.rel (0) target = $region65
    $region64: #{_lambda_.1} parent=1 // pred_region
      _
    $region65: #{_lambda_.1} parent=1 // pred_fallthru
      _
    // Predicated region
    $region66: #{_lambda_.1} parent=1 // pred_check
      _
    $region67: #{_lambda_.1} parent=1 // pred_check_branch
      %138 = sbr.rel (0) target = $region69
    $region68: #{_lambda_.1} parent=1 // pred_region
      _
    $region69: #{_lambda_.1} parent=1 // pred_fallthru
      _
    // Predicated region
    $region70: #{_lambda_.1} parent=1 // pred_check
      _
    $region71: #{_lambda_.1} parent=1 // pred_check_branch
      %140 = sbr.rel (0) target = $region73
    $region72: #{_lambda_.1} parent=1 // pred_region
      _
    $region73: #{_lambda_.1} parent=1 // pred_fallthru
      _
    // Predicated region
    $region74: #{_lambda_.1} parent=1 // pred_check
      _
    $region75: #{_lambda_.1} parent=1 // pred_check_branch
      %142 = sbr.rel (0) target = $region77
    $region76: #{_lambda_.1} parent=1 // pred_region
      _
    $region77: #{_lambda_.1} parent=1 // pred_fallthru
      _
    // Predicated region
    $region78: #{_lambda_.1} parent=1 // pred_check
      _
    $region79: #{_lambda_.1} parent=1 // pred_check_branch
      %144 = sbr.rel (0) target = $region81
    $region80: #{_lambda_.1} parent=1 // pred_region
      _
    $region81: #{_lambda_.1} parent=1 // pred_fallthru
      _
    // Predicated region
    $region82: #{_lambda_.1} parent=1 // pred_check
      _
    $region83: #{_lambda_.1} parent=1 // pred_check_branch
      %146 = sbr.rel (0) target = $region85
    $region84: #{_lambda_.1} parent=1 // pred_region
      _
    $region85: #{_lambda_.1} parent=1 // pred_fallthru
      _
    // Predicated region
    $region86: #{_lambda_.1} parent=1 // pred_check
      _
    $region87: #{_lambda_.1} parent=1 // pred_check_branch
      %148 = sbr.rel (0) target = $region89
    $region88: #{_lambda_.1} parent=1 // pred_region
      _
    $region89: #{_lambda_.1} parent=1 // pred_fallthru
      _
    // Predicated region
    $region90: #{_lambda_.1} parent=1 // pred_check
      _
    $region91: #{_lambda_.1} parent=1 // pred_check_branch
      %150 = sbr.rel (0) target = $region93
    $region92: #{_lambda_.1} parent=1 // pred_region
      _
    $region93: #{_lambda_.1} parent=1 // pred_fallthru
      _
    // Predicated region
    $region94: #{_lambda_.1} parent=1 // pred_check
      _
    $region95: #{_lambda_.1} parent=1 // pred_check_branch
      %152 = sbr.rel (0) target = $region97
    $region96: #{_lambda_.1} parent=1 // pred_region
      _
    $region97: #{_lambda_.1} parent=1 // pred_fallthru
      _
    // Predicated region
    $region98: #{_lambda_.1} parent=1 // pred_check
      _
    $region99: #{_lambda_.1} parent=1 // pred_check_branch
      %154 = sbr.rel (0) target = $region101
    $region100: #{_lambda_.1} parent=1 // pred_region
      _
    $region101: #{_lambda_.1} parent=1 // pred_fallthru
      _
    // Predicated region
    $region102: #{_lambda_.1} parent=1 // pred_check
      _
    $region103: #{_lambda_.1} parent=1 // pred_check_branch
      %156 = sbr.rel (0) target = $region105
    $region104: #{_lambda_.1} parent=1 // pred_region
      _
    $region105: #{_lambda_.1} parent=1 // pred_fallthru
      _
    // Predicated region
    $region106: #{_lambda_.1} parent=1 // pred_check
      _
    $region107: #{_lambda_.1} parent=1 // pred_check_branch
      %158 = sbr.rel (0) target = $region109
    $region108: #{_lambda_.1} parent=1 // pred_region
      _
    $region109: #{_lambda_.1} parent=1 // pred_fallthru
      _
    // Predicated region
    $region110: #{_lambda_.1} parent=1 // pred_check
      _
    $region111: #{_lambda_.1} parent=1 // pred_check_branch
      %160 = sbr.rel (0) target = $region113
    $region112: #{_lambda_.1} parent=1 // pred_region
      _
    $region113: #{_lambda_.1} parent=1 // pred_fallthru
      _
    // Predicated region
    $region114: #{_lambda_.1} parent=1 // pred_check
      _
    $region115: #{_lambda_.1} parent=1 // pred_check_branch
      %162 = sbr.rel (0) target = $region117
    $region116: #{_lambda_.1} parent=1 // pred_region
      _
    $region117: #{_lambda_.1} parent=1 // pred_fallthru
      _
    // Predicated region
    $region118: #{_lambda_.1} parent=1 // pred_check
      _
    $region119: #{_lambda_.1} parent=1 // pred_check_branch
      %164 = sbr.rel (0) target = $region121
    $region120: #{_lambda_.1} parent=1 // pred_region
      _
    $region121: #{_lambda_.1} parent=1 // pred_fallthru
      _
    // Predicated region
    $region122: #{_lambda_.1} parent=1 // pred_check
      _
    $region123: #{_lambda_.1} parent=1 // pred_check_branch
      %166 = sbr.rel (0) target = $region125
    $region124: #{_lambda_.1} parent=1 // pred_region
      _
    $region125: #{_lambda_.1} parent=1 // pred_fallthru
      _
    // Predicated region
    $region126: #{_lambda_.1} parent=1 // pred_check
      _
    $region127: #{_lambda_.1} parent=1 // pred_check_branch
      %168 = sbr.rel (0) target = $region129
    $region128: #{_lambda_.1} parent=1 // pred_region
      _
    $region129: #{_lambda_.1} parent=1 // pred_fallthru
      _
    // Predicated region
    $region130: #{_lambda_.1} parent=1 // pred_check
      _
    $region131: #{_lambda_.1} parent=1 // pred_check_branch
      %170 = sbr.rel (0) target = $region133
    $region132: #{_lambda_.1} parent=1 // pred_region
      _
    $region133: #{_lambda_.1} parent=1 // pred_fallthru
      _
    // Predicated region
    $region134: #{_lambda_.1} parent=1 // pred_check
      _
    $region135: #{_lambda_.1} parent=1 // pred_check_branch
      %172 = sbr.rel (0) target = $region137
    $region136: #{_lambda_.1} parent=1 // pred_region
      _
    $region137: #{_lambda_.1} parent=1 // pred_fallthru
      _
    // Predicated region
    $region138: #{_lambda_.1} parent=1 // pred_check
      _
    $region139: #{_lambda_.1} parent=1 // pred_check_branch
      %174 = sbr.rel (0) target = $region141
    $region140: #{_lambda_.1} parent=1 // pred_region
      _
    $region141: #{_lambda_.1} parent=1 // pred_fallthru
      _
    // Predicated region
    $region142: #{_lambda_.1} parent=1 // pred_check
      _
    $region143: #{_lambda_.1} parent=1 // pred_check_branch
      %176 = sbr.rel (0) target = $region145
    $region144: #{_lambda_.1} parent=1 // pred_region
      _
    $region145: #{_lambda_.1} parent=1 // pred_fallthru
      _
    // Predicated region
    $region146: #{_lambda_.1} parent=1 // pred_check
      _
    $region147: #{_lambda_.1} parent=1 // pred_check_branch
      %178 = sbr.rel (0) target = $region149
    $region148: #{_lambda_.1} parent=1 // pred_region
      _
    $region149: #{_lambda_.1} parent=1 // pred_fallthru
      _
    // Predicated region
    $region150: #{_lambda_.1} parent=1 // pred_check
      _
    $region151: #{_lambda_.1} parent=1 // pred_check_branch
      %180 = sbr.rel (0) target = $region153
    $region152: #{_lambda_.1} parent=1 // pred_region
      _
    $region153: #{_lambda_.1} parent=1 // pred_fallthru
      _
    // Predicated region
    $region154: #{_lambda_.1} parent=1 // pred_check
      _
    $region155: #{_lambda_.1} parent=1 // pred_check_branch
      %182 = sbr.rel (0) target = $region157
    $region156: #{_lambda_.1} parent=1 // pred_region
      _
    $region157: #{_lambda_.1} parent=1 // pred_fallthru
      _
    // Predicated region
    $region158: #{_lambda_.1} parent=1 // pred_check
      _
    $region159: #{_lambda_.1} parent=1 // pred_check_branch
      %184 = sbr.rel (0) target = $region161
    $region160: #{_lambda_.1} parent=1 // pred_region
      _
    $region161: #{_lambda_.1} parent=1 // pred_fallthru
      _
    // Predicated region
    $region162: #{_lambda_.1} parent=1 // pred_check
      _
    $region163: #{_lambda_.1} parent=1 // pred_check_branch
      %186 = sbr.rel (0) target = $region165
    $region164: #{_lambda_.1} parent=1 // pred_region
      %187 = dma.done [#allocation4], 16
    $region165: #{_lambda_.1} parent=1 // pred_fallthru
      _
    // Predicated region
    $region166: #{_lambda_.1} parent=1 // pred_check
      _
    $region167: #{_lambda_.1} parent=1 // pred_check_branch
      %189 = sbr.rel (0) target = $region169
    $region168: #{_lambda_.1} parent=1 // pred_region
      %190 = dma.done [#allocation6], 16
    $region169: #{_lambda_.1} parent=1 // pred_fallthru
      _
    %191 = sfence
    %v192 = vld [vmem:[%s1] sm:$0xff]
    %v193 = vld [vmem:[%s1 + $0x8] sm:$0xff]
    %v194 = vld [vmem:[%s5] sm:$0x1]
    %v195 = vld [vmem:[%s7] sm:$0x1]
    %vm196 = vcmask 261120
    %v197 = vsel %vm196, %v192, 0.0
    %198 = vadd.xlane.f32.xlu0 %v197
    %v199 = vpop.xlane.xlu0 %198
    %v200 = vsel %vm196, %v193, 0.0
    %201 = vadd.xlane.f32.xlu0 %v200
    %v202 = vpop.xlane.xlu0 %201
    %v203 = vrcp.pop 32.0
    %v204 = vmul.f32 %v199, %v203
    %v205 = vmul.f32 %v202, %v203
    %v206 = vsub.f32 %v192, %v204
    %v207 = vsub.f32 %v193, %v205
    %v208 = vmul.f32 %v206, %v206
    %v209 = vmul.f32 %v207, %v207
    %v210 = vsel %vm196, %v208, 0.0
    %211 = vadd.xlane.f32.xlu0 %v210
    %v212 = vpop.xlane.xlu0 %211
    %v213 = vsel %vm196, %v209, 0.0
    %214 = vadd.xlane.f32.xlu0 %v213
    %v215 = vpop.xlane.xlu0 %214
    %v216 = vmul.f32 %v212, 0.032258064
    %v217 = vmul.f32 %v215, 0.032258064
    %v218 = vrsqrt.pop %v216
    %v219 = vmul.f32 %v216, %v218
    %vm220 = vcmp.eq.f32.partialorder %v216, inf
    %v221 = vsel %vm220, %v216, %v219
    %vm222 = vcmp.eq.f32.partialorder %v216, 0.0
    %v223 = vand.u32 %v216, 2147483648
    %v224 = vsel %vm222, %v223, %v221
    %v225 = vrsqrt.pop %v217
    %v226 = vmul.f32 %v217, %v225
    %vm227 = vcmp.eq.f32.partialorder %v217, inf
    %v228 = vsel %vm227, %v217, %v226
    %vm229 = vcmp.eq.f32.partialorder %v217, 0.0
    %v230 = vand.u32 %v217, 2147483648
    %v231 = vsel %vm229, %v230, %v228
    %v232 = vadd.f32 %v224, 1e-06
    %v233 = vadd.f32 %v231, 1e-06
    %v234 = vrcp.pop %v232
    %v235 = vrcp.pop %v233
    %v237 = vlaneseq
    %v238 = vshrl.u32 %v237, 7
    %v239 = vsub.s32 0, %v238
    %v240 = vrot.slane %v194, %v239
    %v242 = vmul.f32 %v240, %v206
    %v243 = vmul.f32 %v240, %v207
    %v244 = vmul.f32 %v242, %v234
    %v245 = vmul.f32 %v243, %v235
    %v247 = vlaneseq
    %v248 = vshrl.u32 %v247, 7
    %v249 = vsub.s32 0, %v248
    %v250 = vrot.slane %v195, %v249
    %v252 = vadd.f32 %v244, %v250
    %v253 = vadd.f32 %v245, %v250
    %v254 = vld [vmem:[%s25] sm:$0xff]
    %v255 = vld [vmem:[%s25 + $0x8] sm:$0xff]
    %v256 = vld [vmem:[%s27] sm:$0x1]
    %v258 = vlaneseq
    %v259 = vshrl.u32 %v258, 7
    %v260 = vsub.s32 0, %v259
    %v261 = vrot.slane %v256, %v260
    %vm263 = vcmask 130048
    %v265 = vsel %vm263, %v252, 0
    %v268 = vsel %vm263, %v253, 0
    %270 = vmatprep.subr.mxu0 0.0
    %271 = vmatpush1.msra.mxu0 %v254
    %272 = vmatprep.subr.mxu0 0.0
    %273 = vmatpush1.msra.mxu0 %v255
    %274 = vmatprep.subr.mxu0 0.0
    %275 = vmatpush1.msra.mxu0 0.0
    %276 = vmatprep.subr.mxu0 0.0
    %277 = vmatpush1.msra.mxu0 0.0
    %278 = vmatprep.subr.mxu0 0.0
    %279 = vmatpush1.msra.mxu0 0.0
    %280 = vmatprep.subr.mxu0 0.0
    %281 = vmatpush1.msra.mxu0 0.0
    %282 = vmatprep.subr.mxu0 0.0
    %283 = vmatpush1.msra.mxu0 0.0
    %284 = vmatprep.subr.mxu0 0.0
    %285 = vmatpush1.msra.mxu0 0.0
    %286 = vmatprep.subr.mxu0 0.0
    %287 = vmatpush1.msra.mxu0 0.0
    %288 = vmatprep.subr.mxu0 0.0
    %289 = vmatpush1.msra.mxu0 0.0
    %290 = vmatprep.subr.mxu0 0.0
    %291 = vmatpush1.msra.mxu0 0.0
    %292 = vmatprep.subr.mxu0 0.0
    %293 = vmatpush1.msra.mxu0 0.0
    %294 = vmatprep.subr.mxu0 0.0
    %295 = vmatpush1.msra.mxu0 0.0
    %296 = vmatprep.subr.mxu0 0.0
    %297 = vmatpush1.msra.mxu0 0.0
    %298 = vmatprep.subr.mxu0 0.0
    %299 = vmatpush1.msra.mxu0 0.0
    %300 = vmatprep.subr.mxu0 0.0
    %301 = vmatpush1.msra.mxu0 0.0
    %302 = vmatprep.subr.mxu0 0.0
    %303 = vmatpush1.msra.mxu0 0.0
    %304 = vmatprep.subr.mxu0 0.0
    %305 = vmatpush1.msra.mxu0 0.0
    %306 = vmatprep.subr.mxu0 0.0
    %307 = vmatpush1.msra.mxu0 0.0
    %308 = vmatprep.subr.mxu0 0.0
    %309 = vmatpush1.msra.mxu0 0.0
    %310 = vmatprep.subr.mxu0 0.0
    %311 = vmatpush1.msra.mxu0 0.0
    %312 = vmatprep.subr.mxu0 0.0
    %313 = vmatpush1.msra.mxu0 0.0
    %314 = vmatprep.subr.mxu0 0.0
    %315 = vmatpush1.msra.mxu0 0.0
    %316 = vmatprep.subr.mxu0 0.0
    %317 = vmatpush1.msra.mxu0 0.0
    %318 = vmatprep.subr.mxu0 0.0
    %319 = vmatpush1.msra.mxu0 0.0
    %320 = vmatprep.subr.mxu0 0.0
    %321 = vmatpush1.msra.mxu0 0.0
    %322 = vmatprep.subr.mxu0 0.0
    %323 = vmatpush1.msra.mxu0 0.0
    %324 = vmatprep.subr.mxu0 0.0
    %325 = vmatpush1.msra.mxu0 0.0
    %326 = vmatprep.subr.mxu0 0.0
    %327 = vmatpush1.msra.mxu0 0.0
    %328 = vmatprep.subr.mxu0 0.0
    %329 = vmatpush1.msra.mxu0 0.0
    %330 = vmatprep.subr.mxu0 0.0
    %331 = vmatpush1.msra.mxu0 0.0
    %332 = vmatprep.subr.mxu0 0.0
    %333 = vmatpush1.msra.mxu0 0.0
    %334 = vmatprep.mubr.f32.mxu0 0.0
    %335 = vmatmul.mubr.f32.gmra.mrb[0].mxu0 %v265
    %v336 = vpop.f32.mrb[0].mxu0
    %v337 = vadd.f32 %v261, %v336
    %v338 = vpop.f32.mrb[0].mxu0
    %339 = vmatprep.mubr.f32.mxu0 0.0
    %340 = vmatmul.mubr.f32.gmra.mrb[0].mxu0 %v268
    %v341 = vpop.f32.mrb[0].mxu0
    %v342 = vadd.f32 %v261, %v341
    %v343 = vpop.f32.mrb[0].mxu0
    %344 = vdwg.mxu0
    %346 = vrot.lane.b32.xlu0 %v337, 112
    %v347 = vpop.permute.xlu0 %346
    %vm348 = vcmask 64512
    %v349 = vsel %vm348, %v337, 0
    %v351 = vsel %vm348, %v347, 0
    %353 = vmatprep.subr.mxu0 0.0
    %354 = vmatpush1.xpose.msra.mxu0 %v351
    %355 = vmatprep.subr.mxu0 0.0
    %356 = vmatpush1.xpose.msra.mxu0 0.0
    %357 = vmatprep.subr.mxu0 0.0
    %358 = vmatpush1.xpose.msra.mxu0 0.0
    %359 = vmatprep.subr.mxu0 0.0
    %360 = vmatpush1.xpose.msra.mxu0 0.0
    %361 = vmatprep.subr.mxu0 0.0
    %362 = vmatpush1.xpose.msra.mxu0 0.0
    %363 = vmatprep.subr.mxu0 0.0
    %364 = vmatpush1.xpose.msra.mxu0 0.0
    %365 = vmatprep.subr.mxu0 0.0
    %366 = vmatpush1.xpose.msra.mxu0 0.0
    %367 = vmatprep.subr.mxu0 0.0
    %368 = vmatpush1.xpose.msra.mxu0 0.0
    %369 = vmatprep.subr.mxu0 0.0
    %370 = vmatpush1.xpose.msra.mxu0 0.0
    %371 = vmatprep.subr.mxu0 0.0
    %372 = vmatpush1.xpose.msra.mxu0 0.0
    %373 = vmatprep.subr.mxu0 0.0
    %374 = vmatpush1.xpose.msra.mxu0 0.0
    %375 = vmatprep.subr.mxu0 0.0
    %376 = vmatpush1.xpose.msra.mxu0 0.0
    %377 = vmatprep.subr.mxu0 0.0
    %378 = vmatpush1.xpose.msra.mxu0 0.0
    %379 = vmatprep.subr.mxu0 0.0
    %380 = vmatpush1.xpose.msra.mxu0 0.0
    %381 = vmatprep.subr.mxu0 0.0
    %382 = vmatpush1.xpose.msra.mxu0 0.0
    %383 = vmatprep.subr.mxu0 0.0
    %384 = vmatpush1.xpose.msra.mxu0 0.0
    %385 = vmatprep.subr.mxu0 0.0
    %386 = vmatpush1.xpose.msra.mxu0 0.0
    %387 = vmatprep.subr.mxu0 0.0
    %388 = vmatpush1.xpose.msra.mxu0 0.0
    %389 = vmatprep.subr.mxu0 0.0
    %390 = vmatpush1.xpose.msra.mxu0 0.0
    %391 = vmatprep.subr.mxu0 0.0
    %392 = vmatpush1.xpose.msra.mxu0 0.0
    %393 = vmatprep.subr.mxu0 0.0
    %394 = vmatpush1.xpose.msra.mxu0 0.0
    %395 = vmatprep.subr.mxu0 0.0
    %396 = vmatpush1.xpose.msra.mxu0 0.0
    %397 = vmatprep.subr.mxu0 0.0
    %398 = vmatpush1.xpose.msra.mxu0 0.0
    %399 = vmatprep.subr.mxu0 0.0
    %400 = vmatpush1.xpose.msra.mxu0 0.0
    %401 = vmatprep.subr.mxu0 0.0
    %402 = vmatpush1.xpose.msra.mxu0 0.0
    %403 = vmatprep.subr.mxu0 0.0
    %404 = vmatpush1.xpose.msra.mxu0 0.0
    %405 = vmatprep.subr.mxu0 0.0
    %406 = vmatpush1.xpose.msra.mxu0 0.0
    %407 = vmatprep.subr.mxu0 0.0
    %408 = vmatpush1.xpose.msra.mxu0 0.0
    %409 = vmatprep.subr.mxu0 0.0
    %410 = vmatpush1.xpose.msra.mxu0 0.0
    %411 = vmatprep.subr.mxu0 0.0
    %412 = vmatpush1.xpose.msra.mxu0 0.0
    %413 = vmatprep.subr.mxu0 0.0
    %414 = vmatpush1.xpose.msra.mxu0 0.0
    %415 = vmatprep.subr.mxu0 0.0
    %416 = vmatpush1.xpose.msra.mxu0 0.0
    %417 = vmatprep.mubr.f32.mxu0 0.0
    %418 = vmatmul.mubr.f32.gmra.mrb[0].mxu0 %v349
    %v419 = vpop.f32.mrb[0].mxu0
    %v420 = vadd.f32 0.0, %v419
    %v421 = vpop.f32.mrb[0].mxu0
    %422 = vdwg.mxu0
    %v423 = vmul.f32 %v420, 0.35355338
    %v424 = vld [vmem:[%s3] sm:$0xff]
    %vm425 = vcmp.eq.f32.partialorder %v424, 0.0
    %v426 = vsel %vm425, -1e+09, %v423
    %v427 = vsel %vm348, %v426, -inf
    %428 = vmax.xlane.f32.xlu0 %v427
    %v429 = vpop.xlane.xlu0 %428
    %v430 = vsub.f32 %v426, %v429
    %v431 = vmul.f32 %v430, 1.442695
    %v432 = vpow.pop %v431
    %v433 = vsel %vm348, %v432, 0.0
    %434 = vadd.xlane.f32.xlu0 %v433
    %v435 = vpop.xlane.xlu0 %434
    %v436 = vrcp.pop %v435
    %v437 = vmul.f32 %v432, %v436
    %438 = vrot.lane.b32.xlu0 %v337, 96
    %v439 = vpop.permute.xlu0 %438
    %v442 = vsel %vm348, %v437, 0
    %444 = vmatprep.subr.mxu0 0.0
    %445 = vmatpush1.msra.mxu0 %v439
    %446 = vmatprep.subr.mxu0 0.0
    %447 = vmatpush1.msra.mxu0 0.0
    %448 = vmatprep.subr.mxu0 0.0
    %449 = vmatpush1.msra.mxu0 0.0
    %450 = vmatprep.subr.mxu0 0.0
    %451 = vmatpush1.msra.mxu0 0.0
    %452 = vmatprep.subr.mxu0 0.0
    %453 = vmatpush1.msra.mxu0 0.0
    %454 = vmatprep.subr.mxu0 0.0
    %455 = vmatpush1.msra.mxu0 0.0
    %456 = vmatprep.subr.mxu0 0.0
    %457 = vmatpush1.msra.mxu0 0.0
    %458 = vmatprep.subr.mxu0 0.0
    %459 = vmatpush1.msra.mxu0 0.0
    %460 = vmatprep.subr.mxu0 0.0
    %461 = vmatpush1.msra.mxu0 0.0
    %462 = vmatprep.subr.mxu0 0.0
    %463 = vmatpush1.msra.mxu0 0.0
    %464 = vmatprep.subr.mxu0 0.0
    %465 = vmatpush1.msra.mxu0 0.0
    %466 = vmatprep.subr.mxu0 0.0
    %467 = vmatpush1.msra.mxu0 0.0
    %468 = vmatprep.subr.mxu0 0.0
    %469 = vmatpush1.msra.mxu0 0.0
    %470 = vmatprep.subr.mxu0 0.0
    %471 = vmatpush1.msra.mxu0 0.0
    %472 = vmatprep.subr.mxu0 0.0
    %473 = vmatpush1.msra.mxu0 0.0
    %474 = vmatprep.subr.mxu0 0.0
    %475 = vmatpush1.msra.mxu0 0.0
    %476 = vmatprep.subr.mxu0 0.0
    %477 = vmatpush1.msra.mxu0 0.0
    %478 = vmatprep.subr.mxu0 0.0
    %479 = vmatpush1.msra.mxu0 0.0
    %480 = vmatprep.subr.mxu0 0.0
    %481 = vmatpush1.msra.mxu0 0.0
    %482 = vmatprep.subr.mxu0 0.0
    %483 = vmatpush1.msra.mxu0 0.0
    %484 = vmatprep.subr.mxu0 0.0
    %485 = vmatpush1.msra.mxu0 0.0
    %486 = vmatprep.subr.mxu0 0.0
    %487 = vmatpush1.msra.mxu0 0.0
    %488 = vmatprep.subr.mxu0 0.0
    %489 = vmatpush1.msra.mxu0 0.0
    %490 = vmatprep.subr.mxu0 0.0
    %491 = vmatpush1.msra.mxu0 0.0
    %492 = vmatprep.subr.mxu0 0.0
    %493 = vmatpush1.msra.mxu0 0.0
    %494 = vmatprep.subr.mxu0 0.0
    %495 = vmatpush1.msra.mxu0 0.0
    %496 = vmatprep.subr.mxu0 0.0
    %497 = vmatpush1.msra.mxu0 0.0
    %498 = vmatprep.subr.mxu0 0.0
    %499 = vmatpush1.msra.mxu0 0.0
    %500 = vmatprep.subr.mxu0 0.0
    %501 = vmatpush1.msra.mxu0 0.0
    %502 = vmatprep.subr.mxu0 0.0
    %503 = vmatpush1.msra.mxu0 0.0
    %504 = vmatprep.subr.mxu0 0.0
    %505 = vmatpush1.msra.mxu0 0.0
    %506 = vmatprep.subr.mxu0 0.0
    %507 = vmatpush1.msra.mxu0 0.0
    %508 = vmatprep.mubr.f32.mxu0 0.0
    %509 = vmatmul.mubr.f32.gmra.mrb[0].mxu0 %v442
    %v510 = vpop.f32.mrb[0].mxu0
    %v511 = vadd.f32 0.0, %v510
    %v512 = vpop.f32.mrb[0].mxu0
    %513 = vdwg.mxu0
    %515 = vrot.lane.b32.xlu0 %v342, 112
    %v516 = vpop.permute.xlu0 %515
    %v517 = vsel %vm348, %v342, 0
    %v519 = vsel %vm348, %v516, 0
    %521 = vmatprep.subr.mxu0 0.0
    %522 = vmatpush1.xpose.msra.mxu0 %v519
    %523 = vmatprep.subr.mxu0 0.0
    %524 = vmatpush1.xpose.msra.mxu0 0.0
    %525 = vmatprep.subr.mxu0 0.0
    %526 = vmatpush1.xpose.msra.mxu0 0.0
    %527 = vmatprep.subr.mxu0 0.0
    %528 = vmatpush1.xpose.msra.mxu0 0.0
    %529 = vmatprep.subr.mxu0 0.0
    %530 = vmatpush1.xpose.msra.mxu0 0.0
    %531 = vmatprep.subr.mxu0 0.0
    %532 = vmatpush1.xpose.msra.mxu0 0.0
    %533 = vmatprep.subr.mxu0 0.0
    %534 = vmatpush1.xpose.msra.mxu0 0.0
    %535 = vmatprep.subr.mxu0 0.0
    %536 = vmatpush1.xpose.msra.mxu0 0.0
    %537 = vmatprep.subr.mxu0 0.0
    %538 = vmatpush1.xpose.msra.mxu0 0.0
    %539 = vmatprep.subr.mxu0 0.0
    %540 = vmatpush1.xpose.msra.mxu0 0.0
    %541 = vmatprep.subr.mxu0 0.0
    %542 = vmatpush1.xpose.msra.mxu0 0.0
    %543 = vmatprep.subr.mxu0 0.0
    %544 = vmatpush1.xpose.msra.mxu0 0.0
    %545 = vmatprep.subr.mxu0 0.0
    %546 = vmatpush1.xpose.msra.mxu0 0.0
    %547 = vmatprep.subr.mxu0 0.0
    %548 = vmatpush1.xpose.msra.mxu0 0.0
    %549 = vmatprep.subr.mxu0 0.0
    %550 = vmatpush1.xpose.msra.mxu0 0.0
    %551 = vmatprep.subr.mxu0 0.0
    %552 = vmatpush1.xpose.msra.mxu0 0.0
    %553 = vmatprep.subr.mxu0 0.0
    %554 = vmatpush1.xpose.msra.mxu0 0.0
    %555 = vmatprep.subr.mxu0 0.0
    %556 = vmatpush1.xpose.msra.mxu0 0.0
    %557 = vmatprep.subr.mxu0 0.0
    %558 = vmatpush1.xpose.msra.mxu0 0.0
    %559 = vmatprep.subr.mxu0 0.0
    %560 = vmatpush1.xpose.msra.mxu0 0.0
    %561 = vmatprep.subr.mxu0 0.0
    %562 = vmatpush1.xpose.msra.mxu0 0.0
    %563 = vmatprep.subr.mxu0 0.0
    %564 = vmatpush1.xpose.msra.mxu0 0.0
    %565 = vmatprep.subr.mxu0 0.0
    %566 = vmatpush1.xpose.msra.mxu0 0.0
    %567 = vmatprep.subr.mxu0 0.0
    %568 = vmatpush1.xpose.msra.mxu0 0.0
    %569 = vmatprep.subr.mxu0 0.0
    %570 = vmatpush1.xpose.msra.mxu0 0.0
    %571 = vmatprep.subr.mxu0 0.0
    %572 = vmatpush1.xpose.msra.mxu0 0.0
    %573 = vmatprep.subr.mxu0 0.0
    %574 = vmatpush1.xpose.msra.mxu0 0.0
    %575 = vmatprep.subr.mxu0 0.0
    %576 = vmatpush1.xpose.msra.mxu0 0.0
    %577 = vmatprep.subr.mxu0 0.0
    %578 = vmatpush1.xpose.msra.mxu0 0.0
    %579 = vmatprep.subr.mxu0 0.0
    %580 = vmatpush1.xpose.msra.mxu0 0.0
    %581 = vmatprep.subr.mxu0 0.0
    %582 = vmatpush1.xpose.msra.mxu0 0.0
    %583 = vmatprep.subr.mxu0 0.0
    %584 = vmatpush1.xpose.msra.mxu0 0.0
    %585 = vmatprep.mubr.f32.mxu0 0.0
    %586 = vmatmul.mubr.f32.gmra.mrb[0].mxu0 %v517
    %v587 = vpop.f32.mrb[0].mxu0
    %v588 = vadd.f32 0.0, %v587
    %v589 = vpop.f32.mrb[0].mxu0
    %590 = vdwg.mxu0
    %v591 = vmul.f32 %v588, 0.35355338
    %s592 = scalar_lea.vmem %s3, 8
    %v593 = vld [vmem:[%s592] sm:$0xff]
    %vm594 = vcmp.eq.f32.partialorder %v593, 0.0
    %v595 = vsel %vm594, -1e+09, %v591
    %v596 = vsel %vm348, %v595, -inf
    %597 = vmax.xlane.f32.xlu0 %v596
    %v598 = vpop.xlane.xlu0 %597
    %v599 = vsub.f32 %v595, %v598
    %v600 = vmul.f32 %v599, 1.442695
    %v601 = vpow.pop %v600
    %v602 = vsel %vm348, %v601, 0.0
    %603 = vadd.xlane.f32.xlu0 %v602
    %v604 = vpop.xlane.xlu0 %603
    %v605 = vrcp.pop %v604
    %v606 = vmul.f32 %v601, %v605
    %607 = vrot.lane.b32.xlu0 %v342, 96
    %v608 = vpop.permute.xlu0 %607
    %v611 = vsel %vm348, %v606, 0
    %613 = vmatprep.subr.mxu0 0.0
    %614 = vmatpush1.msra.mxu0 %v608
    %615 = vmatprep.subr.mxu0 0.0
    %616 = vmatpush1.msra.mxu0 0.0
    %617 = vmatprep.subr.mxu0 0.0
    %618 = vmatpush1.msra.mxu0 0.0
    %619 = vmatprep.subr.mxu0 0.0
    %620 = vmatpush1.msra.mxu0 0.0
    %621 = vmatprep.subr.mxu0 0.0
    %622 = vmatpush1.msra.mxu0 0.0
    %623 = vmatprep.subr.mxu0 0.0
    %624 = vmatpush1.msra.mxu0 0.0
    %625 = vmatprep.subr.mxu0 0.0
    %626 = vmatpush1.msra.mxu0 0.0
    %627 = vmatprep.subr.mxu0 0.0
    %628 = vmatpush1.msra.mxu0 0.0
    %629 = vmatprep.subr.mxu0 0.0
    %630 = vmatpush1.msra.mxu0 0.0
    %631 = vmatprep.subr.mxu0 0.0
    %632 = vmatpush1.msra.mxu0 0.0
    %633 = vmatprep.subr.mxu0 0.0
    %634 = vmatpush1.msra.mxu0 0.0
    %635 = vmatprep.subr.mxu0 0.0
    %636 = vmatpush1.msra.mxu0 0.0
    %637 = vmatprep.subr.mxu0 0.0
    %638 = vmatpush1.msra.mxu0 0.0
    %639 = vmatprep.subr.mxu0 0.0
    %640 = vmatpush1.msra.mxu0 0.0
    %641 = vmatprep.subr.mxu0 0.0
    %642 = vmatpush1.msra.mxu0 0.0
    %643 = vmatprep.subr.mxu0 0.0
    %644 = vmatpush1.msra.mxu0 0.0
    %645 = vmatprep.subr.mxu0 0.0
    %646 = vmatpush1.msra.mxu0 0.0
    %647 = vmatprep.subr.mxu0 0.0
    %648 = vmatpush1.msra.mxu0 0.0
    %649 = vmatprep.subr.mxu0 0.0
    %650 = vmatpush1.msra.mxu0 0.0
    %651 = vmatprep.subr.mxu0 0.0
    %652 = vmatpush1.msra.mxu0 0.0
    %653 = vmatprep.subr.mxu0 0.0
    %654 = vmatpush1.msra.mxu0 0.0
    %655 = vmatprep.subr.mxu0 0.0
    %656 = vmatpush1.msra.mxu0 0.0
    %657 = vmatprep.subr.mxu0 0.0
    %658 = vmatpush1.msra.mxu0 0.0
    %659 = vmatprep.subr.mxu0 0.0
    %660 = vmatpush1.msra.mxu0 0.0
    %661 = vmatprep.subr.mxu0 0.0
    %662 = vmatpush1.msra.mxu0 0.0
    %663 = vmatprep.subr.mxu0 0.0
    %664 = vmatpush1.msra.mxu0 0.0
    %665 = vmatprep.subr.mxu0 0.0
    %666 = vmatpush1.msra.mxu0 0.0
    %667 = vmatprep.subr.mxu0 0.0
    %668 = vmatpush1.msra.mxu0 0.0
    %669 = vmatprep.subr.mxu0 0.0
    %670 = vmatpush1.msra.mxu0 0.0
    %671 = vmatprep.subr.mxu0 0.0
    %672 = vmatpush1.msra.mxu0 0.0
    %673 = vmatprep.subr.mxu0 0.0
    %674 = vmatpush1.msra.mxu0 0.0
    %675 = vmatprep.subr.mxu0 0.0
    %676 = vmatpush1.msra.mxu0 0.0
    %677 = vmatprep.mubr.f32.mxu0 0.0
    %678 = vmatmul.mubr.f32.gmra.mrb[0].mxu0 %v611
    %v679 = vpop.f32.mrb[0].mxu0
    %v680 = vadd.f32 0.0, %v679
    %v681 = vpop.f32.mrb[0].mxu0
    %682 = vdwg.mxu0
    %v683 = vld [vmem:[%s29] sm:$0xff]
    %v684 = vld [vmem:[%s31] sm:$0x1]
    %v686 = vlaneseq
    %v687 = vshrl.u32 %v686, 7
    %v688 = vsub.s32 0, %v687
    %v689 = vrot.slane %v684, %v688
    %v692 = vsel %vm348, %v511, 0
    %v695 = vsel %vm348, %v680, 0
    %697 = vmatprep.subr.mxu0 0.0
    %698 = vmatpush1.msra.mxu0 %v683
    %699 = vmatprep.subr.mxu0 0.0
    %700 = vmatpush1.msra.mxu0 0.0
    %701 = vmatprep.subr.mxu0 0.0
    %702 = vmatpush1.msra.mxu0 0.0
    %703 = vmatprep.subr.mxu0 0.0
    %704 = vmatpush1.msra.mxu0 0.0
    %705 = vmatprep.subr.mxu0 0.0
    %706 = vmatpush1.msra.mxu0 0.0
    %707 = vmatprep.subr.mxu0 0.0
    %708 = vmatpush1.msra.mxu0 0.0
    %709 = vmatprep.subr.mxu0 0.0
    %710 = vmatpush1.msra.mxu0 0.0
    %711 = vmatprep.subr.mxu0 0.0
    %712 = vmatpush1.msra.mxu0 0.0
    %713 = vmatprep.subr.mxu0 0.0
    %714 = vmatpush1.msra.mxu0 0.0
    %715 = vmatprep.subr.mxu0 0.0
    %716 = vmatpush1.msra.mxu0 0.0
    %717 = vmatprep.subr.mxu0 0.0
    %718 = vmatpush1.msra.mxu0 0.0
    %719 = vmatprep.subr.mxu0 0.0
    %720 = vmatpush1.msra.mxu0 0.0
    %721 = vmatprep.subr.mxu0 0.0
    %722 = vmatpush1.msra.mxu0 0.0
    %723 = vmatprep.subr.mxu0 0.0
    %724 = vmatpush1.msra.mxu0 0.0
    %725 = vmatprep.subr.mxu0 0.0
    %726 = vmatpush1.msra.mxu0 0.0
    %727 = vmatprep.subr.mxu0 0.0
    %728 = vmatpush1.msra.mxu0 0.0
    %729 = vmatprep.subr.mxu0 0.0
    %730 = vmatpush1.msra.mxu0 0.0
    %731 = vmatprep.subr.mxu0 0.0
    %732 = vmatpush1.msra.mxu0 0.0
    %733 = vmatprep.subr.mxu0 0.0
    %734 = vmatpush1.msra.mxu0 0.0
    %735 = vmatprep.subr.mxu0 0.0
    %736 = vmatpush1.msra.mxu0 0.0
    %737 = vmatprep.subr.mxu0 0.0
    %738 = vmatpush1.msra.mxu0 0.0
    %739 = vmatprep.subr.mxu0 0.0
    %740 = vmatpush1.msra.mxu0 0.0
    %741 = vmatprep.subr.mxu0 0.0
    %742 = vmatpush1.msra.mxu0 0.0
    %743 = vmatprep.subr.mxu0 0.0
    %744 = vmatpush1.msra.mxu0 0.0
    %745 = vmatprep.subr.mxu0 0.0
    %746 = vmatpush1.msra.mxu0 0.0
    %747 = vmatprep.subr.mxu0 0.0
    %748 = vmatpush1.msra.mxu0 0.0
    %749 = vmatprep.subr.mxu0 0.0
    %750 = vmatpush1.msra.mxu0 0.0
    %751 = vmatprep.subr.mxu0 0.0
    %752 = vmatpush1.msra.mxu0 0.0
    %753 = vmatprep.subr.mxu0 0.0
    %754 = vmatpush1.msra.mxu0 0.0
    %755 = vmatprep.subr.mxu0 0.0
    %756 = vmatpush1.msra.mxu0 0.0
    %757 = vmatprep.subr.mxu0 0.0
    %758 = vmatpush1.msra.mxu0 0.0
    %759 = vmatprep.subr.mxu0 0.0
    %760 = vmatpush1.msra.mxu0 0.0
    %761 = vmatprep.mubr.f32.mxu0 0.0
    %762 = vmatmul.mubr.f32.gmra.mrb[0].mxu0 %v692
    %v763 = vpop.f32.mrb[0].mxu0
    %v764 = vadd.f32 %v689, %v763
    %v765 = vpop.f32.mrb[0].mxu0
    %766 = vmatprep.mubr.f32.mxu0 0.0
    %767 = vmatmul.mubr.f32.gmra.mrb[0].mxu0 %v695
    %v768 = vpop.f32.mrb[0].mxu0
    %v769 = vadd.f32 %v689, %v768
    %v770 = vpop.f32.mrb[0].mxu0
    %771 = vdwg.mxu0
    %v772 = vadd.f32 %v192, %v764
    %v773 = vadd.f32 %v193, %v769
    %s774 = sld [smem:[#allocation2]]
    %v775 = vstv %s774
    %v776 = vmul.f32 %v772, %v775
    %v777 = vmul.f32 %v773, %v775
    %v778 = vadd.f32 %v776, 0.0
    %v779 = vadd.f32 %v777, 0.0
    %780 = vrot.lane.b32.xlu0 %v337, 120
    %v781 = vpop.permute.xlu0 %780
    %782 = vrot.lane.b32.xlu0 %v337, 104
    %v783 = vpop.permute.xlu0 %782
    %v784 = vsel %vm348, %v781, 0
    %v786 = vsel %vm348, %v783, 0
    %788 = vmatprep.subr.mxu0 0.0
    %789 = vmatpush1.xpose.msra.mxu0 %v786
    %790 = vmatprep.subr.mxu0 0.0
    %791 = vmatpush1.xpose.msra.mxu0 0.0
    %792 = vmatprep.subr.mxu0 0.0
    %793 = vmatpush1.xpose.msra.mxu0 0.0
    %794 = vmatprep.subr.mxu0 0.0
    %795 = vmatpush1.xpose.msra.mxu0 0.0
    %796 = vmatprep.subr.mxu0 0.0
    %797 = vmatpush1.xpose.msra.mxu0 0.0
    %798 = vmatprep.subr.mxu0 0.0
    %799 = vmatpush1.xpose.msra.mxu0 0.0
    %800 = vmatprep.subr.mxu0 0.0
    %801 = vmatpush1.xpose.msra.mxu0 0.0
    %802 = vmatprep.subr.mxu0 0.0
    %803 = vmatpush1.xpose.msra.mxu0 0.0
    %804 = vmatprep.subr.mxu0 0.0
    %805 = vmatpush1.xpose.msra.mxu0 0.0
    %806 = vmatprep.subr.mxu0 0.0
    %807 = vmatpush1.xpose.msra.mxu0 0.0
    %808 = vmatprep.subr.mxu0 0.0
    %809 = vmatpush1.xpose.msra.mxu0 0.0
    %810 = vmatprep.subr.mxu0 0.0
    %811 = vmatpush1.xpose.msra.mxu0 0.0
    %812 = vmatprep.subr.mxu0 0.0
    %813 = vmatpush1.xpose.msra.mxu0 0.0
    %814 = vmatprep.subr.mxu0 0.0
    %815 = vmatpush1.xpose.msra.mxu0 0.0
    %816 = vmatprep.subr.mxu0 0.0
    %817 = vmatpush1.xpose.msra.mxu0 0.0
    %818 = vmatprep.subr.mxu0 0.0
    %819 = vmatpush1.xpose.msra.mxu0 0.0
    %820 = vmatprep.subr.mxu0 0.0
    %821 = vmatpush1.xpose.msra.mxu0 0.0
    %822 = vmatprep.subr.mxu0 0.0
    %823 = vmatpush1.xpose.msra.mxu0 0.0
    %824 = vmatprep.subr.mxu0 0.0
    %825 = vmatpush1.xpose.msra.mxu0 0.0
    %826 = vmatprep.subr.mxu0 0.0
    %827 = vmatpush1.xpose.msra.mxu0 0.0
    %828 = vmatprep.subr.mxu0 0.0
    %829 = vmatpush1.xpose.msra.mxu0 0.0
    %830 = vmatprep.subr.mxu0 0.0
    %831 = vmatpush1.xpose.msra.mxu0 0.0
    %832 = vmatprep.subr.mxu0 0.0
    %833 = vmatpush1.xpose.msra.mxu0 0.0
    %834 = vmatprep.subr.mxu0 0.0
    %835 = vmatpush1.xpose.msra.mxu0 0.0
    %836 = vmatprep.subr.mxu0 0.0
    %837 = vmatpush1.xpose.msra.mxu0 0.0
    %838 = vmatprep.subr.mxu0 0.0
    %839 = vmatpush1.xpose.msra.mxu0 0.0
    %840 = vmatprep.subr.mxu0 0.0
    %841 = vmatpush1.xpose.msra.mxu0 0.0
    %842 = vmatprep.subr.mxu0 0.0
    %843 = vmatpush1.xpose.msra.mxu0 0.0
    %844 = vmatprep.subr.mxu0 0.0
    %845 = vmatpush1.xpose.msra.mxu0 0.0
    %846 = vmatprep.subr.mxu0 0.0
    %847 = vmatpush1.xpose.msra.mxu0 0.0
    %848 = vmatprep.subr.mxu0 0.0
    %849 = vmatpush1.xpose.msra.mxu0 0.0
    %850 = vmatprep.subr.mxu0 0.0
    %851 = vmatpush1.xpose.msra.mxu0 0.0
    %852 = vmatprep.mubr.f32.mxu0 0.0
    %853 = vmatmul.mubr.f32.gmra.mrb[0].mxu0 %v784
    %v854 = vpop.f32.mrb[0].mxu0
    %v855 = vadd.f32 0.0, %v854
    %v856 = vpop.f32.mrb[0].mxu0
    %857 = vdwg.mxu0
    %v858 = vmul.f32 %v855, 0.35355338
    %v859 = vsel %vm425, -1e+09, %v858
    %v860 = vsel %vm348, %v859, -inf
    %861 = vmax.xlane.f32.xlu0 %v860
    %v862 = vpop.xlane.xlu0 %861
    %v863 = vsub.f32 %v859, %v862
    %v864 = vmul.f32 %v863, 1.442695
    %v865 = vpow.pop %v864
    %v866 = vsel %vm348, %v865, 0.0
    %867 = vadd.xlane.f32.xlu0 %v866
    %v868 = vpop.xlane.xlu0 %867
    %v869 = vrcp.pop %v868
    %v870 = vmul.f32 %v865, %v869
    %871 = vrot.lane.b32.xlu0 %v337, 88
    %v872 = vpop.permute.xlu0 %871
    %v875 = vsel %vm348, %v870, 0
    %877 = vmatprep.subr.mxu0 0.0
    %878 = vmatpush1.msra.mxu0 %v872
    %879 = vmatprep.subr.mxu0 0.0
    %880 = vmatpush1.msra.mxu0 0.0
    %881 = vmatprep.subr.mxu0 0.0
    %882 = vmatpush1.msra.mxu0 0.0
    %883 = vmatprep.subr.mxu0 0.0
    %884 = vmatpush1.msra.mxu0 0.0
    %885 = vmatprep.subr.mxu0 0.0
    %886 = vmatpush1.msra.mxu0 0.0
    %887 = vmatprep.subr.mxu0 0.0
    %888 = vmatpush1.msra.mxu0 0.0
    %889 = vmatprep.subr.mxu0 0.0
    %890 = vmatpush1.msra.mxu0 0.0
    %891 = vmatprep.subr.mxu0 0.0
    %892 = vmatpush1.msra.mxu0 0.0
    %893 = vmatprep.subr.mxu0 0.0
    %894 = vmatpush1.msra.mxu0 0.0
    %895 = vmatprep.subr.mxu0 0.0
    %896 = vmatpush1.msra.mxu0 0.0
    %897 = vmatprep.subr.mxu0 0.0
    %898 = vmatpush1.msra.mxu0 0.0
    %899 = vmatprep.subr.mxu0 0.0
    %900 = vmatpush1.msra.mxu0 0.0
    %901 = vmatprep.subr.mxu0 0.0
    %902 = vmatpush1.msra.mxu0 0.0
    %903 = vmatprep.subr.mxu0 0.0
    %904 = vmatpush1.msra.mxu0 0.0
    %905 = vmatprep.subr.mxu0 0.0
    %906 = vmatpush1.msra.mxu0 0.0
    %907 = vmatprep.subr.mxu0 0.0
    %908 = vmatpush1.msra.mxu0 0.0
    %909 = vmatprep.subr.mxu0 0.0
    %910 = vmatpush1.msra.mxu0 0.0
    %911 = vmatprep.subr.mxu0 0.0
    %912 = vmatpush1.msra.mxu0 0.0
    %913 = vmatprep.subr.mxu0 0.0
    %914 = vmatpush1.msra.mxu0 0.0
    %915 = vmatprep.subr.mxu0 0.0
    %916 = vmatpush1.msra.mxu0 0.0
    %917 = vmatprep.subr.mxu0 0.0
    %918 = vmatpush1.msra.mxu0 0.0
    %919 = vmatprep.subr.mxu0 0.0
    %920 = vmatpush1.msra.mxu0 0.0
    %921 = vmatprep.subr.mxu0 0.0
    %922 = vmatpush1.msra.mxu0 0.0
    %923 = vmatprep.subr.mxu0 0.0
    %924 = vmatpush1.msra.mxu0 0.0
    %925 = vmatprep.subr.mxu0 0.0
    %926 = vmatpush1.msra.mxu0 0.0
    %927 = vmatprep.subr.mxu0 0.0
    %928 = vmatpush1.msra.mxu0 0.0
    %929 = vmatprep.subr.mxu0 0.0
    %930 = vmatpush1.msra.mxu0 0.0
    %931 = vmatprep.subr.mxu0 0.0
    %932 = vmatpush1.msra.mxu0 0.0
    %933 = vmatprep.subr.mxu0 0.0
    %934 = vmatpush1.msra.mxu0 0.0
    %935 = vmatprep.subr.mxu0 0.0
    %936 = vmatpush1.msra.mxu0 0.0
    %937 = vmatprep.subr.mxu0 0.0
    %938 = vmatpush1.msra.mxu0 0.0
    %939 = vmatprep.subr.mxu0 0.0
    %940 = vmatpush1.msra.mxu0 0.0
    %941 = vmatprep.mubr.f32.mxu0 0.0
    %942 = vmatmul.mubr.f32.gmra.mrb[0].mxu0 %v875
    %v943 = vpop.f32.mrb[0].mxu0
    %v944 = vadd.f32 0.0, %v943
    %v945 = vpop.f32.mrb[0].mxu0
    %946 = vdwg.mxu0
    %947 = vrot.lane.b32.xlu0 %v342, 120
    %v948 = vpop.permute.xlu0 %947
    %949 = vrot.lane.b32.xlu0 %v342, 104
    %v950 = vpop.permute.xlu0 %949
    %v951 = vsel %vm348, %v948, 0
    %v953 = vsel %vm348, %v950, 0
    %955 = vmatprep.subr.mxu0 0.0
    %956 = vmatpush1.xpose.msra.mxu0 %v953
    %957 = vmatprep.subr.mxu0 0.0
    %958 = vmatpush1.xpose.msra.mxu0 0.0
    %959 = vmatprep.subr.mxu0 0.0
    %960 = vmatpush1.xpose.msra.mxu0 0.0
    %961 = vmatprep.subr.mxu0 0.0
    %962 = vmatpush1.xpose.msra.mxu0 0.0
    %963 = vmatprep.subr.mxu0 0.0
    %964 = vmatpush1.xpose.msra.mxu0 0.0
    %965 = vmatprep.subr.mxu0 0.0
    %966 = vmatpush1.xpose.msra.mxu0 0.0
    %967 = vmatprep.subr.mxu0 0.0
    %968 = vmatpush1.xpose.msra.mxu0 0.0
    %969 = vmatprep.subr.mxu0 0.0
    %970 = vmatpush1.xpose.msra.mxu0 0.0
    %971 = vmatprep.subr.mxu0 0.0
    %972 = vmatpush1.xpose.msra.mxu0 0.0
    %973 = vmatprep.subr.mxu0 0.0
    %974 = vmatpush1.xpose.msra.mxu0 0.0
    %975 = vmatprep.subr.mxu0 0.0
    %976 = vmatpush1.xpose.msra.mxu0 0.0
    %977 = vmatprep.subr.mxu0 0.0
    %978 = vmatpush1.xpose.msra.mxu0 0.0
    %979 = vmatprep.subr.mxu0 0.0
    %980 = vmatpush1.xpose.msra.mxu0 0.0
    %981 = vmatprep.subr.mxu0 0.0
    %982 = vmatpush1.xpose.msra.mxu0 0.0
    %983 = vmatprep.subr.mxu0 0.0
    %984 = vmatpush1.xpose.msra.mxu0 0.0
    %985 = vmatprep.subr.mxu0 0.0
    %986 = vmatpush1.xpose.msra.mxu0 0.0
    %987 = vmatprep.subr.mxu0 0.0
    %988 = vmatpush1.xpose.msra.mxu0 0.0
    %989 = vmatprep.subr.mxu0 0.0
    %990 = vmatpush1.xpose.msra.mxu0 0.0
    %991 = vmatprep.subr.mxu0 0.0
    %992 = vmatpush1.xpose.msra.mxu0 0.0
    %993 = vmatprep.subr.mxu0 0.0
    %994 = vmatpush1.xpose.msra.mxu0 0.0
    %995 = vmatprep.subr.mxu0 0.0
    %996 = vmatpush1.xpose.msra.mxu0 0.0
    %997 = vmatprep.subr.mxu0 0.0
    %998 = vmatpush1.xpose.msra.mxu0 0.0
    %999 = vmatprep.subr.mxu0 0.0
    %1000 = vmatpush1.xpose.msra.mxu0 0.0
    %1001 = vmatprep.subr.mxu0 0.0
    %1002 = vmatpush1.xpose.msra.mxu0 0.0
    %1003 = vmatprep.subr.mxu0 0.0
    %1004 = vmatpush1.xpose.msra.mxu0 0.0
    %1005 = vmatprep.subr.mxu0 0.0
    %1006 = vmatpush1.xpose.msra.mxu0 0.0
    %1007 = vmatprep.subr.mxu0 0.0
    %1008 = vmatpush1.xpose.msra.mxu0 0.0
    %1009 = vmatprep.subr.mxu0 0.0
    %1010 = vmatpush1.xpose.msra.mxu0 0.0
    %1011 = vmatprep.subr.mxu0 0.0
    %1012 = vmatpush1.xpose.msra.mxu0 0.0
    %1013 = vmatprep.subr.mxu0 0.0
    %1014 = vmatpush1.xpose.msra.mxu0 0.0
    %1015 = vmatprep.subr.mxu0 0.0
    %1016 = vmatpush1.xpose.msra.mxu0 0.0
    %1017 = vmatprep.subr.mxu0 0.0
    %1018 = vmatpush1.xpose.msra.mxu0 0.0
    %1019 = vmatprep.mubr.f32.mxu0 0.0
    %1020 = vmatmul.mubr.f32.gmra.mrb[0].mxu0 %v951
    %v1021 = vpop.f32.mrb[0].mxu0
    %v1022 = vadd.f32 0.0, %v1021
    %v1023 = vpop.f32.mrb[0].mxu0
    %1024 = vdwg.mxu0
    %v1025 = vmul.f32 %v1022, 0.35355338
    %v1026 = vsel %vm594, -1e+09, %v1025
    %v1027 = vsel %vm348, %v1026, -inf
    %1028 = vmax.xlane.f32.xlu0 %v1027
    %v1029 = vpop.xlane.xlu0 %1028
    %v1030 = vsub.f32 %v1026, %v1029
    %v1031 = vmul.f32 %v1030, 1.442695
    %v1032 = vpow.pop %v1031
    %v1033 = vsel %vm348, %v1032, 0.0
    %1034 = vadd.xlane.f32.xlu0 %v1033
    %v1035 = vpop.xlane.xlu0 %1034
    %v1036 = vrcp.pop %v1035
    %v1037 = vmul.f32 %v1032, %v1036
    %1038 = vrot.lane.b32.xlu0 %v342, 88
    %v1039 = vpop.permute.xlu0 %1038
    %v1042 = vsel %vm348, %v1037, 0
    %1044 = vmatprep.subr.mxu0 0.0
    %1045 = vmatpush1.msra.mxu0 %v1039
    %1046 = vmatprep.subr.mxu0 0.0
    %1047 = vmatpush1.msra.mxu0 0.0
    %1048 = vmatprep.subr.mxu0 0.0
    %1049 = vmatpush1.msra.mxu0 0.0
    %1050 = vmatprep.subr.mxu0 0.0
    %1051 = vmatpush1.msra.mxu0 0.0
    %1052 = vmatprep.subr.mxu0 0.0
    %1053 = vmatpush1.msra.mxu0 0.0
    %1054 = vmatprep.subr.mxu0 0.0
    %1055 = vmatpush1.msra.mxu0 0.0
    %1056 = vmatprep.subr.mxu0 0.0
    %1057 = vmatpush1.msra.mxu0 0.0
    %1058 = vmatprep.subr.mxu0 0.0
    %1059 = vmatpush1.msra.mxu0 0.0
    %1060 = vmatprep.subr.mxu0 0.0
    %1061 = vmatpush1.msra.mxu0 0.0
    %1062 = vmatprep.subr.mxu0 0.0
    %1063 = vmatpush1.msra.mxu0 0.0
    %1064 = vmatprep.subr.mxu0 0.0
    %1065 = vmatpush1.msra.mxu0 0.0
    %1066 = vmatprep.subr.mxu0 0.0
    %1067 = vmatpush1.msra.mxu0 0.0
    %1068 = vmatprep.subr.mxu0 0.0
    %1069 = vmatpush1.msra.mxu0 0.0
    %1070 = vmatprep.subr.mxu0 0.0
    %1071 = vmatpush1.msra.mxu0 0.0
    %1072 = vmatprep.subr.mxu0 0.0
    %1073 = vmatpush1.msra.mxu0 0.0
    %1074 = vmatprep.subr.mxu0 0.0
    %1075 = vmatpush1.msra.mxu0 0.0
    %1076 = vmatprep.subr.mxu0 0.0
    %1077 = vmatpush1.msra.mxu0 0.0
    %1078 = vmatprep.subr.mxu0 0.0
    %1079 = vmatpush1.msra.mxu0 0.0
    %1080 = vmatprep.subr.mxu0 0.0
    %1081 = vmatpush1.msra.mxu0 0.0
    %1082 = vmatprep.subr.mxu0 0.0
    %1083 = vmatpush1.msra.mxu0 0.0
    %1084 = vmatprep.subr.mxu0 0.0
    %1085 = vmatpush1.msra.mxu0 0.0
    %1086 = vmatprep.subr.mxu0 0.0
    %1087 = vmatpush1.msra.mxu0 0.0
    %1088 = vmatprep.subr.mxu0 0.0
    %1089 = vmatpush1.msra.mxu0 0.0
    %1090 = vmatprep.subr.mxu0 0.0
    %1091 = vmatpush1.msra.mxu0 0.0
    %1092 = vmatprep.subr.mxu0 0.0
    %1093 = vmatpush1.msra.mxu0 0.0
    %1094 = vmatprep.subr.mxu0 0.0
    %1095 = vmatpush1.msra.mxu0 0.0
    %1096 = vmatprep.subr.mxu0 0.0
    %1097 = vmatpush1.msra.mxu0 0.0
    %1098 = vmatprep.subr.mxu0 0.0
    %1099 = vmatpush1.msra.mxu0 0.0
    %1100 = vmatprep.subr.mxu0 0.0
    %1101 = vmatpush1.msra.mxu0 0.0
    %1102 = vmatprep.subr.mxu0 0.0
    %1103 = vmatpush1.msra.mxu0 0.0
    %1104 = vmatprep.subr.mxu0 0.0
    %1105 = vmatpush1.msra.mxu0 0.0
    %1106 = vmatprep.subr.mxu0 0.0
    %1107 = vmatpush1.msra.mxu0 0.0
    %1108 = vmatprep.mubr.f32.mxu0 0.0
    %1109 = vmatmul.mubr.f32.gmra.mrb[0].mxu0 %v1042
    %v1110 = vpop.f32.mrb[0].mxu0
    %v1111 = vadd.f32 0.0, %v1110
    %v1112 = vpop.f32.mrb[0].mxu0
    %1113 = vdwg.mxu0
    %s1114 = scalar_lea.vmem %s29, 8
    %v1115 = vld [vmem:[%s1114] sm:$0xff]
    %s1116 = scalar_lea.vmem %s31, 1
    %v1117 = vld [vmem:[%s1116] sm:$0x1]
    %v1119 = vlaneseq
    %v1120 = vshrl.u32 %v1119, 7
    %v1121 = vsub.s32 0, %v1120
    %v1122 = vrot.slane %v1117, %v1121
    %v1125 = vsel %vm348, %v944, 0
    %v1128 = vsel %vm348, %v1111, 0
    %1130 = vmatprep.subr.mxu0 0.0
    %1131 = vmatpush1.msra.mxu0 %v1115
    %1132 = vmatprep.subr.mxu0 0.0
    %1133 = vmatpush1.msra.mxu0 0.0
    %1134 = vmatprep.subr.mxu0 0.0
    %1135 = vmatpush1.msra.mxu0 0.0
    %1136 = vmatprep.subr.mxu0 0.0
    %1137 = vmatpush1.msra.mxu0 0.0
    %1138 = vmatprep.subr.mxu0 0.0
    %1139 = vmatpush1.msra.mxu0 0.0
    %1140 = vmatprep.subr.mxu0 0.0
    %1141 = vmatpush1.msra.mxu0 0.0
    %1142 = vmatprep.subr.mxu0 0.0
    %1143 = vmatpush1.msra.mxu0 0.0
    %1144 = vmatprep.subr.mxu0 0.0
    %1145 = vmatpush1.msra.mxu0 0.0
    %1146 = vmatprep.subr.mxu0 0.0
    %1147 = vmatpush1.msra.mxu0 0.0
    %1148 = vmatprep.subr.mxu0 0.0
    %1149 = vmatpush1.msra.mxu0 0.0
    %1150 = vmatprep.subr.mxu0 0.0
    %1151 = vmatpush1.msra.mxu0 0.0
    %1152 = vmatprep.subr.mxu0 0.0
    %1153 = vmatpush1.msra.mxu0 0.0
    %1154 = vmatprep.subr.mxu0 0.0
    %1155 = vmatpush1.msra.mxu0 0.0
    %1156 = vmatprep.subr.mxu0 0.0
    %1157 = vmatpush1.msra.mxu0 0.0
    %1158 = vmatprep.subr.mxu0 0.0
    %1159 = vmatpush1.msra.mxu0 0.0
    %1160 = vmatprep.subr.mxu0 0.0
    %1161 = vmatpush1.msra.mxu0 0.0
    %1162 = vmatprep.subr.mxu0 0.0
    %1163 = vmatpush1.msra.mxu0 0.0
    %1164 = vmatprep.subr.mxu0 0.0
    %1165 = vmatpush1.msra.mxu0 0.0
    %1166 = vmatprep.subr.mxu0 0.0
    %1167 = vmatpush1.msra.mxu0 0.0
    %1168 = vmatprep.subr.mxu0 0.0
    %1169 = vmatpush1.msra.mxu0 0.0
    %1170 = vmatprep.subr.mxu0 0.0
    %1171 = vmatpush1.msra.mxu0 0.0
    %1172 = vmatprep.subr.mxu0 0.0
    %1173 = vmatpush1.msra.mxu0 0.0
    %1174 = vmatprep.subr.mxu0 0.0
    %1175 = vmatpush1.msra.mxu0 0.0
    %1176 = vmatprep.subr.mxu0 0.0
    %1177 = vmatpush1.msra.mxu0 0.0
    %1178 = vmatprep.subr.mxu0 0.0
    %1179 = vmatpush1.msra.mxu0 0.0
    %1180 = vmatprep.subr.mxu0 0.0
    %1181 = vmatpush1.msra.mxu0 0.0
    %1182 = vmatprep.subr.mxu0 0.0
    %1183 = vmatpush1.msra.mxu0 0.0
    %1184 = vmatprep.subr.mxu0 0.0
    %1185 = vmatpush1.msra.mxu0 0.0
    %1186 = vmatprep.subr.mxu0 0.0
    %1187 = vmatpush1.msra.mxu0 0.0
    %1188 = vmatprep.subr.mxu0 0.0
    %1189 = vmatpush1.msra.mxu0 0.0
    %1190 = vmatprep.subr.mxu0 0.0
    %1191 = vmatpush1.msra.mxu0 0.0
    %1192 = vmatprep.subr.mxu0 0.0
    %1193 = vmatpush1.msra.mxu0 0.0
    %1194 = vmatprep.mubr.f32.mxu0 0.0
    %1195 = vmatmul.mubr.f32.gmra.mrb[0].mxu0 %v1125
    %v1196 = vpop.f32.mrb[0].mxu0
    %v1197 = vadd.f32 %v1122, %v1196
    %v1198 = vpop.f32.mrb[0].mxu0
    %1199 = vmatprep.mubr.f32.mxu0 0.0
    %1200 = vmatmul.mubr.f32.gmra.mrb[0].mxu0 %v1128
    %v1201 = vpop.f32.mrb[0].mxu0
    %v1202 = vadd.f32 %v1122, %v1201
    %v1203 = vpop.f32.mrb[0].mxu0
    %1204 = vdwg.mxu0
    %v1205 = vadd.f32 %v772, %v1197
    %v1206 = vadd.f32 %v773, %v1202
    %s1207 = sld [smem:[#allocation2 + $0x4]]
    %v1208 = vstv %s1207
    %v1209 = vmul.f32 %v1205, %v1208
    %v1210 = vmul.f32 %v1206, %v1208
    %v1211 = vadd.f32 %v778, %v1209
    %v1212 = vadd.f32 %v779, %v1210
    %v1213 = vld [vmem:[%s33] sm:$0xff]
    %v1214 = vld [vmem:[%s35] sm:$0x1]
    %v1216 = vlaneseq
    %v1217 = vshrl.u32 %v1216, 7
    %v1218 = vsub.s32 0, %v1217
    %v1219 = vrot.slane %v1214, %v1218
    %1221 = vrot.lane.b32.xlu0 %v252, 112
    %v1222 = vpop.permute.xlu0 %1221
    %1223 = vrot.lane.b32.xlu0 %v253, 112
    %v1224 = vpop.permute.xlu0 %1223
    %v1225 = vsel %vm348, %v1222, 0
    %v1227 = vsel %vm348, %v1224, 0
    %1229 = vmatprep.subr.mxu0 0.0
    %1230 = vmatpush1.msra.mxu0 %v1213
    %1231 = vmatprep.subr.mxu0 0.0
    %1232 = vmatpush1.msra.mxu0 0.0
    %1233 = vmatprep.subr.mxu0 0.0
    %1234 = vmatpush1.msra.mxu0 0.0
    %1235 = vmatprep.subr.mxu0 0.0
    %1236 = vmatpush1.msra.mxu0 0.0
    %1237 = vmatprep.subr.mxu0 0.0
    %1238 = vmatpush1.msra.mxu0 0.0
    %1239 = vmatprep.subr.mxu0 0.0
    %1240 = vmatpush1.msra.mxu0 0.0
    %1241 = vmatprep.subr.mxu0 0.0
    %1242 = vmatpush1.msra.mxu0 0.0
    %1243 = vmatprep.subr.mxu0 0.0
    %1244 = vmatpush1.msra.mxu0 0.0
    %1245 = vmatprep.subr.mxu0 0.0
    %1246 = vmatpush1.msra.mxu0 0.0
    %1247 = vmatprep.subr.mxu0 0.0
    %1248 = vmatpush1.msra.mxu0 0.0
    %1249 = vmatprep.subr.mxu0 0.0
    %1250 = vmatpush1.msra.mxu0 0.0
    %1251 = vmatprep.subr.mxu0 0.0
    %1252 = vmatpush1.msra.mxu0 0.0
    %1253 = vmatprep.subr.mxu0 0.0
    %1254 = vmatpush1.msra.mxu0 0.0
    %1255 = vmatprep.subr.mxu0 0.0
    %1256 = vmatpush1.msra.mxu0 0.0
    %1257 = vmatprep.subr.mxu0 0.0
    %1258 = vmatpush1.msra.mxu0 0.0
    %1259 = vmatprep.subr.mxu0 0.0
    %1260 = vmatpush1.msra.mxu0 0.0
    %1261 = vmatprep.subr.mxu0 0.0
    %1262 = vmatpush1.msra.mxu0 0.0
    %1263 = vmatprep.subr.mxu0 0.0
    %1264 = vmatpush1.msra.mxu0 0.0
    %1265 = vmatprep.subr.mxu0 0.0
    %1266 = vmatpush1.msra.mxu0 0.0
    %1267 = vmatprep.subr.mxu0 0.0
    %1268 = vmatpush1.msra.mxu0 0.0
    %1269 = vmatprep.subr.mxu0 0.0
    %1270 = vmatpush1.msra.mxu0 0.0
    %1271 = vmatprep.subr.mxu0 0.0
    %1272 = vmatpush1.msra.mxu0 0.0
    %1273 = vmatprep.subr.mxu0 0.0
    %1274 = vmatpush1.msra.mxu0 0.0
    %1275 = vmatprep.subr.mxu0 0.0
    %1276 = vmatpush1.msra.mxu0 0.0
    %1277 = vmatprep.subr.mxu0 0.0
    %1278 = vmatpush1.msra.mxu0 0.0
    %1279 = vmatprep.subr.mxu0 0.0
    %1280 = vmatpush1.msra.mxu0 0.0
    %1281 = vmatprep.subr.mxu0 0.0
    %1282 = vmatpush1.msra.mxu0 0.0
    %1283 = vmatprep.subr.mxu0 0.0
    %1284 = vmatpush1.msra.mxu0 0.0
    %1285 = vmatprep.subr.mxu0 0.0
    %1286 = vmatpush1.msra.mxu0 0.0
    %1287 = vmatprep.subr.mxu0 0.0
    %1288 = vmatpush1.msra.mxu0 0.0
    %1289 = vmatprep.subr.mxu0 0.0
    %1290 = vmatpush1.msra.mxu0 0.0
    %1291 = vmatprep.subr.mxu0 0.0
    %1292 = vmatpush1.msra.mxu0 0.0
    %1293 = vmatprep.mubr.f32.mxu0 0.0
    %1294 = vmatmul.mubr.f32.gmra.mrb[0].mxu0 %v1225
    %v1295 = vpop.f32.mrb[0].mxu0
    %v1296 = vadd.f32 %v1219, %v1295
    %v1297 = vpop.f32.mrb[0].mxu0
    %1298 = vmatprep.mubr.f32.mxu0 0.0
    %1299 = vmatmul.mubr.f32.gmra.mrb[0].mxu0 %v1227
    %v1300 = vpop.f32.mrb[0].mxu0
    %v1301 = vadd.f32 %v1219, %v1300
    %v1302 = vpop.f32.mrb[0].mxu0
    %1303 = vdwg.mxu0
    %1305 = vrot.lane.b32.xlu0 %v1296, 120
    %v1306 = vpop.permute.xlu0 %1305
    %vm1307 = vcmask 31744
    %v1308 = vsel %vm1307, %v1296, 0
    %v1310 = vsel %vm1307, %v1306, 0
    %1312 = vmatprep.subr.mxu0 0.0
    %1313 = vmatpush1.xpose.msra.mxu0 %v1310
    %1314 = vmatprep.subr.mxu0 0.0
    %1315 = vmatpush1.xpose.msra.mxu0 0.0
    %1316 = vmatprep.subr.mxu0 0.0
    %1317 = vmatpush1.xpose.msra.mxu0 0.0
    %1318 = vmatprep.subr.mxu0 0.0
    %1319 = vmatpush1.xpose.msra.mxu0 0.0
    %1320 = vmatprep.subr.mxu0 0.0
    %1321 = vmatpush1.xpose.msra.mxu0 0.0
    %1322 = vmatprep.subr.mxu0 0.0
    %1323 = vmatpush1.xpose.msra.mxu0 0.0
    %1324 = vmatprep.subr.mxu0 0.0
    %1325 = vmatpush1.xpose.msra.mxu0 0.0
    %1326 = vmatprep.subr.mxu0 0.0
    %1327 = vmatpush1.xpose.msra.mxu0 0.0
    %1328 = vmatprep.subr.mxu0 0.0
    %1329 = vmatpush1.xpose.msra.mxu0 0.0
    %1330 = vmatprep.subr.mxu0 0.0
    %1331 = vmatpush1.xpose.msra.mxu0 0.0
    %1332 = vmatprep.subr.mxu0 0.0
    %1333 = vmatpush1.xpose.msra.mxu0 0.0
    %1334 = vmatprep.subr.mxu0 0.0
    %1335 = vmatpush1.xpose.msra.mxu0 0.0
    %1336 = vmatprep.subr.mxu0 0.0
    %1337 = vmatpush1.xpose.msra.mxu0 0.0
    %1338 = vmatprep.subr.mxu0 0.0
    %1339 = vmatpush1.xpose.msra.mxu0 0.0
    %1340 = vmatprep.subr.mxu0 0.0
    %1341 = vmatpush1.xpose.msra.mxu0 0.0
    %1342 = vmatprep.subr.mxu0 0.0
    %1343 = vmatpush1.xpose.msra.mxu0 0.0
    %1344 = vmatprep.subr.mxu0 0.0
    %1345 = vmatpush1.xpose.msra.mxu0 0.0
    %1346 = vmatprep.subr.mxu0 0.0
    %1347 = vmatpush1.xpose.msra.mxu0 0.0
    %1348 = vmatprep.subr.mxu0 0.0
    %1349 = vmatpush1.xpose.msra.mxu0 0.0
    %1350 = vmatprep.subr.mxu0 0.0
    %1351 = vmatpush1.xpose.msra.mxu0 0.0
    %1352 = vmatprep.subr.mxu0 0.0
    %1353 = vmatpush1.xpose.msra.mxu0 0.0
    %1354 = vmatprep.subr.mxu0 0.0
    %1355 = vmatpush1.xpose.msra.mxu0 0.0
    %1356 = vmatprep.subr.mxu0 0.0
    %1357 = vmatpush1.xpose.msra.mxu0 0.0
    %1358 = vmatprep.subr.mxu0 0.0
    %1359 = vmatpush1.xpose.msra.mxu0 0.0
    %1360 = vmatprep.subr.mxu0 0.0
    %1361 = vmatpush1.xpose.msra.mxu0 0.0
    %1362 = vmatprep.subr.mxu0 0.0
    %1363 = vmatpush1.xpose.msra.mxu0 0.0
    %1364 = vmatprep.subr.mxu0 0.0
    %1365 = vmatpush1.xpose.msra.mxu0 0.0
    %1366 = vmatprep.subr.mxu0 0.0
    %1367 = vmatpush1.xpose.msra.mxu0 0.0
    %1368 = vmatprep.subr.mxu0 0.0
    %1369 = vmatpush1.xpose.msra.mxu0 0.0
    %1370 = vmatprep.subr.mxu0 0.0
    %1371 = vmatpush1.xpose.msra.mxu0 0.0
    %1372 = vmatprep.subr.mxu0 0.0
    %1373 = vmatpush1.xpose.msra.mxu0 0.0
    %1374 = vmatprep.subr.mxu0 0.0
    %1375 = vmatpush1.xpose.msra.mxu0 0.0
    %1376 = vmatprep.mubr.f32.mxu0 0.0
    %1377 = vmatmul.mubr.f32.gmra.mrb[0].mxu0 %v1308
    %v1378 = vpop.f32.mrb[0].mxu0
    %v1379 = vadd.f32 0.0, %v1378
    %v1380 = vpop.f32.mrb[0].mxu0
    %1381 = vdwg.mxu0
    %v1382 = vmul.f32 %v1379, 0.5
    %s1383 = scalar_lea.vmem %s3, 16
    %v1384 = vld [vmem:[%s1383] sm:$0xff]
    %vm1385 = vcmp.eq.f32.partialorder %v1384, 0.0
    %v1386 = vsel %vm1385, -1e+09, %v1382
    %v1387 = vsel %vm348, %v1386, -inf
    %1388 = vmax.xlane.f32.xlu0 %v1387
    %v1389 = vpop.xlane.xlu0 %1388
    %v1390 = vsub.f32 %v1386, %v1389
    %v1391 = vmul.f32 %v1390, 1.442695
    %v1392 = vpow.pop %v1391
    %v1393 = vsel %vm348, %v1392, 0.0
    %1394 = vadd.xlane.f32.xlu0 %v1393
    %v1395 = vpop.xlane.xlu0 %1394
    %v1396 = vrcp.pop %v1395
    %v1397 = vmul.f32 %v1392, %v1396
    %1398 = vrot.lane.b32.xlu0 %v1296, 112
    %v1399 = vpop.permute.xlu0 %1398
    %v1402 = vsel %vm348, %v1397, 0
    %1404 = vmatprep.subr.mxu0 0.0
    %1405 = vmatpush1.msra.mxu0 %v1399
    %1406 = vmatprep.subr.mxu0 0.0
    %1407 = vmatpush1.msra.mxu0 0.0
    %1408 = vmatprep.subr.mxu0 0.0
    %1409 = vmatpush1.msra.mxu0 0.0
    %1410 = vmatprep.subr.mxu0 0.0
    %1411 = vmatpush1.msra.mxu0 0.0
    %1412 = vmatprep.subr.mxu0 0.0
    %1413 = vmatpush1.msra.mxu0 0.0
    %1414 = vmatprep.subr.mxu0 0.0
    %1415 = vmatpush1.msra.mxu0 0.0
    %1416 = vmatprep.subr.mxu0 0.0
    %1417 = vmatpush1.msra.mxu0 0.0
    %1418 = vmatprep.subr.mxu0 0.0
    %1419 = vmatpush1.msra.mxu0 0.0
    %1420 = vmatprep.subr.mxu0 0.0
    %1421 = vmatpush1.msra.mxu0 0.0
    %1422 = vmatprep.subr.mxu0 0.0
    %1423 = vmatpush1.msra.mxu0 0.0
    %1424 = vmatprep.subr.mxu0 0.0
    %1425 = vmatpush1.msra.mxu0 0.0
    %1426 = vmatprep.subr.mxu0 0.0
    %1427 = vmatpush1.msra.mxu0 0.0
    %1428 = vmatprep.subr.mxu0 0.0
    %1429 = vmatpush1.msra.mxu0 0.0
    %1430 = vmatprep.subr.mxu0 0.0
    %1431 = vmatpush1.msra.mxu0 0.0
    %1432 = vmatprep.subr.mxu0 0.0
    %1433 = vmatpush1.msra.mxu0 0.0
    %1434 = vmatprep.subr.mxu0 0.0
    %1435 = vmatpush1.msra.mxu0 0.0
    %1436 = vmatprep.subr.mxu0 0.0
    %1437 = vmatpush1.msra.mxu0 0.0
    %1438 = vmatprep.subr.mxu0 0.0
    %1439 = vmatpush1.msra.mxu0 0.0
    %1440 = vmatprep.subr.mxu0 0.0
    %1441 = vmatpush1.msra.mxu0 0.0
    %1442 = vmatprep.subr.mxu0 0.0
    %1443 = vmatpush1.msra.mxu0 0.0
    %1444 = vmatprep.subr.mxu0 0.0
    %1445 = vmatpush1.msra.mxu0 0.0
    %1446 = vmatprep.subr.mxu0 0.0
    %1447 = vmatpush1.msra.mxu0 0.0
    %1448 = vmatprep.subr.mxu0 0.0
    %1449 = vmatpush1.msra.mxu0 0.0
    %1450 = vmatprep.subr.mxu0 0.0
    %1451 = vmatpush1.msra.mxu0 0.0
    %1452 = vmatprep.subr.mxu0 0.0
    %1453 = vmatpush1.msra.mxu0 0.0
    %1454 = vmatprep.subr.mxu0 0.0
    %1455 = vmatpush1.msra.mxu0 0.0
    %1456 = vmatprep.subr.mxu0 0.0
    %1457 = vmatpush1.msra.mxu0 0.0
    %1458 = vmatprep.subr.mxu0 0.0
    %1459 = vmatpush1.msra.mxu0 0.0
    %1460 = vmatprep.subr.mxu0 0.0
    %1461 = vmatpush1.msra.mxu0 0.0
    %1462 = vmatprep.subr.mxu0 0.0
    %1463 = vmatpush1.msra.mxu0 0.0
    %1464 = vmatprep.subr.mxu0 0.0
    %1465 = vmatpush1.msra.mxu0 0.0
    %1466 = vmatprep.subr.mxu0 0.0
    %1467 = vmatpush1.msra.mxu0 0.0
    %1468 = vmatprep.mubr.f32.mxu0 0.0
    %1469 = vmatmul.mubr.f32.gmra.mrb[0].mxu0 %v1402
    %v1470 = vpop.f32.mrb[0].mxu0
    %v1471 = vadd.f32 0.0, %v1470
    %v1472 = vpop.f32.mrb[0].mxu0
    %1473 = vdwg.mxu0
    %1475 = vrot.lane.b32.xlu0 %v1301, 120
    %v1476 = vpop.permute.xlu0 %1475
    %v1477 = vsel %vm1307, %v1301, 0
    %v1479 = vsel %vm1307, %v1476, 0
    %1481 = vmatprep.subr.mxu0 0.0
    %1482 = vmatpush1.xpose.msra.mxu0 %v1479
    %1483 = vmatprep.subr.mxu0 0.0
    %1484 = vmatpush1.xpose.msra.mxu0 0.0
    %1485 = vmatprep.subr.mxu0 0.0
    %1486 = vmatpush1.xpose.msra.mxu0 0.0
    %1487 = vmatprep.subr.mxu0 0.0
    %1488 = vmatpush1.xpose.msra.mxu0 0.0
    %1489 = vmatprep.subr.mxu0 0.0
    %1490 = vmatpush1.xpose.msra.mxu0 0.0
    %1491 = vmatprep.subr.mxu0 0.0
    %1492 = vmatpush1.xpose.msra.mxu0 0.0
    %1493 = vmatprep.subr.mxu0 0.0
    %1494 = vmatpush1.xpose.msra.mxu0 0.0
    %1495 = vmatprep.subr.mxu0 0.0
    %1496 = vmatpush1.xpose.msra.mxu0 0.0
    %1497 = vmatprep.subr.mxu0 0.0
    %1498 = vmatpush1.xpose.msra.mxu0 0.0
    %1499 = vmatprep.subr.mxu0 0.0
    %1500 = vmatpush1.xpose.msra.mxu0 0.0
    %1501 = vmatprep.subr.mxu0 0.0
    %1502 = vmatpush1.xpose.msra.mxu0 0.0
    %1503 = vmatprep.subr.mxu0 0.0
    %1504 = vmatpush1.xpose.msra.mxu0 0.0
    %1505 = vmatprep.subr.mxu0 0.0
    %1506 = vmatpush1.xpose.msra.mxu0 0.0
    %1507 = vmatprep.subr.mxu0 0.0
    %1508 = vmatpush1.xpose.msra.mxu0 0.0
    %1509 = vmatprep.subr.mxu0 0.0
    %1510 = vmatpush1.xpose.msra.mxu0 0.0
    %1511 = vmatprep.subr.mxu0 0.0
    %1512 = vmatpush1.xpose.msra.mxu0 0.0
    %1513 = vmatprep.subr.mxu0 0.0
    %1514 = vmatpush1.xpose.msra.mxu0 0.0
    %1515 = vmatprep.subr.mxu0 0.0
    %1516 = vmatpush1.xpose.msra.mxu0 0.0
    %1517 = vmatprep.subr.mxu0 0.0
    %1518 = vmatpush1.xpose.msra.mxu0 0.0
    %1519 = vmatprep.subr.mxu0 0.0
    %1520 = vmatpush1.xpose.msra.mxu0 0.0
    %1521 = vmatprep.subr.mxu0 0.0
    %1522 = vmatpush1.xpose.msra.mxu0 0.0
    %1523 = vmatprep.subr.mxu0 0.0
    %1524 = vmatpush1.xpose.msra.mxu0 0.0
    %1525 = vmatprep.subr.mxu0 0.0
    %1526 = vmatpush1.xpose.msra.mxu0 0.0
    %1527 = vmatprep.subr.mxu0 0.0
    %1528 = vmatpush1.xpose.msra.mxu0 0.0
    %1529 = vmatprep.subr.mxu0 0.0
    %1530 = vmatpush1.xpose.msra.mxu0 0.0
    %1531 = vmatprep.subr.mxu0 0.0
    %1532 = vmatpush1.xpose.msra.mxu0 0.0
    %1533 = vmatprep.subr.mxu0 0.0
    %1534 = vmatpush1.xpose.msra.mxu0 0.0
    %1535 = vmatprep.subr.mxu0 0.0
    %1536 = vmatpush1.xpose.msra.mxu0 0.0
    %1537 = vmatprep.subr.mxu0 0.0
    %1538 = vmatpush1.xpose.msra.mxu0 0.0
    %1539 = vmatprep.subr.mxu0 0.0
    %1540 = vmatpush1.xpose.msra.mxu0 0.0
    %1541 = vmatprep.subr.mxu0 0.0
    %1542 = vmatpush1.xpose.msra.mxu0 0.0
    %1543 = vmatprep.subr.mxu0 0.0
    %1544 = vmatpush1.xpose.msra.mxu0 0.0
    %1545 = vmatprep.mubr.f32.mxu0 0.0
    %1546 = vmatmul.mubr.f32.gmra.mrb[0].mxu0 %v1477
    %v1547 = vpop.f32.mrb[0].mxu0
    %v1548 = vadd.f32 0.0, %v1547
    %v1549 = vpop.f32.mrb[0].mxu0
    %1550 = vdwg.mxu0
    %v1551 = vmul.f32 %v1548, 0.5
    %s1552 = scalar_lea.vmem %s3, 24
    %v1553 = vld [vmem:[%s1552] sm:$0xff]
    %vm1554 = vcmp.eq.f32.partialorder %v1553, 0.0
    %v1555 = vsel %vm1554, -1e+09, %v1551
    %v1556 = vsel %vm348, %v1555, -inf
    %1557 = vmax.xlane.f32.xlu0 %v1556
    %v1558 = vpop.xlane.xlu0 %1557
    %v1559 = vsub.f32 %v1555, %v1558
    %v1560 = vmul.f32 %v1559, 1.442695
    %v1561 = vpow.pop %v1560
    %v1562 = vsel %vm348, %v1561, 0.0
    %1563 = vadd.xlane.f32.xlu0 %v1562
    %v1564 = vpop.xlane.xlu0 %1563
    %v1565 = vrcp.pop %v1564
    %v1566 = vmul.f32 %v1561, %v1565
    %1567 = vrot.lane.b32.xlu0 %v1301, 112
    %v1568 = vpop.permute.xlu0 %1567
    %v1571 = vsel %vm348, %v1566, 0
    %1573 = vmatprep.subr.mxu0 0.0
    %1574 = vmatpush1.msra.mxu0 %v1568
    %1575 = vmatprep.subr.mxu0 0.0
    %1576 = vmatpush1.msra.mxu0 0.0
    %1577 = vmatprep.subr.mxu0 0.0
    %1578 = vmatpush1.msra.mxu0 0.0
    %1579 = vmatprep.subr.mxu0 0.0
    %1580 = vmatpush1.msra.mxu0 0.0
    %1581 = vmatprep.subr.mxu0 0.0
    %1582 = vmatpush1.msra.mxu0 0.0
    %1583 = vmatprep.subr.mxu0 0.0
    %1584 = vmatpush1.msra.mxu0 0.0
    %1585 = vmatprep.subr.mxu0 0.0
    %1586 = vmatpush1.msra.mxu0 0.0
    %1587 = vmatprep.subr.mxu0 0.0
    %1588 = vmatpush1.msra.mxu0 0.0
    %1589 = vmatprep.subr.mxu0 0.0
    %1590 = vmatpush1.msra.mxu0 0.0
    %1591 = vmatprep.subr.mxu0 0.0
    %1592 = vmatpush1.msra.mxu0 0.0
    %1593 = vmatprep.subr.mxu0 0.0
    %1594 = vmatpush1.msra.mxu0 0.0
    %1595 = vmatprep.subr.mxu0 0.0
    %1596 = vmatpush1.msra.mxu0 0.0
    %1597 = vmatprep.subr.mxu0 0.0
    %1598 = vmatpush1.msra.mxu0 0.0
    %1599 = vmatprep.subr.mxu0 0.0
    %1600 = vmatpush1.msra.mxu0 0.0
    %1601 = vmatprep.subr.mxu0 0.0
    %1602 = vmatpush1.msra.mxu0 0.0
    %1603 = vmatprep.subr.mxu0 0.0
    %1604 = vmatpush1.msra.mxu0 0.0
    %1605 = vmatprep.subr.mxu0 0.0
    %1606 = vmatpush1.msra.mxu0 0.0
    %1607 = vmatprep.subr.mxu0 0.0
    %1608 = vmatpush1.msra.mxu0 0.0
    %1609 = vmatprep.subr.mxu0 0.0
    %1610 = vmatpush1.msra.mxu0 0.0
    %1611 = vmatprep.subr.mxu0 0.0
    %1612 = vmatpush1.msra.mxu0 0.0
    %1613 = vmatprep.subr.mxu0 0.0
    %1614 = vmatpush1.msra.mxu0 0.0
    %1615 = vmatprep.subr.mxu0 0.0
    %1616 = vmatpush1.msra.mxu0 0.0
    %1617 = vmatprep.subr.mxu0 0.0
    %1618 = vmatpush1.msra.mxu0 0.0
    %1619 = vmatprep.subr.mxu0 0.0
    %1620 = vmatpush1.msra.mxu0 0.0
    %1621 = vmatprep.subr.mxu0 0.0
    %1622 = vmatpush1.msra.mxu0 0.0
    %1623 = vmatprep.subr.mxu0 0.0
    %1624 = vmatpush1.msra.mxu0 0.0
    %1625 = vmatprep.subr.mxu0 0.0
    %1626 = vmatpush1.msra.mxu0 0.0
    %1627 = vmatprep.subr.mxu0 0.0
    %1628 = vmatpush1.msra.mxu0 0.0
    %1629 = vmatprep.subr.mxu0 0.0
    %1630 = vmatpush1.msra.mxu0 0.0
    %1631 = vmatprep.subr.mxu0 0.0
    %1632 = vmatpush1.msra.mxu0 0.0
    %1633 = vmatprep.subr.mxu0 0.0
    %1634 = vmatpush1.msra.mxu0 0.0
    %1635 = vmatprep.subr.mxu0 0.0
    %1636 = vmatpush1.msra.mxu0 0.0
    %1637 = vmatprep.mubr.f32.mxu0 0.0
    %1638 = vmatmul.mubr.f32.gmra.mrb[0].mxu0 %v1571
    %v1639 = vpop.f32.mrb[0].mxu0
    %v1640 = vadd.f32 0.0, %v1639
    %v1641 = vpop.f32.mrb[0].mxu0
    %1642 = vdwg.mxu0
    %v1643 = vld [vmem:[%s37] sm:$0xf]
    %v1644 = vld [vmem:[%s39] sm:$0x1]
    %v1646 = vlaneseq
    %v1647 = vshrl.u32 %v1646, 7
    %v1648 = vsub.s32 0, %v1647
    %v1649 = vrot.slane %v1644, %v1648
    %v1652 = vsel %vm1307, %v1471, 0
    %v1655 = vsel %vm1307, %v1640, 0
    %vm1657 = vcmask 1043456
    %v1659 = vsel %vm1657, %v1643, 0
    %1661 = vmatprep.subr.mxu0 0.0
    %1662 = vmatpush1.msra.mxu0 %v1659
    %1663 = vmatprep.subr.mxu0 0.0
    %1664 = vmatpush1.msra.mxu0 0.0
    %1665 = vmatprep.subr.mxu0 0.0
    %1666 = vmatpush1.msra.mxu0 0.0
    %1667 = vmatprep.subr.mxu0 0.0
    %1668 = vmatpush1.msra.mxu0 0.0
    %1669 = vmatprep.subr.mxu0 0.0
    %1670 = vmatpush1.msra.mxu0 0.0
    %1671 = vmatprep.subr.mxu0 0.0
    %1672 = vmatpush1.msra.mxu0 0.0
    %1673 = vmatprep.subr.mxu0 0.0
    %1674 = vmatpush1.msra.mxu0 0.0
    %1675 = vmatprep.subr.mxu0 0.0
    %1676 = vmatpush1.msra.mxu0 0.0
    %1677 = vmatprep.subr.mxu0 0.0
    %1678 = vmatpush1.msra.mxu0 0.0
    %1679 = vmatprep.subr.mxu0 0.0
    %1680 = vmatpush1.msra.mxu0 0.0
    %1681 = vmatprep.subr.mxu0 0.0
    %1682 = vmatpush1.msra.mxu0 0.0
    %1683 = vmatprep.subr.mxu0 0.0
    %1684 = vmatpush1.msra.mxu0 0.0
    %1685 = vmatprep.subr.mxu0 0.0
    %1686 = vmatpush1.msra.mxu0 0.0
    %1687 = vmatprep.subr.mxu0 0.0
    %1688 = vmatpush1.msra.mxu0 0.0
    %1689 = vmatprep.subr.mxu0 0.0
    %1690 = vmatpush1.msra.mxu0 0.0
    %1691 = vmatprep.subr.mxu0 0.0
    %1692 = vmatpush1.msra.mxu0 0.0
    %1693 = vmatprep.subr.mxu0 0.0
    %1694 = vmatpush1.msra.mxu0 0.0
    %1695 = vmatprep.subr.mxu0 0.0
    %1696 = vmatpush1.msra.mxu0 0.0
    %1697 = vmatprep.subr.mxu0 0.0
    %1698 = vmatpush1.msra.mxu0 0.0
    %1699 = vmatprep.subr.mxu0 0.0
    %1700 = vmatpush1.msra.mxu0 0.0
    %1701 = vmatprep.subr.mxu0 0.0
    %1702 = vmatpush1.msra.mxu0 0.0
    %1703 = vmatprep.subr.mxu0 0.0
    %1704 = vmatpush1.msra.mxu0 0.0
    %1705 = vmatprep.subr.mxu0 0.0
    %1706 = vmatpush1.msra.mxu0 0.0
    %1707 = vmatprep.subr.mxu0 0.0
    %1708 = vmatpush1.msra.mxu0 0.0
    %1709 = vmatprep.subr.mxu0 0.0
    %1710 = vmatpush1.msra.mxu0 0.0
    %1711 = vmatprep.subr.mxu0 0.0
    %1712 = vmatpush1.msra.mxu0 0.0
    %1713 = vmatprep.subr.mxu0 0.0
    %1714 = vmatpush1.msra.mxu0 0.0
    %1715 = vmatprep.subr.mxu0 0.0
    %1716 = vmatpush1.msra.mxu0 0.0
    %1717 = vmatprep.subr.mxu0 0.0
    %1718 = vmatpush1.msra.mxu0 0.0
    %1719 = vmatprep.subr.mxu0 0.0
    %1720 = vmatpush1.msra.mxu0 0.0
    %1721 = vmatprep.subr.mxu0 0.0
    %1722 = vmatpush1.msra.mxu0 0.0
    %1723 = vmatprep.subr.mxu0 0.0
    %1724 = vmatpush1.msra.mxu0 0.0
    %1725 = vmatprep.mubr.f32.mxu0 0.0
    %1726 = vmatmul.mubr.f32.gmra.mrb[0].mxu0 %v1652
    %v1727 = vpop.f32.mrb[0].mxu0
    %v1728 = vadd.f32 %v1649, %v1727
    %v1729 = vpop.f32.mrb[0].mxu0
    %1730 = vmatprep.mubr.f32.mxu0 0.0
    %1731 = vmatmul.mubr.f32.gmra.mrb[0].mxu0 %v1655
    %v1732 = vpop.f32.mrb[0].mxu0
    %v1733 = vadd.f32 %v1649, %v1732
    %v1734 = vpop.f32.mrb[0].mxu0
    %1735 = vdwg.mxu0
    %1738 = vrot.lane.b32.xlu0 %v1728, 16
    %v1739 = vpop.permute.xlu0 %1738
    %1740 = vrot.lane.b32.xlu0 %v1733, 16
    %v1741 = vpop.permute.xlu0 %1740
    %v1744 = vadd.f32 %v192, %v1739
    %v1745 = vadd.f32 %v193, %v1741
    %s1746 = sld [smem:[#allocation2 + $0x8]]
    %v1747 = vstv %s1746
    %v1748 = vmul.f32 %v1744, %v1747
    %v1749 = vmul.f32 %v1745, %v1747
    %v1750 = vadd.f32 %v1748, 0.0
    %v1751 = vadd.f32 %v1749, 0.0
    %1752 = vrot.lane.b32.xlu0 %v1296, 124
    %v1753 = vpop.permute.xlu0 %1752
    %1754 = vrot.lane.b32.xlu0 %v1296, 116
    %v1755 = vpop.permute.xlu0 %1754
    %v1756 = vsel %vm1307, %v1753, 0
    %v1758 = vsel %vm1307, %v1755, 0
    %1760 = vmatprep.subr.mxu0 0.0
    %1761 = vmatpush1.xpose.msra.mxu0 %v1758
    %1762 = vmatprep.subr.mxu0 0.0
    %1763 = vmatpush1.xpose.msra.mxu0 0.0
    %1764 = vmatprep.subr.mxu0 0.0
    %1765 = vmatpush1.xpose.msra.mxu0 0.0
    %1766 = vmatprep.subr.mxu0 0.0
    %1767 = vmatpush1.xpose.msra.mxu0 0.0
    %1768 = vmatprep.subr.mxu0 0.0
    %1769 = vmatpush1.xpose.msra.mxu0 0.0
    %1770 = vmatprep.subr.mxu0 0.0
    %1771 = vmatpush1.xpose.msra.mxu0 0.0
    %1772 = vmatprep.subr.mxu0 0.0
    %1773 = vmatpush1.xpose.msra.mxu0 0.0
    %1774 = vmatprep.subr.mxu0 0.0
    %1775 = vmatpush1.xpose.msra.mxu0 0.0
    %1776 = vmatprep.subr.mxu0 0.0
    %1777 = vmatpush1.xpose.msra.mxu0 0.0
    %1778 = vmatprep.subr.mxu0 0.0
    %1779 = vmatpush1.xpose.msra.mxu0 0.0
    %1780 = vmatprep.subr.mxu0 0.0
    %1781 = vmatpush1.xpose.msra.mxu0 0.0
    %1782 = vmatprep.subr.mxu0 0.0
    %1783 = vmatpush1.xpose.msra.mxu0 0.0
    %1784 = vmatprep.subr.mxu0 0.0
    %1785 = vmatpush1.xpose.msra.mxu0 0.0
    %1786 = vmatprep.subr.mxu0 0.0
    %1787 = vmatpush1.xpose.msra.mxu0 0.0
    %1788 = vmatprep.subr.mxu0 0.0
    %1789 = vmatpush1.xpose.msra.mxu0 0.0
    %1790 = vmatprep.subr.mxu0 0.0
    %1791 = vmatpush1.xpose.msra.mxu0 0.0
    %1792 = vmatprep.subr.mxu0 0.0
    %1793 = vmatpush1.xpose.msra.mxu0 0.0
    %1794 = vmatprep.subr.mxu0 0.0
    %1795 = vmatpush1.xpose.msra.mxu0 0.0
    %1796 = vmatprep.subr.mxu0 0.0
    %1797 = vmatpush1.xpose.msra.mxu0 0.0
    %1798 = vmatprep.subr.mxu0 0.0
    %1799 = vmatpush1.xpose.msra.mxu0 0.0
    %1800 = vmatprep.subr.mxu0 0.0
    %1801 = vmatpush1.xpose.msra.mxu0 0.0
    %1802 = vmatprep.subr.mxu0 0.0
    %1803 = vmatpush1.xpose.msra.mxu0 0.0
    %1804 = vmatprep.subr.mxu0 0.0
    %1805 = vmatpush1.xpose.msra.mxu0 0.0
    %1806 = vmatprep.subr.mxu0 0.0
    %1807 = vmatpush1.xpose.msra.mxu0 0.0
    %1808 = vmatprep.subr.mxu0 0.0
    %1809 = vmatpush1.xpose.msra.mxu0 0.0
    %1810 = vmatprep.subr.mxu0 0.0
    %1811 = vmatpush1.xpose.msra.mxu0 0.0
    %1812 = vmatprep.subr.mxu0 0.0
    %1813 = vmatpush1.xpose.msra.mxu0 0.0
    %1814 = vmatprep.subr.mxu0 0.0
    %1815 = vmatpush1.xpose.msra.mxu0 0.0
    %1816 = vmatprep.subr.mxu0 0.0
    %1817 = vmatpush1.xpose.msra.mxu0 0.0
    %1818 = vmatprep.subr.mxu0 0.0
    %1819 = vmatpush1.xpose.msra.mxu0 0.0
    %1820 = vmatprep.subr.mxu0 0.0
    %1821 = vmatpush1.xpose.msra.mxu0 0.0
    %1822 = vmatprep.subr.mxu0 0.0
    %1823 = vmatpush1.xpose.msra.mxu0 0.0
    %1824 = vmatprep.mubr.f32.mxu0 0.0
    %1825 = vmatmul.mubr.f32.gmra.mrb[0].mxu0 %v1756
    %v1826 = vpop.f32.mrb[0].mxu0
    %v1827 = vadd.f32 0.0, %v1826
    %v1828 = vpop.f32.mrb[0].mxu0
    %1829 = vdwg.mxu0
    %v1830 = vmul.f32 %v1827, 0.5
    %v1831 = vsel %vm1385, -1e+09, %v1830
    %v1832 = vsel %vm348, %v1831, -inf
    %1833 = vmax.xlane.f32.xlu0 %v1832
    %v1834 = vpop.xlane.xlu0 %1833
    %v1835 = vsub.f32 %v1831, %v1834
    %v1836 = vmul.f32 %v1835, 1.442695
    %v1837 = vpow.pop %v1836
    %v1838 = vsel %vm348, %v1837, 0.0
    %1839 = vadd.xlane.f32.xlu0 %v1838
    %v1840 = vpop.xlane.xlu0 %1839
    %v1841 = vrcp.pop %v1840
    %v1842 = vmul.f32 %v1837, %v1841
    %1843 = vrot.lane.b32.xlu0 %v1296, 108
    %v1844 = vpop.permute.xlu0 %1843
    %v1847 = vsel %vm348, %v1842, 0
    %1849 = vmatprep.subr.mxu0 0.0
    %1850 = vmatpush1.msra.mxu0 %v1844
    %1851 = vmatprep.subr.mxu0 0.0
    %1852 = vmatpush1.msra.mxu0 0.0
    %1853 = vmatprep.subr.mxu0 0.0
    %1854 = vmatpush1.msra.mxu0 0.0
    %1855 = vmatprep.subr.mxu0 0.0
    %1856 = vmatpush1.msra.mxu0 0.0
    %1857 = vmatprep.subr.mxu0 0.0
    %1858 = vmatpush1.msra.mxu0 0.0
    %1859 = vmatprep.subr.mxu0 0.0
    %1860 = vmatpush1.msra.mxu0 0.0
    %1861 = vmatprep.subr.mxu0 0.0
    %1862 = vmatpush1.msra.mxu0 0.0
    %1863 = vmatprep.subr.mxu0 0.0
    %1864 = vmatpush1.msra.mxu0 0.0
    %1865 = vmatprep.subr.mxu0 0.0
    %1866 = vmatpush1.msra.mxu0 0.0
    %1867 = vmatprep.subr.mxu0 0.0
    %1868 = vmatpush1.msra.mxu0 0.0
    %1869 = vmatprep.subr.mxu0 0.0
    %1870 = vmatpush1.msra.mxu0 0.0
    %1871 = vmatprep.subr.mxu0 0.0
    %1872 = vmatpush1.msra.mxu0 0.0
    %1873 = vmatprep.subr.mxu0 0.0
    %1874 = vmatpush1.msra.mxu0 0.0
    %1875 = vmatprep.subr.mxu0 0.0
    %1876 = vmatpush1.msra.mxu0 0.0
    %1877 = vmatprep.subr.mxu0 0.0
    %1878 = vmatpush1.msra.mxu0 0.0
    %1879 = vmatprep.subr.mxu0 0.0
    %1880 = vmatpush1.msra.mxu0 0.0
    %1881 = vmatprep.subr.mxu0 0.0
    %1882 = vmatpush1.msra.mxu0 0.0
    %1883 = vmatprep.subr.mxu0 0.0
    %1884 = vmatpush1.msra.mxu0 0.0
    %1885 = vmatprep.subr.mxu0 0.0
    %1886 = vmatpush1.msra.mxu0 0.0
    %1887 = vmatprep.subr.mxu0 0.0
    %1888 = vmatpush1.msra.mxu0 0.0
    %1889 = vmatprep.subr.mxu0 0.0
    %1890 = vmatpush1.msra.mxu0 0.0
    %1891 = vmatprep.subr.mxu0 0.0
    %1892 = vmatpush1.msra.mxu0 0.0
    %1893 = vmatprep.subr.mxu0 0.0
    %1894 = vmatpush1.msra.mxu0 0.0
    %1895 = vmatprep.subr.mxu0 0.0
    %1896 = vmatpush1.msra.mxu0 0.0
    %1897 = vmatprep.subr.mxu0 0.0
    %1898 = vmatpush1.msra.mxu0 0.0
    %1899 = vmatprep.subr.mxu0 0.0
    %1900 = vmatpush1.msra.mxu0 0.0
    %1901 = vmatprep.subr.mxu0 0.0
    %1902 = vmatpush1.msra.mxu0 0.0
    %1903 = vmatprep.subr.mxu0 0.0
    %1904 = vmatpush1.msra.mxu0 0.0
    %1905 = vmatprep.subr.mxu0 0.0
    %1906 = vmatpush1.msra.mxu0 0.0
    %1907 = vmatprep.subr.mxu0 0.0
    %1908 = vmatpush1.msra.mxu0 0.0
    %1909 = vmatprep.subr.mxu0 0.0
    %1910 = vmatpush1.msra.mxu0 0.0
    %1911 = vmatprep.subr.mxu0 0.0
    %1912 = vmatpush1.msra.mxu0 0.0
    %1913 = vmatprep.mubr.f32.mxu0 0.0
    %1914 = vmatmul.mubr.f32.gmra.mrb[0].mxu0 %v1847
    %v1915 = vpop.f32.mrb[0].mxu0
    %v1916 = vadd.f32 0.0, %v1915
    %v1917 = vpop.f32.mrb[0].mxu0
    %1918 = vdwg.mxu0
    %1919 = vrot.lane.b32.xlu0 %v1301, 124
    %v1920 = vpop.permute.xlu0 %1919
    %1921 = vrot.lane.b32.xlu0 %v1301, 116
    %v1922 = vpop.permute.xlu0 %1921
    %v1923 = vsel %vm1307, %v1920, 0
    %v1925 = vsel %vm1307, %v1922, 0
    %1927 = vmatprep.subr.mxu0 0.0
    %1928 = vmatpush1.xpose.msra.mxu0 %v1925
    %1929 = vmatprep.subr.mxu0 0.0
    %1930 = vmatpush1.xpose.msra.mxu0 0.0
    %1931 = vmatprep.subr.mxu0 0.0
    %1932 = vmatpush1.xpose.msra.mxu0 0.0
    %1933 = vmatprep.subr.mxu0 0.0
    %1934 = vmatpush1.xpose.msra.mxu0 0.0
    %1935 = vmatprep.subr.mxu0 0.0
    %1936 = vmatpush1.xpose.msra.mxu0 0.0
    %1937 = vmatprep.subr.mxu0 0.0
    %1938 = vmatpush1.xpose.msra.mxu0 0.0
    %1939 = vmatprep.subr.mxu0 0.0
    %1940 = vmatpush1.xpose.msra.mxu0 0.0
    %1941 = vmatprep.subr.mxu0 0.0
    %1942 = vmatpush1.xpose.msra.mxu0 0.0
    %1943 = vmatprep.subr.mxu0 0.0
    %1944 = vmatpush1.xpose.msra.mxu0 0.0
    %1945 = vmatprep.subr.mxu0 0.0
    %1946 = vmatpush1.xpose.msra.mxu0 0.0
    %1947 = vmatprep.subr.mxu0 0.0
    %1948 = vmatpush1.xpose.msra.mxu0 0.0
    %1949 = vmatprep.subr.mxu0 0.0
    %1950 = vmatpush1.xpose.msra.mxu0 0.0
    %1951 = vmatprep.subr.mxu0 0.0
    %1952 = vmatpush1.xpose.msra.mxu0 0.0
    %1953 = vmatprep.subr.mxu0 0.0
    %1954 = vmatpush1.xpose.msra.mxu0 0.0
    %1955 = vmatprep.subr.mxu0 0.0
    %1956 = vmatpush1.xpose.msra.mxu0 0.0
    %1957 = vmatprep.subr.mxu0 0.0
    %1958 = vmatpush1.xpose.msra.mxu0 0.0
    %1959 = vmatprep.subr.mxu0 0.0
    %1960 = vmatpush1.xpose.msra.mxu0 0.0
    %1961 = vmatprep.subr.mxu0 0.0
    %1962 = vmatpush1.xpose.msra.mxu0 0.0
    %1963 = vmatprep.subr.mxu0 0.0
    %1964 = vmatpush1.xpose.msra.mxu0 0.0
    %1965 = vmatprep.subr.mxu0 0.0
    %1966 = vmatpush1.xpose.msra.mxu0 0.0
    %1967 = vmatprep.subr.mxu0 0.0
    %1968 = vmatpush1.xpose.msra.mxu0 0.0
    %1969 = vmatprep.subr.mxu0 0.0
    %1970 = vmatpush1.xpose.msra.mxu0 0.0
    %1971 = vmatprep.subr.mxu0 0.0
    %1972 = vmatpush1.xpose.msra.mxu0 0.0
    %1973 = vmatprep.subr.mxu0 0.0
    %1974 = vmatpush1.xpose.msra.mxu0 0.0
    %1975 = vmatprep.subr.mxu0 0.0
    %1976 = vmatpush1.xpose.msra.mxu0 0.0
    %1977 = vmatprep.subr.mxu0 0.0
    %1978 = vmatpush1.xpose.msra.mxu0 0.0
    %1979 = vmatprep.subr.mxu0 0.0
    %1980 = vmatpush1.xpose.msra.mxu0 0.0
    %1981 = vmatprep.subr.mxu0 0.0
    %1982 = vmatpush1.xpose.msra.mxu0 0.0
    %1983 = vmatprep.subr.mxu0 0.0
    %1984 = vmatpush1.xpose.msra.mxu0 0.0
    %1985 = vmatprep.subr.mxu0 0.0
    %1986 = vmatpush1.xpose.msra.mxu0 0.0
    %1987 = vmatprep.subr.mxu0 0.0
    %1988 = vmatpush1.xpose.msra.mxu0 0.0
    %1989 = vmatprep.subr.mxu0 0.0
    %1990 = vmatpush1.xpose.msra.mxu0 0.0
    %1991 = vmatprep.mubr.f32.mxu0 0.0
    %1992 = vmatmul.mubr.f32.gmra.mrb[0].mxu0 %v1923
    %v1993 = vpop.f32.mrb[0].mxu0
    %v1994 = vadd.f32 0.0, %v1993
    %v1995 = vpop.f32.mrb[0].mxu0
    %1996 = vdwg.mxu0
    %v1997 = vmul.f32 %v1994, 0.5
    %v1998 = vsel %vm1554, -1e+09, %v1997
    %v1999 = vsel %vm348, %v1998, -inf
    %2000 = vmax.xlane.f32.xlu0 %v1999
    %v2001 = vpop.xlane.xlu0 %2000
    %v2002 = vsub.f32 %v1998, %v2001
    %v2003 = vmul.f32 %v2002, 1.442695
    %v2004 = vpow.pop %v2003
    %v2005 = vsel %vm348, %v2004, 0.0
    %2006 = vadd.xlane.f32.xlu0 %v2005
    %v2007 = vpop.xlane.xlu0 %2006
    %v2008 = vrcp.pop %v2007
    %v2009 = vmul.f32 %v2004, %v2008
    %2010 = vrot.lane.b32.xlu0 %v1301, 108
    %v2011 = vpop.permute.xlu0 %2010
    %v2014 = vsel %vm348, %v2009, 0
    %2016 = vmatprep.subr.mxu0 0.0
    %2017 = vmatpush1.msra.mxu0 %v2011
    %2018 = vmatprep.subr.mxu0 0.0
    %2019 = vmatpush1.msra.mxu0 0.0
    %2020 = vmatprep.subr.mxu0 0.0
    %2021 = vmatpush1.msra.mxu0 0.0
    %2022 = vmatprep.subr.mxu0 0.0
    %2023 = vmatpush1.msra.mxu0 0.0
    %2024 = vmatprep.subr.mxu0 0.0
    %2025 = vmatpush1.msra.mxu0 0.0
    %2026 = vmatprep.subr.mxu0 0.0
    %2027 = vmatpush1.msra.mxu0 0.0
    %2028 = vmatprep.subr.mxu0 0.0
    %2029 = vmatpush1.msra.mxu0 0.0
    %2030 = vmatprep.subr.mxu0 0.0
    %2031 = vmatpush1.msra.mxu0 0.0
    %2032 = vmatprep.subr.mxu0 0.0
    %2033 = vmatpush1.msra.mxu0 0.0
    %2034 = vmatprep.subr.mxu0 0.0
    %2035 = vmatpush1.msra.mxu0 0.0
    %2036 = vmatprep.subr.mxu0 0.0
    %2037 = vmatpush1.msra.mxu0 0.0
    %2038 = vmatprep.subr.mxu0 0.0
    %2039 = vmatpush1.msra.mxu0 0.0
    %2040 = vmatprep.subr.mxu0 0.0
    %2041 = vmatpush1.msra.mxu0 0.0
    %2042 = vmatprep.subr.mxu0 0.0
    %2043 = vmatpush1.msra.mxu0 0.0
    %2044 = vmatprep.subr.mxu0 0.0
    %2045 = vmatpush1.msra.mxu0 0.0
    %2046 = vmatprep.subr.mxu0 0.0
    %2047 = vmatpush1.msra.mxu0 0.0
    %2048 = vmatprep.subr.mxu0 0.0
    %2049 = vmatpush1.msra.mxu0 0.0
    %2050 = vmatprep.subr.mxu0 0.0
    %2051 = vmatpush1.msra.mxu0 0.0
    %2052 = vmatprep.subr.mxu0 0.0
    %2053 = vmatpush1.msra.mxu0 0.0
    %2054 = vmatprep.subr.mxu0 0.0
    %2055 = vmatpush1.msra.mxu0 0.0
    %2056 = vmatprep.subr.mxu0 0.0
    %2057 = vmatpush1.msra.mxu0 0.0
    %2058 = vmatprep.subr.mxu0 0.0
    %2059 = vmatpush1.msra.mxu0 0.0
    %2060 = vmatprep.subr.mxu0 0.0
    %2061 = vmatpush1.msra.mxu0 0.0
    %2062 = vmatprep.subr.mxu0 0.0
    %2063 = vmatpush1.msra.mxu0 0.0
    %2064 = vmatprep.subr.mxu0 0.0
    %2065 = vmatpush1.msra.mxu0 0.0
    %2066 = vmatprep.subr.mxu0 0.0
    %2067 = vmatpush1.msra.mxu0 0.0
    %2068 = vmatprep.subr.mxu0 0.0
    %2069 = vmatpush1.msra.mxu0 0.0
    %2070 = vmatprep.subr.mxu0 0.0
    %2071 = vmatpush1.msra.mxu0 0.0
    %2072 = vmatprep.subr.mxu0 0.0
    %2073 = vmatpush1.msra.mxu0 0.0
    %2074 = vmatprep.subr.mxu0 0.0
    %2075 = vmatpush1.msra.mxu0 0.0
    %2076 = vmatprep.subr.mxu0 0.0
    %2077 = vmatpush1.msra.mxu0 0.0
    %2078 = vmatprep.subr.mxu0 0.0
    %2079 = vmatpush1.msra.mxu0 0.0
    %2080 = vmatprep.mubr.f32.mxu0 0.0
    %2081 = vmatmul.mubr.f32.gmra.mrb[0].mxu0 %v2014
    %v2082 = vpop.f32.mrb[0].mxu0
    %v2083 = vadd.f32 0.0, %v2082
    %v2084 = vpop.f32.mrb[0].mxu0
    %2085 = vdwg.mxu0
    %s2086 = scalar_lea.vmem %s37, 4
    %v2087 = vld [vmem:[%s2086] sm:$0xf]
    %s2088 = scalar_lea.vmem %s39, 1
    %v2089 = vld [vmem:[%s2088] sm:$0x1]
    %v2091 = vlaneseq
    %v2092 = vshrl.u32 %v2091, 7
    %v2093 = vsub.s32 0, %v2092
    %v2094 = vrot.slane %v2089, %v2093
    %v2097 = vsel %vm1307, %v1916, 0
    %v2100 = vsel %vm1307, %v2083, 0
    %v2103 = vsel %vm1657, %v2087, 0
    %2105 = vmatprep.subr.mxu0 0.0
    %2106 = vmatpush1.msra.mxu0 %v2103
    %2107 = vmatprep.subr.mxu0 0.0
    %2108 = vmatpush1.msra.mxu0 0.0
    %2109 = vmatprep.subr.mxu0 0.0
    %2110 = vmatpush1.msra.mxu0 0.0
    %2111 = vmatprep.subr.mxu0 0.0
    %2112 = vmatpush1.msra.mxu0 0.0
    %2113 = vmatprep.subr.mxu0 0.0
    %2114 = vmatpush1.msra.mxu0 0.0
    %2115 = vmatprep.subr.mxu0 0.0
    %2116 = vmatpush1.msra.mxu0 0.0
    %2117 = vmatprep.subr.mxu0 0.0
    %2118 = vmatpush1.msra.mxu0 0.0
    %2119 = vmatprep.subr.mxu0 0.0
    %2120 = vmatpush1.msra.mxu0 0.0
    %2121 = vmatprep.subr.mxu0 0.0
    %2122 = vmatpush1.msra.mxu0 0.0
    %2123 = vmatprep.subr.mxu0 0.0
    %2124 = vmatpush1.msra.mxu0 0.0
    %2125 = vmatprep.subr.mxu0 0.0
    %2126 = vmatpush1.msra.mxu0 0.0
    %2127 = vmatprep.subr.mxu0 0.0
    %2128 = vmatpush1.msra.mxu0 0.0
    %2129 = vmatprep.subr.mxu0 0.0
    %2130 = vmatpush1.msra.mxu0 0.0
    %2131 = vmatprep.subr.mxu0 0.0
    %2132 = vmatpush1.msra.mxu0 0.0
    %2133 = vmatprep.subr.mxu0 0.0
    %2134 = vmatpush1.msra.mxu0 0.0
    %2135 = vmatprep.subr.mxu0 0.0
    %2136 = vmatpush1.msra.mxu0 0.0
    %2137 = vmatprep.subr.mxu0 0.0
    %2138 = vmatpush1.msra.mxu0 0.0
    %2139 = vmatprep.subr.mxu0 0.0
    %2140 = vmatpush1.msra.mxu0 0.0
    %2141 = vmatprep.subr.mxu0 0.0
    %2142 = vmatpush1.msra.mxu0 0.0
    %2143 = vmatprep.subr.mxu0 0.0
    %2144 = vmatpush1.msra.mxu0 0.0
    %2145 = vmatprep.subr.mxu0 0.0
    %2146 = vmatpush1.msra.mxu0 0.0
    %2147 = vmatprep.subr.mxu0 0.0
    %2148 = vmatpush1.msra.mxu0 0.0
    %2149 = vmatprep.subr.mxu0 0.0
    %2150 = vmatpush1.msra.mxu0 0.0
    %2151 = vmatprep.subr.mxu0 0.0
    %2152 = vmatpush1.msra.mxu0 0.0
    %2153 = vmatprep.subr.mxu0 0.0
    %2154 = vmatpush1.msra.mxu0 0.0
    %2155 = vmatprep.subr.mxu0 0.0
    %2156 = vmatpush1.msra.mxu0 0.0
    %2157 = vmatprep.subr.mxu0 0.0
    %2158 = vmatpush1.msra.mxu0 0.0
    %2159 = vmatprep.subr.mxu0 0.0
    %2160 = vmatpush1.msra.mxu0 0.0
    %2161 = vmatprep.subr.mxu0 0.0
    %2162 = vmatpush1.msra.mxu0 0.0
    %2163 = vmatprep.subr.mxu0 0.0
    %2164 = vmatpush1.msra.mxu0 0.0
    %2165 = vmatprep.subr.mxu0 0.0
    %2166 = vmatpush1.msra.mxu0 0.0
    %2167 = vmatprep.subr.mxu0 0.0
    %2168 = vmatpush1.msra.mxu0 0.0
    %2169 = vmatprep.mubr.f32.mxu0 0.0
    %2170 = vmatmul.mubr.f32.gmra.mrb[0].mxu0 %v2097
    %v2171 = vpop.f32.mrb[0].mxu0
    %v2172 = vadd.f32 %v2094, %v2171
    %v2173 = vpop.f32.mrb[0].mxu0
    %2174 = vmatprep.mubr.f32.mxu0 0.0
    %2175 = vmatmul.mubr.f32.gmra.mrb[0].mxu0 %v2100
    %v2176 = vpop.f32.mrb[0].mxu0
    %v2177 = vadd.f32 %v2094, %v2176
    %v2178 = vpop.f32.mrb[0].mxu0
    %2179 = vdwg.mxu0
    %2182 = vrot.lane.b32.xlu0 %v2172, 16
    %v2183 = vpop.permute.xlu0 %2182
    %2184 = vrot.lane.b32.xlu0 %v2177, 16
    %v2185 = vpop.permute.xlu0 %2184
    %v2188 = vadd.f32 %v1744, %v2183
    %v2189 = vadd.f32 %v1745, %v2185
    %s2190 = sld [smem:[#allocation2 + $0xc]]
    %v2191 = vstv %s2190
    %v2192 = vmul.f32 %v2188, %v2191
    %v2193 = vmul.f32 %v2189, %v2191
    %v2194 = vadd.f32 %v1750, %v2192
    %v2195 = vadd.f32 %v1751, %v2193
    %v2196 = vld [vmem:[%s41] sm:$0xff]
    %v2197 = vld [vmem:[%s43] sm:$0x1]
    %v2199 = vlaneseq
    %v2200 = vshrl.u32 %v2199, 7
    %v2201 = vsub.s32 0, %v2200
    %v2202 = vrot.slane %v2197, %v2201
    %2204 = vrot.lane.b32.xlu0 %v252, 104
    %v2205 = vpop.permute.xlu0 %2204
    %2206 = vrot.lane.b32.xlu0 %v253, 104
    %v2207 = vpop.permute.xlu0 %2206
    %v2208 = vsel %vm348, %v2205, 0
    %v2210 = vsel %vm348, %v2207, 0
    %2212 = vmatprep.subr.mxu0 0.0
    %2213 = vmatpush1.msra.mxu0 %v2196
    %2214 = vmatprep.subr.mxu0 0.0
    %2215 = vmatpush1.msra.mxu0 0.0
    %2216 = vmatprep.subr.mxu0 0.0
    %2217 = vmatpush1.msra.mxu0 0.0
    %2218 = vmatprep.subr.mxu0 0.0
    %2219 = vmatpush1.msra.mxu0 0.0
    %2220 = vmatprep.subr.mxu0 0.0
    %2221 = vmatpush1.msra.mxu0 0.0
    %2222 = vmatprep.subr.mxu0 0.0
    %2223 = vmatpush1.msra.mxu0 0.0
    %2224 = vmatprep.subr.mxu0 0.0
    %2225 = vmatpush1.msra.mxu0 0.0
    %2226 = vmatprep.subr.mxu0 0.0
    %2227 = vmatpush1.msra.mxu0 0.0
    %2228 = vmatprep.subr.mxu0 0.0
    %2229 = vmatpush1.msra.mxu0 0.0
    %2230 = vmatprep.subr.mxu0 0.0
    %2231 = vmatpush1.msra.mxu0 0.0
    %2232 = vmatprep.subr.mxu0 0.0
    %2233 = vmatpush1.msra.mxu0 0.0
    %2234 = vmatprep.subr.mxu0 0.0
    %2235 = vmatpush1.msra.mxu0 0.0
    %2236 = vmatprep.subr.mxu0 0.0
    %2237 = vmatpush1.msra.mxu0 0.0
    %2238 = vmatprep.subr.mxu0 0.0
    %2239 = vmatpush1.msra.mxu0 0.0
    %2240 = vmatprep.subr.mxu0 0.0
    %2241 = vmatpush1.msra.mxu0 0.0
    %2242 = vmatprep.subr.mxu0 0.0
    %2243 = vmatpush1.msra.mxu0 0.0
    %2244 = vmatprep.subr.mxu0 0.0
    %2245 = vmatpush1.msra.mxu0 0.0
    %2246 = vmatprep.subr.mxu0 0.0
    %2247 = vmatpush1.msra.mxu0 0.0
    %2248 = vmatprep.subr.mxu0 0.0
    %2249 = vmatpush1.msra.mxu0 0.0
    %2250 = vmatprep.subr.mxu0 0.0
    %2251 = vmatpush1.msra.mxu0 0.0
    %2252 = vmatprep.subr.mxu0 0.0
    %2253 = vmatpush1.msra.mxu0 0.0
    %2254 = vmatprep.subr.mxu0 0.0
    %2255 = vmatpush1.msra.mxu0 0.0
    %2256 = vmatprep.subr.mxu0 0.0
    %2257 = vmatpush1.msra.mxu0 0.0
    %2258 = vmatprep.subr.mxu0 0.0
    %2259 = vmatpush1.msra.mxu0 0.0
    %2260 = vmatprep.subr.mxu0 0.0
    %2261 = vmatpush1.msra.mxu0 0.0
    %2262 = vmatprep.subr.mxu0 0.0
    %2263 = vmatpush1.msra.mxu0 0.0
    %2264 = vmatprep.subr.mxu0 0.0
    %2265 = vmatpush1.msra.mxu0 0.0
    %2266 = vmatprep.subr.mxu0 0.0
    %2267 = vmatpush1.msra.mxu0 0.0
    %2268 = vmatprep.subr.mxu0 0.0
    %2269 = vmatpush1.msra.mxu0 0.0
    %2270 = vmatprep.subr.mxu0 0.0
    %2271 = vmatpush1.msra.mxu0 0.0
    %2272 = vmatprep.subr.mxu0 0.0
    %2273 = vmatpush1.msra.mxu0 0.0
    %2274 = vmatprep.subr.mxu0 0.0
    %2275 = vmatpush1.msra.mxu0 0.0
    %2276 = vmatprep.mubr.f32.mxu0 0.0
    %2277 = vmatmul.mubr.f32.gmra.mrb[0].mxu0 %v2208
    %v2278 = vpop.f32.mrb[0].mxu0
    %v2279 = vadd.f32 %v2202, %v2278
    %v2280 = vpop.f32.mrb[0].mxu0
    %2281 = vmatprep.mubr.f32.mxu0 0.0
    %2282 = vmatmul.mubr.f32.gmra.mrb[0].mxu0 %v2210
    %v2283 = vpop.f32.mrb[0].mxu0
    %v2284 = vadd.f32 %v2202, %v2283
    %v2285 = vpop.f32.mrb[0].mxu0
    %2286 = vdwg.mxu0
    %2288 = vrot.lane.b32.xlu0 %v2279, 120
    %v2289 = vpop.permute.xlu0 %2288
    %v2290 = vsel %vm1307, %v2279, 0
    %v2292 = vsel %vm1307, %v2289, 0
    %2294 = vmatprep.subr.mxu0 0.0
    %2295 = vmatpush1.xpose.msra.mxu0 %v2292
    %2296 = vmatprep.subr.mxu0 0.0
    %2297 = vmatpush1.xpose.msra.mxu0 0.0
    %2298 = vmatprep.subr.mxu0 0.0
    %2299 = vmatpush1.xpose.msra.mxu0 0.0
    %2300 = vmatprep.subr.mxu0 0.0
    %2301 = vmatpush1.xpose.msra.mxu0 0.0
    %2302 = vmatprep.subr.mxu0 0.0
    %2303 = vmatpush1.xpose.msra.mxu0 0.0
    %2304 = vmatprep.subr.mxu0 0.0
    %2305 = vmatpush1.xpose.msra.mxu0 0.0
    %2306 = vmatprep.subr.mxu0 0.0
    %2307 = vmatpush1.xpose.msra.mxu0 0.0
    %2308 = vmatprep.subr.mxu0 0.0
    %2309 = vmatpush1.xpose.msra.mxu0 0.0
    %2310 = vmatprep.subr.mxu0 0.0
    %2311 = vmatpush1.xpose.msra.mxu0 0.0
    %2312 = vmatprep.subr.mxu0 0.0
    %2313 = vmatpush1.xpose.msra.mxu0 0.0
    %2314 = vmatprep.subr.mxu0 0.0
    %2315 = vmatpush1.xpose.msra.mxu0 0.0
    %2316 = vmatprep.subr.mxu0 0.0
    %2317 = vmatpush1.xpose.msra.mxu0 0.0
    %2318 = vmatprep.subr.mxu0 0.0
    %2319 = vmatpush1.xpose.msra.mxu0 0.0
    %2320 = vmatprep.subr.mxu0 0.0
    %2321 = vmatpush1.xpose.msra.mxu0 0.0
    %2322 = vmatprep.subr.mxu0 0.0
    %2323 = vmatpush1.xpose.msra.mxu0 0.0
    %2324 = vmatprep.subr.mxu0 0.0
    %2325 = vmatpush1.xpose.msra.mxu0 0.0
    %2326 = vmatprep.subr.mxu0 0.0
    %2327 = vmatpush1.xpose.msra.mxu0 0.0
    %2328 = vmatprep.subr.mxu0 0.0
    %2329 = vmatpush1.xpose.msra.mxu0 0.0
    %2330 = vmatprep.subr.mxu0 0.0
    %2331 = vmatpush1.xpose.msra.mxu0 0.0
    %2332 = vmatprep.subr.mxu0 0.0
    %2333 = vmatpush1.xpose.msra.mxu0 0.0
    %2334 = vmatprep.subr.mxu0 0.0
    %2335 = vmatpush1.xpose.msra.mxu0 0.0
    %2336 = vmatprep.subr.mxu0 0.0
    %2337 = vmatpush1.xpose.msra.mxu0 0.0
    %2338 = vmatprep.subr.mxu0 0.0
    %2339 = vmatpush1.xpose.msra.mxu0 0.0
    %2340 = vmatprep.subr.mxu0 0.0
    %2341 = vmatpush1.xpose.msra.mxu0 0.0
    %2342 = vmatprep.subr.mxu0 0.0
    %2343 = vmatpush1.xpose.msra.mxu0 0.0
    %2344 = vmatprep.subr.mxu0 0.0
    %2345 = vmatpush1.xpose.msra.mxu0 0.0
    %2346 = vmatprep.subr.mxu0 0.0
    %2347 = vmatpush1.xpose.msra.mxu0 0.0
    %2348 = vmatprep.subr.mxu0 0.0
    %2349 = vmatpush1.xpose.msra.mxu0 0.0
    %2350 = vmatprep.subr.mxu0 0.0
    %2351 = vmatpush1.xpose.msra.mxu0 0.0
    %2352 = vmatprep.subr.mxu0 0.0
    %2353 = vmatpush1.xpose.msra.mxu0 0.0
    %2354 = vmatprep.subr.mxu0 0.0
    %2355 = vmatpush1.xpose.msra.mxu0 0.0
    %2356 = vmatprep.subr.mxu0 0.0
    %2357 = vmatpush1.xpose.msra.mxu0 0.0
    %2358 = vmatprep.mubr.f32.mxu0 0.0
    %2359 = vmatmul.mubr.f32.gmra.mrb[0].mxu0 %v2290
    %v2360 = vpop.f32.mrb[0].mxu0
    %v2361 = vadd.f32 0.0, %v2360
    %v2362 = vpop.f32.mrb[0].mxu0
    %2363 = vdwg.mxu0
    %v2364 = vmul.f32 %v2361, 0.5
    %s2365 = scalar_lea.vmem %s3, 32
    %v2366 = vld [vmem:[%s2365] sm:$0xff]
    %vm2367 = vcmp.eq.f32.partialorder %v2366, 0.0
    %v2368 = vsel %vm2367, -1e+09, %v2364
    %v2369 = vsel %vm348, %v2368, -inf
    %2370 = vmax.xlane.f32.xlu0 %v2369
    %v2371 = vpop.xlane.xlu0 %2370
    %v2372 = vsub.f32 %v2368, %v2371
    %v2373 = vmul.f32 %v2372, 1.442695
    %v2374 = vpow.pop %v2373
    %v2375 = vsel %vm348, %v2374, 0.0
    %2376 = vadd.xlane.f32.xlu0 %v2375
    %v2377 = vpop.xlane.xlu0 %2376
    %v2378 = vrcp.pop %v2377
    %v2379 = vmul.f32 %v2374, %v2378
    %2380 = vrot.lane.b32.xlu0 %v2279, 112
    %v2381 = vpop.permute.xlu0 %2380
    %v2384 = vsel %vm348, %v2379, 0
    %2386 = vmatprep.subr.mxu0 0.0
    %2387 = vmatpush1.msra.mxu0 %v2381
    %2388 = vmatprep.subr.mxu0 0.0
    %2389 = vmatpush1.msra.mxu0 0.0
    %2390 = vmatprep.subr.mxu0 0.0
    %2391 = vmatpush1.msra.mxu0 0.0
    %2392 = vmatprep.subr.mxu0 0.0
    %2393 = vmatpush1.msra.mxu0 0.0
    %2394 = vmatprep.subr.mxu0 0.0
    %2395 = vmatpush1.msra.mxu0 0.0
    %2396 = vmatprep.subr.mxu0 0.0
    %2397 = vmatpush1.msra.mxu0 0.0
    %2398 = vmatprep.subr.mxu0 0.0
    %2399 = vmatpush1.msra.mxu0 0.0
    %2400 = vmatprep.subr.mxu0 0.0
    %2401 = vmatpush1.msra.mxu0 0.0
    %2402 = vmatprep.subr.mxu0 0.0
    %2403 = vmatpush1.msra.mxu0 0.0
    %2404 = vmatprep.subr.mxu0 0.0
    %2405 = vmatpush1.msra.mxu0 0.0
    %2406 = vmatprep.subr.mxu0 0.0
    %2407 = vmatpush1.msra.mxu0 0.0
    %2408 = vmatprep.subr.mxu0 0.0
    %2409 = vmatpush1.msra.mxu0 0.0
    %2410 = vmatprep.subr.mxu0 0.0
    %2411 = vmatpush1.msra.mxu0 0.0
    %2412 = vmatprep.subr.mxu0 0.0
    %2413 = vmatpush1.msra.mxu0 0.0
    %2414 = vmatprep.subr.mxu0 0.0
    %2415 = vmatpush1.msra.mxu0 0.0
    %2416 = vmatprep.subr.mxu0 0.0
    %2417 = vmatpush1.msra.mxu0 0.0
    %2418 = vmatprep.subr.mxu0 0.0
    %2419 = vmatpush1.msra.mxu0 0.0
    %2420 = vmatprep.subr.mxu0 0.0
    %2421 = vmatpush1.msra.mxu0 0.0
    %2422 = vmatprep.subr.mxu0 0.0
    %2423 = vmatpush1.msra.mxu0 0.0
    %2424 = vmatprep.subr.mxu0 0.0
    %2425 = vmatpush1.msra.mxu0 0.0
    %2426 = vmatprep.subr.mxu0 0.0
    %2427 = vmatpush1.msra.mxu0 0.0
    %2428 = vmatprep.subr.mxu0 0.0
    %2429 = vmatpush1.msra.mxu0 0.0
    %2430 = vmatprep.subr.mxu0 0.0
    %2431 = vmatpush1.msra.mxu0 0.0
    %2432 = vmatprep.subr.mxu0 0.0
    %2433 = vmatpush1.msra.mxu0 0.0
    %2434 = vmatprep.subr.mxu0 0.0
    %2435 = vmatpush1.msra.mxu0 0.0
    %2436 = vmatprep.subr.mxu0 0.0
    %2437 = vmatpush1.msra.mxu0 0.0
    %2438 = vmatprep.subr.mxu0 0.0
    %2439 = vmatpush1.msra.mxu0 0.0
    %2440 = vmatprep.subr.mxu0 0.0
    %2441 = vmatpush1.msra.mxu0 0.0
    %2442 = vmatprep.subr.mxu0 0.0
    %2443 = vmatpush1.msra.mxu0 0.0
    %2444 = vmatprep.subr.mxu0 0.0
    %2445 = vmatpush1.msra.mxu0 0.0
    %2446 = vmatprep.subr.mxu0 0.0
    %2447 = vmatpush1.msra.mxu0 0.0
    %2448 = vmatprep.subr.mxu0 0.0
    %2449 = vmatpush1.msra.mxu0 0.0
    %2450 = vmatprep.mubr.f32.mxu0 0.0
    %2451 = vmatmul.mubr.f32.gmra.mrb[0].mxu0 %v2384
    %v2452 = vpop.f32.mrb[0].mxu0
    %v2453 = vadd.f32 0.0, %v2452
    %v2454 = vpop.f32.mrb[0].mxu0
    %2455 = vdwg.mxu0
    %2457 = vrot.lane.b32.xlu0 %v2284, 120
    %v2458 = vpop.permute.xlu0 %2457
    %v2459 = vsel %vm1307, %v2284, 0
    %v2461 = vsel %vm1307, %v2458, 0
    %2463 = vmatprep.subr.mxu0 0.0
    %2464 = vmatpush1.xpose.msra.mxu0 %v2461
    %2465 = vmatprep.subr.mxu0 0.0
    %2466 = vmatpush1.xpose.msra.mxu0 0.0
    %2467 = vmatprep.subr.mxu0 0.0
    %2468 = vmatpush1.xpose.msra.mxu0 0.0
    %2469 = vmatprep.subr.mxu0 0.0
    %2470 = vmatpush1.xpose.msra.mxu0 0.0
    %2471 = vmatprep.subr.mxu0 0.0
    %2472 = vmatpush1.xpose.msra.mxu0 0.0
    %2473 = vmatprep.subr.mxu0 0.0
    %2474 = vmatpush1.xpose.msra.mxu0 0.0
    %2475 = vmatprep.subr.mxu0 0.0
    %2476 = vmatpush1.xpose.msra.mxu0 0.0
    %2477 = vmatprep.subr.mxu0 0.0
    %2478 = vmatpush1.xpose.msra.mxu0 0.0
    %2479 = vmatprep.subr.mxu0 0.0
    %2480 = vmatpush1.xpose.msra.mxu0 0.0
    %2481 = vmatprep.subr.mxu0 0.0
    %2482 = vmatpush1.xpose.msra.mxu0 0.0
    %2483 = vmatprep.subr.mxu0 0.0
    %2484 = vmatpush1.xpose.msra.mxu0 0.0
    %2485 = vmatprep.subr.mxu0 0.0
    %2486 = vmatpush1.xpose.msra.mxu0 0.0
    %2487 = vmatprep.subr.mxu0 0.0
    %2488 = vmatpush1.xpose.msra.mxu0 0.0
    %2489 = vmatprep.subr.mxu0 0.0
    %2490 = vmatpush1.xpose.msra.mxu0 0.0
    %2491 = vmatprep.subr.mxu0 0.0
    %2492 = vmatpush1.xpose.msra.mxu0 0.0
    %2493 = vmatprep.subr.mxu0 0.0
    %2494 = vmatpush1.xpose.msra.mxu0 0.0
    %2495 = vmatprep.subr.mxu0 0.0
    %2496 = vmatpush1.xpose.msra.mxu0 0.0
    %2497 = vmatprep.subr.mxu0 0.0
    %2498 = vmatpush1.xpose.msra.mxu0 0.0
    %2499 = vmatprep.subr.mxu0 0.0
    %2500 = vmatpush1.xpose.msra.mxu0 0.0
    %2501 = vmatprep.subr.mxu0 0.0
    %2502 = vmatpush1.xpose.msra.mxu0 0.0
    %2503 = vmatprep.subr.mxu0 0.0
    %2504 = vmatpush1.xpose.msra.mxu0 0.0
    %2505 = vmatprep.subr.mxu0 0.0
    %2506 = vmatpush1.xpose.msra.mxu0 0.0
    %2507 = vmatprep.subr.mxu0 0.0
    %2508 = vmatpush1.xpose.msra.mxu0 0.0
    %2509 = vmatprep.subr.mxu0 0.0
    %2510 = vmatpush1.xpose.msra.mxu0 0.0
    %2511 = vmatprep.subr.mxu0 0.0
    %2512 = vmatpush1.xpose.msra.mxu0 0.0
    %2513 = vmatprep.subr.mxu0 0.0
    %2514 = vmatpush1.xpose.msra.mxu0 0.0
    %2515 = vmatprep.subr.mxu0 0.0
    %2516 = vmatpush1.xpose.msra.mxu0 0.0
    %2517 = vmatprep.subr.mxu0 0.0
    %2518 = vmatpush1.xpose.msra.mxu0 0.0
    %2519 = vmatprep.subr.mxu0 0.0
    %2520 = vmatpush1.xpose.msra.mxu0 0.0
    %2521 = vmatprep.subr.mxu0 0.0
    %2522 = vmatpush1.xpose.msra.mxu0 0.0
    %2523 = vmatprep.subr.mxu0 0.0
    %2524 = vmatpush1.xpose.msra.mxu0 0.0
    %2525 = vmatprep.subr.mxu0 0.0
    %2526 = vmatpush1.xpose.msra.mxu0 0.0
    %2527 = vmatprep.mubr.f32.mxu0 0.0
    %2528 = vmatmul.mubr.f32.gmra.mrb[0].mxu0 %v2459
    %v2529 = vpop.f32.mrb[0].mxu0
    %v2530 = vadd.f32 0.0, %v2529
    %v2531 = vpop.f32.mrb[0].mxu0
    %2532 = vdwg.mxu0
    %v2533 = vmul.f32 %v2530, 0.5
    %s2534 = scalar_lea.vmem %s3, 40
    %v2535 = vld [vmem:[%s2534] sm:$0xff]
    %vm2536 = vcmp.eq.f32.partialorder %v2535, 0.0
    %v2537 = vsel %vm2536, -1e+09, %v2533
    %v2538 = vsel %vm348, %v2537, -inf
    %2539 = vmax.xlane.f32.xlu0 %v2538
    %v2540 = vpop.xlane.xlu0 %2539
    %v2541 = vsub.f32 %v2537, %v2540
    %v2542 = vmul.f32 %v2541, 1.442695
    %v2543 = vpow.pop %v2542
    %v2544 = vsel %vm348, %v2543, 0.0
    %2545 = vadd.xlane.f32.xlu0 %v2544
    %v2546 = vpop.xlane.xlu0 %2545
    %v2547 = vrcp.pop %v2546
    %v2548 = vmul.f32 %v2543, %v2547
    %2549 = vrot.lane.b32.xlu0 %v2284, 112
    %v2550 = vpop.permute.xlu0 %2549
    %v2553 = vsel %vm348, %v2548, 0
    %2555 = vmatprep.subr.mxu0 0.0
    %2556 = vmatpush1.msra.mxu0 %v2550
    %2557 = vmatprep.subr.mxu0 0.0
    %2558 = vmatpush1.msra.mxu0 0.0
    %2559 = vmatprep.subr.mxu0 0.0
    %2560 = vmatpush1.msra.mxu0 0.0
    %2561 = vmatprep.subr.mxu0 0.0
    %2562 = vmatpush1.msra.mxu0 0.0
    %2563 = vmatprep.subr.mxu0 0.0
    %2564 = vmatpush1.msra.mxu0 0.0
    %2565 = vmatprep.subr.mxu0 0.0
    %2566 = vmatpush1.msra.mxu0 0.0
    %2567 = vmatprep.subr.mxu0 0.0
    %2568 = vmatpush1.msra.mxu0 0.0
    %2569 = vmatprep.subr.mxu0 0.0
    %2570 = vmatpush1.msra.mxu0 0.0
    %2571 = vmatprep.subr.mxu0 0.0
    %2572 = vmatpush1.msra.mxu0 0.0
    %2573 = vmatprep.subr.mxu0 0.0
    %2574 = vmatpush1.msra.mxu0 0.0
    %2575 = vmatprep.subr.mxu0 0.0
    %2576 = vmatpush1.msra.mxu0 0.0
    %2577 = vmatprep.subr.mxu0 0.0
    %2578 = vmatpush1.msra.mxu0 0.0
    %2579 = vmatprep.subr.mxu0 0.0
    %2580 = vmatpush1.msra.mxu0 0.0
    %2581 = vmatprep.subr.mxu0 0.0
    %2582 = vmatpush1.msra.mxu0 0.0
    %2583 = vmatprep.subr.mxu0 0.0
    %2584 = vmatpush1.msra.mxu0 0.0
    %2585 = vmatprep.subr.mxu0 0.0
    %2586 = vmatpush1.msra.mxu0 0.0
    %2587 = vmatprep.subr.mxu0 0.0
    %2588 = vmatpush1.msra.mxu0 0.0
    %2589 = vmatprep.subr.mxu0 0.0
    %2590 = vmatpush1.msra.mxu0 0.0
    %2591 = vmatprep.subr.mxu0 0.0
    %2592 = vmatpush1.msra.mxu0 0.0
    %2593 = vmatprep.subr.mxu0 0.0
    %2594 = vmatpush1.msra.mxu0 0.0
    %2595 = vmatprep.subr.mxu0 0.0
    %2596 = vmatpush1.msra.mxu0 0.0
    %2597 = vmatprep.subr.mxu0 0.0
    %2598 = vmatpush1.msra.mxu0 0.0
    %2599 = vmatprep.subr.mxu0 0.0
    %2600 = vmatpush1.msra.mxu0 0.0
    %2601 = vmatprep.subr.mxu0 0.0
    %2602 = vmatpush1.msra.mxu0 0.0
    %2603 = vmatprep.subr.mxu0 0.0
    %2604 = vmatpush1.msra.mxu0 0.0
    %2605 = vmatprep.subr.mxu0 0.0
    %2606 = vmatpush1.msra.mxu0 0.0
    %2607 = vmatprep.subr.mxu0 0.0
    %2608 = vmatpush1.msra.mxu0 0.0
    %2609 = vmatprep.subr.mxu0 0.0
    %2610 = vmatpush1.msra.mxu0 0.0
    %2611 = vmatprep.subr.mxu0 0.0
    %2612 = vmatpush1.msra.mxu0 0.0
    %2613 = vmatprep.subr.mxu0 0.0
    %2614 = vmatpush1.msra.mxu0 0.0
    %2615 = vmatprep.subr.mxu0 0.0
    %2616 = vmatpush1.msra.mxu0 0.0
    %2617 = vmatprep.subr.mxu0 0.0
    %2618 = vmatpush1.msra.mxu0 0.0
    %2619 = vmatprep.mubr.f32.mxu0 0.0
    %2620 = vmatmul.mubr.f32.gmra.mrb[0].mxu0 %v2553
    %v2621 = vpop.f32.mrb[0].mxu0
    %v2622 = vadd.f32 0.0, %v2621
    %v2623 = vpop.f32.mrb[0].mxu0
    %2624 = vdwg.mxu0
    %v2625 = vld [vmem:[%s45] sm:$0xf]
    %v2626 = vld [vmem:[%s47] sm:$0x1]
    %v2628 = vlaneseq
    %v2629 = vshrl.u32 %v2628, 7
    %v2630 = vsub.s32 0, %v2629
    %v2631 = vrot.slane %v2626, %v2630
    %v2634 = vsel %vm1307, %v2453, 0
    %v2637 = vsel %vm1307, %v2622, 0
    %v2640 = vsel %vm1657, %v2625, 0
    %2642 = vmatprep.subr.mxu0 0.0
    %2643 = vmatpush1.msra.mxu0 %v2640
    %2644 = vmatprep.subr.mxu0 0.0
    %2645 = vmatpush1.msra.mxu0 0.0
    %2646 = vmatprep.subr.mxu0 0.0
    %2647 = vmatpush1.msra.mxu0 0.0
    %2648 = vmatprep.subr.mxu0 0.0
    %2649 = vmatpush1.msra.mxu0 0.0
    %2650 = vmatprep.subr.mxu0 0.0
    %2651 = vmatpush1.msra.mxu0 0.0
    %2652 = vmatprep.subr.mxu0 0.0
    %2653 = vmatpush1.msra.mxu0 0.0
    %2654 = vmatprep.subr.mxu0 0.0
    %2655 = vmatpush1.msra.mxu0 0.0
    %2656 = vmatprep.subr.mxu0 0.0
    %2657 = vmatpush1.msra.mxu0 0.0
    %2658 = vmatprep.subr.mxu0 0.0
    %2659 = vmatpush1.msra.mxu0 0.0
    %2660 = vmatprep.subr.mxu0 0.0
    %2661 = vmatpush1.msra.mxu0 0.0
    %2662 = vmatprep.subr.mxu0 0.0
    %2663 = vmatpush1.msra.mxu0 0.0
    %2664 = vmatprep.subr.mxu0 0.0
    %2665 = vmatpush1.msra.mxu0 0.0
    %2666 = vmatprep.subr.mxu0 0.0
    %2667 = vmatpush1.msra.mxu0 0.0
    %2668 = vmatprep.subr.mxu0 0.0
    %2669 = vmatpush1.msra.mxu0 0.0
    %2670 = vmatprep.subr.mxu0 0.0
    %2671 = vmatpush1.msra.mxu0 0.0
    %2672 = vmatprep.subr.mxu0 0.0
    %2673 = vmatpush1.msra.mxu0 0.0
    %2674 = vmatprep.subr.mxu0 0.0
    %2675 = vmatpush1.msra.mxu0 0.0
    %2676 = vmatprep.subr.mxu0 0.0
    %2677 = vmatpush1.msra.mxu0 0.0
    %2678 = vmatprep.subr.mxu0 0.0
    %2679 = vmatpush1.msra.mxu0 0.0
    %2680 = vmatprep.subr.mxu0 0.0
    %2681 = vmatpush1.msra.mxu0 0.0
    %2682 = vmatprep.subr.mxu0 0.0
    %2683 = vmatpush1.msra.mxu0 0.0
    %2684 = vmatprep.subr.mxu0 0.0
    %2685 = vmatpush1.msra.mxu0 0.0
    %2686 = vmatprep.subr.mxu0 0.0
    %2687 = vmatpush1.msra.mxu0 0.0
    %2688 = vmatprep.subr.mxu0 0.0
    %2689 = vmatpush1.msra.mxu0 0.0
    %2690 = vmatprep.subr.mxu0 0.0
    %2691 = vmatpush1.msra.mxu0 0.0
    %2692 = vmatprep.subr.mxu0 0.0
    %2693 = vmatpush1.msra.mxu0 0.0
    %2694 = vmatprep.subr.mxu0 0.0
    %2695 = vmatpush1.msra.mxu0 0.0
    %2696 = vmatprep.subr.mxu0 0.0
    %2697 = vmatpush1.msra.mxu0 0.0
    %2698 = vmatprep.subr.mxu0 0.0
    %2699 = vmatpush1.msra.mxu0 0.0
    %2700 = vmatprep.subr.mxu0 0.0
    %2701 = vmatpush1.msra.mxu0 0.0
    %2702 = vmatprep.subr.mxu0 0.0
    %2703 = vmatpush1.msra.mxu0 0.0
    %2704 = vmatprep.subr.mxu0 0.0
    %2705 = vmatpush1.msra.mxu0 0.0
    %2706 = vmatprep.mubr.f32.mxu0 0.0
    %2707 = vmatmul.mubr.f32.gmra.mrb[0].mxu0 %v2634
    %v2708 = vpop.f32.mrb[0].mxu0
    %v2709 = vadd.f32 %v2631, %v2708
    %v2710 = vpop.f32.mrb[0].mxu0
    %2711 = vmatprep.mubr.f32.mxu0 0.0
    %2712 = vmatmul.mubr.f32.gmra.mrb[0].mxu0 %v2637
    %v2713 = vpop.f32.mrb[0].mxu0
    %v2714 = vadd.f32 %v2631, %v2713
    %v2715 = vpop.f32.mrb[0].mxu0
    %2716 = vdwg.mxu0
    %2719 = vrot.lane.b32.xlu0 %v2709, 24
    %v2720 = vpop.permute.xlu0 %2719
    %2721 = vrot.lane.b32.xlu0 %v2714, 24
    %v2722 = vpop.permute.xlu0 %2721
    %v2725 = vadd.f32 %v192, %v2720
    %v2726 = vadd.f32 %v193, %v2722
    %s2727 = sld [smem:[#allocation2 + $0x10]]
    %v2728 = vstv %s2727
    %v2729 = vmul.f32 %v2725, %v2728
    %v2730 = vmul.f32 %v2726, %v2728
    %v2731 = vadd.f32 %v2729, 0.0
    %v2732 = vadd.f32 %v2730, 0.0
    %2733 = vrot.lane.b32.xlu0 %v2279, 124
    %v2734 = vpop.permute.xlu0 %2733
    %2735 = vrot.lane.b32.xlu0 %v2279, 116
    %v2736 = vpop.permute.xlu0 %2735
    %v2737 = vsel %vm1307, %v2734, 0
    %v2739 = vsel %vm1307, %v2736, 0
    %2741 = vmatprep.subr.mxu0 0.0
    %2742 = vmatpush1.xpose.msra.mxu0 %v2739
    %2743 = vmatprep.subr.mxu0 0.0
    %2744 = vmatpush1.xpose.msra.mxu0 0.0
    %2745 = vmatprep.subr.mxu0 0.0
    %2746 = vmatpush1.xpose.msra.mxu0 0.0
    %2747 = vmatprep.subr.mxu0 0.0
    %2748 = vmatpush1.xpose.msra.mxu0 0.0
    %2749 = vmatprep.subr.mxu0 0.0
    %2750 = vmatpush1.xpose.msra.mxu0 0.0
    %2751 = vmatprep.subr.mxu0 0.0
    %2752 = vmatpush1.xpose.msra.mxu0 0.0
    %2753 = vmatprep.subr.mxu0 0.0
    %2754 = vmatpush1.xpose.msra.mxu0 0.0
    %2755 = vmatprep.subr.mxu0 0.0
    %2756 = vmatpush1.xpose.msra.mxu0 0.0
    %2757 = vmatprep.subr.mxu0 0.0
    %2758 = vmatpush1.xpose.msra.mxu0 0.0
    %2759 = vmatprep.subr.mxu0 0.0
    %2760 = vmatpush1.xpose.msra.mxu0 0.0
    %2761 = vmatprep.subr.mxu0 0.0
    %2762 = vmatpush1.xpose.msra.mxu0 0.0
    %2763 = vmatprep.subr.mxu0 0.0
    %2764 = vmatpush1.xpose.msra.mxu0 0.0
    %2765 = vmatprep.subr.mxu0 0.0
    %2766 = vmatpush1.xpose.msra.mxu0 0.0
    %2767 = vmatprep.subr.mxu0 0.0
    %2768 = vmatpush1.xpose.msra.mxu0 0.0
    %2769 = vmatprep.subr.mxu0 0.0
    %2770 = vmatpush1.xpose.msra.mxu0 0.0
    %2771 = vmatprep.subr.mxu0 0.0
    %2772 = vmatpush1.xpose.msra.mxu0 0.0
    %2773 = vmatprep.subr.mxu0 0.0
    %2774 = vmatpush1.xpose.msra.mxu0 0.0
    %2775 = vmatprep.subr.mxu0 0.0
    %2776 = vmatpush1.xpose.msra.mxu0 0.0
    %2777 = vmatprep.subr.mxu0 0.0
    %2778 = vmatpush1.xpose.msra.mxu0 0.0
    %2779 = vmatprep.subr.mxu0 0.0
    %2780 = vmatpush1.xpose.msra.mxu0 0.0
    %2781 = vmatprep.subr.mxu0 0.0
    %2782 = vmatpush1.xpose.msra.mxu0 0.0
    %2783 = vmatprep.subr.mxu0 0.0
    %2784 = vmatpush1.xpose.msra.mxu0 0.0
    %2785 = vmatprep.subr.mxu0 0.0
    %2786 = vmatpush1.xpose.msra.mxu0 0.0
    %2787 = vmatprep.subr.mxu0 0.0
    %2788 = vmatpush1.xpose.msra.mxu0 0.0
    %2789 = vmatprep.subr.mxu0 0.0
    %2790 = vmatpush1.xpose.msra.mxu0 0.0
    %2791 = vmatprep.subr.mxu0 0.0
    %2792 = vmatpush1.xpose.msra.mxu0 0.0
    %2793 = vmatprep.subr.mxu0 0.0
    %2794 = vmatpush1.xpose.msra.mxu0 0.0
    %2795 = vmatprep.subr.mxu0 0.0
    %2796 = vmatpush1.xpose.msra.mxu0 0.0
    %2797 = vmatprep.subr.mxu0 0.0
    %2798 = vmatpush1.xpose.msra.mxu0 0.0
    %2799 = vmatprep.subr.mxu0 0.0
    %2800 = vmatpush1.xpose.msra.mxu0 0.0
    %2801 = vmatprep.subr.mxu0 0.0
    %2802 = vmatpush1.xpose.msra.mxu0 0.0
    %2803 = vmatprep.subr.mxu0 0.0
    %2804 = vmatpush1.xpose.msra.mxu0 0.0
    %2805 = vmatprep.mubr.f32.mxu0 0.0
    %2806 = vmatmul.mubr.f32.gmra.mrb[0].mxu0 %v2737
    %v2807 = vpop.f32.mrb[0].mxu0
    %v2808 = vadd.f32 0.0, %v2807
    %v2809 = vpop.f32.mrb[0].mxu0
    %2810 = vdwg.mxu0
    %v2811 = vmul.f32 %v2808, 0.5
    %v2812 = vsel %vm2367, -1e+09, %v2811
    %v2813 = vsel %vm348, %v2812, -inf
    %2814 = vmax.xlane.f32.xlu0 %v2813
    %v2815 = vpop.xlane.xlu0 %2814
    %v2816 = vsub.f32 %v2812, %v2815
    %v2817 = vmul.f32 %v2816, 1.442695
    %v2818 = vpow.pop %v2817
    %v2819 = vsel %vm348, %v2818, 0.0
    %2820 = vadd.xlane.f32.xlu0 %v2819
    %v2821 = vpop.xlane.xlu0 %2820
    %v2822 = vrcp.pop %v2821
    %v2823 = vmul.f32 %v2818, %v2822
    %2824 = vrot.lane.b32.xlu0 %v2279, 108
    %v2825 = vpop.permute.xlu0 %2824
    %v2828 = vsel %vm348, %v2823, 0
    %2830 = vmatprep.subr.mxu0 0.0
    %2831 = vmatpush1.msra.mxu0 %v2825
    %2832 = vmatprep.subr.mxu0 0.0
    %2833 = vmatpush1.msra.mxu0 0.0
    %2834 = vmatprep.subr.mxu0 0.0
    %2835 = vmatpush1.msra.mxu0 0.0
    %2836 = vmatprep.subr.mxu0 0.0
    %2837 = vmatpush1.msra.mxu0 0.0
    %2838 = vmatprep.subr.mxu0 0.0
    %2839 = vmatpush1.msra.mxu0 0.0
    %2840 = vmatprep.subr.mxu0 0.0
    %2841 = vmatpush1.msra.mxu0 0.0
    %2842 = vmatprep.subr.mxu0 0.0
    %2843 = vmatpush1.msra.mxu0 0.0
    %2844 = vmatprep.subr.mxu0 0.0
    %2845 = vmatpush1.msra.mxu0 0.0
    %2846 = vmatprep.subr.mxu0 0.0
    %2847 = vmatpush1.msra.mxu0 0.0
    %2848 = vmatprep.subr.mxu0 0.0
    %2849 = vmatpush1.msra.mxu0 0.0
    %2850 = vmatprep.subr.mxu0 0.0
    %2851 = vmatpush1.msra.mxu0 0.0
    %2852 = vmatprep.subr.mxu0 0.0
    %2853 = vmatpush1.msra.mxu0 0.0
    %2854 = vmatprep.subr.mxu0 0.0
    %2855 = vmatpush1.msra.mxu0 0.0
    %2856 = vmatprep.subr.mxu0 0.0
    %2857 = vmatpush1.msra.mxu0 0.0
    %2858 = vmatprep.subr.mxu0 0.0
    %2859 = vmatpush1.msra.mxu0 0.0
    %2860 = vmatprep.subr.mxu0 0.0
    %2861 = vmatpush1.msra.mxu0 0.0
    %2862 = vmatprep.subr.mxu0 0.0
    %2863 = vmatpush1.msra.mxu0 0.0
    %2864 = vmatprep.subr.mxu0 0.0
    %2865 = vmatpush1.msra.mxu0 0.0
    %2866 = vmatprep.subr.mxu0 0.0
    %2867 = vmatpush1.msra.mxu0 0.0
    %2868 = vmatprep.subr.mxu0 0.0
    %2869 = vmatpush1.msra.mxu0 0.0
    %2870 = vmatprep.subr.mxu0 0.0
    %2871 = vmatpush1.msra.mxu0 0.0
    %2872 = vmatprep.subr.mxu0 0.0
    %2873 = vmatpush1.msra.mxu0 0.0
    %2874 = vmatprep.subr.mxu0 0.0
    %2875 = vmatpush1.msra.mxu0 0.0
    %2876 = vmatprep.subr.mxu0 0.0
    %2877 = vmatpush1.msra.mxu0 0.0
    %2878 = vmatprep.subr.mxu0 0.0
    %2879 = vmatpush1.msra.mxu0 0.0
    %2880 = vmatprep.subr.mxu0 0.0
    %2881 = vmatpush1.msra.mxu0 0.0
    %2882 = vmatprep.subr.mxu0 0.0
    %2883 = vmatpush1.msra.mxu0 0.0
    %2884 = vmatprep.subr.mxu0 0.0
    %2885 = vmatpush1.msra.mxu0 0.0
    %2886 = vmatprep.subr.mxu0 0.0
    %2887 = vmatpush1.msra.mxu0 0.0
    %2888 = vmatprep.subr.mxu0 0.0
    %2889 = vmatpush1.msra.mxu0 0.0
    %2890 = vmatprep.subr.mxu0 0.0
    %2891 = vmatpush1.msra.mxu0 0.0
    %2892 = vmatprep.subr.mxu0 0.0
    %2893 = vmatpush1.msra.mxu0 0.0
    %2894 = vmatprep.mubr.f32.mxu0 0.0
    %2895 = vmatmul.mubr.f32.gmra.mrb[0].mxu0 %v2828
    %v2896 = vpop.f32.mrb[0].mxu0
    %v2897 = vadd.f32 0.0, %v2896
    %v2898 = vpop.f32.mrb[0].mxu0
    %2899 = vdwg.mxu0
    %2900 = vrot.lane.b32.xlu0 %v2284, 124
    %v2901 = vpop.permute.xlu0 %2900
    %2902 = vrot.lane.b32.xlu0 %v2284, 116
    %v2903 = vpop.permute.xlu0 %2902
    %v2904 = vsel %vm1307, %v2901, 0
    %v2906 = vsel %vm1307, %v2903, 0
    %2908 = vmatprep.subr.mxu0 0.0
    %2909 = vmatpush1.xpose.msra.mxu0 %v2906
    %2910 = vmatprep.subr.mxu0 0.0
    %2911 = vmatpush1.xpose.msra.mxu0 0.0
    %2912 = vmatprep.subr.mxu0 0.0
    %2913 = vmatpush1.xpose.msra.mxu0 0.0
    %2914 = vmatprep.subr.mxu0 0.0
    %2915 = vmatpush1.xpose.msra.mxu0 0.0
    %2916 = vmatprep.subr.mxu0 0.0
    %2917 = vmatpush1.xpose.msra.mxu0 0.0
    %2918 = vmatprep.subr.mxu0 0.0
    %2919 = vmatpush1.xpose.msra.mxu0 0.0
    %2920 = vmatprep.subr.mxu0 0.0
    %2921 = vmatpush1.xpose.msra.mxu0 0.0
    %2922 = vmatprep.subr.mxu0 0.0
    %2923 = vmatpush1.xpose.msra.mxu0 0.0
    %2924 = vmatprep.subr.mxu0 0.0
    %2925 = vmatpush1.xpose.msra.mxu0 0.0
    %2926 = vmatprep.subr.mxu0 0.0
    %2927 = vmatpush1.xpose.msra.mxu0 0.0
    %2928 = vmatprep.subr.mxu0 0.0
    %2929 = vmatpush1.xpose.msra.mxu0 0.0
    %2930 = vmatprep.subr.mxu0 0.0
    %2931 = vmatpush1.xpose.msra.mxu0 0.0
    %2932 = vmatprep.subr.mxu0 0.0
    %2933 = vmatpush1.xpose.msra.mxu0 0.0
    %2934 = vmatprep.subr.mxu0 0.0
    %2935 = vmatpush1.xpose.msra.mxu0 0.0
    %2936 = vmatprep.subr.mxu0 0.0
    %2937 = vmatpush1.xpose.msra.mxu0 0.0
    %2938 = vmatprep.subr.mxu0 0.0
    %2939 = vmatpush1.xpose.msra.mxu0 0.0
    %2940 = vmatprep.subr.mxu0 0.0
    %2941 = vmatpush1.xpose.msra.mxu0 0.0
    %2942 = vmatprep.subr.mxu0 0.0
    %2943 = vmatpush1.xpose.msra.mxu0 0.0
    %2944 = vmatprep.subr.mxu0 0.0
    %2945 = vmatpush1.xpose.msra.mxu0 0.0
    %2946 = vmatprep.subr.mxu0 0.0
    %2947 = vmatpush1.xpose.msra.mxu0 0.0
    %2948 = vmatprep.subr.mxu0 0.0
    %2949 = vmatpush1.xpose.msra.mxu0 0.0
    %2950 = vmatprep.subr.mxu0 0.0
    %2951 = vmatpush1.xpose.msra.mxu0 0.0
    %2952 = vmatprep.subr.mxu0 0.0
    %2953 = vmatpush1.xpose.msra.mxu0 0.0
    %2954 = vmatprep.subr.mxu0 0.0
    %2955 = vmatpush1.xpose.msra.mxu0 0.0
    %2956 = vmatprep.subr.mxu0 0.0
    %2957 = vmatpush1.xpose.msra.mxu0 0.0
    %2958 = vmatprep.subr.mxu0 0.0
    %2959 = vmatpush1.xpose.msra.mxu0 0.0
    %2960 = vmatprep.subr.mxu0 0.0
    %2961 = vmatpush1.xpose.msra.mxu0 0.0
    %2962 = vmatprep.subr.mxu0 0.0
    %2963 = vmatpush1.xpose.msra.mxu0 0.0
    %2964 = vmatprep.subr.mxu0 0.0
    %2965 = vmatpush1.xpose.msra.mxu0 0.0
    %2966 = vmatprep.subr.mxu0 0.0
    %2967 = vmatpush1.xpose.msra.mxu0 0.0
    %2968 = vmatprep.subr.mxu0 0.0
    %2969 = vmatpush1.xpose.msra.mxu0 0.0
    %2970 = vmatprep.subr.mxu0 0.0
    %2971 = vmatpush1.xpose.msra.mxu0 0.0
    %2972 = vmatprep.mubr.f32.mxu0 0.0
    %2973 = vmatmul.mubr.f32.gmra.mrb[0].mxu0 %v2904
    %v2974 = vpop.f32.mrb[0].mxu0
    %v2975 = vadd.f32 0.0, %v2974
    %v2976 = vpop.f32.mrb[0].mxu0
    %2977 = vdwg.mxu0
    %v2978 = vmul.f32 %v2975, 0.5
    %v2979 = vsel %vm2536, -1e+09, %v2978
    %v2980 = vsel %vm348, %v2979, -inf
    %2981 = vmax.xlane.f32.xlu0 %v2980
    %v2982 = vpop.xlane.xlu0 %2981
    %v2983 = vsub.f32 %v2979, %v2982
    %v2984 = vmul.f32 %v2983, 1.442695
    %v2985 = vpow.pop %v2984
    %v2986 = vsel %vm348, %v2985, 0.0
    %2987 = vadd.xlane.f32.xlu0 %v2986
    %v2988 = vpop.xlane.xlu0 %2987
    %v2989 = vrcp.pop %v2988
    %v2990 = vmul.f32 %v2985, %v2989
    %2991 = vrot.lane.b32.xlu0 %v2284, 108
    %v2992 = vpop.permute.xlu0 %2991
    %v2995 = vsel %vm348, %v2990, 0
    %2997 = vmatprep.subr.mxu0 0.0
    %2998 = vmatpush1.msra.mxu0 %v2992
    %2999 = vmatprep.subr.mxu0 0.0
    %3000 = vmatpush1.msra.mxu0 0.0
    %3001 = vmatprep.subr.mxu0 0.0
    %3002 = vmatpush1.msra.mxu0 0.0
    %3003 = vmatprep.subr.mxu0 0.0
    %3004 = vmatpush1.msra.mxu0 0.0
    %3005 = vmatprep.subr.mxu0 0.0
    %3006 = vmatpush1.msra.mxu0 0.0
    %3007 = vmatprep.subr.mxu0 0.0
    %3008 = vmatpush1.msra.mxu0 0.0
    %3009 = vmatprep.subr.mxu0 0.0
    %3010 = vmatpush1.msra.mxu0 0.0
    %3011 = vmatprep.subr.mxu0 0.0
    %3012 = vmatpush1.msra.mxu0 0.0
    %3013 = vmatprep.subr.mxu0 0.0
    %3014 = vmatpush1.msra.mxu0 0.0
    %3015 = vmatprep.subr.mxu0 0.0
    %3016 = vmatpush1.msra.mxu0 0.0
    %3017 = vmatprep.subr.mxu0 0.0
    %3018 = vmatpush1.msra.mxu0 0.0
    %3019 = vmatprep.subr.mxu0 0.0
    %3020 = vmatpush1.msra.mxu0 0.0
    %3021 = vmatprep.subr.mxu0 0.0
    %3022 = vmatpush1.msra.mxu0 0.0
    %3023 = vmatprep.subr.mxu0 0.0
    %3024 = vmatpush1.msra.mxu0 0.0
    %3025 = vmatprep.subr.mxu0 0.0
    %3026 = vmatpush1.msra.mxu0 0.0
    %3027 = vmatprep.subr.mxu0 0.0
    %3028 = vmatpush1.msra.mxu0 0.0
    %3029 = vmatprep.subr.mxu0 0.0
    %3030 = vmatpush1.msra.mxu0 0.0
    %3031 = vmatprep.subr.mxu0 0.0
    %3032 = vmatpush1.msra.mxu0 0.0
    %3033 = vmatprep.subr.mxu0 0.0
    %3034 = vmatpush1.msra.mxu0 0.0
    %3035 = vmatprep.subr.mxu0 0.0
    %3036 = vmatpush1.msra.mxu0 0.0
    %3037 = vmatprep.subr.mxu0 0.0
    %3038 = vmatpush1.msra.mxu0 0.0
    %3039 = vmatprep.subr.mxu0 0.0
    %3040 = vmatpush1.msra.mxu0 0.0
    %3041 = vmatprep.subr.mxu0 0.0
    %3042 = vmatpush1.msra.mxu0 0.0
    %3043 = vmatprep.subr.mxu0 0.0
    %3044 = vmatpush1.msra.mxu0 0.0
    %3045 = vmatprep.subr.mxu0 0.0
    %3046 = vmatpush1.msra.mxu0 0.0
    %3047 = vmatprep.subr.mxu0 0.0
    %3048 = vmatpush1.msra.mxu0 0.0
    %3049 = vmatprep.subr.mxu0 0.0
    %3050 = vmatpush1.msra.mxu0 0.0
    %3051 = vmatprep.subr.mxu0 0.0
    %3052 = vmatpush1.msra.mxu0 0.0
    %3053 = vmatprep.subr.mxu0 0.0
    %3054 = vmatpush1.msra.mxu0 0.0
    %3055 = vmatprep.subr.mxu0 0.0
    %3056 = vmatpush1.msra.mxu0 0.0
    %3057 = vmatprep.subr.mxu0 0.0
    %3058 = vmatpush1.msra.mxu0 0.0
    %3059 = vmatprep.subr.mxu0 0.0
    %3060 = vmatpush1.msra.mxu0 0.0
    %3061 = vmatprep.mubr.f32.mxu0 0.0
    %3062 = vmatmul.mubr.f32.gmra.mrb[0].mxu0 %v2995
    %v3063 = vpop.f32.mrb[0].mxu0
    %v3064 = vadd.f32 0.0, %v3063
    %v3065 = vpop.f32.mrb[0].mxu0
    %3066 = vdwg.mxu0
    %s3067 = scalar_lea.vmem %s45, 4
    %v3068 = vld [vmem:[%s3067] sm:$0xf]
    %s3069 = scalar_lea.vmem %s47, 1
    %v3070 = vld [vmem:[%s3069] sm:$0x1]
    %v3072 = vlaneseq
    %v3073 = vshrl.u32 %v3072, 7
    %v3074 = vsub.s32 0, %v3073
    %v3075 = vrot.slane %v3070, %v3074
    %v3078 = vsel %vm1307, %v2897, 0
    %v3081 = vsel %vm1307, %v3064, 0
    %v3084 = vsel %vm1657, %v3068, 0
    %3086 = vmatprep.subr.mxu0 0.0
    %3087 = vmatpush1.msra.mxu0 %v3084
    %3088 = vmatprep.subr.mxu0 0.0
    %3089 = vmatpush1.msra.mxu0 0.0
    %3090 = vmatprep.subr.mxu0 0.0
    %3091 = vmatpush1.msra.mxu0 0.0
    %3092 = vmatprep.subr.mxu0 0.0
    %3093 = vmatpush1.msra.mxu0 0.0
    %3094 = vmatprep.subr.mxu0 0.0
    %3095 = vmatpush1.msra.mxu0 0.0
    %3096 = vmatprep.subr.mxu0 0.0
    %3097 = vmatpush1.msra.mxu0 0.0
    %3098 = vmatprep.subr.mxu0 0.0
    %3099 = vmatpush1.msra.mxu0 0.0
    %3100 = vmatprep.subr.mxu0 0.0
    %3101 = vmatpush1.msra.mxu0 0.0
    %3102 = vmatprep.subr.mxu0 0.0
    %3103 = vmatpush1.msra.mxu0 0.0
    %3104 = vmatprep.subr.mxu0 0.0
    %3105 = vmatpush1.msra.mxu0 0.0
    %3106 = vmatprep.subr.mxu0 0.0
    %3107 = vmatpush1.msra.mxu0 0.0
    %3108 = vmatprep.subr.mxu0 0.0
    %3109 = vmatpush1.msra.mxu0 0.0
    %3110 = vmatprep.subr.mxu0 0.0
    %3111 = vmatpush1.msra.mxu0 0.0
    %3112 = vmatprep.subr.mxu0 0.0
    %3113 = vmatpush1.msra.mxu0 0.0
    %3114 = vmatprep.subr.mxu0 0.0
    %3115 = vmatpush1.msra.mxu0 0.0
    %3116 = vmatprep.subr.mxu0 0.0
    %3117 = vmatpush1.msra.mxu0 0.0
    %3118 = vmatprep.subr.mxu0 0.0
    %3119 = vmatpush1.msra.mxu0 0.0
    %3120 = vmatprep.subr.mxu0 0.0
    %3121 = vmatpush1.msra.mxu0 0.0
    %3122 = vmatprep.subr.mxu0 0.0
    %3123 = vmatpush1.msra.mxu0 0.0
    %3124 = vmatprep.subr.mxu0 0.0
    %3125 = vmatpush1.msra.mxu0 0.0
    %3126 = vmatprep.subr.mxu0 0.0
    %3127 = vmatpush1.msra.mxu0 0.0
    %3128 = vmatprep.subr.mxu0 0.0
    %3129 = vmatpush1.msra.mxu0 0.0
    %3130 = vmatprep.subr.mxu0 0.0
    %3131 = vmatpush1.msra.mxu0 0.0
    %3132 = vmatprep.subr.mxu0 0.0
    %3133 = vmatpush1.msra.mxu0 0.0
    %3134 = vmatprep.subr.mxu0 0.0
    %3135 = vmatpush1.msra.mxu0 0.0
    %3136 = vmatprep.subr.mxu0 0.0
    %3137 = vmatpush1.msra.mxu0 0.0
    %3138 = vmatprep.subr.mxu0 0.0
    %3139 = vmatpush1.msra.mxu0 0.0
    %3140 = vmatprep.subr.mxu0 0.0
    %3141 = vmatpush1.msra.mxu0 0.0
    %3142 = vmatprep.subr.mxu0 0.0
    %3143 = vmatpush1.msra.mxu0 0.0
    %3144 = vmatprep.subr.mxu0 0.0
    %3145 = vmatpush1.msra.mxu0 0.0
    %3146 = vmatprep.subr.mxu0 0.0
    %3147 = vmatpush1.msra.mxu0 0.0
    %3148 = vmatprep.subr.mxu0 0.0
    %3149 = vmatpush1.msra.mxu0 0.0
    %3150 = vmatprep.mubr.f32.mxu0 0.0
    %3151 = vmatmul.mubr.f32.gmra.mrb[0].mxu0 %v3078
    %v3152 = vpop.f32.mrb[0].mxu0
    %v3153 = vadd.f32 %v3075, %v3152
    %v3154 = vpop.f32.mrb[0].mxu0
    %3155 = vmatprep.mubr.f32.mxu0 0.0
    %3156 = vmatmul.mubr.f32.gmra.mrb[0].mxu0 %v3081
    %v3157 = vpop.f32.mrb[0].mxu0
    %v3158 = vadd.f32 %v3075, %v3157
    %v3159 = vpop.f32.mrb[0].mxu0
    %3160 = vdwg.mxu0
    %3163 = vrot.lane.b32.xlu0 %v3153, 24
    %v3164 = vpop.permute.xlu0 %3163
    %3165 = vrot.lane.b32.xlu0 %v3158, 24
    %v3166 = vpop.permute.xlu0 %3165
    %v3169 = vadd.f32 %v2725, %v3164
    %v3170 = vadd.f32 %v2726, %v3166
    %s3171 = sld [smem:[#allocation2 + $0x14]]
    %v3172 = vstv %s3171
    %v3173 = vmul.f32 %v3169, %v3172
    %v3174 = vmul.f32 %v3170, %v3172
    %v3175 = vadd.f32 %v2731, %v3173
    %v3176 = vadd.f32 %v2732, %v3174
    %v3177 = vld [vmem:[%s49] sm:$0xff]
    %v3178 = vld [vmem:[%s49 + $0x8] sm:$0xff]
    %v3179 = vld [vmem:[%s49 + $0x10] sm:$0xff]
    %v3180 = vld [vmem:[%s51] sm:$0x1]
    %3181 = vmatprep.subr.mxu0 0.0
    %3182 = vmatpush1.msra.mxu0 %v3179
    %3183 = vmatprep.subr.mxu0 0.0
    %3184 = vmatpush1.msra.mxu0 0.0
    %3185 = vmatprep.subr.mxu0 0.0
    %3186 = vmatpush1.msra.mxu0 0.0
    %3187 = vmatprep.subr.mxu0 0.0
    %3188 = vmatpush1.msra.mxu0 0.0
    %3189 = vmatprep.subr.mxu0 0.0
    %3190 = vmatpush1.msra.mxu0 0.0
    %3191 = vmatprep.subr.mxu0 0.0
    %3192 = vmatpush1.msra.mxu0 0.0
    %3193 = vmatprep.subr.mxu0 0.0
    %3194 = vmatpush1.msra.mxu0 0.0
    %3195 = vmatprep.subr.mxu0 0.0
    %3196 = vmatpush1.msra.mxu0 0.0
    %3197 = vmatprep.subr.mxu0 0.0
    %3198 = vmatpush1.msra.mxu0 0.0
    %3199 = vmatprep.subr.mxu0 0.0
    %3200 = vmatpush1.msra.mxu0 0.0
    %3201 = vmatprep.subr.mxu0 0.0
    %3202 = vmatpush1.msra.mxu0 0.0
    %3203 = vmatprep.subr.mxu0 0.0
    %3204 = vmatpush1.msra.mxu0 0.0
    %3205 = vmatprep.subr.mxu0 0.0
    %3206 = vmatpush1.msra.mxu0 0.0
    %3207 = vmatprep.subr.mxu0 0.0
    %3208 = vmatpush1.msra.mxu0 0.0
    %3209 = vmatprep.subr.mxu0 0.0
    %3210 = vmatpush1.msra.mxu0 0.0
    %3211 = vmatprep.subr.mxu0 0.0
    %3212 = vmatpush1.msra.mxu0 0.0
    %3213 = vmatprep.subr.mxu0 0.0
    %3214 = vmatpush1.msra.mxu0 0.0
    %3215 = vmatprep.subr.mxu0 0.0
    %3216 = vmatpush1.msra.mxu0 0.0
    %3217 = vmatprep.subr.mxu0 0.0
    %3218 = vmatpush1.msra.mxu0 0.0
    %3219 = vmatprep.subr.mxu0 0.0
    %3220 = vmatpush1.msra.mxu0 0.0
    %3221 = vmatprep.subr.mxu0 0.0
    %3222 = vmatpush1.msra.mxu0 0.0
    %3223 = vmatprep.subr.mxu0 0.0
    %3224 = vmatpush1.msra.mxu0 0.0
    %3225 = vmatprep.subr.mxu0 0.0
    %3226 = vmatpush1.msra.mxu0 0.0
    %3227 = vmatprep.subr.mxu0 0.0
    %3228 = vmatpush1.msra.mxu0 0.0
    %3229 = vmatprep.subr.mxu0 0.0
    %3230 = vmatpush1.msra.mxu0 0.0
    %3231 = vmatprep.subr.mxu0 0.0
    %3232 = vmatpush1.msra.mxu0 0.0
    %3233 = vmatprep.subr.mxu0 0.0
    %3234 = vmatpush1.msra.mxu0 0.0
    %3235 = vmatprep.subr.mxu0 0.0
    %3236 = vmatpush1.msra.mxu0 0.0
    %3237 = vmatprep.subr.mxu0 0.0
    %3238 = vmatpush1.msra.mxu0 0.0
    %3239 = vmatprep.subr.mxu0 0.0
    %3240 = vmatpush1.msra.mxu0 0.0
    %3241 = vmatprep.subr.mxu0 0.0
    %3242 = vmatpush1.msra.mxu0 0.0
    %3243 = vmatprep.subr.mxu0 0.0
    %3244 = vmatpush1.msra.mxu0 0.0
    %3245 = vmatprep.mubr.f32.mxu0 0.0
    %3246 = vmatmul.mubr.f32.gmra.mrb[0].mxu0 %v1225
    %v3247 = vpop.f32.mrb[0].mxu0
    %v3248 = vadd.f32 0.0, %v3247
    %v3249 = vpop.f32.mrb[0].mxu0
    %3250 = vmatprep.mubr.f32.mxu0 0.0
    %3251 = vmatmul.mubr.f32.gmra.mrb[0].mxu0 %v1227
    %v3252 = vpop.f32.mrb[0].mxu0
    %v3253 = vadd.f32 0.0, %v3252
    %v3254 = vpop.f32.mrb[0].mxu0
    %3255 = vdwg.mxu0
    %3256 = vmatprep.subr.mxu0 0.0
    %3257 = vmatpush1.msra.mxu0 %v3177
    %3258 = vmatprep.subr.mxu0 0.0
    %3259 = vmatpush1.msra.mxu0 %v3178
    %3260 = vmatprep.subr.mxu0 0.0
    %3261 = vmatpush1.msra.mxu0 0.0
    %3262 = vmatprep.subr.mxu0 0.0
    %3263 = vmatpush1.msra.mxu0 0.0
    %3264 = vmatprep.subr.mxu0 0.0
    %3265 = vmatpush1.msra.mxu0 0.0
    %3266 = vmatprep.subr.mxu0 0.0
    %3267 = vmatpush1.msra.mxu0 0.0
    %3268 = vmatprep.subr.mxu0 0.0
    %3269 = vmatpush1.msra.mxu0 0.0
    %3270 = vmatprep.subr.mxu0 0.0
    %3271 = vmatpush1.msra.mxu0 0.0
    %3272 = vmatprep.subr.mxu0 0.0
    %3273 = vmatpush1.msra.mxu0 0.0
    %3274 = vmatprep.subr.mxu0 0.0
    %3275 = vmatpush1.msra.mxu0 0.0
    %3276 = vmatprep.subr.mxu0 0.0
    %3277 = vmatpush1.msra.mxu0 0.0
    %3278 = vmatprep.subr.mxu0 0.0
    %3279 = vmatpush1.msra.mxu0 0.0
    %3280 = vmatprep.subr.mxu0 0.0
    %3281 = vmatpush1.msra.mxu0 0.0
    %3282 = vmatprep.subr.mxu0 0.0
    %3283 = vmatpush1.msra.mxu0 0.0
    %3284 = vmatprep.subr.mxu0 0.0
    %3285 = vmatpush1.msra.mxu0 0.0
    %3286 = vmatprep.subr.mxu0 0.0
    %3287 = vmatpush1.msra.mxu0 0.0
    %3288 = vmatprep.subr.mxu0 0.0
    %3289 = vmatpush1.msra.mxu0 0.0
    %3290 = vmatprep.subr.mxu0 0.0
    %3291 = vmatpush1.msra.mxu0 0.0
    %3292 = vmatprep.subr.mxu0 0.0
    %3293 = vmatpush1.msra.mxu0 0.0
    %3294 = vmatprep.subr.mxu0 0.0
    %3295 = vmatpush1.msra.mxu0 0.0
    %3296 = vmatprep.subr.mxu0 0.0
    %3297 = vmatpush1.msra.mxu0 0.0
    %3298 = vmatprep.subr.mxu0 0.0
    %3299 = vmatpush1.msra.mxu0 0.0
    %3300 = vmatprep.subr.mxu0 0.0
    %3301 = vmatpush1.msra.mxu0 0.0
    %3302 = vmatprep.subr.mxu0 0.0
    %3303 = vmatpush1.msra.mxu0 0.0
    %3304 = vmatprep.subr.mxu0 0.0
    %3305 = vmatpush1.msra.mxu0 0.0
    %3306 = vmatprep.subr.mxu0 0.0
    %3307 = vmatpush1.msra.mxu0 0.0
    %3308 = vmatprep.subr.mxu0 0.0
    %3309 = vmatpush1.msra.mxu0 0.0
    %3310 = vmatprep.subr.mxu0 0.0
    %3311 = vmatpush1.msra.mxu0 0.0
    %3312 = vmatprep.subr.mxu0 0.0
    %3313 = vmatpush1.msra.mxu0 0.0
    %3314 = vmatprep.subr.mxu0 0.0
    %3315 = vmatpush1.msra.mxu0 0.0
    %3316 = vmatprep.subr.mxu0 0.0
    %3317 = vmatpush1.msra.mxu0 0.0
    %3318 = vmatprep.subr.mxu0 0.0
    %3319 = vmatpush1.msra.mxu0 0.0
    %3320 = vmatprep.mubr.f32.mxu0 0.0
    %3321 = vmatmul.mubr.f32.gmra.mrb[0].mxu0 %v265
    %v3322 = vpop.f32.mrb[0].mxu0
    %v3323 = vadd.f32 %v3248, %v3322
    %v3324 = vpop.f32.mrb[0].mxu0
    %3325 = vmatprep.mubr.f32.mxu0 0.0
    %3326 = vmatmul.mubr.f32.gmra.mrb[0].mxu0 %v268
    %v3327 = vpop.f32.mrb[0].mxu0
    %v3328 = vadd.f32 %v3253, %v3327
    %v3329 = vpop.f32.mrb[0].mxu0
    %3330 = vdwg.mxu0
    %v3332 = vlaneseq
    %v3333 = vshrl.u32 %v3332, 7
    %v3334 = vsub.s32 0, %v3333
    %v3335 = vrot.slane %v3180, %v3334
    %v3337 = vadd.f32 %v3323, %v3335
    %v3338 = vadd.f32 %v3328, %v3335
    %3340 = vrot.lane.b32.xlu0 %v3337, 104
    %v3341 = vpop.permute.xlu0 %3340
    %vm3342 = vcmask 97280
    %v3343 = vsel %vm3342, %v3337, 0
    %v3345 = vsel %vm3342, %v3341, 0
    %3347 = vmatprep.subr.mxu0 0.0
    %3348 = vmatpush1.xpose.msra.mxu0 %v3345
    %3349 = vmatprep.subr.mxu0 0.0
    %3350 = vmatpush1.xpose.msra.mxu0 0.0
    %3351 = vmatprep.subr.mxu0 0.0
    %3352 = vmatpush1.xpose.msra.mxu0 0.0
    %3353 = vmatprep.subr.mxu0 0.0
    %3354 = vmatpush1.xpose.msra.mxu0 0.0
    %3355 = vmatprep.subr.mxu0 0.0
    %3356 = vmatpush1.xpose.msra.mxu0 0.0
    %3357 = vmatprep.subr.mxu0 0.0
    %3358 = vmatpush1.xpose.msra.mxu0 0.0
    %3359 = vmatprep.subr.mxu0 0.0
    %3360 = vmatpush1.xpose.msra.mxu0 0.0
    %3361 = vmatprep.subr.mxu0 0.0
    %3362 = vmatpush1.xpose.msra.mxu0 0.0
    %3363 = vmatprep.subr.mxu0 0.0
    %3364 = vmatpush1.xpose.msra.mxu0 0.0
    %3365 = vmatprep.subr.mxu0 0.0
    %3366 = vmatpush1.xpose.msra.mxu0 0.0
    %3367 = vmatprep.subr.mxu0 0.0
    %3368 = vmatpush1.xpose.msra.mxu0 0.0
    %3369 = vmatprep.subr.mxu0 0.0
    %3370 = vmatpush1.xpose.msra.mxu0 0.0
    %3371 = vmatprep.subr.mxu0 0.0
    %3372 = vmatpush1.xpose.msra.mxu0 0.0
    %3373 = vmatprep.subr.mxu0 0.0
    %3374 = vmatpush1.xpose.msra.mxu0 0.0
    %3375 = vmatprep.subr.mxu0 0.0
    %3376 = vmatpush1.xpose.msra.mxu0 0.0
    %3377 = vmatprep.subr.mxu0 0.0
    %3378 = vmatpush1.xpose.msra.mxu0 0.0
    %3379 = vmatprep.subr.mxu0 0.0
    %3380 = vmatpush1.xpose.msra.mxu0 0.0
    %3381 = vmatprep.subr.mxu0 0.0
    %3382 = vmatpush1.xpose.msra.mxu0 0.0
    %3383 = vmatprep.subr.mxu0 0.0
    %3384 = vmatpush1.xpose.msra.mxu0 0.0
    %3385 = vmatprep.subr.mxu0 0.0
    %3386 = vmatpush1.xpose.msra.mxu0 0.0
    %3387 = vmatprep.subr.mxu0 0.0
    %3388 = vmatpush1.xpose.msra.mxu0 0.0
    %3389 = vmatprep.subr.mxu0 0.0
    %3390 = vmatpush1.xpose.msra.mxu0 0.0
    %3391 = vmatprep.subr.mxu0 0.0
    %3392 = vmatpush1.xpose.msra.mxu0 0.0
    %3393 = vmatprep.subr.mxu0 0.0
    %3394 = vmatpush1.xpose.msra.mxu0 0.0
    %3395 = vmatprep.subr.mxu0 0.0
    %3396 = vmatpush1.xpose.msra.mxu0 0.0
    %3397 = vmatprep.subr.mxu0 0.0
    %3398 = vmatpush1.xpose.msra.mxu0 0.0
    %3399 = vmatprep.subr.mxu0 0.0
    %3400 = vmatpush1.xpose.msra.mxu0 0.0
    %3401 = vmatprep.subr.mxu0 0.0
    %3402 = vmatpush1.xpose.msra.mxu0 0.0
    %3403 = vmatprep.subr.mxu0 0.0
    %3404 = vmatpush1.xpose.msra.mxu0 0.0
    %3405 = vmatprep.subr.mxu0 0.0
    %3406 = vmatpush1.xpose.msra.mxu0 0.0
    %3407 = vmatprep.subr.mxu0 0.0
    %3408 = vmatpush1.xpose.msra.mxu0 0.0
    %3409 = vmatprep.subr.mxu0 0.0
    %3410 = vmatpush1.xpose.msra.mxu0 0.0
    %3411 = vmatprep.mubr.f32.mxu0 0.0
    %3412 = vmatmul.mubr.f32.gmra.mrb[0].mxu0 %v3343
    %v3413 = vpop.f32.mrb[0].mxu0
    %v3414 = vadd.f32 0.0, %v3413
    %v3415 = vpop.f32.mrb[0].mxu0
    %3416 = vdwg.mxu0
    %v3417 = vmul.f32 %v3414, 0.28867513
    %s3418 = scalar_lea.vmem %s3, 48
    %v3419 = vld [vmem:[%s3418] sm:$0xff]
    %vm3420 = vcmp.eq.f32.partialorder %v3419, 0.0
    %v3421 = vsel %vm3420, -1e+09, %v3417
    %v3422 = vsel %vm348, %v3421, -inf
    %3423 = vmax.xlane.f32.xlu0 %v3422
    %v3424 = vpop.xlane.xlu0 %3423
    %v3425 = vsub.f32 %v3421, %v3424
    %v3426 = vmul.f32 %v3425, 1.442695
    %v3427 = vpow.pop %v3426
    %v3428 = vsel %vm348, %v3427, 0.0
    %3429 = vadd.xlane.f32.xlu0 %v3428
    %v3430 = vpop.xlane.xlu0 %3429
    %v3431 = vrcp.pop %v3430
    %v3432 = vmul.f32 %v3427, %v3431
    %3433 = vrot.lane.b32.xlu0 %v3337, 80
    %v3434 = vpop.permute.xlu0 %3433
    %v3437 = vsel %vm348, %v3432, 0
    %3439 = vmatprep.subr.mxu0 0.0
    %3440 = vmatpush1.msra.mxu0 %v3434
    %3441 = vmatprep.subr.mxu0 0.0
    %3442 = vmatpush1.msra.mxu0 0.0
    %3443 = vmatprep.subr.mxu0 0.0
    %3444 = vmatpush1.msra.mxu0 0.0
    %3445 = vmatprep.subr.mxu0 0.0
    %3446 = vmatpush1.msra.mxu0 0.0
    %3447 = vmatprep.subr.mxu0 0.0
    %3448 = vmatpush1.msra.mxu0 0.0
    %3449 = vmatprep.subr.mxu0 0.0
    %3450 = vmatpush1.msra.mxu0 0.0
    %3451 = vmatprep.subr.mxu0 0.0
    %3452 = vmatpush1.msra.mxu0 0.0
    %3453 = vmatprep.subr.mxu0 0.0
    %3454 = vmatpush1.msra.mxu0 0.0
    %3455 = vmatprep.subr.mxu0 0.0
    %3456 = vmatpush1.msra.mxu0 0.0
    %3457 = vmatprep.subr.mxu0 0.0
    %3458 = vmatpush1.msra.mxu0 0.0
    %3459 = vmatprep.subr.mxu0 0.0
    %3460 = vmatpush1.msra.mxu0 0.0
    %3461 = vmatprep.subr.mxu0 0.0
    %3462 = vmatpush1.msra.mxu0 0.0
    %3463 = vmatprep.subr.mxu0 0.0
    %3464 = vmatpush1.msra.mxu0 0.0
    %3465 = vmatprep.subr.mxu0 0.0
    %3466 = vmatpush1.msra.mxu0 0.0
    %3467 = vmatprep.subr.mxu0 0.0
    %3468 = vmatpush1.msra.mxu0 0.0
    %3469 = vmatprep.subr.mxu0 0.0
    %3470 = vmatpush1.msra.mxu0 0.0
    %3471 = vmatprep.subr.mxu0 0.0
    %3472 = vmatpush1.msra.mxu0 0.0
    %3473 = vmatprep.subr.mxu0 0.0
    %3474 = vmatpush1.msra.mxu0 0.0
    %3475 = vmatprep.subr.mxu0 0.0
    %3476 = vmatpush1.msra.mxu0 0.0
    %3477 = vmatprep.subr.mxu0 0.0
    %3478 = vmatpush1.msra.mxu0 0.0
    %3479 = vmatprep.subr.mxu0 0.0
    %3480 = vmatpush1.msra.mxu0 0.0
    %3481 = vmatprep.subr.mxu0 0.0
    %3482 = vmatpush1.msra.mxu0 0.0
    %3483 = vmatprep.subr.mxu0 0.0
    %3484 = vmatpush1.msra.mxu0 0.0
    %3485 = vmatprep.subr.mxu0 0.0
    %3486 = vmatpush1.msra.mxu0 0.0
    %3487 = vmatprep.subr.mxu0 0.0
    %3488 = vmatpush1.msra.mxu0 0.0
    %3489 = vmatprep.subr.mxu0 0.0
    %3490 = vmatpush1.msra.mxu0 0.0
    %3491 = vmatprep.subr.mxu0 0.0
    %3492 = vmatpush1.msra.mxu0 0.0
    %3493 = vmatprep.subr.mxu0 0.0
    %3494 = vmatpush1.msra.mxu0 0.0
    %3495 = vmatprep.subr.mxu0 0.0
    %3496 = vmatpush1.msra.mxu0 0.0
    %3497 = vmatprep.subr.mxu0 0.0
    %3498 = vmatpush1.msra.mxu0 0.0
    %3499 = vmatprep.subr.mxu0 0.0
    %3500 = vmatpush1.msra.mxu0 0.0
    %3501 = vmatprep.subr.mxu0 0.0
    %3502 = vmatpush1.msra.mxu0 0.0
    %3503 = vmatprep.mubr.f32.mxu0 0.0
    %3504 = vmatmul.mubr.f32.gmra.mrb[0].mxu0 %v3437
    %v3505 = vpop.f32.mrb[0].mxu0
    %v3506 = vadd.f32 0.0, %v3505
    %v3507 = vpop.f32.mrb[0].mxu0
    %3508 = vdwg.mxu0
    %3510 = vrot.lane.b32.xlu0 %v3338, 104
    %v3511 = vpop.permute.xlu0 %3510
    %v3512 = vsel %vm3342, %v3338, 0
    %v3514 = vsel %vm3342, %v3511, 0
    %3516 = vmatprep.subr.mxu0 0.0
    %3517 = vmatpush1.xpose.msra.mxu0 %v3514
    %3518 = vmatprep.subr.mxu0 0.0
    %3519 = vmatpush1.xpose.msra.mxu0 0.0
    %3520 = vmatprep.subr.mxu0 0.0
    %3521 = vmatpush1.xpose.msra.mxu0 0.0
    %3522 = vmatprep.subr.mxu0 0.0
    %3523 = vmatpush1.xpose.msra.mxu0 0.0
    %3524 = vmatprep.subr.mxu0 0.0
    %3525 = vmatpush1.xpose.msra.mxu0 0.0
    %3526 = vmatprep.subr.mxu0 0.0
    %3527 = vmatpush1.xpose.msra.mxu0 0.0
    %3528 = vmatprep.subr.mxu0 0.0
    %3529 = vmatpush1.xpose.msra.mxu0 0.0
    %3530 = vmatprep.subr.mxu0 0.0
    %3531 = vmatpush1.xpose.msra.mxu0 0.0
    %3532 = vmatprep.subr.mxu0 0.0
    %3533 = vmatpush1.xpose.msra.mxu0 0.0
    %3534 = vmatprep.subr.mxu0 0.0
    %3535 = vmatpush1.xpose.msra.mxu0 0.0
    %3536 = vmatprep.subr.mxu0 0.0
    %3537 = vmatpush1.xpose.msra.mxu0 0.0
    %3538 = vmatprep.subr.mxu0 0.0
    %3539 = vmatpush1.xpose.msra.mxu0 0.0
    %3540 = vmatprep.subr.mxu0 0.0
    %3541 = vmatpush1.xpose.msra.mxu0 0.0
    %3542 = vmatprep.subr.mxu0 0.0
    %3543 = vmatpush1.xpose.msra.mxu0 0.0
    %3544 = vmatprep.subr.mxu0 0.0
    %3545 = vmatpush1.xpose.msra.mxu0 0.0
    %3546 = vmatprep.subr.mxu0 0.0
    %3547 = vmatpush1.xpose.msra.mxu0 0.0
    %3548 = vmatprep.subr.mxu0 0.0
    %3549 = vmatpush1.xpose.msra.mxu0 0.0
    %3550 = vmatprep.subr.mxu0 0.0
    %3551 = vmatpush1.xpose.msra.mxu0 0.0
    %3552 = vmatprep.subr.mxu0 0.0
    %3553 = vmatpush1.xpose.msra.mxu0 0.0
    %3554 = vmatprep.subr.mxu0 0.0
    %3555 = vmatpush1.xpose.msra.mxu0 0.0
    %3556 = vmatprep.subr.mxu0 0.0
    %3557 = vmatpush1.xpose.msra.mxu0 0.0
    %3558 = vmatprep.subr.mxu0 0.0
    %3559 = vmatpush1.xpose.msra.mxu0 0.0
    %3560 = vmatprep.subr.mxu0 0.0
    %3561 = vmatpush1.xpose.msra.mxu0 0.0
    %3562 = vmatprep.subr.mxu0 0.0
    %3563 = vmatpush1.xpose.msra.mxu0 0.0
    %3564 = vmatprep.subr.mxu0 0.0
    %3565 = vmatpush1.xpose.msra.mxu0 0.0
    %3566 = vmatprep.subr.mxu0 0.0
    %3567 = vmatpush1.xpose.msra.mxu0 0.0
    %3568 = vmatprep.subr.mxu0 0.0
    %3569 = vmatpush1.xpose.msra.mxu0 0.0
    %3570 = vmatprep.subr.mxu0 0.0
    %3571 = vmatpush1.xpose.msra.mxu0 0.0
    %3572 = vmatprep.subr.mxu0 0.0
    %3573 = vmatpush1.xpose.msra.mxu0 0.0
    %3574 = vmatprep.subr.mxu0 0.0
    %3575 = vmatpush1.xpose.msra.mxu0 0.0
    %3576 = vmatprep.subr.mxu0 0.0
    %3577 = vmatpush1.xpose.msra.mxu0 0.0
    %3578 = vmatprep.subr.mxu0 0.0
    %3579 = vmatpush1.xpose.msra.mxu0 0.0
    %3580 = vmatprep.mubr.f32.mxu0 0.0
    %3581 = vmatmul.mubr.f32.gmra.mrb[0].mxu0 %v3512
    %v3582 = vpop.f32.mrb[0].mxu0
    %v3583 = vadd.f32 0.0, %v3582
    %v3584 = vpop.f32.mrb[0].mxu0
    %3585 = vdwg.mxu0
    %v3586 = vmul.f32 %v3583, 0.28867513
    %s3587 = scalar_lea.vmem %s3, 56
    %v3588 = vld [vmem:[%s3587] sm:$0xff]
    %vm3589 = vcmp.eq.f32.partialorder %v3588, 0.0
    %v3590 = vsel %vm3589, -1e+09, %v3586
    %v3591 = vsel %vm348, %v3590, -inf
    %3592 = vmax.xlane.f32.xlu0 %v3591
    %v3593 = vpop.xlane.xlu0 %3592
    %v3594 = vsub.f32 %v3590, %v3593
    %v3595 = vmul.f32 %v3594, 1.442695
    %v3596 = vpow.pop %v3595
    %v3597 = vsel %vm348, %v3596, 0.0
    %3598 = vadd.xlane.f32.xlu0 %v3597
    %v3599 = vpop.xlane.xlu0 %3598
    %v3600 = vrcp.pop %v3599
    %v3601 = vmul.f32 %v3596, %v3600
    %3602 = vrot.lane.b32.xlu0 %v3338, 80
    %v3603 = vpop.permute.xlu0 %3602
    %v3606 = vsel %vm348, %v3601, 0
    %3608 = vmatprep.subr.mxu0 0.0
    %3609 = vmatpush1.msra.mxu0 %v3603
    %3610 = vmatprep.subr.mxu0 0.0
    %3611 = vmatpush1.msra.mxu0 0.0
    %3612 = vmatprep.subr.mxu0 0.0
    %3613 = vmatpush1.msra.mxu0 0.0
    %3614 = vmatprep.subr.mxu0 0.0
    %3615 = vmatpush1.msra.mxu0 0.0
    %3616 = vmatprep.subr.mxu0 0.0
    %3617 = vmatpush1.msra.mxu0 0.0
    %3618 = vmatprep.subr.mxu0 0.0
    %3619 = vmatpush1.msra.mxu0 0.0
    %3620 = vmatprep.subr.mxu0 0.0
    %3621 = vmatpush1.msra.mxu0 0.0
    %3622 = vmatprep.subr.mxu0 0.0
    %3623 = vmatpush1.msra.mxu0 0.0
    %3624 = vmatprep.subr.mxu0 0.0
    %3625 = vmatpush1.msra.mxu0 0.0
    %3626 = vmatprep.subr.mxu0 0.0
    %3627 = vmatpush1.msra.mxu0 0.0
    %3628 = vmatprep.subr.mxu0 0.0
    %3629 = vmatpush1.msra.mxu0 0.0
    %3630 = vmatprep.subr.mxu0 0.0
    %3631 = vmatpush1.msra.mxu0 0.0
    %3632 = vmatprep.subr.mxu0 0.0
    %3633 = vmatpush1.msra.mxu0 0.0
    %3634 = vmatprep.subr.mxu0 0.0
    %3635 = vmatpush1.msra.mxu0 0.0
    %3636 = vmatprep.subr.mxu0 0.0
    %3637 = vmatpush1.msra.mxu0 0.0
    %3638 = vmatprep.subr.mxu0 0.0
    %3639 = vmatpush1.msra.mxu0 0.0
    %3640 = vmatprep.subr.mxu0 0.0
    %3641 = vmatpush1.msra.mxu0 0.0
    %3642 = vmatprep.subr.mxu0 0.0
    %3643 = vmatpush1.msra.mxu0 0.0
    %3644 = vmatprep.subr.mxu0 0.0
    %3645 = vmatpush1.msra.mxu0 0.0
    %3646 = vmatprep.subr.mxu0 0.0
    %3647 = vmatpush1.msra.mxu0 0.0
    %3648 = vmatprep.subr.mxu0 0.0
    %3649 = vmatpush1.msra.mxu0 0.0
    %3650 = vmatprep.subr.mxu0 0.0
    %3651 = vmatpush1.msra.mxu0 0.0
    %3652 = vmatprep.subr.mxu0 0.0
    %3653 = vmatpush1.msra.mxu0 0.0
    %3654 = vmatprep.subr.mxu0 0.0
    %3655 = vmatpush1.msra.mxu0 0.0
    %3656 = vmatprep.subr.mxu0 0.0
    %3657 = vmatpush1.msra.mxu0 0.0
    %3658 = vmatprep.subr.mxu0 0.0
    %3659 = vmatpush1.msra.mxu0 0.0
    %3660 = vmatprep.subr.mxu0 0.0
    %3661 = vmatpush1.msra.mxu0 0.0
    %3662 = vmatprep.subr.mxu0 0.0
    %3663 = vmatpush1.msra.mxu0 0.0
    %3664 = vmatprep.subr.mxu0 0.0
    %3665 = vmatpush1.msra.mxu0 0.0
    %3666 = vmatprep.subr.mxu0 0.0
    %3667 = vmatpush1.msra.mxu0 0.0
    %3668 = vmatprep.subr.mxu0 0.0
    %3669 = vmatpush1.msra.mxu0 0.0
    %3670 = vmatprep.subr.mxu0 0.0
    %3671 = vmatpush1.msra.mxu0 0.0
    %3672 = vmatprep.mubr.f32.mxu0 0.0
    %3673 = vmatmul.mubr.f32.gmra.mrb[0].mxu0 %v3606
    %v3674 = vpop.f32.mrb[0].mxu0
    %v3675 = vadd.f32 0.0, %v3674
    %v3676 = vpop.f32.mrb[0].mxu0
    %3677 = vdwg.mxu0
    %v3678 = vld [vmem:[%s53] sm:$0xff]
    %v3679 = vld [vmem:[%s53 + $0x8] sm:$0xf]
    %v3680 = vld [vmem:[%s55] sm:$0x1]
    %v3682 = vlaneseq
    %v3683 = vshrl.u32 %v3682, 7
    %v3684 = vsub.s32 0, %v3683
    %v3685 = vrot.slane %v3680, %v3684
    %v3688 = vsel %vm3342, %v3506, 0
    %v3691 = vsel %vm3342, %v3675, 0
    %v3694 = vsel %vm1657, %v3679, 0
    %3696 = vmatprep.subr.mxu0 0.0
    %3697 = vmatpush1.msra.mxu0 %v3678
    %3698 = vmatprep.subr.mxu0 0.0
    %3699 = vmatpush1.msra.mxu0 %v3694
    %3700 = vmatprep.subr.mxu0 0.0
    %3701 = vmatpush1.msra.mxu0 0.0
    %3702 = vmatprep.subr.mxu0 0.0
    %3703 = vmatpush1.msra.mxu0 0.0
    %3704 = vmatprep.subr.mxu0 0.0
    %3705 = vmatpush1.msra.mxu0 0.0
    %3706 = vmatprep.subr.mxu0 0.0
    %3707 = vmatpush1.msra.mxu0 0.0
    %3708 = vmatprep.subr.mxu0 0.0
    %3709 = vmatpush1.msra.mxu0 0.0
    %3710 = vmatprep.subr.mxu0 0.0
    %3711 = vmatpush1.msra.mxu0 0.0
    %3712 = vmatprep.subr.mxu0 0.0
    %3713 = vmatpush1.msra.mxu0 0.0
    %3714 = vmatprep.subr.mxu0 0.0
    %3715 = vmatpush1.msra.mxu0 0.0
    %3716 = vmatprep.subr.mxu0 0.0
    %3717 = vmatpush1.msra.mxu0 0.0
    %3718 = vmatprep.subr.mxu0 0.0
    %3719 = vmatpush1.msra.mxu0 0.0
    %3720 = vmatprep.subr.mxu0 0.0
    %3721 = vmatpush1.msra.mxu0 0.0
    %3722 = vmatprep.subr.mxu0 0.0
    %3723 = vmatpush1.msra.mxu0 0.0
    %3724 = vmatprep.subr.mxu0 0.0
    %3725 = vmatpush1.msra.mxu0 0.0
    %3726 = vmatprep.subr.mxu0 0.0
    %3727 = vmatpush1.msra.mxu0 0.0
    %3728 = vmatprep.subr.mxu0 0.0
    %3729 = vmatpush1.msra.mxu0 0.0
    %3730 = vmatprep.subr.mxu0 0.0
    %3731 = vmatpush1.msra.mxu0 0.0
    %3732 = vmatprep.subr.mxu0 0.0
    %3733 = vmatpush1.msra.mxu0 0.0
    %3734 = vmatprep.subr.mxu0 0.0
    %3735 = vmatpush1.msra.mxu0 0.0
    %3736 = vmatprep.subr.mxu0 0.0
    %3737 = vmatpush1.msra.mxu0 0.0
    %3738 = vmatprep.subr.mxu0 0.0
    %3739 = vmatpush1.msra.mxu0 0.0
    %3740 = vmatprep.subr.mxu0 0.0
    %3741 = vmatpush1.msra.mxu0 0.0
    %3742 = vmatprep.subr.mxu0 0.0
    %3743 = vmatpush1.msra.mxu0 0.0
    %3744 = vmatprep.subr.mxu0 0.0
    %3745 = vmatpush1.msra.mxu0 0.0
    %3746 = vmatprep.subr.mxu0 0.0
    %3747 = vmatpush1.msra.mxu0 0.0
    %3748 = vmatprep.subr.mxu0 0.0
    %3749 = vmatpush1.msra.mxu0 0.0
    %3750 = vmatprep.subr.mxu0 0.0
    %3751 = vmatpush1.msra.mxu0 0.0
    %3752 = vmatprep.subr.mxu0 0.0
    %3753 = vmatpush1.msra.mxu0 0.0
    %3754 = vmatprep.subr.mxu0 0.0
    %3755 = vmatpush1.msra.mxu0 0.0
    %3756 = vmatprep.subr.mxu0 0.0
    %3757 = vmatpush1.msra.mxu0 0.0
    %3758 = vmatprep.subr.mxu0 0.0
    %3759 = vmatpush1.msra.mxu0 0.0
    %3760 = vmatprep.mubr.f32.mxu0 0.0
    %3761 = vmatmul.mubr.f32.gmra.mrb[0].mxu0 %v3688
    %v3762 = vpop.f32.mrb[0].mxu0
    %v3763 = vadd.f32 %v3685, %v3762
    %v3764 = vpop.f32.mrb[0].mxu0
    %3765 = vmatprep.mubr.f32.mxu0 0.0
    %3766 = vmatmul.mubr.f32.gmra.mrb[0].mxu0 %v3691
    %v3767 = vpop.f32.mrb[0].mxu0
    %v3768 = vadd.f32 %v3685, %v3767
    %v3769 = vpop.f32.mrb[0].mxu0
    %3770 = vdwg.mxu0
    %v3771 = vadd.f32 %v192, %v3763
    %v3772 = vadd.f32 %v193, %v3768
    %s3773 = sld [smem:[#allocation2 + $0x1]]
    %v3774 = vstv %s3773
    %v3775 = vmul.f32 %v3771, %v3774
    %v3776 = vmul.f32 %v3772, %v3774
    %v3777 = vadd.f32 %v1211, %v3775
    %v3778 = vadd.f32 %v1212, %v3776
    %s3779 = sld [smem:[#allocation2 + $0x9]]
    %v3780 = vstv %s3779
    %v3781 = vmul.f32 %v3771, %v3780
    %v3782 = vmul.f32 %v3772, %v3780
    %v3783 = vadd.f32 %v2194, %v3781
    %v3784 = vadd.f32 %v2195, %v3782
    %3785 = vrot.lane.b32.xlu0 %v3337, 116
    %v3786 = vpop.permute.xlu0 %3785
    %3787 = vrot.lane.b32.xlu0 %v3337, 92
    %v3788 = vpop.permute.xlu0 %3787
    %v3789 = vsel %vm3342, %v3786, 0
    %v3791 = vsel %vm3342, %v3788, 0
    %3793 = vmatprep.subr.mxu0 0.0
    %3794 = vmatpush1.xpose.msra.mxu0 %v3791
    %3795 = vmatprep.subr.mxu0 0.0
    %3796 = vmatpush1.xpose.msra.mxu0 0.0
    %3797 = vmatprep.subr.mxu0 0.0
    %3798 = vmatpush1.xpose.msra.mxu0 0.0
    %3799 = vmatprep.subr.mxu0 0.0
    %3800 = vmatpush1.xpose.msra.mxu0 0.0
    %3801 = vmatprep.subr.mxu0 0.0
    %3802 = vmatpush1.xpose.msra.mxu0 0.0
    %3803 = vmatprep.subr.mxu0 0.0
    %3804 = vmatpush1.xpose.msra.mxu0 0.0
    %3805 = vmatprep.subr.mxu0 0.0
    %3806 = vmatpush1.xpose.msra.mxu0 0.0
    %3807 = vmatprep.subr.mxu0 0.0
    %3808 = vmatpush1.xpose.msra.mxu0 0.0
    %3809 = vmatprep.subr.mxu0 0.0
    %3810 = vmatpush1.xpose.msra.mxu0 0.0
    %3811 = vmatprep.subr.mxu0 0.0
    %3812 = vmatpush1.xpose.msra.mxu0 0.0
    %3813 = vmatprep.subr.mxu0 0.0
    %3814 = vmatpush1.xpose.msra.mxu0 0.0
    %3815 = vmatprep.subr.mxu0 0.0
    %3816 = vmatpush1.xpose.msra.mxu0 0.0
    %3817 = vmatprep.subr.mxu0 0.0
    %3818 = vmatpush1.xpose.msra.mxu0 0.0
    %3819 = vmatprep.subr.mxu0 0.0
    %3820 = vmatpush1.xpose.msra.mxu0 0.0
    %3821 = vmatprep.subr.mxu0 0.0
    %3822 = vmatpush1.xpose.msra.mxu0 0.0
    %3823 = vmatprep.subr.mxu0 0.0
    %3824 = vmatpush1.xpose.msra.mxu0 0.0
    %3825 = vmatprep.subr.mxu0 0.0
    %3826 = vmatpush1.xpose.msra.mxu0 0.0
    %3827 = vmatprep.subr.mxu0 0.0
    %3828 = vmatpush1.xpose.msra.mxu0 0.0
    %3829 = vmatprep.subr.mxu0 0.0
    %3830 = vmatpush1.xpose.msra.mxu0 0.0
    %3831 = vmatprep.subr.mxu0 0.0
    %3832 = vmatpush1.xpose.msra.mxu0 0.0
    %3833 = vmatprep.subr.mxu0 0.0
    %3834 = vmatpush1.xpose.msra.mxu0 0.0
    %3835 = vmatprep.subr.mxu0 0.0
    %3836 = vmatpush1.xpose.msra.mxu0 0.0
    %3837 = vmatprep.subr.mxu0 0.0
    %3838 = vmatpush1.xpose.msra.mxu0 0.0
    %3839 = vmatprep.subr.mxu0 0.0
    %3840 = vmatpush1.xpose.msra.mxu0 0.0
    %3841 = vmatprep.subr.mxu0 0.0
    %3842 = vmatpush1.xpose.msra.mxu0 0.0
    %3843 = vmatprep.subr.mxu0 0.0
    %3844 = vmatpush1.xpose.msra.mxu0 0.0
    %3845 = vmatprep.subr.mxu0 0.0
    %3846 = vmatpush1.xpose.msra.mxu0 0.0
    %3847 = vmatprep.subr.mxu0 0.0
    %3848 = vmatpush1.xpose.msra.mxu0 0.0
    %3849 = vmatprep.subr.mxu0 0.0
    %3850 = vmatpush1.xpose.msra.mxu0 0.0
    %3851 = vmatprep.subr.mxu0 0.0
    %3852 = vmatpush1.xpose.msra.mxu0 0.0
    %3853 = vmatprep.subr.mxu0 0.0
    %3854 = vmatpush1.xpose.msra.mxu0 0.0
    %3855 = vmatprep.subr.mxu0 0.0
    %3856 = vmatpush1.xpose.msra.mxu0 0.0
    %3857 = vmatprep.mubr.f32.mxu0 0.0
    %3858 = vmatmul.mubr.f32.gmra.mrb[0].mxu0 %v3789
    %v3859 = vpop.f32.mrb[0].mxu0
    %v3860 = vadd.f32 0.0, %v3859
    %v3861 = vpop.f32.mrb[0].mxu0
    %3862 = vdwg.mxu0
    %v3863 = vmul.f32 %v3860, 0.28867513
    %v3864 = vsel %vm3420, -1e+09, %v3863
    %v3865 = vsel %vm348, %v3864, -inf
    %3866 = vmax.xlane.f32.xlu0 %v3865
    %v3867 = vpop.xlane.xlu0 %3866
    %v3868 = vsub.f32 %v3864, %v3867
    %v3869 = vmul.f32 %v3868, 1.442695
    %v3870 = vpow.pop %v3869
    %v3871 = vsel %vm348, %v3870, 0.0
    %3872 = vadd.xlane.f32.xlu0 %v3871
    %v3873 = vpop.xlane.xlu0 %3872
    %v3874 = vrcp.pop %v3873
    %v3875 = vmul.f32 %v3870, %v3874
    %3876 = vrot.lane.b32.xlu0 %v3337, 68
    %v3877 = vpop.permute.xlu0 %3876
    %v3880 = vsel %vm348, %v3875, 0
    %3882 = vmatprep.subr.mxu0 0.0
    %3883 = vmatpush1.msra.mxu0 %v3877
    %3884 = vmatprep.subr.mxu0 0.0
    %3885 = vmatpush1.msra.mxu0 0.0
    %3886 = vmatprep.subr.mxu0 0.0
    %3887 = vmatpush1.msra.mxu0 0.0
    %3888 = vmatprep.subr.mxu0 0.0
    %3889 = vmatpush1.msra.mxu0 0.0
    %3890 = vmatprep.subr.mxu0 0.0
    %3891 = vmatpush1.msra.mxu0 0.0
    %3892 = vmatprep.subr.mxu0 0.0
    %3893 = vmatpush1.msra.mxu0 0.0
    %3894 = vmatprep.subr.mxu0 0.0
    %3895 = vmatpush1.msra.mxu0 0.0
    %3896 = vmatprep.subr.mxu0 0.0
    %3897 = vmatpush1.msra.mxu0 0.0
    %3898 = vmatprep.subr.mxu0 0.0
    %3899 = vmatpush1.msra.mxu0 0.0
    %3900 = vmatprep.subr.mxu0 0.0
    %3901 = vmatpush1.msra.mxu0 0.0
    %3902 = vmatprep.subr.mxu0 0.0
    %3903 = vmatpush1.msra.mxu0 0.0
    %3904 = vmatprep.subr.mxu0 0.0
    %3905 = vmatpush1.msra.mxu0 0.0
    %3906 = vmatprep.subr.mxu0 0.0
    %3907 = vmatpush1.msra.mxu0 0.0
    %3908 = vmatprep.subr.mxu0 0.0
    %3909 = vmatpush1.msra.mxu0 0.0
    %3910 = vmatprep.subr.mxu0 0.0
    %3911 = vmatpush1.msra.mxu0 0.0
    %3912 = vmatprep.subr.mxu0 0.0
    %3913 = vmatpush1.msra.mxu0 0.0
    %3914 = vmatprep.subr.mxu0 0.0
    %3915 = vmatpush1.msra.mxu0 0.0
    %3916 = vmatprep.subr.mxu0 0.0
    %3917 = vmatpush1.msra.mxu0 0.0
    %3918 = vmatprep.subr.mxu0 0.0
    %3919 = vmatpush1.msra.mxu0 0.0
    %3920 = vmatprep.subr.mxu0 0.0
    %3921 = vmatpush1.msra.mxu0 0.0
    %3922 = vmatprep.subr.mxu0 0.0
    %3923 = vmatpush1.msra.mxu0 0.0
    %3924 = vmatprep.subr.mxu0 0.0
    %3925 = vmatpush1.msra.mxu0 0.0
    %3926 = vmatprep.subr.mxu0 0.0
    %3927 = vmatpush1.msra.mxu0 0.0
    %3928 = vmatprep.subr.mxu0 0.0
    %3929 = vmatpush1.msra.mxu0 0.0
    %3930 = vmatprep.subr.mxu0 0.0
    %3931 = vmatpush1.msra.mxu0 0.0
    %3932 = vmatprep.subr.mxu0 0.0
    %3933 = vmatpush1.msra.mxu0 0.0
    %3934 = vmatprep.subr.mxu0 0.0
    %3935 = vmatpush1.msra.mxu0 0.0
    %3936 = vmatprep.subr.mxu0 0.0
    %3937 = vmatpush1.msra.mxu0 0.0
    %3938 = vmatprep.subr.mxu0 0.0
    %3939 = vmatpush1.msra.mxu0 0.0
    %3940 = vmatprep.subr.mxu0 0.0
    %3941 = vmatpush1.msra.mxu0 0.0
    %3942 = vmatprep.subr.mxu0 0.0
    %3943 = vmatpush1.msra.mxu0 0.0
    %3944 = vmatprep.subr.mxu0 0.0
    %3945 = vmatpush1.msra.mxu0 0.0
    %3946 = vmatprep.mubr.f32.mxu0 0.0
    %3947 = vmatmul.mubr.f32.gmra.mrb[0].mxu0 %v3880
    %v3948 = vpop.f32.mrb[0].mxu0
    %v3949 = vadd.f32 0.0, %v3948
    %v3950 = vpop.f32.mrb[0].mxu0
    %3951 = vdwg.mxu0
    %3952 = vrot.lane.b32.xlu0 %v3338, 116
    %v3953 = vpop.permute.xlu0 %3952
    %3954 = vrot.lane.b32.xlu0 %v3338, 92
    %v3955 = vpop.permute.xlu0 %3954
    %v3956 = vsel %vm3342, %v3953, 0
    %v3958 = vsel %vm3342, %v3955, 0
    %3960 = vmatprep.subr.mxu0 0.0
    %3961 = vmatpush1.xpose.msra.mxu0 %v3958
    %3962 = vmatprep.subr.mxu0 0.0
    %3963 = vmatpush1.xpose.msra.mxu0 0.0
    %3964 = vmatprep.subr.mxu0 0.0
    %3965 = vmatpush1.xpose.msra.mxu0 0.0
    %3966 = vmatprep.subr.mxu0 0.0
    %3967 = vmatpush1.xpose.msra.mxu0 0.0
    %3968 = vmatprep.subr.mxu0 0.0
    %3969 = vmatpush1.xpose.msra.mxu0 0.0
    %3970 = vmatprep.subr.mxu0 0.0
    %3971 = vmatpush1.xpose.msra.mxu0 0.0
    %3972 = vmatprep.subr.mxu0 0.0
    %3973 = vmatpush1.xpose.msra.mxu0 0.0
    %3974 = vmatprep.subr.mxu0 0.0
    %3975 = vmatpush1.xpose.msra.mxu0 0.0
    %3976 = vmatprep.subr.mxu0 0.0
    %3977 = vmatpush1.xpose.msra.mxu0 0.0
    %3978 = vmatprep.subr.mxu0 0.0
    %3979 = vmatpush1.xpose.msra.mxu0 0.0
    %3980 = vmatprep.subr.mxu0 0.0
    %3981 = vmatpush1.xpose.msra.mxu0 0.0
    %3982 = vmatprep.subr.mxu0 0.0
    %3983 = vmatpush1.xpose.msra.mxu0 0.0
    %3984 = vmatprep.subr.mxu0 0.0
    %3985 = vmatpush1.xpose.msra.mxu0 0.0
    %3986 = vmatprep.subr.mxu0 0.0
    %3987 = vmatpush1.xpose.msra.mxu0 0.0
    %3988 = vmatprep.subr.mxu0 0.0
    %3989 = vmatpush1.xpose.msra.mxu0 0.0
    %3990 = vmatprep.subr.mxu0 0.0
    %3991 = vmatpush1.xpose.msra.mxu0 0.0
    %3992 = vmatprep.subr.mxu0 0.0
    %3993 = vmatpush1.xpose.msra.mxu0 0.0
    %3994 = vmatprep.subr.mxu0 0.0
    %3995 = vmatpush1.xpose.msra.mxu0 0.0
    %3996 = vmatprep.subr.mxu0 0.0
    %3997 = vmatpush1.xpose.msra.mxu0 0.0
    %3998 = vmatprep.subr.mxu0 0.0
    %3999 = vmatpush1.xpose.msra.mxu0 0.0
    %4000 = vmatprep.subr.mxu0 0.0
    %4001 = vmatpush1.xpose.msra.mxu0 0.0
    %4002 = vmatprep.subr.mxu0 0.0
    %4003 = vmatpush1.xpose.msra.mxu0 0.0
    %4004 = vmatprep.subr.mxu0 0.0
    %4005 = vmatpush1.xpose.msra.mxu0 0.0
    %4006 = vmatprep.subr.mxu0 0.0
    %4007 = vmatpush1.xpose.msra.mxu0 0.0
    %4008 = vmatprep.subr.mxu0 0.0
    %4009 = vmatpush1.xpose.msra.mxu0 0.0
    %4010 = vmatprep.subr.mxu0 0.0
    %4011 = vmatpush1.xpose.msra.mxu0 0.0
    %4012 = vmatprep.subr.mxu0 0.0
    %4013 = vmatpush1.xpose.msra.mxu0 0.0
    %4014 = vmatprep.subr.mxu0 0.0
    %4015 = vmatpush1.xpose.msra.mxu0 0.0
    %4016 = vmatprep.subr.mxu0 0.0
    %4017 = vmatpush1.xpose.msra.mxu0 0.0
    %4018 = vmatprep.subr.mxu0 0.0
    %4019 = vmatpush1.xpose.msra.mxu0 0.0
    %4020 = vmatprep.subr.mxu0 0.0
    %4021 = vmatpush1.xpose.msra.mxu0 0.0
    %4022 = vmatprep.subr.mxu0 0.0
    %4023 = vmatpush1.xpose.msra.mxu0 0.0
    %4024 = vmatprep.mubr.f32.mxu0 0.0
    %4025 = vmatmul.mubr.f32.gmra.mrb[0].mxu0 %v3956
    %v4026 = vpop.f32.mrb[0].mxu0
    %v4027 = vadd.f32 0.0, %v4026
    %v4028 = vpop.f32.mrb[0].mxu0
    %4029 = vdwg.mxu0
    %v4030 = vmul.f32 %v4027, 0.28867513
    %v4031 = vsel %vm3589, -1e+09, %v4030
    %v4032 = vsel %vm348, %v4031, -inf
    %4033 = vmax.xlane.f32.xlu0 %v4032
    %v4034 = vpop.xlane.xlu0 %4033
    %v4035 = vsub.f32 %v4031, %v4034
    %v4036 = vmul.f32 %v4035, 1.442695
    %v4037 = vpow.pop %v4036
    %v4038 = vsel %vm348, %v4037, 0.0
    %4039 = vadd.xlane.f32.xlu0 %v4038
    %v4040 = vpop.xlane.xlu0 %4039
    %v4041 = vrcp.pop %v4040
    %v4042 = vmul.f32 %v4037, %v4041
    %4043 = vrot.lane.b32.xlu0 %v3338, 68
    %v4044 = vpop.permute.xlu0 %4043
    %v4047 = vsel %vm348, %v4042, 0
    %4049 = vmatprep.subr.mxu0 0.0
    %4050 = vmatpush1.msra.mxu0 %v4044
    %4051 = vmatprep.subr.mxu0 0.0
    %4052 = vmatpush1.msra.mxu0 0.0
    %4053 = vmatprep.subr.mxu0 0.0
    %4054 = vmatpush1.msra.mxu0 0.0
    %4055 = vmatprep.subr.mxu0 0.0
    %4056 = vmatpush1.msra.mxu0 0.0
    %4057 = vmatprep.subr.mxu0 0.0
    %4058 = vmatpush1.msra.mxu0 0.0
    %4059 = vmatprep.subr.mxu0 0.0
    %4060 = vmatpush1.msra.mxu0 0.0
    %4061 = vmatprep.subr.mxu0 0.0
    %4062 = vmatpush1.msra.mxu0 0.0
    %4063 = vmatprep.subr.mxu0 0.0
    %4064 = vmatpush1.msra.mxu0 0.0
    %4065 = vmatprep.subr.mxu0 0.0
    %4066 = vmatpush1.msra.mxu0 0.0
    %4067 = vmatprep.subr.mxu0 0.0
    %4068 = vmatpush1.msra.mxu0 0.0
    %4069 = vmatprep.subr.mxu0 0.0
    %4070 = vmatpush1.msra.mxu0 0.0
    %4071 = vmatprep.subr.mxu0 0.0
    %4072 = vmatpush1.msra.mxu0 0.0
    %4073 = vmatprep.subr.mxu0 0.0
    %4074 = vmatpush1.msra.mxu0 0.0
    %4075 = vmatprep.subr.mxu0 0.0
    %4076 = vmatpush1.msra.mxu0 0.0
    %4077 = vmatprep.subr.mxu0 0.0
    %4078 = vmatpush1.msra.mxu0 0.0
    %4079 = vmatprep.subr.mxu0 0.0
    %4080 = vmatpush1.msra.mxu0 0.0
    %4081 = vmatprep.subr.mxu0 0.0
    %4082 = vmatpush1.msra.mxu0 0.0
    %4083 = vmatprep.subr.mxu0 0.0
    %4084 = vmatpush1.msra.mxu0 0.0
    %4085 = vmatprep.subr.mxu0 0.0
    %4086 = vmatpush1.msra.mxu0 0.0
    %4087 = vmatprep.subr.mxu0 0.0
    %4088 = vmatpush1.msra.mxu0 0.0
    %4089 = vmatprep.subr.mxu0 0.0
    %4090 = vmatpush1.msra.mxu0 0.0
    %4091 = vmatprep.subr.mxu0 0.0
    %4092 = vmatpush1.msra.mxu0 0.0
    %4093 = vmatprep.subr.mxu0 0.0
    %4094 = vmatpush1.msra.mxu0 0.0
    %4095 = vmatprep.subr.mxu0 0.0
    %4096 = vmatpush1.msra.mxu0 0.0
    %4097 = vmatprep.subr.mxu0 0.0
    %4098 = vmatpush1.msra.mxu0 0.0
    %4099 = vmatprep.subr.mxu0 0.0
    %4100 = vmatpush1.msra.mxu0 0.0
    %4101 = vmatprep.subr.mxu0 0.0
    %4102 = vmatpush1.msra.mxu0 0.0
    %4103 = vmatprep.subr.mxu0 0.0
    %4104 = vmatpush1.msra.mxu0 0.0
    %4105 = vmatprep.subr.mxu0 0.0
    %4106 = vmatpush1.msra.mxu0 0.0
    %4107 = vmatprep.subr.mxu0 0.0
    %4108 = vmatpush1.msra.mxu0 0.0
    %4109 = vmatprep.subr.mxu0 0.0
    %4110 = vmatpush1.msra.mxu0 0.0
    %4111 = vmatprep.subr.mxu0 0.0
    %4112 = vmatpush1.msra.mxu0 0.0
    %4113 = vmatprep.mubr.f32.mxu0 0.0
    %4114 = vmatmul.mubr.f32.gmra.mrb[0].mxu0 %v4047
    %v4115 = vpop.f32.mrb[0].mxu0
    %v4116 = vadd.f32 0.0, %v4115
    %v4117 = vpop.f32.mrb[0].mxu0
    %4118 = vdwg.mxu0
    %s4119 = scalar_lea.vmem %s53, 16
    %v4120 = vld [vmem:[%s4119] sm:$0xff]
    %v4121 = vld [vmem:[%s4119 + $0x8] sm:$0xf]
    %s4122 = scalar_lea.vmem %s55, 1
    %v4123 = vld [vmem:[%s4122] sm:$0x1]
    %v4125 = vlaneseq
    %v4126 = vshrl.u32 %v4125, 7
    %v4127 = vsub.s32 0, %v4126
    %v4128 = vrot.slane %v4123, %v4127
    %v4131 = vsel %vm3342, %v3949, 0
    %v4134 = vsel %vm3342, %v4116, 0
    %v4137 = vsel %vm1657, %v4121, 0
    %4139 = vmatprep.subr.mxu0 0.0
    %4140 = vmatpush1.msra.mxu0 %v4120
    %4141 = vmatprep.subr.mxu0 0.0
    %4142 = vmatpush1.msra.mxu0 %v4137
    %4143 = vmatprep.subr.mxu0 0.0
    %4144 = vmatpush1.msra.mxu0 0.0
    %4145 = vmatprep.subr.mxu0 0.0
    %4146 = vmatpush1.msra.mxu0 0.0
    %4147 = vmatprep.subr.mxu0 0.0
    %4148 = vmatpush1.msra.mxu0 0.0
    %4149 = vmatprep.subr.mxu0 0.0
    %4150 = vmatpush1.msra.mxu0 0.0
    %4151 = vmatprep.subr.mxu0 0.0
    %4152 = vmatpush1.msra.mxu0 0.0
    %4153 = vmatprep.subr.mxu0 0.0
    %4154 = vmatpush1.msra.mxu0 0.0
    %4155 = vmatprep.subr.mxu0 0.0
    %4156 = vmatpush1.msra.mxu0 0.0
    %4157 = vmatprep.subr.mxu0 0.0
    %4158 = vmatpush1.msra.mxu0 0.0
    %4159 = vmatprep.subr.mxu0 0.0
    %4160 = vmatpush1.msra.mxu0 0.0
    %4161 = vmatprep.subr.mxu0 0.0
    %4162 = vmatpush1.msra.mxu0 0.0
    %4163 = vmatprep.subr.mxu0 0.0
    %4164 = vmatpush1.msra.mxu0 0.0
    %4165 = vmatprep.subr.mxu0 0.0
    %4166 = vmatpush1.msra.mxu0 0.0
    %4167 = vmatprep.subr.mxu0 0.0
    %4168 = vmatpush1.msra.mxu0 0.0
    %4169 = vmatprep.subr.mxu0 0.0
    %4170 = vmatpush1.msra.mxu0 0.0
    %4171 = vmatprep.subr.mxu0 0.0
    %4172 = vmatpush1.msra.mxu0 0.0
    %4173 = vmatprep.subr.mxu0 0.0
    %4174 = vmatpush1.msra.mxu0 0.0
    %4175 = vmatprep.subr.mxu0 0.0
    %4176 = vmatpush1.msra.mxu0 0.0
    %4177 = vmatprep.subr.mxu0 0.0
    %4178 = vmatpush1.msra.mxu0 0.0
    %4179 = vmatprep.subr.mxu0 0.0
    %4180 = vmatpush1.msra.mxu0 0.0
    %4181 = vmatprep.subr.mxu0 0.0
    %4182 = vmatpush1.msra.mxu0 0.0
    %4183 = vmatprep.subr.mxu0 0.0
    %4184 = vmatpush1.msra.mxu0 0.0
    %4185 = vmatprep.subr.mxu0 0.0
    %4186 = vmatpush1.msra.mxu0 0.0
    %4187 = vmatprep.subr.mxu0 0.0
    %4188 = vmatpush1.msra.mxu0 0.0
    %4189 = vmatprep.subr.mxu0 0.0
    %4190 = vmatpush1.msra.mxu0 0.0
    %4191 = vmatprep.subr.mxu0 0.0
    %4192 = vmatpush1.msra.mxu0 0.0
    %4193 = vmatprep.subr.mxu0 0.0
    %4194 = vmatpush1.msra.mxu0 0.0
    %4195 = vmatprep.subr.mxu0 0.0
    %4196 = vmatpush1.msra.mxu0 0.0
    %4197 = vmatprep.subr.mxu0 0.0
    %4198 = vmatpush1.msra.mxu0 0.0
    %4199 = vmatprep.subr.mxu0 0.0
    %4200 = vmatpush1.msra.mxu0 0.0
    %4201 = vmatprep.subr.mxu0 0.0
    %4202 = vmatpush1.msra.mxu0 0.0
    %4203 = vmatprep.mubr.f32.mxu0 0.0
    %4204 = vmatmul.mubr.f32.gmra.mrb[0].mxu0 %v4131
    %v4205 = vpop.f32.mrb[0].mxu0
    %v4206 = vadd.f32 %v4128, %v4205
    %v4207 = vpop.f32.mrb[0].mxu0
    %4208 = vmatprep.mubr.f32.mxu0 0.0
    %4209 = vmatmul.mubr.f32.gmra.mrb[0].mxu0 %v4134
    %v4210 = vpop.f32.mrb[0].mxu0
    %v4211 = vadd.f32 %v4128, %v4210
    %v4212 = vpop.f32.mrb[0].mxu0
    %4213 = vdwg.mxu0
    %v4214 = vadd.f32 %v3771, %v4206
    %v4215 = vadd.f32 %v3772, %v4211
    %s4216 = sld [smem:[#allocation2 + $0x5]]
    %v4217 = vstv %s4216
    %v4218 = vmul.f32 %v4214, %v4217
    %v4219 = vmul.f32 %v4215, %v4217
    %v4220 = vadd.f32 %v3777, %v4218
    %v4221 = vadd.f32 %v3778, %v4219
    %s4222 = sld [smem:[#allocation2 + $0xd]]
    %v4223 = vstv %s4222
    %v4224 = vmul.f32 %v4214, %v4223
    %v4225 = vmul.f32 %v4215, %v4223
    %v4226 = vadd.f32 %v3783, %v4224
    %v4227 = vadd.f32 %v3784, %v4225
    %v4228 = vld [vmem:[%s57] sm:$0xff]
    %v4229 = vld [vmem:[%s57 + $0x8] sm:$0xff]
    %v4230 = vld [vmem:[%s57 + $0x10] sm:$0xff]
    %v4231 = vld [vmem:[%s59] sm:$0x1]
    %4232 = vmatprep.subr.mxu0 0.0
    %4233 = vmatpush1.msra.mxu0 %v4230
    %4234 = vmatprep.subr.mxu0 0.0
    %4235 = vmatpush1.msra.mxu0 0.0
    %4236 = vmatprep.subr.mxu0 0.0
    %4237 = vmatpush1.msra.mxu0 0.0
    %4238 = vmatprep.subr.mxu0 0.0
    %4239 = vmatpush1.msra.mxu0 0.0
    %4240 = vmatprep.subr.mxu0 0.0
    %4241 = vmatpush1.msra.mxu0 0.0
    %4242 = vmatprep.subr.mxu0 0.0
    %4243 = vmatpush1.msra.mxu0 0.0
    %4244 = vmatprep.subr.mxu0 0.0
    %4245 = vmatpush1.msra.mxu0 0.0
    %4246 = vmatprep.subr.mxu0 0.0
    %4247 = vmatpush1.msra.mxu0 0.0
    %4248 = vmatprep.subr.mxu0 0.0
    %4249 = vmatpush1.msra.mxu0 0.0
    %4250 = vmatprep.subr.mxu0 0.0
    %4251 = vmatpush1.msra.mxu0 0.0
    %4252 = vmatprep.subr.mxu0 0.0
    %4253 = vmatpush1.msra.mxu0 0.0
    %4254 = vmatprep.subr.mxu0 0.0
    %4255 = vmatpush1.msra.mxu0 0.0
    %4256 = vmatprep.subr.mxu0 0.0
    %4257 = vmatpush1.msra.mxu0 0.0
    %4258 = vmatprep.subr.mxu0 0.0
    %4259 = vmatpush1.msra.mxu0 0.0
    %4260 = vmatprep.subr.mxu0 0.0
    %4261 = vmatpush1.msra.mxu0 0.0
    %4262 = vmatprep.subr.mxu0 0.0
    %4263 = vmatpush1.msra.mxu0 0.0
    %4264 = vmatprep.subr.mxu0 0.0
    %4265 = vmatpush1.msra.mxu0 0.0
    %4266 = vmatprep.subr.mxu0 0.0
    %4267 = vmatpush1.msra.mxu0 0.0
    %4268 = vmatprep.subr.mxu0 0.0
    %4269 = vmatpush1.msra.mxu0 0.0
    %4270 = vmatprep.subr.mxu0 0.0
    %4271 = vmatpush1.msra.mxu0 0.0
    %4272 = vmatprep.subr.mxu0 0.0
    %4273 = vmatpush1.msra.mxu0 0.0
    %4274 = vmatprep.subr.mxu0 0.0
    %4275 = vmatpush1.msra.mxu0 0.0
    %4276 = vmatprep.subr.mxu0 0.0
    %4277 = vmatpush1.msra.mxu0 0.0
    %4278 = vmatprep.subr.mxu0 0.0
    %4279 = vmatpush1.msra.mxu0 0.0
    %4280 = vmatprep.subr.mxu0 0.0
    %4281 = vmatpush1.msra.mxu0 0.0
    %4282 = vmatprep.subr.mxu0 0.0
    %4283 = vmatpush1.msra.mxu0 0.0
    %4284 = vmatprep.subr.mxu0 0.0
    %4285 = vmatpush1.msra.mxu0 0.0
    %4286 = vmatprep.subr.mxu0 0.0
    %4287 = vmatpush1.msra.mxu0 0.0
    %4288 = vmatprep.subr.mxu0 0.0
    %4289 = vmatpush1.msra.mxu0 0.0
    %4290 = vmatprep.subr.mxu0 0.0
    %4291 = vmatpush1.msra.mxu0 0.0
    %4292 = vmatprep.subr.mxu0 0.0
    %4293 = vmatpush1.msra.mxu0 0.0
    %4294 = vmatprep.subr.mxu0 0.0
    %4295 = vmatpush1.msra.mxu0 0.0
    %4296 = vmatprep.mubr.f32.mxu0 0.0
    %4297 = vmatmul.mubr.f32.gmra.mrb[0].mxu0 %v2208
    %v4298 = vpop.f32.mrb[0].mxu0
    %v4299 = vadd.f32 0.0, %v4298
    %v4300 = vpop.f32.mrb[0].mxu0
    %4301 = vmatprep.mubr.f32.mxu0 0.0
    %4302 = vmatmul.mubr.f32.gmra.mrb[0].mxu0 %v2210
    %v4303 = vpop.f32.mrb[0].mxu0
    %v4304 = vadd.f32 0.0, %v4303
    %v4305 = vpop.f32.mrb[0].mxu0
    %4306 = vdwg.mxu0
    %4307 = vmatprep.subr.mxu0 0.0
    %4308 = vmatpush1.msra.mxu0 %v4228
    %4309 = vmatprep.subr.mxu0 0.0
    %4310 = vmatpush1.msra.mxu0 %v4229
    %4311 = vmatprep.subr.mxu0 0.0
    %4312 = vmatpush1.msra.mxu0 0.0
    %4313 = vmatprep.subr.mxu0 0.0
    %4314 = vmatpush1.msra.mxu0 0.0
    %4315 = vmatprep.subr.mxu0 0.0
    %4316 = vmatpush1.msra.mxu0 0.0
    %4317 = vmatprep.subr.mxu0 0.0
    %4318 = vmatpush1.msra.mxu0 0.0
    %4319 = vmatprep.subr.mxu0 0.0
    %4320 = vmatpush1.msra.mxu0 0.0
    %4321 = vmatprep.subr.mxu0 0.0
    %4322 = vmatpush1.msra.mxu0 0.0
    %4323 = vmatprep.subr.mxu0 0.0
    %4324 = vmatpush1.msra.mxu0 0.0
    %4325 = vmatprep.subr.mxu0 0.0
    %4326 = vmatpush1.msra.mxu0 0.0
    %4327 = vmatprep.subr.mxu0 0.0
    %4328 = vmatpush1.msra.mxu0 0.0
    %4329 = vmatprep.subr.mxu0 0.0
    %4330 = vmatpush1.msra.mxu0 0.0
    %4331 = vmatprep.subr.mxu0 0.0
    %4332 = vmatpush1.msra.mxu0 0.0
    %4333 = vmatprep.subr.mxu0 0.0
    %4334 = vmatpush1.msra.mxu0 0.0
    %4335 = vmatprep.subr.mxu0 0.0
    %4336 = vmatpush1.msra.mxu0 0.0
    %4337 = vmatprep.subr.mxu0 0.0
    %4338 = vmatpush1.msra.mxu0 0.0
    %4339 = vmatprep.subr.mxu0 0.0
    %4340 = vmatpush1.msra.mxu0 0.0
    %4341 = vmatprep.subr.mxu0 0.0
    %4342 = vmatpush1.msra.mxu0 0.0
    %4343 = vmatprep.subr.mxu0 0.0
    %4344 = vmatpush1.msra.mxu0 0.0
    %4345 = vmatprep.subr.mxu0 0.0
    %4346 = vmatpush1.msra.mxu0 0.0
    %4347 = vmatprep.subr.mxu0 0.0
    %4348 = vmatpush1.msra.mxu0 0.0
    %4349 = vmatprep.subr.mxu0 0.0
    %4350 = vmatpush1.msra.mxu0 0.0
    %4351 = vmatprep.subr.mxu0 0.0
    %4352 = vmatpush1.msra.mxu0 0.0
    %4353 = vmatprep.subr.mxu0 0.0
    %4354 = vmatpush1.msra.mxu0 0.0
    %4355 = vmatprep.subr.mxu0 0.0
    %4356 = vmatpush1.msra.mxu0 0.0
    %4357 = vmatprep.subr.mxu0 0.0
    %4358 = vmatpush1.msra.mxu0 0.0
    %4359 = vmatprep.subr.mxu0 0.0
    %4360 = vmatpush1.msra.mxu0 0.0
    %4361 = vmatprep.subr.mxu0 0.0
    %4362 = vmatpush1.msra.mxu0 0.0
    %4363 = vmatprep.subr.mxu0 0.0
    %4364 = vmatpush1.msra.mxu0 0.0
    %4365 = vmatprep.subr.mxu0 0.0
    %4366 = vmatpush1.msra.mxu0 0.0
    %4367 = vmatprep.subr.mxu0 0.0
    %4368 = vmatpush1.msra.mxu0 0.0
    %4369 = vmatprep.subr.mxu0 0.0
    %4370 = vmatpush1.msra.mxu0 0.0
    %4371 = vmatprep.mubr.f32.mxu0 0.0
    %4372 = vmatmul.mubr.f32.gmra.mrb[0].mxu0 %v265
    %v4373 = vpop.f32.mrb[0].mxu0
    %v4374 = vadd.f32 %v4299, %v4373
    %v4375 = vpop.f32.mrb[0].mxu0
    %4376 = vmatprep.mubr.f32.mxu0 0.0
    %4377 = vmatmul.mubr.f32.gmra.mrb[0].mxu0 %v268
    %v4378 = vpop.f32.mrb[0].mxu0
    %v4379 = vadd.f32 %v4304, %v4378
    %v4380 = vpop.f32.mrb[0].mxu0
    %4381 = vdwg.mxu0
    %v4383 = vlaneseq
    %v4384 = vshrl.u32 %v4383, 7
    %v4385 = vsub.s32 0, %v4384
    %v4386 = vrot.slane %v4231, %v4385
    %v4388 = vadd.f32 %v4374, %v4386
    %v4389 = vadd.f32 %v4379, %v4386
    %4391 = vrot.lane.b32.xlu0 %v4388, 104
    %v4392 = vpop.permute.xlu0 %4391
    %v4393 = vsel %vm3342, %v4388, 0
    %v4395 = vsel %vm3342, %v4392, 0
    %4397 = vmatprep.subr.mxu0 0.0
    %4398 = vmatpush1.xpose.msra.mxu0 %v4395
    %4399 = vmatprep.subr.mxu0 0.0
    %4400 = vmatpush1.xpose.msra.mxu0 0.0
    %4401 = vmatprep.subr.mxu0 0.0
    %4402 = vmatpush1.xpose.msra.mxu0 0.0
    %4403 = vmatprep.subr.mxu0 0.0
    %4404 = vmatpush1.xpose.msra.mxu0 0.0
    %4405 = vmatprep.subr.mxu0 0.0
    %4406 = vmatpush1.xpose.msra.mxu0 0.0
    %4407 = vmatprep.subr.mxu0 0.0
    %4408 = vmatpush1.xpose.msra.mxu0 0.0
    %4409 = vmatprep.subr.mxu0 0.0
    %4410 = vmatpush1.xpose.msra.mxu0 0.0
    %4411 = vmatprep.subr.mxu0 0.0
    %4412 = vmatpush1.xpose.msra.mxu0 0.0
    %4413 = vmatprep.subr.mxu0 0.0
    %4414 = vmatpush1.xpose.msra.mxu0 0.0
    %4415 = vmatprep.subr.mxu0 0.0
    %4416 = vmatpush1.xpose.msra.mxu0 0.0
    %4417 = vmatprep.subr.mxu0 0.0
    %4418 = vmatpush1.xpose.msra.mxu0 0.0
    %4419 = vmatprep.subr.mxu0 0.0
    %4420 = vmatpush1.xpose.msra.mxu0 0.0
    %4421 = vmatprep.subr.mxu0 0.0
    %4422 = vmatpush1.xpose.msra.mxu0 0.0
    %4423 = vmatprep.subr.mxu0 0.0
    %4424 = vmatpush1.xpose.msra.mxu0 0.0
    %4425 = vmatprep.subr.mxu0 0.0
    %4426 = vmatpush1.xpose.msra.mxu0 0.0
    %4427 = vmatprep.subr.mxu0 0.0
    %4428 = vmatpush1.xpose.msra.mxu0 0.0
    %4429 = vmatprep.subr.mxu0 0.0
    %4430 = vmatpush1.xpose.msra.mxu0 0.0
    %4431 = vmatprep.subr.mxu0 0.0
    %4432 = vmatpush1.xpose.msra.mxu0 0.0
    %4433 = vmatprep.subr.mxu0 0.0
    %4434 = vmatpush1.xpose.msra.mxu0 0.0
    %4435 = vmatprep.subr.mxu0 0.0
    %4436 = vmatpush1.xpose.msra.mxu0 0.0
    %4437 = vmatprep.subr.mxu0 0.0
    %4438 = vmatpush1.xpose.msra.mxu0 0.0
    %4439 = vmatprep.subr.mxu0 0.0
    %4440 = vmatpush1.xpose.msra.mxu0 0.0
    %4441 = vmatprep.subr.mxu0 0.0
    %4442 = vmatpush1.xpose.msra.mxu0 0.0
    %4443 = vmatprep.subr.mxu0 0.0
    %4444 = vmatpush1.xpose.msra.mxu0 0.0
    %4445 = vmatprep.subr.mxu0 0.0
    %4446 = vmatpush1.xpose.msra.mxu0 0.0
    %4447 = vmatprep.subr.mxu0 0.0
    %4448 = vmatpush1.xpose.msra.mxu0 0.0
    %4449 = vmatprep.subr.mxu0 0.0
    %4450 = vmatpush1.xpose.msra.mxu0 0.0
    %4451 = vmatprep.subr.mxu0 0.0
    %4452 = vmatpush1.xpose.msra.mxu0 0.0
    %4453 = vmatprep.subr.mxu0 0.0
    %4454 = vmatpush1.xpose.msra.mxu0 0.0
    %4455 = vmatprep.subr.mxu0 0.0
    %4456 = vmatpush1.xpose.msra.mxu0 0.0
    %4457 = vmatprep.subr.mxu0 0.0
    %4458 = vmatpush1.xpose.msra.mxu0 0.0
    %4459 = vmatprep.subr.mxu0 0.0
    %4460 = vmatpush1.xpose.msra.mxu0 0.0
    %4461 = vmatprep.mubr.f32.mxu0 0.0
    %4462 = vmatmul.mubr.f32.gmra.mrb[0].mxu0 %v4393
    %v4463 = vpop.f32.mrb[0].mxu0
    %v4464 = vadd.f32 0.0, %v4463
    %v4465 = vpop.f32.mrb[0].mxu0
    %4466 = vdwg.mxu0
    %v4467 = vmul.f32 %v4464, 0.28867513
    %s4468 = scalar_lea.vmem %s3, 64
    %v4469 = vld [vmem:[%s4468] sm:$0xff]
    %vm4470 = vcmp.eq.f32.partialorder %v4469, 0.0
    %v4471 = vsel %vm4470, -1e+09, %v4467
    %v4472 = vsel %vm348, %v4471, -inf
    %4473 = vmax.xlane.f32.xlu0 %v4472
    %v4474 = vpop.xlane.xlu0 %4473
    %v4475 = vsub.f32 %v4471, %v4474
    %v4476 = vmul.f32 %v4475, 1.442695
    %v4477 = vpow.pop %v4476
    %v4478 = vsel %vm348, %v4477, 0.0
    %4479 = vadd.xlane.f32.xlu0 %v4478
    %v4480 = vpop.xlane.xlu0 %4479
    %v4481 = vrcp.pop %v4480
    %v4482 = vmul.f32 %v4477, %v4481
    %4483 = vrot.lane.b32.xlu0 %v4388, 80
    %v4484 = vpop.permute.xlu0 %4483
    %v4487 = vsel %vm348, %v4482, 0
    %4489 = vmatprep.subr.mxu0 0.0
    %4490 = vmatpush1.msra.mxu0 %v4484
    %4491 = vmatprep.subr.mxu0 0.0
    %4492 = vmatpush1.msra.mxu0 0.0
    %4493 = vmatprep.subr.mxu0 0.0
    %4494 = vmatpush1.msra.mxu0 0.0
    %4495 = vmatprep.subr.mxu0 0.0
    %4496 = vmatpush1.msra.mxu0 0.0
    %4497 = vmatprep.subr.mxu0 0.0
    %4498 = vmatpush1.msra.mxu0 0.0
    %4499 = vmatprep.subr.mxu0 0.0
    %4500 = vmatpush1.msra.mxu0 0.0
    %4501 = vmatprep.subr.mxu0 0.0
    %4502 = vmatpush1.msra.mxu0 0.0
    %4503 = vmatprep.subr.mxu0 0.0
    %4504 = vmatpush1.msra.mxu0 0.0
    %4505 = vmatprep.subr.mxu0 0.0
    %4506 = vmatpush1.msra.mxu0 0.0
    %4507 = vmatprep.subr.mxu0 0.0
    %4508 = vmatpush1.msra.mxu0 0.0
    %4509 = vmatprep.subr.mxu0 0.0
    %4510 = vmatpush1.msra.mxu0 0.0
    %4511 = vmatprep.subr.mxu0 0.0
    %4512 = vmatpush1.msra.mxu0 0.0
    %4513 = vmatprep.subr.mxu0 0.0
    %4514 = vmatpush1.msra.mxu0 0.0
    %4515 = vmatprep.subr.mxu0 0.0
    %4516 = vmatpush1.msra.mxu0 0.0
    %4517 = vmatprep.subr.mxu0 0.0
    %4518 = vmatpush1.msra.mxu0 0.0
    %4519 = vmatprep.subr.mxu0 0.0
    %4520 = vmatpush1.msra.mxu0 0.0
    %4521 = vmatprep.subr.mxu0 0.0
    %4522 = vmatpush1.msra.mxu0 0.0
    %4523 = vmatprep.subr.mxu0 0.0
    %4524 = vmatpush1.msra.mxu0 0.0
    %4525 = vmatprep.subr.mxu0 0.0
    %4526 = vmatpush1.msra.mxu0 0.0
    %4527 = vmatprep.subr.mxu0 0.0
    %4528 = vmatpush1.msra.mxu0 0.0
    %4529 = vmatprep.subr.mxu0 0.0
    %4530 = vmatpush1.msra.mxu0 0.0
    %4531 = vmatprep.subr.mxu0 0.0
    %4532 = vmatpush1.msra.mxu0 0.0
    %4533 = vmatprep.subr.mxu0 0.0
    %4534 = vmatpush1.msra.mxu0 0.0
    %4535 = vmatprep.subr.mxu0 0.0
    %4536 = vmatpush1.msra.mxu0 0.0
    %4537 = vmatprep.subr.mxu0 0.0
    %4538 = vmatpush1.msra.mxu0 0.0
    %4539 = vmatprep.subr.mxu0 0.0
    %4540 = vmatpush1.msra.mxu0 0.0
    %4541 = vmatprep.subr.mxu0 0.0
    %4542 = vmatpush1.msra.mxu0 0.0
    %4543 = vmatprep.subr.mxu0 0.0
    %4544 = vmatpush1.msra.mxu0 0.0
    %4545 = vmatprep.subr.mxu0 0.0
    %4546 = vmatpush1.msra.mxu0 0.0
    %4547 = vmatprep.subr.mxu0 0.0
    %4548 = vmatpush1.msra.mxu0 0.0
    %4549 = vmatprep.subr.mxu0 0.0
    %4550 = vmatpush1.msra.mxu0 0.0
    %4551 = vmatprep.subr.mxu0 0.0
    %4552 = vmatpush1.msra.mxu0 0.0
    %4553 = vmatprep.mubr.f32.mxu0 0.0
    %4554 = vmatmul.mubr.f32.gmra.mrb[0].mxu0 %v4487
    %v4555 = vpop.f32.mrb[0].mxu0
    %v4556 = vadd.f32 0.0, %v4555
    %v4557 = vpop.f32.mrb[0].mxu0
    %4558 = vdwg.mxu0
    %4560 = vrot.lane.b32.xlu0 %v4389, 104
    %v4561 = vpop.permute.xlu0 %4560
    %v4562 = vsel %vm3342, %v4389, 0
    %v4564 = vsel %vm3342, %v4561, 0
    %4566 = vmatprep.subr.mxu0 0.0
    %4567 = vmatpush1.xpose.msra.mxu0 %v4564
    %4568 = vmatprep.subr.mxu0 0.0
    %4569 = vmatpush1.xpose.msra.mxu0 0.0
    %4570 = vmatprep.subr.mxu0 0.0
    %4571 = vmatpush1.xpose.msra.mxu0 0.0
    %4572 = vmatprep.subr.mxu0 0.0
    %4573 = vmatpush1.xpose.msra.mxu0 0.0
    %4574 = vmatprep.subr.mxu0 0.0
    %4575 = vmatpush1.xpose.msra.mxu0 0.0
    %4576 = vmatprep.subr.mxu0 0.0
    %4577 = vmatpush1.xpose.msra.mxu0 0.0
    %4578 = vmatprep.subr.mxu0 0.0
    %4579 = vmatpush1.xpose.msra.mxu0 0.0
    %4580 = vmatprep.subr.mxu0 0.0
    %4581 = vmatpush1.xpose.msra.mxu0 0.0
    %4582 = vmatprep.subr.mxu0 0.0
    %4583 = vmatpush1.xpose.msra.mxu0 0.0
    %4584 = vmatprep.subr.mxu0 0.0
    %4585 = vmatpush1.xpose.msra.mxu0 0.0
    %4586 = vmatprep.subr.mxu0 0.0
    %4587 = vmatpush1.xpose.msra.mxu0 0.0
    %4588 = vmatprep.subr.mxu0 0.0
    %4589 = vmatpush1.xpose.msra.mxu0 0.0
    %4590 = vmatprep.subr.mxu0 0.0
    %4591 = vmatpush1.xpose.msra.mxu0 0.0
    %4592 = vmatprep.subr.mxu0 0.0
    %4593 = vmatpush1.xpose.msra.mxu0 0.0
    %4594 = vmatprep.subr.mxu0 0.0
    %4595 = vmatpush1.xpose.msra.mxu0 0.0
    %4596 = vmatprep.subr.mxu0 0.0
    %4597 = vmatpush1.xpose.msra.mxu0 0.0
    %4598 = vmatprep.subr.mxu0 0.0
    %4599 = vmatpush1.xpose.msra.mxu0 0.0
    %4600 = vmatprep.subr.mxu0 0.0
    %4601 = vmatpush1.xpose.msra.mxu0 0.0
    %4602 = vmatprep.subr.mxu0 0.0
    %4603 = vmatpush1.xpose.msra.mxu0 0.0
    %4604 = vmatprep.subr.mxu0 0.0
    %4605 = vmatpush1.xpose.msra.mxu0 0.0
    %4606 = vmatprep.subr.mxu0 0.0
    %4607 = vmatpush1.xpose.msra.mxu0 0.0
    %4608 = vmatprep.subr.mxu0 0.0
    %4609 = vmatpush1.xpose.msra.mxu0 0.0
    %4610 = vmatprep.subr.mxu0 0.0
    %4611 = vmatpush1.xpose.msra.mxu0 0.0
    %4612 = vmatprep.subr.mxu0 0.0
    %4613 = vmatpush1.xpose.msra.mxu0 0.0
    %4614 = vmatprep.subr.mxu0 0.0
    %4615 = vmatpush1.xpose.msra.mxu0 0.0
    %4616 = vmatprep.subr.mxu0 0.0
    %4617 = vmatpush1.xpose.msra.mxu0 0.0
    %4618 = vmatprep.subr.mxu0 0.0
    %4619 = vmatpush1.xpose.msra.mxu0 0.0
    %4620 = vmatprep.subr.mxu0 0.0
    %4621 = vmatpush1.xpose.msra.mxu0 0.0
    %4622 = vmatprep.subr.mxu0 0.0
    %4623 = vmatpush1.xpose.msra.mxu0 0.0
    %4624 = vmatprep.subr.mxu0 0.0
    %4625 = vmatpush1.xpose.msra.mxu0 0.0
    %4626 = vmatprep.subr.mxu0 0.0
    %4627 = vmatpush1.xpose.msra.mxu0 0.0
    %4628 = vmatprep.subr.mxu0 0.0
    %4629 = vmatpush1.xpose.msra.mxu0 0.0
    %4630 = vmatprep.mubr.f32.mxu0 0.0
    %4631 = vmatmul.mubr.f32.gmra.mrb[0].mxu0 %v4562
    %v4632 = vpop.f32.mrb[0].mxu0
    %v4633 = vadd.f32 0.0, %v4632
    %v4634 = vpop.f32.mrb[0].mxu0
    %4635 = vdwg.mxu0
    %v4636 = vmul.f32 %v4633, 0.28867513
    %s4637 = scalar_lea.vmem %s3, 72
    %v4638 = vld [vmem:[%s4637] sm:$0xff]
    %vm4639 = vcmp.eq.f32.partialorder %v4638, 0.0
    %v4640 = vsel %vm4639, -1e+09, %v4636
    %v4641 = vsel %vm348, %v4640, -inf
    %4642 = vmax.xlane.f32.xlu0 %v4641
    %v4643 = vpop.xlane.xlu0 %4642
    %v4644 = vsub.f32 %v4640, %v4643
    %v4645 = vmul.f32 %v4644, 1.442695
    %v4646 = vpow.pop %v4645
    %v4647 = vsel %vm348, %v4646, 0.0
    %4648 = vadd.xlane.f32.xlu0 %v4647
    %v4649 = vpop.xlane.xlu0 %4648
    %v4650 = vrcp.pop %v4649
    %v4651 = vmul.f32 %v4646, %v4650
    %4652 = vrot.lane.b32.xlu0 %v4389, 80
    %v4653 = vpop.permute.xlu0 %4652
    %v4656 = vsel %vm348, %v4651, 0
    %4658 = vmatprep.subr.mxu0 0.0
    %4659 = vmatpush1.msra.mxu0 %v4653
    %4660 = vmatprep.subr.mxu0 0.0
    %4661 = vmatpush1.msra.mxu0 0.0
    %4662 = vmatprep.subr.mxu0 0.0
    %4663 = vmatpush1.msra.mxu0 0.0
    %4664 = vmatprep.subr.mxu0 0.0
    %4665 = vmatpush1.msra.mxu0 0.0
    %4666 = vmatprep.subr.mxu0 0.0
    %4667 = vmatpush1.msra.mxu0 0.0
    %4668 = vmatprep.subr.mxu0 0.0
    %4669 = vmatpush1.msra.mxu0 0.0
    %4670 = vmatprep.subr.mxu0 0.0
    %4671 = vmatpush1.msra.mxu0 0.0
    %4672 = vmatprep.subr.mxu0 0.0
    %4673 = vmatpush1.msra.mxu0 0.0
    %4674 = vmatprep.subr.mxu0 0.0
    %4675 = vmatpush1.msra.mxu0 0.0
    %4676 = vmatprep.subr.mxu0 0.0
    %4677 = vmatpush1.msra.mxu0 0.0
    %4678 = vmatprep.subr.mxu0 0.0
    %4679 = vmatpush1.msra.mxu0 0.0
    %4680 = vmatprep.subr.mxu0 0.0
    %4681 = vmatpush1.msra.mxu0 0.0
    %4682 = vmatprep.subr.mxu0 0.0
    %4683 = vmatpush1.msra.mxu0 0.0
    %4684 = vmatprep.subr.mxu0 0.0
    %4685 = vmatpush1.msra.mxu0 0.0
    %4686 = vmatprep.subr.mxu0 0.0
    %4687 = vmatpush1.msra.mxu0 0.0
    %4688 = vmatprep.subr.mxu0 0.0
    %4689 = vmatpush1.msra.mxu0 0.0
    %4690 = vmatprep.subr.mxu0 0.0
    %4691 = vmatpush1.msra.mxu0 0.0
    %4692 = vmatprep.subr.mxu0 0.0
    %4693 = vmatpush1.msra.mxu0 0.0
    %4694 = vmatprep.subr.mxu0 0.0
    %4695 = vmatpush1.msra.mxu0 0.0
    %4696 = vmatprep.subr.mxu0 0.0
    %4697 = vmatpush1.msra.mxu0 0.0
    %4698 = vmatprep.subr.mxu0 0.0
    %4699 = vmatpush1.msra.mxu0 0.0
    %4700 = vmatprep.subr.mxu0 0.0
    %4701 = vmatpush1.msra.mxu0 0.0
    %4702 = vmatprep.subr.mxu0 0.0
    %4703 = vmatpush1.msra.mxu0 0.0
    %4704 = vmatprep.subr.mxu0 0.0
    %4705 = vmatpush1.msra.mxu0 0.0
    %4706 = vmatprep.subr.mxu0 0.0
    %4707 = vmatpush1.msra.mxu0 0.0
    %4708 = vmatprep.subr.mxu0 0.0
    %4709 = vmatpush1.msra.mxu0 0.0
    %4710 = vmatprep.subr.mxu0 0.0
    %4711 = vmatpush1.msra.mxu0 0.0
    %4712 = vmatprep.subr.mxu0 0.0
    %4713 = vmatpush1.msra.mxu0 0.0
    %4714 = vmatprep.subr.mxu0 0.0
    %4715 = vmatpush1.msra.mxu0 0.0
    %4716 = vmatprep.subr.mxu0 0.0
    %4717 = vmatpush1.msra.mxu0 0.0
    %4718 = vmatprep.subr.mxu0 0.0
    %4719 = vmatpush1.msra.mxu0 0.0
    %4720 = vmatprep.subr.mxu0 0.0
    %4721 = vmatpush1.msra.mxu0 0.0
    %4722 = vmatprep.mubr.f32.mxu0 0.0
    %4723 = vmatmul.mubr.f32.gmra.mrb[0].mxu0 %v4656
    %v4724 = vpop.f32.mrb[0].mxu0
    %v4725 = vadd.f32 0.0, %v4724
    %v4726 = vpop.f32.mrb[0].mxu0
    %4727 = vdwg.mxu0
    %v4728 = vld [vmem:[%s61] sm:$0xff]
    %v4729 = vld [vmem:[%s61 + $0x8] sm:$0xf]
    %v4730 = vld [vmem:[%s63] sm:$0x1]
    %v4732 = vlaneseq
    %v4733 = vshrl.u32 %v4732, 7
    %v4734 = vsub.s32 0, %v4733
    %v4735 = vrot.slane %v4730, %v4734
    %v4738 = vsel %vm3342, %v4556, 0
    %v4741 = vsel %vm3342, %v4725, 0
    %v4744 = vsel %vm1657, %v4729, 0
    %4746 = vmatprep.subr.mxu0 0.0
    %4747 = vmatpush1.msra.mxu0 %v4728
    %4748 = vmatprep.subr.mxu0 0.0
    %4749 = vmatpush1.msra.mxu0 %v4744
    %4750 = vmatprep.subr.mxu0 0.0
    %4751 = vmatpush1.msra.mxu0 0.0
    %4752 = vmatprep.subr.mxu0 0.0
    %4753 = vmatpush1.msra.mxu0 0.0
    %4754 = vmatprep.subr.mxu0 0.0
    %4755 = vmatpush1.msra.mxu0 0.0
    %4756 = vmatprep.subr.mxu0 0.0
    %4757 = vmatpush1.msra.mxu0 0.0
    %4758 = vmatprep.subr.mxu0 0.0
    %4759 = vmatpush1.msra.mxu0 0.0
    %4760 = vmatprep.subr.mxu0 0.0
    %4761 = vmatpush1.msra.mxu0 0.0
    %4762 = vmatprep.subr.mxu0 0.0
    %4763 = vmatpush1.msra.mxu0 0.0
    %4764 = vmatprep.subr.mxu0 0.0
    %4765 = vmatpush1.msra.mxu0 0.0
    %4766 = vmatprep.subr.mxu0 0.0
    %4767 = vmatpush1.msra.mxu0 0.0
    %4768 = vmatprep.subr.mxu0 0.0
    %4769 = vmatpush1.msra.mxu0 0.0
    %4770 = vmatprep.subr.mxu0 0.0
    %4771 = vmatpush1.msra.mxu0 0.0
    %4772 = vmatprep.subr.mxu0 0.0
    %4773 = vmatpush1.msra.mxu0 0.0
    %4774 = vmatprep.subr.mxu0 0.0
    %4775 = vmatpush1.msra.mxu0 0.0
    %4776 = vmatprep.subr.mxu0 0.0
    %4777 = vmatpush1.msra.mxu0 0.0
    %4778 = vmatprep.subr.mxu0 0.0
    %4779 = vmatpush1.msra.mxu0 0.0
    %4780 = vmatprep.subr.mxu0 0.0
    %4781 = vmatpush1.msra.mxu0 0.0
    %4782 = vmatprep.subr.mxu0 0.0
    %4783 = vmatpush1.msra.mxu0 0.0
    %4784 = vmatprep.subr.mxu0 0.0
    %4785 = vmatpush1.msra.mxu0 0.0
    %4786 = vmatprep.subr.mxu0 0.0
    %4787 = vmatpush1.msra.mxu0 0.0
    %4788 = vmatprep.subr.mxu0 0.0
    %4789 = vmatpush1.msra.mxu0 0.0
    %4790 = vmatprep.subr.mxu0 0.0
    %4791 = vmatpush1.msra.mxu0 0.0
    %4792 = vmatprep.subr.mxu0 0.0
    %4793 = vmatpush1.msra.mxu0 0.0
    %4794 = vmatprep.subr.mxu0 0.0
    %4795 = vmatpush1.msra.mxu0 0.0
    %4796 = vmatprep.subr.mxu0 0.0
    %4797 = vmatpush1.msra.mxu0 0.0
    %4798 = vmatprep.subr.mxu0 0.0
    %4799 = vmatpush1.msra.mxu0 0.0
    %4800 = vmatprep.subr.mxu0 0.0
    %4801 = vmatpush1.msra.mxu0 0.0
    %4802 = vmatprep.subr.mxu0 0.0
    %4803 = vmatpush1.msra.mxu0 0.0
    %4804 = vmatprep.subr.mxu0 0.0
    %4805 = vmatpush1.msra.mxu0 0.0
    %4806 = vmatprep.subr.mxu0 0.0
    %4807 = vmatpush1.msra.mxu0 0.0
    %4808 = vmatprep.subr.mxu0 0.0
    %4809 = vmatpush1.msra.mxu0 0.0
    %4810 = vmatprep.mubr.f32.mxu0 0.0
    %4811 = vmatmul.mubr.f32.gmra.mrb[0].mxu0 %v4738
    %v4812 = vpop.f32.mrb[0].mxu0
    %v4813 = vadd.f32 %v4735, %v4812
    %v4814 = vpop.f32.mrb[0].mxu0
    %4815 = vmatprep.mubr.f32.mxu0 0.0
    %4816 = vmatmul.mubr.f32.gmra.mrb[0].mxu0 %v4741
    %v4817 = vpop.f32.mrb[0].mxu0
    %v4818 = vadd.f32 %v4735, %v4817
    %v4819 = vpop.f32.mrb[0].mxu0
    %4820 = vdwg.mxu0
    %v4821 = vadd.f32 %v192, %v4813
    %v4822 = vadd.f32 %v193, %v4818
    %s4823 = sld [smem:[#allocation2 + $0x2]]
    %v4824 = vstv %s4823
    %v4825 = vmul.f32 %v4821, %v4824
    %v4826 = vmul.f32 %v4822, %v4824
    %v4827 = vadd.f32 %v4220, %v4825
    %v4828 = vadd.f32 %v4221, %v4826
    %4831 = vrot.lane.b32.xlu0 %v4813, 8
    %v4832 = vpop.permute.xlu0 %4831
    %4833 = vrot.lane.b32.xlu0 %v4818, 8
    %v4834 = vpop.permute.xlu0 %4833
    %v4837 = vadd.f32 %v192, %v4832
    %v4838 = vadd.f32 %v193, %v4834
    %s4839 = sld [smem:[#allocation2 + $0x11]]
    %v4840 = vstv %s4839
    %v4841 = vmul.f32 %v4837, %v4840
    %v4842 = vmul.f32 %v4838, %v4840
    %v4843 = vadd.f32 %v3175, %v4841
    %v4844 = vadd.f32 %v3176, %v4842
    %4845 = vrot.lane.b32.xlu0 %v4388, 116
    %v4846 = vpop.permute.xlu0 %4845
    %4847 = vrot.lane.b32.xlu0 %v4388, 92
    %v4848 = vpop.permute.xlu0 %4847
    %v4849 = vsel %vm3342, %v4846, 0
    %v4851 = vsel %vm3342, %v4848, 0
    %4853 = vmatprep.subr.mxu0 0.0
    %4854 = vmatpush1.xpose.msra.mxu0 %v4851
    %4855 = vmatprep.subr.mxu0 0.0
    %4856 = vmatpush1.xpose.msra.mxu0 0.0
    %4857 = vmatprep.subr.mxu0 0.0
    %4858 = vmatpush1.xpose.msra.mxu0 0.0
    %4859 = vmatprep.subr.mxu0 0.0
    %4860 = vmatpush1.xpose.msra.mxu0 0.0
    %4861 = vmatprep.subr.mxu0 0.0
    %4862 = vmatpush1.xpose.msra.mxu0 0.0
    %4863 = vmatprep.subr.mxu0 0.0
    %4864 = vmatpush1.xpose.msra.mxu0 0.0
    %4865 = vmatprep.subr.mxu0 0.0
    %4866 = vmatpush1.xpose.msra.mxu0 0.0
    %4867 = vmatprep.subr.mxu0 0.0
    %4868 = vmatpush1.xpose.msra.mxu0 0.0
    %4869 = vmatprep.subr.mxu0 0.0
    %4870 = vmatpush1.xpose.msra.mxu0 0.0
    %4871 = vmatprep.subr.mxu0 0.0
    %4872 = vmatpush1.xpose.msra.mxu0 0.0
    %4873 = vmatprep.subr.mxu0 0.0
    %4874 = vmatpush1.xpose.msra.mxu0 0.0
    %4875 = vmatprep.subr.mxu0 0.0
    %4876 = vmatpush1.xpose.msra.mxu0 0.0
    %4877 = vmatprep.subr.mxu0 0.0
    %4878 = vmatpush1.xpose.msra.mxu0 0.0
    %4879 = vmatprep.subr.mxu0 0.0
    %4880 = vmatpush1.xpose.msra.mxu0 0.0
    %4881 = vmatprep.subr.mxu0 0.0
    %4882 = vmatpush1.xpose.msra.mxu0 0.0
    %4883 = vmatprep.subr.mxu0 0.0
    %4884 = vmatpush1.xpose.msra.mxu0 0.0
    %4885 = vmatprep.subr.mxu0 0.0
    %4886 = vmatpush1.xpose.msra.mxu0 0.0
    %4887 = vmatprep.subr.mxu0 0.0
    %4888 = vmatpush1.xpose.msra.mxu0 0.0
    %4889 = vmatprep.subr.mxu0 0.0
    %4890 = vmatpush1.xpose.msra.mxu0 0.0
    %4891 = vmatprep.subr.mxu0 0.0
    %4892 = vmatpush1.xpose.msra.mxu0 0.0
    %4893 = vmatprep.subr.mxu0 0.0
    %4894 = vmatpush1.xpose.msra.mxu0 0.0
    %4895 = vmatprep.subr.mxu0 0.0
    %4896 = vmatpush1.xpose.msra.mxu0 0.0
    %4897 = vmatprep.subr.mxu0 0.0
    %4898 = vmatpush1.xpose.msra.mxu0 0.0
    %4899 = vmatprep.subr.mxu0 0.0
    %4900 = vmatpush1.xpose.msra.mxu0 0.0
    %4901 = vmatprep.subr.mxu0 0.0
    %4902 = vmatpush1.xpose.msra.mxu0 0.0
    %4903 = vmatprep.subr.mxu0 0.0
    %4904 = vmatpush1.xpose.msra.mxu0 0.0
    %4905 = vmatprep.subr.mxu0 0.0
    %4906 = vmatpush1.xpose.msra.mxu0 0.0
    %4907 = vmatprep.subr.mxu0 0.0
    %4908 = vmatpush1.xpose.msra.mxu0 0.0
    %4909 = vmatprep.subr.mxu0 0.0
    %4910 = vmatpush1.xpose.msra.mxu0 0.0
    %4911 = vmatprep.subr.mxu0 0.0
    %4912 = vmatpush1.xpose.msra.mxu0 0.0
    %4913 = vmatprep.subr.mxu0 0.0
    %4914 = vmatpush1.xpose.msra.mxu0 0.0
    %4915 = vmatprep.subr.mxu0 0.0
    %4916 = vmatpush1.xpose.msra.mxu0 0.0
    %4917 = vmatprep.mubr.f32.mxu0 0.0
    %4918 = vmatmul.mubr.f32.gmra.mrb[0].mxu0 %v4849
    %v4919 = vpop.f32.mrb[0].mxu0
    %v4920 = vadd.f32 0.0, %v4919
    %v4921 = vpop.f32.mrb[0].mxu0
    %4922 = vdwg.mxu0
    %v4923 = vmul.f32 %v4920, 0.28867513
    %v4924 = vsel %vm4470, -1e+09, %v4923
    %v4925 = vsel %vm348, %v4924, -inf
    %4926 = vmax.xlane.f32.xlu0 %v4925
    %v4927 = vpop.xlane.xlu0 %4926
    %v4928 = vsub.f32 %v4924, %v4927
    %v4929 = vmul.f32 %v4928, 1.442695
    %v4930 = vpow.pop %v4929
    %v4931 = vsel %vm348, %v4930, 0.0
    %4932 = vadd.xlane.f32.xlu0 %v4931
    %v4933 = vpop.xlane.xlu0 %4932
    %v4934 = vrcp.pop %v4933
    %v4935 = vmul.f32 %v4930, %v4934
    %4936 = vrot.lane.b32.xlu0 %v4388, 68
    %v4937 = vpop.permute.xlu0 %4936
    %v4940 = vsel %vm348, %v4935, 0
    %4942 = vmatprep.subr.mxu0 0.0
    %4943 = vmatpush1.msra.mxu0 %v4937
    %4944 = vmatprep.subr.mxu0 0.0
    %4945 = vmatpush1.msra.mxu0 0.0
    %4946 = vmatprep.subr.mxu0 0.0
    %4947 = vmatpush1.msra.mxu0 0.0
    %4948 = vmatprep.subr.mxu0 0.0
    %4949 = vmatpush1.msra.mxu0 0.0
    %4950 = vmatprep.subr.mxu0 0.0
    %4951 = vmatpush1.msra.mxu0 0.0
    %4952 = vmatprep.subr.mxu0 0.0
    %4953 = vmatpush1.msra.mxu0 0.0
    %4954 = vmatprep.subr.mxu0 0.0
    %4955 = vmatpush1.msra.mxu0 0.0
    %4956 = vmatprep.subr.mxu0 0.0
    %4957 = vmatpush1.msra.mxu0 0.0
    %4958 = vmatprep.subr.mxu0 0.0
    %4959 = vmatpush1.msra.mxu0 0.0
    %4960 = vmatprep.subr.mxu0 0.0
    %4961 = vmatpush1.msra.mxu0 0.0
    %4962 = vmatprep.subr.mxu0 0.0
    %4963 = vmatpush1.msra.mxu0 0.0
    %4964 = vmatprep.subr.mxu0 0.0
    %4965 = vmatpush1.msra.mxu0 0.0
    %4966 = vmatprep.subr.mxu0 0.0
    %4967 = vmatpush1.msra.mxu0 0.0
    %4968 = vmatprep.subr.mxu0 0.0
    %4969 = vmatpush1.msra.mxu0 0.0
    %4970 = vmatprep.subr.mxu0 0.0
    %4971 = vmatpush1.msra.mxu0 0.0
    %4972 = vmatprep.subr.mxu0 0.0
    %4973 = vmatpush1.msra.mxu0 0.0
    %4974 = vmatprep.subr.mxu0 0.0
    %4975 = vmatpush1.msra.mxu0 0.0
    %4976 = vmatprep.subr.mxu0 0.0
    %4977 = vmatpush1.msra.mxu0 0.0
    %4978 = vmatprep.subr.mxu0 0.0
    %4979 = vmatpush1.msra.mxu0 0.0
    %4980 = vmatprep.subr.mxu0 0.0
    %4981 = vmatpush1.msra.mxu0 0.0
    %4982 = vmatprep.subr.mxu0 0.0
    %4983 = vmatpush1.msra.mxu0 0.0
    %4984 = vmatprep.subr.mxu0 0.0
    %4985 = vmatpush1.msra.mxu0 0.0
    %4986 = vmatprep.subr.mxu0 0.0
    %4987 = vmatpush1.msra.mxu0 0.0
    %4988 = vmatprep.subr.mxu0 0.0
    %4989 = vmatpush1.msra.mxu0 0.0
    %4990 = vmatprep.subr.mxu0 0.0
    %4991 = vmatpush1.msra.mxu0 0.0
    %4992 = vmatprep.subr.mxu0 0.0
    %4993 = vmatpush1.msra.mxu0 0.0
    %4994 = vmatprep.subr.mxu0 0.0
    %4995 = vmatpush1.msra.mxu0 0.0
    %4996 = vmatprep.subr.mxu0 0.0
    %4997 = vmatpush1.msra.mxu0 0.0
    %4998 = vmatprep.subr.mxu0 0.0
    %4999 = vmatpush1.msra.mxu0 0.0
    %5000 = vmatprep.subr.mxu0 0.0
    %5001 = vmatpush1.msra.mxu0 0.0
    %5002 = vmatprep.subr.mxu0 0.0
    %5003 = vmatpush1.msra.mxu0 0.0
    %5004 = vmatprep.subr.mxu0 0.0
    %5005 = vmatpush1.msra.mxu0 0.0
    %5006 = vmatprep.mubr.f32.mxu0 0.0
    %5007 = vmatmul.mubr.f32.gmra.mrb[0].mxu0 %v4940
    %v5008 = vpop.f32.mrb[0].mxu0
    %v5009 = vadd.f32 0.0, %v5008
    %v5010 = vpop.f32.mrb[0].mxu0
    %5011 = vdwg.mxu0
    %5012 = vrot.lane.b32.xlu0 %v4389, 116
    %v5013 = vpop.permute.xlu0 %5012
    %5014 = vrot.lane.b32.xlu0 %v4389, 92
    %v5015 = vpop.permute.xlu0 %5014
    %v5016 = vsel %vm3342, %v5013, 0
    %v5018 = vsel %vm3342, %v5015, 0
    %5020 = vmatprep.subr.mxu0 0.0
    %5021 = vmatpush1.xpose.msra.mxu0 %v5018
    %5022 = vmatprep.subr.mxu0 0.0
    %5023 = vmatpush1.xpose.msra.mxu0 0.0
    %5024 = vmatprep.subr.mxu0 0.0
    %5025 = vmatpush1.xpose.msra.mxu0 0.0
    %5026 = vmatprep.subr.mxu0 0.0
    %5027 = vmatpush1.xpose.msra.mxu0 0.0
    %5028 = vmatprep.subr.mxu0 0.0
    %5029 = vmatpush1.xpose.msra.mxu0 0.0
    %5030 = vmatprep.subr.mxu0 0.0
    %5031 = vmatpush1.xpose.msra.mxu0 0.0
    %5032 = vmatprep.subr.mxu0 0.0
    %5033 = vmatpush1.xpose.msra.mxu0 0.0
    %5034 = vmatprep.subr.mxu0 0.0
    %5035 = vmatpush1.xpose.msra.mxu0 0.0
    %5036 = vmatprep.subr.mxu0 0.0
    %5037 = vmatpush1.xpose.msra.mxu0 0.0
    %5038 = vmatprep.subr.mxu0 0.0
    %5039 = vmatpush1.xpose.msra.mxu0 0.0
    %5040 = vmatprep.subr.mxu0 0.0
    %5041 = vmatpush1.xpose.msra.mxu0 0.0
    %5042 = vmatprep.subr.mxu0 0.0
    %5043 = vmatpush1.xpose.msra.mxu0 0.0
    %5044 = vmatprep.subr.mxu0 0.0
    %5045 = vmatpush1.xpose.msra.mxu0 0.0
    %5046 = vmatprep.subr.mxu0 0.0
    %5047 = vmatpush1.xpose.msra.mxu0 0.0
    %5048 = vmatprep.subr.mxu0 0.0
    %5049 = vmatpush1.xpose.msra.mxu0 0.0
    %5050 = vmatprep.subr.mxu0 0.0
    %5051 = vmatpush1.xpose.msra.mxu0 0.0
    %5052 = vmatprep.subr.mxu0 0.0
    %5053 = vmatpush1.xpose.msra.mxu0 0.0
    %5054 = vmatprep.subr.mxu0 0.0
    %5055 = vmatpush1.xpose.msra.mxu0 0.0
    %5056 = vmatprep.subr.mxu0 0.0
    %5057 = vmatpush1.xpose.msra.mxu0 0.0
    %5058 = vmatprep.subr.mxu0 0.0
    %5059 = vmatpush1.xpose.msra.mxu0 0.0
    %5060 = vmatprep.subr.mxu0 0.0
    %5061 = vmatpush1.xpose.msra.mxu0 0.0
    %5062 = vmatprep.subr.mxu0 0.0
    %5063 = vmatpush1.xpose.msra.mxu0 0.0
    %5064 = vmatprep.subr.mxu0 0.0
    %5065 = vmatpush1.xpose.msra.mxu0 0.0
    %5066 = vmatprep.subr.mxu0 0.0
    %5067 = vmatpush1.xpose.msra.mxu0 0.0
    %5068 = vmatprep.subr.mxu0 0.0
    %5069 = vmatpush1.xpose.msra.mxu0 0.0
    %5070 = vmatprep.subr.mxu0 0.0
    %5071 = vmatpush1.xpose.msra.mxu0 0.0
    %5072 = vmatprep.subr.mxu0 0.0
    %5073 = vmatpush1.xpose.msra.mxu0 0.0
    %5074 = vmatprep.subr.mxu0 0.0
    %5075 = vmatpush1.xpose.msra.mxu0 0.0
    %5076 = vmatprep.subr.mxu0 0.0
    %5077 = vmatpush1.xpose.msra.mxu0 0.0
    %5078 = vmatprep.subr.mxu0 0.0
    %5079 = vmatpush1.xpose.msra.mxu0 0.0
    %5080 = vmatprep.subr.mxu0 0.0
    %5081 = vmatpush1.xpose.msra.mxu0 0.0
    %5082 = vmatprep.subr.mxu0 0.0
    %5083 = vmatpush1.xpose.msra.mxu0 0.0
    %5084 = vmatprep.mubr.f32.mxu0 0.0
    %5085 = vmatmul.mubr.f32.gmra.mrb[0].mxu0 %v5016
    %v5086 = vpop.f32.mrb[0].mxu0
    %v5087 = vadd.f32 0.0, %v5086
    %v5088 = vpop.f32.mrb[0].mxu0
    %5089 = vdwg.mxu0
    %v5090 = vmul.f32 %v5087, 0.28867513
    %v5091 = vsel %vm4639, -1e+09, %v5090
    %v5092 = vsel %vm348, %v5091, -inf
    %5093 = vmax.xlane.f32.xlu0 %v5092
    %v5094 = vpop.xlane.xlu0 %5093
    %v5095 = vsub.f32 %v5091, %v5094
    %v5096 = vmul.f32 %v5095, 1.442695
    %v5097 = vpow.pop %v5096
    %v5098 = vsel %vm348, %v5097, 0.0
    %5099 = vadd.xlane.f32.xlu0 %v5098
    %v5100 = vpop.xlane.xlu0 %5099
    %v5101 = vrcp.pop %v5100
    %v5102 = vmul.f32 %v5097, %v5101
    %5103 = vrot.lane.b32.xlu0 %v4389, 68
    %v5104 = vpop.permute.xlu0 %5103
    %v5107 = vsel %vm348, %v5102, 0
    %5109 = vmatprep.subr.mxu0 0.0
    %5110 = vmatpush1.msra.mxu0 %v5104
    %5111 = vmatprep.subr.mxu0 0.0
    %5112 = vmatpush1.msra.mxu0 0.0
    %5113 = vmatprep.subr.mxu0 0.0
    %5114 = vmatpush1.msra.mxu0 0.0
    %5115 = vmatprep.subr.mxu0 0.0
    %5116 = vmatpush1.msra.mxu0 0.0
    %5117 = vmatprep.subr.mxu0 0.0
    %5118 = vmatpush1.msra.mxu0 0.0
    %5119 = vmatprep.subr.mxu0 0.0
    %5120 = vmatpush1.msra.mxu0 0.0
    %5121 = vmatprep.subr.mxu0 0.0
    %5122 = vmatpush1.msra.mxu0 0.0
    %5123 = vmatprep.subr.mxu0 0.0
    %5124 = vmatpush1.msra.mxu0 0.0
    %5125 = vmatprep.subr.mxu0 0.0
    %5126 = vmatpush1.msra.mxu0 0.0
    %5127 = vmatprep.subr.mxu0 0.0
    %5128 = vmatpush1.msra.mxu0 0.0
    %5129 = vmatprep.subr.mxu0 0.0
    %5130 = vmatpush1.msra.mxu0 0.0
    %5131 = vmatprep.subr.mxu0 0.0
    %5132 = vmatpush1.msra.mxu0 0.0
    %5133 = vmatprep.subr.mxu0 0.0
    %5134 = vmatpush1.msra.mxu0 0.0
    %5135 = vmatprep.subr.mxu0 0.0
    %5136 = vmatpush1.msra.mxu0 0.0
    %5137 = vmatprep.subr.mxu0 0.0
    %5138 = vmatpush1.msra.mxu0 0.0
    %5139 = vmatprep.subr.mxu0 0.0
    %5140 = vmatpush1.msra.mxu0 0.0
    %5141 = vmatprep.subr.mxu0 0.0
    %5142 = vmatpush1.msra.mxu0 0.0
    %5143 = vmatprep.subr.mxu0 0.0
    %5144 = vmatpush1.msra.mxu0 0.0
    %5145 = vmatprep.subr.mxu0 0.0
    %5146 = vmatpush1.msra.mxu0 0.0
    %5147 = vmatprep.subr.mxu0 0.0
    %5148 = vmatpush1.msra.mxu0 0.0
    %5149 = vmatprep.subr.mxu0 0.0
    %5150 = vmatpush1.msra.mxu0 0.0
    %5151 = vmatprep.subr.mxu0 0.0
    %5152 = vmatpush1.msra.mxu0 0.0
    %5153 = vmatprep.subr.mxu0 0.0
    %5154 = vmatpush1.msra.mxu0 0.0
    %5155 = vmatprep.subr.mxu0 0.0
    %5156 = vmatpush1.msra.mxu0 0.0
    %5157 = vmatprep.subr.mxu0 0.0
    %5158 = vmatpush1.msra.mxu0 0.0
    %5159 = vmatprep.subr.mxu0 0.0
    %5160 = vmatpush1.msra.mxu0 0.0
    %5161 = vmatprep.subr.mxu0 0.0
    %5162 = vmatpush1.msra.mxu0 0.0
    %5163 = vmatprep.subr.mxu0 0.0
    %5164 = vmatpush1.msra.mxu0 0.0
    %5165 = vmatprep.subr.mxu0 0.0
    %5166 = vmatpush1.msra.mxu0 0.0
    %5167 = vmatprep.subr.mxu0 0.0
    %5168 = vmatpush1.msra.mxu0 0.0
    %5169 = vmatprep.subr.mxu0 0.0
    %5170 = vmatpush1.msra.mxu0 0.0
    %5171 = vmatprep.subr.mxu0 0.0
    %5172 = vmatpush1.msra.mxu0 0.0
    %5173 = vmatprep.mubr.f32.mxu0 0.0
    %5174 = vmatmul.mubr.f32.gmra.mrb[0].mxu0 %v5107
    %v5175 = vpop.f32.mrb[0].mxu0
    %v5176 = vadd.f32 0.0, %v5175
    %v5177 = vpop.f32.mrb[0].mxu0
    %5178 = vdwg.mxu0
    %s5179 = scalar_lea.vmem %s61, 16
    %v5180 = vld [vmem:[%s5179] sm:$0xff]
    %v5181 = vld [vmem:[%s5179 + $0x8] sm:$0xf]
    %s5182 = scalar_lea.vmem %s63, 1
    %v5183 = vld [vmem:[%s5182] sm:$0x1]
    %v5185 = vlaneseq
    %v5186 = vshrl.u32 %v5185, 7
    %v5187 = vsub.s32 0, %v5186
    %v5188 = vrot.slane %v5183, %v5187
    %v5191 = vsel %vm3342, %v5009, 0
    %v5194 = vsel %vm3342, %v5176, 0
    %v5197 = vsel %vm1657, %v5181, 0
    %5199 = vmatprep.subr.mxu0 0.0
    %5200 = vmatpush1.msra.mxu0 %v5180
    %5201 = vmatprep.subr.mxu0 0.0
    %5202 = vmatpush1.msra.mxu0 %v5197
    %5203 = vmatprep.subr.mxu0 0.0
    %5204 = vmatpush1.msra.mxu0 0.0
    %5205 = vmatprep.subr.mxu0 0.0
    %5206 = vmatpush1.msra.mxu0 0.0
    %5207 = vmatprep.subr.mxu0 0.0
    %5208 = vmatpush1.msra.mxu0 0.0
    %5209 = vmatprep.subr.mxu0 0.0
    %5210 = vmatpush1.msra.mxu0 0.0
    %5211 = vmatprep.subr.mxu0 0.0
    %5212 = vmatpush1.msra.mxu0 0.0
    %5213 = vmatprep.subr.mxu0 0.0
    %5214 = vmatpush1.msra.mxu0 0.0
    %5215 = vmatprep.subr.mxu0 0.0
    %5216 = vmatpush1.msra.mxu0 0.0
    %5217 = vmatprep.subr.mxu0 0.0
    %5218 = vmatpush1.msra.mxu0 0.0
    %5219 = vmatprep.subr.mxu0 0.0
    %5220 = vmatpush1.msra.mxu0 0.0
    %5221 = vmatprep.subr.mxu0 0.0
    %5222 = vmatpush1.msra.mxu0 0.0
    %5223 = vmatprep.subr.mxu0 0.0
    %5224 = vmatpush1.msra.mxu0 0.0
    %5225 = vmatprep.subr.mxu0 0.0
    %5226 = vmatpush1.msra.mxu0 0.0
    %5227 = vmatprep.subr.mxu0 0.0
    %5228 = vmatpush1.msra.mxu0 0.0
    %5229 = vmatprep.subr.mxu0 0.0
    %5230 = vmatpush1.msra.mxu0 0.0
    %5231 = vmatprep.subr.mxu0 0.0
    %5232 = vmatpush1.msra.mxu0 0.0
    %5233 = vmatprep.subr.mxu0 0.0
    %5234 = vmatpush1.msra.mxu0 0.0
    %5235 = vmatprep.subr.mxu0 0.0
    %5236 = vmatpush1.msra.mxu0 0.0
    %5237 = vmatprep.subr.mxu0 0.0
    %5238 = vmatpush1.msra.mxu0 0.0
    %5239 = vmatprep.subr.mxu0 0.0
    %5240 = vmatpush1.msra.mxu0 0.0
    %5241 = vmatprep.subr.mxu0 0.0
    %5242 = vmatpush1.msra.mxu0 0.0
    %5243 = vmatprep.subr.mxu0 0.0
    %5244 = vmatpush1.msra.mxu0 0.0
    %5245 = vmatprep.subr.mxu0 0.0
    %5246 = vmatpush1.msra.mxu0 0.0
    %5247 = vmatprep.subr.mxu0 0.0
    %5248 = vmatpush1.msra.mxu0 0.0
    %5249 = vmatprep.subr.mxu0 0.0
    %5250 = vmatpush1.msra.mxu0 0.0
    %5251 = vmatprep.subr.mxu0 0.0
    %5252 = vmatpush1.msra.mxu0 0.0
    %5253 = vmatprep.subr.mxu0 0.0
    %5254 = vmatpush1.msra.mxu0 0.0
    %5255 = vmatprep.subr.mxu0 0.0
    %5256 = vmatpush1.msra.mxu0 0.0
    %5257 = vmatprep.subr.mxu0 0.0
    %5258 = vmatpush1.msra.mxu0 0.0
    %5259 = vmatprep.subr.mxu0 0.0
    %5260 = vmatpush1.msra.mxu0 0.0
    %5261 = vmatprep.subr.mxu0 0.0
    %5262 = vmatpush1.msra.mxu0 0.0
    %5263 = vmatprep.mubr.f32.mxu0 0.0
    %5264 = vmatmul.mubr.f32.gmra.mrb[0].mxu0 %v5191
    %v5265 = vpop.f32.mrb[0].mxu0
    %v5266 = vadd.f32 %v5188, %v5265
    %v5267 = vpop.f32.mrb[0].mxu0
    %5268 = vmatprep.mubr.f32.mxu0 0.0
    %5269 = vmatmul.mubr.f32.gmra.mrb[0].mxu0 %v5194
    %v5270 = vpop.f32.mrb[0].mxu0
    %v5271 = vadd.f32 %v5188, %v5270
    %v5272 = vpop.f32.mrb[0].mxu0
    %5273 = vdwg.mxu0
    %v5274 = vadd.f32 %v4821, %v5266
    %v5275 = vadd.f32 %v4822, %v5271
    %s5276 = sld [smem:[#allocation2 + $0x6]]
    %v5277 = vstv %s5276
    %v5278 = vmul.f32 %v5274, %v5277
    %v5279 = vmul.f32 %v5275, %v5277
    %v5280 = vadd.f32 %v4827, %v5278
    %v5281 = vadd.f32 %v4828, %v5279
    %5284 = vrot.lane.b32.xlu0 %v5266, 8
    %v5285 = vpop.permute.xlu0 %5284
    %5286 = vrot.lane.b32.xlu0 %v5271, 8
    %v5287 = vpop.permute.xlu0 %5286
    %v5290 = vadd.f32 %v4837, %v5285
    %v5291 = vadd.f32 %v4838, %v5287
    %s5292 = sld [smem:[#allocation2 + $0x15]]
    %v5293 = vstv %s5292
    %v5294 = vmul.f32 %v5290, %v5293
    %v5295 = vmul.f32 %v5291, %v5293
    %v5296 = vadd.f32 %v4843, %v5294
    %v5297 = vadd.f32 %v4844, %v5295
    %v5298 = vld [vmem:[%s65] sm:$0xff]
    %v5299 = vld [vmem:[%s65 + $0x8] sm:$0xff]
    %v5300 = vld [vmem:[%s67] sm:$0x1]
    %5301 = vmatprep.subr.mxu0 0.0
    %5302 = vmatpush1.msra.mxu0 %v5299
    %5303 = vmatprep.subr.mxu0 0.0
    %5304 = vmatpush1.msra.mxu0 0.0
    %5305 = vmatprep.subr.mxu0 0.0
    %5306 = vmatpush1.msra.mxu0 0.0
    %5307 = vmatprep.subr.mxu0 0.0
    %5308 = vmatpush1.msra.mxu0 0.0
    %5309 = vmatprep.subr.mxu0 0.0
    %5310 = vmatpush1.msra.mxu0 0.0
    %5311 = vmatprep.subr.mxu0 0.0
    %5312 = vmatpush1.msra.mxu0 0.0
    %5313 = vmatprep.subr.mxu0 0.0
    %5314 = vmatpush1.msra.mxu0 0.0
    %5315 = vmatprep.subr.mxu0 0.0
    %5316 = vmatpush1.msra.mxu0 0.0
    %5317 = vmatprep.subr.mxu0 0.0
    %5318 = vmatpush1.msra.mxu0 0.0
    %5319 = vmatprep.subr.mxu0 0.0
    %5320 = vmatpush1.msra.mxu0 0.0
    %5321 = vmatprep.subr.mxu0 0.0
    %5322 = vmatpush1.msra.mxu0 0.0
    %5323 = vmatprep.subr.mxu0 0.0
    %5324 = vmatpush1.msra.mxu0 0.0
    %5325 = vmatprep.subr.mxu0 0.0
    %5326 = vmatpush1.msra.mxu0 0.0
    %5327 = vmatprep.subr.mxu0 0.0
    %5328 = vmatpush1.msra.mxu0 0.0
    %5329 = vmatprep.subr.mxu0 0.0
    %5330 = vmatpush1.msra.mxu0 0.0
    %5331 = vmatprep.subr.mxu0 0.0
    %5332 = vmatpush1.msra.mxu0 0.0
    %5333 = vmatprep.subr.mxu0 0.0
    %5334 = vmatpush1.msra.mxu0 0.0
    %5335 = vmatprep.subr.mxu0 0.0
    %5336 = vmatpush1.msra.mxu0 0.0
    %5337 = vmatprep.subr.mxu0 0.0
    %5338 = vmatpush1.msra.mxu0 0.0
    %5339 = vmatprep.subr.mxu0 0.0
    %5340 = vmatpush1.msra.mxu0 0.0
    %5341 = vmatprep.subr.mxu0 0.0
    %5342 = vmatpush1.msra.mxu0 0.0
    %5343 = vmatprep.subr.mxu0 0.0
    %5344 = vmatpush1.msra.mxu0 0.0
    %5345 = vmatprep.subr.mxu0 0.0
    %5346 = vmatpush1.msra.mxu0 0.0
    %5347 = vmatprep.subr.mxu0 0.0
    %5348 = vmatpush1.msra.mxu0 0.0
    %5349 = vmatprep.subr.mxu0 0.0
    %5350 = vmatpush1.msra.mxu0 0.0
    %5351 = vmatprep.subr.mxu0 0.0
    %5352 = vmatpush1.msra.mxu0 0.0
    %5353 = vmatprep.subr.mxu0 0.0
    %5354 = vmatpush1.msra.mxu0 0.0
    %5355 = vmatprep.subr.mxu0 0.0
    %5356 = vmatpush1.msra.mxu0 0.0
    %5357 = vmatprep.subr.mxu0 0.0
    %5358 = vmatpush1.msra.mxu0 0.0
    %5359 = vmatprep.subr.mxu0 0.0
    %5360 = vmatpush1.msra.mxu0 0.0
    %5361 = vmatprep.subr.mxu0 0.0
    %5362 = vmatpush1.msra.mxu0 0.0
    %5363 = vmatprep.subr.mxu0 0.0
    %5364 = vmatpush1.msra.mxu0 0.0
    %5365 = vmatprep.mubr.f32.mxu0 0.0
    %5366 = vmatmul.mubr.f32.gmra.mrb[0].mxu0 %v2208
    %v5367 = vpop.f32.mrb[0].mxu0
    %v5368 = vadd.f32 0.0, %v5367
    %v5369 = vpop.f32.mrb[0].mxu0
    %5370 = vmatprep.mubr.f32.mxu0 0.0
    %5371 = vmatmul.mubr.f32.gmra.mrb[0].mxu0 %v2210
    %v5372 = vpop.f32.mrb[0].mxu0
    %v5373 = vadd.f32 0.0, %v5372
    %v5374 = vpop.f32.mrb[0].mxu0
    %5375 = vdwg.mxu0
    %5376 = vmatprep.subr.mxu0 0.0
    %5377 = vmatpush1.msra.mxu0 %v5298
    %5378 = vmatprep.subr.mxu0 0.0
    %5379 = vmatpush1.msra.mxu0 0.0
    %5380 = vmatprep.subr.mxu0 0.0
    %5381 = vmatpush1.msra.mxu0 0.0
    %5382 = vmatprep.subr.mxu0 0.0
    %5383 = vmatpush1.msra.mxu0 0.0
    %5384 = vmatprep.subr.mxu0 0.0
    %5385 = vmatpush1.msra.mxu0 0.0
    %5386 = vmatprep.subr.mxu0 0.0
    %5387 = vmatpush1.msra.mxu0 0.0
    %5388 = vmatprep.subr.mxu0 0.0
    %5389 = vmatpush1.msra.mxu0 0.0
    %5390 = vmatprep.subr.mxu0 0.0
    %5391 = vmatpush1.msra.mxu0 0.0
    %5392 = vmatprep.subr.mxu0 0.0
    %5393 = vmatpush1.msra.mxu0 0.0
    %5394 = vmatprep.subr.mxu0 0.0
    %5395 = vmatpush1.msra.mxu0 0.0
    %5396 = vmatprep.subr.mxu0 0.0
    %5397 = vmatpush1.msra.mxu0 0.0
    %5398 = vmatprep.subr.mxu0 0.0
    %5399 = vmatpush1.msra.mxu0 0.0
    %5400 = vmatprep.subr.mxu0 0.0
    %5401 = vmatpush1.msra.mxu0 0.0
    %5402 = vmatprep.subr.mxu0 0.0
    %5403 = vmatpush1.msra.mxu0 0.0
    %5404 = vmatprep.subr.mxu0 0.0
    %5405 = vmatpush1.msra.mxu0 0.0
    %5406 = vmatprep.subr.mxu0 0.0
    %5407 = vmatpush1.msra.mxu0 0.0
    %5408 = vmatprep.subr.mxu0 0.0
    %5409 = vmatpush1.msra.mxu0 0.0
    %5410 = vmatprep.subr.mxu0 0.0
    %5411 = vmatpush1.msra.mxu0 0.0
    %5412 = vmatprep.subr.mxu0 0.0
    %5413 = vmatpush1.msra.mxu0 0.0
    %5414 = vmatprep.subr.mxu0 0.0
    %5415 = vmatpush1.msra.mxu0 0.0
    %5416 = vmatprep.subr.mxu0 0.0
    %5417 = vmatpush1.msra.mxu0 0.0
    %5418 = vmatprep.subr.mxu0 0.0
    %5419 = vmatpush1.msra.mxu0 0.0
    %5420 = vmatprep.subr.mxu0 0.0
    %5421 = vmatpush1.msra.mxu0 0.0
    %5422 = vmatprep.subr.mxu0 0.0
    %5423 = vmatpush1.msra.mxu0 0.0
    %5424 = vmatprep.subr.mxu0 0.0
    %5425 = vmatpush1.msra.mxu0 0.0
    %5426 = vmatprep.subr.mxu0 0.0
    %5427 = vmatpush1.msra.mxu0 0.0
    %5428 = vmatprep.subr.mxu0 0.0
    %5429 = vmatpush1.msra.mxu0 0.0
    %5430 = vmatprep.subr.mxu0 0.0
    %5431 = vmatpush1.msra.mxu0 0.0
    %5432 = vmatprep.subr.mxu0 0.0
    %5433 = vmatpush1.msra.mxu0 0.0
    %5434 = vmatprep.subr.mxu0 0.0
    %5435 = vmatpush1.msra.mxu0 0.0
    %5436 = vmatprep.subr.mxu0 0.0
    %5437 = vmatpush1.msra.mxu0 0.0
    %5438 = vmatprep.subr.mxu0 0.0
    %5439 = vmatpush1.msra.mxu0 0.0
    %5440 = vmatprep.mubr.f32.mxu0 0.0
    %5441 = vmatmul.mubr.f32.gmra.mrb[0].mxu0 %v1225
    %v5442 = vpop.f32.mrb[0].mxu0
    %v5443 = vadd.f32 %v5368, %v5442
    %v5444 = vpop.f32.mrb[0].mxu0
    %5445 = vmatprep.mubr.f32.mxu0 0.0
    %5446 = vmatmul.mubr.f32.gmra.mrb[0].mxu0 %v1227
    %v5447 = vpop.f32.mrb[0].mxu0
    %v5448 = vadd.f32 %v5373, %v5447
    %v5449 = vpop.f32.mrb[0].mxu0
    %5450 = vdwg.mxu0
    %v5452 = vlaneseq
    %v5453 = vshrl.u32 %v5452, 7
    %v5454 = vsub.s32 0, %v5453
    %v5455 = vrot.slane %v5300, %v5454
    %v5457 = vadd.f32 %v5443, %v5455
    %v5458 = vadd.f32 %v5448, %v5455
    %5460 = vrot.lane.b32.xlu0 %v5457, 112
    %v5461 = vpop.permute.xlu0 %5460
    %v5462 = vsel %vm348, %v5457, 0
    %v5464 = vsel %vm348, %v5461, 0
    %5466 = vmatprep.subr.mxu0 0.0
    %5467 = vmatpush1.xpose.msra.mxu0 %v5464
    %5468 = vmatprep.subr.mxu0 0.0
    %5469 = vmatpush1.xpose.msra.mxu0 0.0
    %5470 = vmatprep.subr.mxu0 0.0
    %5471 = vmatpush1.xpose.msra.mxu0 0.0
    %5472 = vmatprep.subr.mxu0 0.0
    %5473 = vmatpush1.xpose.msra.mxu0 0.0
    %5474 = vmatprep.subr.mxu0 0.0
    %5475 = vmatpush1.xpose.msra.mxu0 0.0
    %5476 = vmatprep.subr.mxu0 0.0
    %5477 = vmatpush1.xpose.msra.mxu0 0.0
    %5478 = vmatprep.subr.mxu0 0.0
    %5479 = vmatpush1.xpose.msra.mxu0 0.0
    %5480 = vmatprep.subr.mxu0 0.0
    %5481 = vmatpush1.xpose.msra.mxu0 0.0
    %5482 = vmatprep.subr.mxu0 0.0
    %5483 = vmatpush1.xpose.msra.mxu0 0.0
    %5484 = vmatprep.subr.mxu0 0.0
    %5485 = vmatpush1.xpose.msra.mxu0 0.0
    %5486 = vmatprep.subr.mxu0 0.0
    %5487 = vmatpush1.xpose.msra.mxu0 0.0
    %5488 = vmatprep.subr.mxu0 0.0
    %5489 = vmatpush1.xpose.msra.mxu0 0.0
    %5490 = vmatprep.subr.mxu0 0.0
    %5491 = vmatpush1.xpose.msra.mxu0 0.0
    %5492 = vmatprep.subr.mxu0 0.0
    %5493 = vmatpush1.xpose.msra.mxu0 0.0
    %5494 = vmatprep.subr.mxu0 0.0
    %5495 = vmatpush1.xpose.msra.mxu0 0.0
    %5496 = vmatprep.subr.mxu0 0.0
    %5497 = vmatpush1.xpose.msra.mxu0 0.0
    %5498 = vmatprep.subr.mxu0 0.0
    %5499 = vmatpush1.xpose.msra.mxu0 0.0
    %5500 = vmatprep.subr.mxu0 0.0
    %5501 = vmatpush1.xpose.msra.mxu0 0.0
    %5502 = vmatprep.subr.mxu0 0.0
    %5503 = vmatpush1.xpose.msra.mxu0 0.0
    %5504 = vmatprep.subr.mxu0 0.0
    %5505 = vmatpush1.xpose.msra.mxu0 0.0
    %5506 = vmatprep.subr.mxu0 0.0
    %5507 = vmatpush1.xpose.msra.mxu0 0.0
    %5508 = vmatprep.subr.mxu0 0.0
    %5509 = vmatpush1.xpose.msra.mxu0 0.0
    %5510 = vmatprep.subr.mxu0 0.0
    %5511 = vmatpush1.xpose.msra.mxu0 0.0
    %5512 = vmatprep.subr.mxu0 0.0
    %5513 = vmatpush1.xpose.msra.mxu0 0.0
    %5514 = vmatprep.subr.mxu0 0.0
    %5515 = vmatpush1.xpose.msra.mxu0 0.0
    %5516 = vmatprep.subr.mxu0 0.0
    %5517 = vmatpush1.xpose.msra.mxu0 0.0
    %5518 = vmatprep.subr.mxu0 0.0
    %5519 = vmatpush1.xpose.msra.mxu0 0.0
    %5520 = vmatprep.subr.mxu0 0.0
    %5521 = vmatpush1.xpose.msra.mxu0 0.0
    %5522 = vmatprep.subr.mxu0 0.0
    %5523 = vmatpush1.xpose.msra.mxu0 0.0
    %5524 = vmatprep.subr.mxu0 0.0
    %5525 = vmatpush1.xpose.msra.mxu0 0.0
    %5526 = vmatprep.subr.mxu0 0.0
    %5527 = vmatpush1.xpose.msra.mxu0 0.0
    %5528 = vmatprep.subr.mxu0 0.0
    %5529 = vmatpush1.xpose.msra.mxu0 0.0
    %5530 = vmatprep.mubr.f32.mxu0 0.0
    %5531 = vmatmul.mubr.f32.gmra.mrb[0].mxu0 %v5462
    %v5532 = vpop.f32.mrb[0].mxu0
    %v5533 = vadd.f32 0.0, %v5532
    %v5534 = vpop.f32.mrb[0].mxu0
    %5535 = vdwg.mxu0
    %v5536 = vmul.f32 %v5533, 0.35355338
    %s5537 = scalar_lea.vmem %s3, 80
    %v5538 = vld [vmem:[%s5537] sm:$0xff]
    %vm5539 = vcmp.eq.f32.partialorder %v5538, 0.0
    %v5540 = vsel %vm5539, -1e+09, %v5536
    %v5541 = vsel %vm348, %v5540, -inf
    %5542 = vmax.xlane.f32.xlu0 %v5541
    %v5543 = vpop.xlane.xlu0 %5542
    %v5544 = vsub.f32 %v5540, %v5543
    %v5545 = vmul.f32 %v5544, 1.442695
    %v5546 = vpow.pop %v5545
    %v5547 = vsel %vm348, %v5546, 0.0
    %5548 = vadd.xlane.f32.xlu0 %v5547
    %v5549 = vpop.xlane.xlu0 %5548
    %v5550 = vrcp.pop %v5549
    %v5551 = vmul.f32 %v5546, %v5550
    %5552 = vrot.lane.b32.xlu0 %v5457, 96
    %v5553 = vpop.permute.xlu0 %5552
    %v5556 = vsel %vm348, %v5551, 0
    %5558 = vmatprep.subr.mxu0 0.0
    %5559 = vmatpush1.msra.mxu0 %v5553
    %5560 = vmatprep.subr.mxu0 0.0
    %5561 = vmatpush1.msra.mxu0 0.0
    %5562 = vmatprep.subr.mxu0 0.0
    %5563 = vmatpush1.msra.mxu0 0.0
    %5564 = vmatprep.subr.mxu0 0.0
    %5565 = vmatpush1.msra.mxu0 0.0
    %5566 = vmatprep.subr.mxu0 0.0
    %5567 = vmatpush1.msra.mxu0 0.0
    %5568 = vmatprep.subr.mxu0 0.0
    %5569 = vmatpush1.msra.mxu0 0.0
    %5570 = vmatprep.subr.mxu0 0.0
    %5571 = vmatpush1.msra.mxu0 0.0
    %5572 = vmatprep.subr.mxu0 0.0
    %5573 = vmatpush1.msra.mxu0 0.0
    %5574 = vmatprep.subr.mxu0 0.0
    %5575 = vmatpush1.msra.mxu0 0.0
    %5576 = vmatprep.subr.mxu0 0.0
    %5577 = vmatpush1.msra.mxu0 0.0
    %5578 = vmatprep.subr.mxu0 0.0
    %5579 = vmatpush1.msra.mxu0 0.0
    %5580 = vmatprep.subr.mxu0 0.0
    %5581 = vmatpush1.msra.mxu0 0.0
    %5582 = vmatprep.subr.mxu0 0.0
    %5583 = vmatpush1.msra.mxu0 0.0
    %5584 = vmatprep.subr.mxu0 0.0
    %5585 = vmatpush1.msra.mxu0 0.0
    %5586 = vmatprep.subr.mxu0 0.0
    %5587 = vmatpush1.msra.mxu0 0.0
    %5588 = vmatprep.subr.mxu0 0.0
    %5589 = vmatpush1.msra.mxu0 0.0
    %5590 = vmatprep.subr.mxu0 0.0
    %5591 = vmatpush1.msra.mxu0 0.0
    %5592 = vmatprep.subr.mxu0 0.0
    %5593 = vmatpush1.msra.mxu0 0.0
    %5594 = vmatprep.subr.mxu0 0.0
    %5595 = vmatpush1.msra.mxu0 0.0
    %5596 = vmatprep.subr.mxu0 0.0
    %5597 = vmatpush1.msra.mxu0 0.0
    %5598 = vmatprep.subr.mxu0 0.0
    %5599 = vmatpush1.msra.mxu0 0.0
    %5600 = vmatprep.subr.mxu0 0.0
    %5601 = vmatpush1.msra.mxu0 0.0
    %5602 = vmatprep.subr.mxu0 0.0
    %5603 = vmatpush1.msra.mxu0 0.0
    %5604 = vmatprep.subr.mxu0 0.0
    %5605 = vmatpush1.msra.mxu0 0.0
    %5606 = vmatprep.subr.mxu0 0.0
    %5607 = vmatpush1.msra.mxu0 0.0
    %5608 = vmatprep.subr.mxu0 0.0
    %5609 = vmatpush1.msra.mxu0 0.0
    %5610 = vmatprep.subr.mxu0 0.0
    %5611 = vmatpush1.msra.mxu0 0.0
    %5612 = vmatprep.subr.mxu0 0.0
    %5613 = vmatpush1.msra.mxu0 0.0
    %5614 = vmatprep.subr.mxu0 0.0
    %5615 = vmatpush1.msra.mxu0 0.0
    %5616 = vmatprep.subr.mxu0 0.0
    %5617 = vmatpush1.msra.mxu0 0.0
    %5618 = vmatprep.subr.mxu0 0.0
    %5619 = vmatpush1.msra.mxu0 0.0
    %5620 = vmatprep.subr.mxu0 0.0
    %5621 = vmatpush1.msra.mxu0 0.0
    %5622 = vmatprep.mubr.f32.mxu0 0.0
    %5623 = vmatmul.mubr.f32.gmra.mrb[0].mxu0 %v5556
    %v5624 = vpop.f32.mrb[0].mxu0
    %v5625 = vadd.f32 0.0, %v5624
    %v5626 = vpop.f32.mrb[0].mxu0
    %5627 = vdwg.mxu0
    %5629 = vrot.lane.b32.xlu0 %v5458, 112
    %v5630 = vpop.permute.xlu0 %5629
    %v5631 = vsel %vm348, %v5458, 0
    %v5633 = vsel %vm348, %v5630, 0
    %5635 = vmatprep.subr.mxu0 0.0
    %5636 = vmatpush1.xpose.msra.mxu0 %v5633
    %5637 = vmatprep.subr.mxu0 0.0
    %5638 = vmatpush1.xpose.msra.mxu0 0.0
    %5639 = vmatprep.subr.mxu0 0.0
    %5640 = vmatpush1.xpose.msra.mxu0 0.0
    %5641 = vmatprep.subr.mxu0 0.0
    %5642 = vmatpush1.xpose.msra.mxu0 0.0
    %5643 = vmatprep.subr.mxu0 0.0
    %5644 = vmatpush1.xpose.msra.mxu0 0.0
    %5645 = vmatprep.subr.mxu0 0.0
    %5646 = vmatpush1.xpose.msra.mxu0 0.0
    %5647 = vmatprep.subr.mxu0 0.0
    %5648 = vmatpush1.xpose.msra.mxu0 0.0
    %5649 = vmatprep.subr.mxu0 0.0
    %5650 = vmatpush1.xpose.msra.mxu0 0.0
    %5651 = vmatprep.subr.mxu0 0.0
    %5652 = vmatpush1.xpose.msra.mxu0 0.0
    %5653 = vmatprep.subr.mxu0 0.0
    %5654 = vmatpush1.xpose.msra.mxu0 0.0
    %5655 = vmatprep.subr.mxu0 0.0
    %5656 = vmatpush1.xpose.msra.mxu0 0.0
    %5657 = vmatprep.subr.mxu0 0.0
    %5658 = vmatpush1.xpose.msra.mxu0 0.0
    %5659 = vmatprep.subr.mxu0 0.0
    %5660 = vmatpush1.xpose.msra.mxu0 0.0
    %5661 = vmatprep.subr.mxu0 0.0
    %5662 = vmatpush1.xpose.msra.mxu0 0.0
    %5663 = vmatprep.subr.mxu0 0.0
    %5664 = vmatpush1.xpose.msra.mxu0 0.0
    %5665 = vmatprep.subr.mxu0 0.0
    %5666 = vmatpush1.xpose.msra.mxu0 0.0
    %5667 = vmatprep.subr.mxu0 0.0
    %5668 = vmatpush1.xpose.msra.mxu0 0.0
    %5669 = vmatprep.subr.mxu0 0.0
    %5670 = vmatpush1.xpose.msra.mxu0 0.0
    %5671 = vmatprep.subr.mxu0 0.0
    %5672 = vmatpush1.xpose.msra.mxu0 0.0
    %5673 = vmatprep.subr.mxu0 0.0
    %5674 = vmatpush1.xpose.msra.mxu0 0.0
    %5675 = vmatprep.subr.mxu0 0.0
    %5676 = vmatpush1.xpose.msra.mxu0 0.0
    %5677 = vmatprep.subr.mxu0 0.0
    %5678 = vmatpush1.xpose.msra.mxu0 0.0
    %5679 = vmatprep.subr.mxu0 0.0
    %5680 = vmatpush1.xpose.msra.mxu0 0.0
    %5681 = vmatprep.subr.mxu0 0.0
    %5682 = vmatpush1.xpose.msra.mxu0 0.0
    %5683 = vmatprep.subr.mxu0 0.0
    %5684 = vmatpush1.xpose.msra.mxu0 0.0
    %5685 = vmatprep.subr.mxu0 0.0
    %5686 = vmatpush1.xpose.msra.mxu0 0.0
    %5687 = vmatprep.subr.mxu0 0.0
    %5688 = vmatpush1.xpose.msra.mxu0 0.0
    %5689 = vmatprep.subr.mxu0 0.0
    %5690 = vmatpush1.xpose.msra.mxu0 0.0
    %5691 = vmatprep.subr.mxu0 0.0
    %5692 = vmatpush1.xpose.msra.mxu0 0.0
    %5693 = vmatprep.subr.mxu0 0.0
    %5694 = vmatpush1.xpose.msra.mxu0 0.0
    %5695 = vmatprep.subr.mxu0 0.0
    %5696 = vmatpush1.xpose.msra.mxu0 0.0
    %5697 = vmatprep.subr.mxu0 0.0
    %5698 = vmatpush1.xpose.msra.mxu0 0.0
    %5699 = vmatprep.mubr.f32.mxu0 0.0
    %5700 = vmatmul.mubr.f32.gmra.mrb[0].mxu0 %v5631
    %v5701 = vpop.f32.mrb[0].mxu0
    %v5702 = vadd.f32 0.0, %v5701
    %v5703 = vpop.f32.mrb[0].mxu0
    %5704 = vdwg.mxu0
    %v5705 = vmul.f32 %v5702, 0.35355338
    %s5706 = scalar_lea.vmem %s3, 88
    %v5707 = vld [vmem:[%s5706] sm:$0xff]
    %vm5708 = vcmp.eq.f32.partialorder %v5707, 0.0
    %v5709 = vsel %vm5708, -1e+09, %v5705
    %v5710 = vsel %vm348, %v5709, -inf
    %5711 = vmax.xlane.f32.xlu0 %v5710
    %v5712 = vpop.xlane.xlu0 %5711
    %v5713 = vsub.f32 %v5709, %v5712
    %v5714 = vmul.f32 %v5713, 1.442695
    %v5715 = vpow.pop %v5714
    %v5716 = vsel %vm348, %v5715, 0.0
    %5717 = vadd.xlane.f32.xlu0 %v5716
    %v5718 = vpop.xlane.xlu0 %5717
    %v5719 = vrcp.pop %v5718
    %v5720 = vmul.f32 %v5715, %v5719
    %5721 = vrot.lane.b32.xlu0 %v5458, 96
    %v5722 = vpop.permute.xlu0 %5721
    %v5725 = vsel %vm348, %v5720, 0
    %5727 = vmatprep.subr.mxu0 0.0
    %5728 = vmatpush1.msra.mxu0 %v5722
    %5729 = vmatprep.subr.mxu0 0.0
    %5730 = vmatpush1.msra.mxu0 0.0
    %5731 = vmatprep.subr.mxu0 0.0
    %5732 = vmatpush1.msra.mxu0 0.0
    %5733 = vmatprep.subr.mxu0 0.0
    %5734 = vmatpush1.msra.mxu0 0.0
    %5735 = vmatprep.subr.mxu0 0.0
    %5736 = vmatpush1.msra.mxu0 0.0
    %5737 = vmatprep.subr.mxu0 0.0
    %5738 = vmatpush1.msra.mxu0 0.0
    %5739 = vmatprep.subr.mxu0 0.0
    %5740 = vmatpush1.msra.mxu0 0.0
    %5741 = vmatprep.subr.mxu0 0.0
    %5742 = vmatpush1.msra.mxu0 0.0
    %5743 = vmatprep.subr.mxu0 0.0
    %5744 = vmatpush1.msra.mxu0 0.0
    %5745 = vmatprep.subr.mxu0 0.0
    %5746 = vmatpush1.msra.mxu0 0.0
    %5747 = vmatprep.subr.mxu0 0.0
    %5748 = vmatpush1.msra.mxu0 0.0
    %5749 = vmatprep.subr.mxu0 0.0
    %5750 = vmatpush1.msra.mxu0 0.0
    %5751 = vmatprep.subr.mxu0 0.0
    %5752 = vmatpush1.msra.mxu0 0.0
    %5753 = vmatprep.subr.mxu0 0.0
    %5754 = vmatpush1.msra.mxu0 0.0
    %5755 = vmatprep.subr.mxu0 0.0
    %5756 = vmatpush1.msra.mxu0 0.0
    %5757 = vmatprep.subr.mxu0 0.0
    %5758 = vmatpush1.msra.mxu0 0.0
    %5759 = vmatprep.subr.mxu0 0.0
    %5760 = vmatpush1.msra.mxu0 0.0
    %5761 = vmatprep.subr.mxu0 0.0
    %5762 = vmatpush1.msra.mxu0 0.0
    %5763 = vmatprep.subr.mxu0 0.0
    %5764 = vmatpush1.msra.mxu0 0.0
    %5765 = vmatprep.subr.mxu0 0.0
    %5766 = vmatpush1.msra.mxu0 0.0
    %5767 = vmatprep.subr.mxu0 0.0
    %5768 = vmatpush1.msra.mxu0 0.0
    %5769 = vmatprep.subr.mxu0 0.0
    %5770 = vmatpush1.msra.mxu0 0.0
    %5771 = vmatprep.subr.mxu0 0.0
    %5772 = vmatpush1.msra.mxu0 0.0
    %5773 = vmatprep.subr.mxu0 0.0
    %5774 = vmatpush1.msra.mxu0 0.0
    %5775 = vmatprep.subr.mxu0 0.0
    %5776 = vmatpush1.msra.mxu0 0.0
    %5777 = vmatprep.subr.mxu0 0.0
    %5778 = vmatpush1.msra.mxu0 0.0
    %5779 = vmatprep.subr.mxu0 0.0
    %5780 = vmatpush1.msra.mxu0 0.0
    %5781 = vmatprep.subr.mxu0 0.0
    %5782 = vmatpush1.msra.mxu0 0.0
    %5783 = vmatprep.subr.mxu0 0.0
    %5784 = vmatpush1.msra.mxu0 0.0
    %5785 = vmatprep.subr.mxu0 0.0
    %5786 = vmatpush1.msra.mxu0 0.0
    %5787 = vmatprep.subr.mxu0 0.0
    %5788 = vmatpush1.msra.mxu0 0.0
    %5789 = vmatprep.subr.mxu0 0.0
    %5790 = vmatpush1.msra.mxu0 0.0
    %5791 = vmatprep.mubr.f32.mxu0 0.0
    %5792 = vmatmul.mubr.f32.gmra.mrb[0].mxu0 %v5725
    %v5793 = vpop.f32.mrb[0].mxu0
    %v5794 = vadd.f32 0.0, %v5793
    %v5795 = vpop.f32.mrb[0].mxu0
    %5796 = vdwg.mxu0
    %v5797 = vld [vmem:[%s69] sm:$0xff]
    %v5798 = vld [vmem:[%s71] sm:$0x1]
    %v5800 = vlaneseq
    %v5801 = vshrl.u32 %v5800, 7
    %v5802 = vsub.s32 0, %v5801
    %v5803 = vrot.slane %v5798, %v5802
    %v5806 = vsel %vm348, %v5625, 0
    %v5809 = vsel %vm348, %v5794, 0
    %5811 = vmatprep.subr.mxu0 0.0
    %5812 = vmatpush1.msra.mxu0 %v5797
    %5813 = vmatprep.subr.mxu0 0.0
    %5814 = vmatpush1.msra.mxu0 0.0
    %5815 = vmatprep.subr.mxu0 0.0
    %5816 = vmatpush1.msra.mxu0 0.0
    %5817 = vmatprep.subr.mxu0 0.0
    %5818 = vmatpush1.msra.mxu0 0.0
    %5819 = vmatprep.subr.mxu0 0.0
    %5820 = vmatpush1.msra.mxu0 0.0
    %5821 = vmatprep.subr.mxu0 0.0
    %5822 = vmatpush1.msra.mxu0 0.0
    %5823 = vmatprep.subr.mxu0 0.0
    %5824 = vmatpush1.msra.mxu0 0.0
    %5825 = vmatprep.subr.mxu0 0.0
    %5826 = vmatpush1.msra.mxu0 0.0
    %5827 = vmatprep.subr.mxu0 0.0
    %5828 = vmatpush1.msra.mxu0 0.0
    %5829 = vmatprep.subr.mxu0 0.0
    %5830 = vmatpush1.msra.mxu0 0.0
    %5831 = vmatprep.subr.mxu0 0.0
    %5832 = vmatpush1.msra.mxu0 0.0
    %5833 = vmatprep.subr.mxu0 0.0
    %5834 = vmatpush1.msra.mxu0 0.0
    %5835 = vmatprep.subr.mxu0 0.0
    %5836 = vmatpush1.msra.mxu0 0.0
    %5837 = vmatprep.subr.mxu0 0.0
    %5838 = vmatpush1.msra.mxu0 0.0
    %5839 = vmatprep.subr.mxu0 0.0
    %5840 = vmatpush1.msra.mxu0 0.0
    %5841 = vmatprep.subr.mxu0 0.0
    %5842 = vmatpush1.msra.mxu0 0.0
    %5843 = vmatprep.subr.mxu0 0.0
    %5844 = vmatpush1.msra.mxu0 0.0
    %5845 = vmatprep.subr.mxu0 0.0
    %5846 = vmatpush1.msra.mxu0 0.0
    %5847 = vmatprep.subr.mxu0 0.0
    %5848 = vmatpush1.msra.mxu0 0.0
    %5849 = vmatprep.subr.mxu0 0.0
    %5850 = vmatpush1.msra.mxu0 0.0
    %5851 = vmatprep.subr.mxu0 0.0
    %5852 = vmatpush1.msra.mxu0 0.0
    %5853 = vmatprep.subr.mxu0 0.0
    %5854 = vmatpush1.msra.mxu0 0.0
    %5855 = vmatprep.subr.mxu0 0.0
    %5856 = vmatpush1.msra.mxu0 0.0
    %5857 = vmatprep.subr.mxu0 0.0
    %5858 = vmatpush1.msra.mxu0 0.0
    %5859 = vmatprep.subr.mxu0 0.0
    %5860 = vmatpush1.msra.mxu0 0.0
    %5861 = vmatprep.subr.mxu0 0.0
    %5862 = vmatpush1.msra.mxu0 0.0
    %5863 = vmatprep.subr.mxu0 0.0
    %5864 = vmatpush1.msra.mxu0 0.0
    %5865 = vmatprep.subr.mxu0 0.0
    %5866 = vmatpush1.msra.mxu0 0.0
    %5867 = vmatprep.subr.mxu0 0.0
    %5868 = vmatpush1.msra.mxu0 0.0
    %5869 = vmatprep.subr.mxu0 0.0
    %5870 = vmatpush1.msra.mxu0 0.0
    %5871 = vmatprep.subr.mxu0 0.0
    %5872 = vmatpush1.msra.mxu0 0.0
    %5873 = vmatprep.subr.mxu0 0.0
    %5874 = vmatpush1.msra.mxu0 0.0
    %5875 = vmatprep.mubr.f32.mxu0 0.0
    %5876 = vmatmul.mubr.f32.gmra.mrb[0].mxu0 %v5806
    %v5877 = vpop.f32.mrb[0].mxu0
    %v5878 = vadd.f32 %v5803, %v5877
    %v5879 = vpop.f32.mrb[0].mxu0
    %5880 = vmatprep.mubr.f32.mxu0 0.0
    %5881 = vmatmul.mubr.f32.gmra.mrb[0].mxu0 %v5809
    %v5882 = vpop.f32.mrb[0].mxu0
    %v5883 = vadd.f32 %v5803, %v5882
    %v5884 = vpop.f32.mrb[0].mxu0
    %5885 = vdwg.mxu0
    %5888 = vrot.lane.b32.xlu0 %v5878, 16
    %v5889 = vpop.permute.xlu0 %5888
    %5890 = vrot.lane.b32.xlu0 %v5883, 16
    %v5891 = vpop.permute.xlu0 %5890
    %v5894 = vadd.f32 %v192, %v5889
    %v5895 = vadd.f32 %v193, %v5891
    %s5896 = sld [smem:[#allocation2 + $0xa]]
    %v5897 = vstv %s5896
    %v5898 = vmul.f32 %v5894, %v5897
    %v5899 = vmul.f32 %v5895, %v5897
    %v5900 = vadd.f32 %v4226, %v5898
    %v5901 = vadd.f32 %v4227, %v5899
    %s5902 = sld [smem:[#allocation2 + $0x12]]
    %v5903 = vstv %s5902
    %v5904 = vmul.f32 %v5894, %v5903
    %v5905 = vmul.f32 %v5895, %v5903
    %v5906 = vadd.f32 %v5296, %v5904
    %v5907 = vadd.f32 %v5297, %v5905
    %5908 = vrot.lane.b32.xlu0 %v5457, 120
    %v5909 = vpop.permute.xlu0 %5908
    %5910 = vrot.lane.b32.xlu0 %v5457, 104
    %v5911 = vpop.permute.xlu0 %5910
    %v5912 = vsel %vm348, %v5909, 0
    %v5914 = vsel %vm348, %v5911, 0
    %5916 = vmatprep.subr.mxu0 0.0
    %5917 = vmatpush1.xpose.msra.mxu0 %v5914
    %5918 = vmatprep.subr.mxu0 0.0
    %5919 = vmatpush1.xpose.msra.mxu0 0.0
    %5920 = vmatprep.subr.mxu0 0.0
    %5921 = vmatpush1.xpose.msra.mxu0 0.0
    %5922 = vmatprep.subr.mxu0 0.0
    %5923 = vmatpush1.xpose.msra.mxu0 0.0
    %5924 = vmatprep.subr.mxu0 0.0
    %5925 = vmatpush1.xpose.msra.mxu0 0.0
    %5926 = vmatprep.subr.mxu0 0.0
    %5927 = vmatpush1.xpose.msra.mxu0 0.0
    %5928 = vmatprep.subr.mxu0 0.0
    %5929 = vmatpush1.xpose.msra.mxu0 0.0
    %5930 = vmatprep.subr.mxu0 0.0
    %5931 = vmatpush1.xpose.msra.mxu0 0.0
    %5932 = vmatprep.subr.mxu0 0.0
    %5933 = vmatpush1.xpose.msra.mxu0 0.0
    %5934 = vmatprep.subr.mxu0 0.0
    %5935 = vmatpush1.xpose.msra.mxu0 0.0
    %5936 = vmatprep.subr.mxu0 0.0
    %5937 = vmatpush1.xpose.msra.mxu0 0.0
    %5938 = vmatprep.subr.mxu0 0.0
    %5939 = vmatpush1.xpose.msra.mxu0 0.0
    %5940 = vmatprep.subr.mxu0 0.0
    %5941 = vmatpush1.xpose.msra.mxu0 0.0
    %5942 = vmatprep.subr.mxu0 0.0
    %5943 = vmatpush1.xpose.msra.mxu0 0.0
    %5944 = vmatprep.subr.mxu0 0.0
    %5945 = vmatpush1.xpose.msra.mxu0 0.0
    %5946 = vmatprep.subr.mxu0 0.0
    %5947 = vmatpush1.xpose.msra.mxu0 0.0
    %5948 = vmatprep.subr.mxu0 0.0
    %5949 = vmatpush1.xpose.msra.mxu0 0.0
    %5950 = vmatprep.subr.mxu0 0.0
    %5951 = vmatpush1.xpose.msra.mxu0 0.0
    %5952 = vmatprep.subr.mxu0 0.0
    %5953 = vmatpush1.xpose.msra.mxu0 0.0
    %5954 = vmatprep.subr.mxu0 0.0
    %5955 = vmatpush1.xpose.msra.mxu0 0.0
    %5956 = vmatprep.subr.mxu0 0.0
    %5957 = vmatpush1.xpose.msra.mxu0 0.0
    %5958 = vmatprep.subr.mxu0 0.0
    %5959 = vmatpush1.xpose.msra.mxu0 0.0
    %5960 = vmatprep.subr.mxu0 0.0
    %5961 = vmatpush1.xpose.msra.mxu0 0.0
    %5962 = vmatprep.subr.mxu0 0.0
    %5963 = vmatpush1.xpose.msra.mxu0 0.0
    %5964 = vmatprep.subr.mxu0 0.0
    %5965 = vmatpush1.xpose.msra.mxu0 0.0
    %5966 = vmatprep.subr.mxu0 0.0
    %5967 = vmatpush1.xpose.msra.mxu0 0.0
    %5968 = vmatprep.subr.mxu0 0.0
    %5969 = vmatpush1.xpose.msra.mxu0 0.0
    %5970 = vmatprep.subr.mxu0 0.0
    %5971 = vmatpush1.xpose.msra.mxu0 0.0
    %5972 = vmatprep.subr.mxu0 0.0
    %5973 = vmatpush1.xpose.msra.mxu0 0.0
    %5974 = vmatprep.subr.mxu0 0.0
    %5975 = vmatpush1.xpose.msra.mxu0 0.0
    %5976 = vmatprep.subr.mxu0 0.0
    %5977 = vmatpush1.xpose.msra.mxu0 0.0
    %5978 = vmatprep.subr.mxu0 0.0
    %5979 = vmatpush1.xpose.msra.mxu0 0.0
    %5980 = vmatprep.mubr.f32.mxu0 0.0
    %5981 = vmatmul.mubr.f32.gmra.mrb[0].mxu0 %v5912
    %v5982 = vpop.f32.mrb[0].mxu0
    %v5983 = vadd.f32 0.0, %v5982
    %v5984 = vpop.f32.mrb[0].mxu0
    %5985 = vdwg.mxu0
    %v5986 = vmul.f32 %v5983, 0.35355338
    %v5987 = vsel %vm5539, -1e+09, %v5986
    %v5988 = vsel %vm348, %v5987, -inf
    %5989 = vmax.xlane.f32.xlu0 %v5988
    %v5990 = vpop.xlane.xlu0 %5989
    %v5991 = vsub.f32 %v5987, %v5990
    %v5992 = vmul.f32 %v5991, 1.442695
    %v5993 = vpow.pop %v5992
    %v5994 = vsel %vm348, %v5993, 0.0
    %5995 = vadd.xlane.f32.xlu0 %v5994
    %v5996 = vpop.xlane.xlu0 %5995
    %v5997 = vrcp.pop %v5996
    %v5998 = vmul.f32 %v5993, %v5997
    %5999 = vrot.lane.b32.xlu0 %v5457, 88
    %v6000 = vpop.permute.xlu0 %5999
    %v6003 = vsel %vm348, %v5998, 0
    %6005 = vmatprep.subr.mxu0 0.0
    %6006 = vmatpush1.msra.mxu0 %v6000
    %6007 = vmatprep.subr.mxu0 0.0
    %6008 = vmatpush1.msra.mxu0 0.0
    %6009 = vmatprep.subr.mxu0 0.0
    %6010 = vmatpush1.msra.mxu0 0.0
    %6011 = vmatprep.subr.mxu0 0.0
    %6012 = vmatpush1.msra.mxu0 0.0
    %6013 = vmatprep.subr.mxu0 0.0
    %6014 = vmatpush1.msra.mxu0 0.0
    %6015 = vmatprep.subr.mxu0 0.0
    %6016 = vmatpush1.msra.mxu0 0.0
    %6017 = vmatprep.subr.mxu0 0.0
    %6018 = vmatpush1.msra.mxu0 0.0
    %6019 = vmatprep.subr.mxu0 0.0
    %6020 = vmatpush1.msra.mxu0 0.0
    %6021 = vmatprep.subr.mxu0 0.0
    %6022 = vmatpush1.msra.mxu0 0.0
    %6023 = vmatprep.subr.mxu0 0.0
    %6024 = vmatpush1.msra.mxu0 0.0
    %6025 = vmatprep.subr.mxu0 0.0
    %6026 = vmatpush1.msra.mxu0 0.0
    %6027 = vmatprep.subr.mxu0 0.0
    %6028 = vmatpush1.msra.mxu0 0.0
    %6029 = vmatprep.subr.mxu0 0.0
    %6030 = vmatpush1.msra.mxu0 0.0
    %6031 = vmatprep.subr.mxu0 0.0
    %6032 = vmatpush1.msra.mxu0 0.0
    %6033 = vmatprep.subr.mxu0 0.0
    %6034 = vmatpush1.msra.mxu0 0.0
    %6035 = vmatprep.subr.mxu0 0.0
    %6036 = vmatpush1.msra.mxu0 0.0
    %6037 = vmatprep.subr.mxu0 0.0
    %6038 = vmatpush1.msra.mxu0 0.0
    %6039 = vmatprep.subr.mxu0 0.0
    %6040 = vmatpush1.msra.mxu0 0.0
    %6041 = vmatprep.subr.mxu0 0.0
    %6042 = vmatpush1.msra.mxu0 0.0
    %6043 = vmatprep.subr.mxu0 0.0
    %6044 = vmatpush1.msra.mxu0 0.0
    %6045 = vmatprep.subr.mxu0 0.0
    %6046 = vmatpush1.msra.mxu0 0.0
    %6047 = vmatprep.subr.mxu0 0.0
    %6048 = vmatpush1.msra.mxu0 0.0
    %6049 = vmatprep.subr.mxu0 0.0
    %6050 = vmatpush1.msra.mxu0 0.0
    %6051 = vmatprep.subr.mxu0 0.0
    %6052 = vmatpush1.msra.mxu0 0.0
    %6053 = vmatprep.subr.mxu0 0.0
    %6054 = vmatpush1.msra.mxu0 0.0
    %6055 = vmatprep.subr.mxu0 0.0
    %6056 = vmatpush1.msra.mxu0 0.0
    %6057 = vmatprep.subr.mxu0 0.0
    %6058 = vmatpush1.msra.mxu0 0.0
    %6059 = vmatprep.subr.mxu0 0.0
    %6060 = vmatpush1.msra.mxu0 0.0
    %6061 = vmatprep.subr.mxu0 0.0
    %6062 = vmatpush1.msra.mxu0 0.0
    %6063 = vmatprep.subr.mxu0 0.0
    %6064 = vmatpush1.msra.mxu0 0.0
    %6065 = vmatprep.subr.mxu0 0.0
    %6066 = vmatpush1.msra.mxu0 0.0
    %6067 = vmatprep.subr.mxu0 0.0
    %6068 = vmatpush1.msra.mxu0 0.0
    %6069 = vmatprep.mubr.f32.mxu0 0.0
    %6070 = vmatmul.mubr.f32.gmra.mrb[0].mxu0 %v6003
    %v6071 = vpop.f32.mrb[0].mxu0
    %v6072 = vadd.f32 0.0, %v6071
    %v6073 = vpop.f32.mrb[0].mxu0
    %6074 = vdwg.mxu0
    %6075 = vrot.lane.b32.xlu0 %v5458, 120
    %v6076 = vpop.permute.xlu0 %6075
    %6077 = vrot.lane.b32.xlu0 %v5458, 104
    %v6078 = vpop.permute.xlu0 %6077
    %v6079 = vsel %vm348, %v6076, 0
    %v6081 = vsel %vm348, %v6078, 0
    %6083 = vmatprep.subr.mxu0 0.0
    %6084 = vmatpush1.xpose.msra.mxu0 %v6081
    %6085 = vmatprep.subr.mxu0 0.0
    %6086 = vmatpush1.xpose.msra.mxu0 0.0
    %6087 = vmatprep.subr.mxu0 0.0
    %6088 = vmatpush1.xpose.msra.mxu0 0.0
    %6089 = vmatprep.subr.mxu0 0.0
    %6090 = vmatpush1.xpose.msra.mxu0 0.0
    %6091 = vmatprep.subr.mxu0 0.0
    %6092 = vmatpush1.xpose.msra.mxu0 0.0
    %6093 = vmatprep.subr.mxu0 0.0
    %6094 = vmatpush1.xpose.msra.mxu0 0.0
    %6095 = vmatprep.subr.mxu0 0.0
    %6096 = vmatpush1.xpose.msra.mxu0 0.0
    %6097 = vmatprep.subr.mxu0 0.0
    %6098 = vmatpush1.xpose.msra.mxu0 0.0
    %6099 = vmatprep.subr.mxu0 0.0
    %6100 = vmatpush1.xpose.msra.mxu0 0.0
    %6101 = vmatprep.subr.mxu0 0.0
    %6102 = vmatpush1.xpose.msra.mxu0 0.0
    %6103 = vmatprep.subr.mxu0 0.0
    %6104 = vmatpush1.xpose.msra.mxu0 0.0
    %6105 = vmatprep.subr.mxu0 0.0
    %6106 = vmatpush1.xpose.msra.mxu0 0.0
    %6107 = vmatprep.subr.mxu0 0.0
    %6108 = vmatpush1.xpose.msra.mxu0 0.0
    %6109 = vmatprep.subr.mxu0 0.0
    %6110 = vmatpush1.xpose.msra.mxu0 0.0
    %6111 = vmatprep.subr.mxu0 0.0
    %6112 = vmatpush1.xpose.msra.mxu0 0.0
    %6113 = vmatprep.subr.mxu0 0.0
    %6114 = vmatpush1.xpose.msra.mxu0 0.0
    %6115 = vmatprep.subr.mxu0 0.0
    %6116 = vmatpush1.xpose.msra.mxu0 0.0
    %6117 = vmatprep.subr.mxu0 0.0
    %6118 = vmatpush1.xpose.msra.mxu0 0.0
    %6119 = vmatprep.subr.mxu0 0.0
    %6120 = vmatpush1.xpose.msra.mxu0 0.0
    %6121 = vmatprep.subr.mxu0 0.0
    %6122 = vmatpush1.xpose.msra.mxu0 0.0
    %6123 = vmatprep.subr.mxu0 0.0
    %6124 = vmatpush1.xpose.msra.mxu0 0.0
    %6125 = vmatprep.subr.mxu0 0.0
    %6126 = vmatpush1.xpose.msra.mxu0 0.0
    %6127 = vmatprep.subr.mxu0 0.0
    %6128 = vmatpush1.xpose.msra.mxu0 0.0
    %6129 = vmatprep.subr.mxu0 0.0
    %6130 = vmatpush1.xpose.msra.mxu0 0.0
    %6131 = vmatprep.subr.mxu0 0.0
    %6132 = vmatpush1.xpose.msra.mxu0 0.0
    %6133 = vmatprep.subr.mxu0 0.0
    %6134 = vmatpush1.xpose.msra.mxu0 0.0
    %6135 = vmatprep.subr.mxu0 0.0
    %6136 = vmatpush1.xpose.msra.mxu0 0.0
    %6137 = vmatprep.subr.mxu0 0.0
    %6138 = vmatpush1.xpose.msra.mxu0 0.0
    %6139 = vmatprep.subr.mxu0 0.0
    %6140 = vmatpush1.xpose.msra.mxu0 0.0
    %6141 = vmatprep.subr.mxu0 0.0
    %6142 = vmatpush1.xpose.msra.mxu0 0.0
    %6143 = vmatprep.subr.mxu0 0.0
    %6144 = vmatpush1.xpose.msra.mxu0 0.0
    %6145 = vmatprep.subr.mxu0 0.0
    %6146 = vmatpush1.xpose.msra.mxu0 0.0
    %6147 = vmatprep.mubr.f32.mxu0 0.0
    %6148 = vmatmul.mubr.f32.gmra.mrb[0].mxu0 %v6079
    %v6149 = vpop.f32.mrb[0].mxu0
    %v6150 = vadd.f32 0.0, %v6149
    %v6151 = vpop.f32.mrb[0].mxu0
    %6152 = vdwg.mxu0
    %v6153 = vmul.f32 %v6150, 0.35355338
    %v6154 = vsel %vm5708, -1e+09, %v6153
    %v6155 = vsel %vm348, %v6154, -inf
    %6156 = vmax.xlane.f32.xlu0 %v6155
    %v6157 = vpop.xlane.xlu0 %6156
    %v6158 = vsub.f32 %v6154, %v6157
    %v6159 = vmul.f32 %v6158, 1.442695
    %v6160 = vpow.pop %v6159
    %v6161 = vsel %vm348, %v6160, 0.0
    %6162 = vadd.xlane.f32.xlu0 %v6161
    %v6163 = vpop.xlane.xlu0 %6162
    %v6164 = vrcp.pop %v6163
    %v6165 = vmul.f32 %v6160, %v6164
    %6166 = vrot.lane.b32.xlu0 %v5458, 88
    %v6167 = vpop.permute.xlu0 %6166
    %v6170 = vsel %vm348, %v6165, 0
    %6172 = vmatprep.subr.mxu0 0.0
    %6173 = vmatpush1.msra.mxu0 %v6167
    %6174 = vmatprep.subr.mxu0 0.0
    %6175 = vmatpush1.msra.mxu0 0.0
    %6176 = vmatprep.subr.mxu0 0.0
    %6177 = vmatpush1.msra.mxu0 0.0
    %6178 = vmatprep.subr.mxu0 0.0
    %6179 = vmatpush1.msra.mxu0 0.0
    %6180 = vmatprep.subr.mxu0 0.0
    %6181 = vmatpush1.msra.mxu0 0.0
    %6182 = vmatprep.subr.mxu0 0.0
    %6183 = vmatpush1.msra.mxu0 0.0
    %6184 = vmatprep.subr.mxu0 0.0
    %6185 = vmatpush1.msra.mxu0 0.0
    %6186 = vmatprep.subr.mxu0 0.0
    %6187 = vmatpush1.msra.mxu0 0.0
    %6188 = vmatprep.subr.mxu0 0.0
    %6189 = vmatpush1.msra.mxu0 0.0
    %6190 = vmatprep.subr.mxu0 0.0
    %6191 = vmatpush1.msra.mxu0 0.0
    %6192 = vmatprep.subr.mxu0 0.0
    %6193 = vmatpush1.msra.mxu0 0.0
    %6194 = vmatprep.subr.mxu0 0.0
    %6195 = vmatpush1.msra.mxu0 0.0
    %6196 = vmatprep.subr.mxu0 0.0
    %6197 = vmatpush1.msra.mxu0 0.0
    %6198 = vmatprep.subr.mxu0 0.0
    %6199 = vmatpush1.msra.mxu0 0.0
    %6200 = vmatprep.subr.mxu0 0.0
    %6201 = vmatpush1.msra.mxu0 0.0
    %6202 = vmatprep.subr.mxu0 0.0
    %6203 = vmatpush1.msra.mxu0 0.0
    %6204 = vmatprep.subr.mxu0 0.0
    %6205 = vmatpush1.msra.mxu0 0.0
    %6206 = vmatprep.subr.mxu0 0.0
    %6207 = vmatpush1.msra.mxu0 0.0
    %6208 = vmatprep.subr.mxu0 0.0
    %6209 = vmatpush1.msra.mxu0 0.0
    %6210 = vmatprep.subr.mxu0 0.0
    %6211 = vmatpush1.msra.mxu0 0.0
    %6212 = vmatprep.subr.mxu0 0.0
    %6213 = vmatpush1.msra.mxu0 0.0
    %6214 = vmatprep.subr.mxu0 0.0
    %6215 = vmatpush1.msra.mxu0 0.0
    %6216 = vmatprep.subr.mxu0 0.0
    %6217 = vmatpush1.msra.mxu0 0.0
    %6218 = vmatprep.subr.mxu0 0.0
    %6219 = vmatpush1.msra.mxu0 0.0
    %6220 = vmatprep.subr.mxu0 0.0
    %6221 = vmatpush1.msra.mxu0 0.0
    %6222 = vmatprep.subr.mxu0 0.0
    %6223 = vmatpush1.msra.mxu0 0.0
    %6224 = vmatprep.subr.mxu0 0.0
    %6225 = vmatpush1.msra.mxu0 0.0
    %6226 = vmatprep.subr.mxu0 0.0
    %6227 = vmatpush1.msra.mxu0 0.0
    %6228 = vmatprep.subr.mxu0 0.0
    %6229 = vmatpush1.msra.mxu0 0.0
    %6230 = vmatprep.subr.mxu0 0.0
    %6231 = vmatpush1.msra.mxu0 0.0
    %6232 = vmatprep.subr.mxu0 0.0
    %6233 = vmatpush1.msra.mxu0 0.0
    %6234 = vmatprep.subr.mxu0 0.0
    %6235 = vmatpush1.msra.mxu0 0.0
    %6236 = vmatprep.mubr.f32.mxu0 0.0
    %6237 = vmatmul.mubr.f32.gmra.mrb[0].mxu0 %v6170
    %v6238 = vpop.f32.mrb[0].mxu0
    %v6239 = vadd.f32 0.0, %v6238
    %v6240 = vpop.f32.mrb[0].mxu0
    %6241 = vdwg.mxu0
    %s6242 = scalar_lea.vmem %s69, 8
    %v6243 = vld [vmem:[%s6242] sm:$0xff]
    %s6244 = scalar_lea.vmem %s71, 1
    %v6245 = vld [vmem:[%s6244] sm:$0x1]
    %v6247 = vlaneseq
    %v6248 = vshrl.u32 %v6247, 7
    %v6249 = vsub.s32 0, %v6248
    %v6250 = vrot.slane %v6245, %v6249
    %v6253 = vsel %vm348, %v6072, 0
    %v6256 = vsel %vm348, %v6239, 0
    %6258 = vmatprep.subr.mxu0 0.0
    %6259 = vmatpush1.msra.mxu0 %v6243
    %6260 = vmatprep.subr.mxu0 0.0
    %6261 = vmatpush1.msra.mxu0 0.0
    %6262 = vmatprep.subr.mxu0 0.0
    %6263 = vmatpush1.msra.mxu0 0.0
    %6264 = vmatprep.subr.mxu0 0.0
    %6265 = vmatpush1.msra.mxu0 0.0
    %6266 = vmatprep.subr.mxu0 0.0
    %6267 = vmatpush1.msra.mxu0 0.0
    %6268 = vmatprep.subr.mxu0 0.0
    %6269 = vmatpush1.msra.mxu0 0.0
    %6270 = vmatprep.subr.mxu0 0.0
    %6271 = vmatpush1.msra.mxu0 0.0
    %6272 = vmatprep.subr.mxu0 0.0
    %6273 = vmatpush1.msra.mxu0 0.0
    %6274 = vmatprep.subr.mxu0 0.0
    %6275 = vmatpush1.msra.mxu0 0.0
    %6276 = vmatprep.subr.mxu0 0.0
    %6277 = vmatpush1.msra.mxu0 0.0
    %6278 = vmatprep.subr.mxu0 0.0
    %6279 = vmatpush1.msra.mxu0 0.0
    %6280 = vmatprep.subr.mxu0 0.0
    %6281 = vmatpush1.msra.mxu0 0.0
    %6282 = vmatprep.subr.mxu0 0.0
    %6283 = vmatpush1.msra.mxu0 0.0
    %6284 = vmatprep.subr.mxu0 0.0
    %6285 = vmatpush1.msra.mxu0 0.0
    %6286 = vmatprep.subr.mxu0 0.0
    %6287 = vmatpush1.msra.mxu0 0.0
    %6288 = vmatprep.subr.mxu0 0.0
    %6289 = vmatpush1.msra.mxu0 0.0
    %6290 = vmatprep.subr.mxu0 0.0
    %6291 = vmatpush1.msra.mxu0 0.0
    %6292 = vmatprep.subr.mxu0 0.0
    %6293 = vmatpush1.msra.mxu0 0.0
    %6294 = vmatprep.subr.mxu0 0.0
    %6295 = vmatpush1.msra.mxu0 0.0
    %6296 = vmatprep.subr.mxu0 0.0
    %6297 = vmatpush1.msra.mxu0 0.0
    %6298 = vmatprep.subr.mxu0 0.0
    %6299 = vmatpush1.msra.mxu0 0.0
    %6300 = vmatprep.subr.mxu0 0.0
    %6301 = vmatpush1.msra.mxu0 0.0
    %6302 = vmatprep.subr.mxu0 0.0
    %6303 = vmatpush1.msra.mxu0 0.0
    %6304 = vmatprep.subr.mxu0 0.0
    %6305 = vmatpush1.msra.mxu0 0.0
    %6306 = vmatprep.subr.mxu0 0.0
    %6307 = vmatpush1.msra.mxu0 0.0
    %6308 = vmatprep.subr.mxu0 0.0
    %6309 = vmatpush1.msra.mxu0 0.0
    %6310 = vmatprep.subr.mxu0 0.0
    %6311 = vmatpush1.msra.mxu0 0.0
    %6312 = vmatprep.subr.mxu0 0.0
    %6313 = vmatpush1.msra.mxu0 0.0
    %6314 = vmatprep.subr.mxu0 0.0
    %6315 = vmatpush1.msra.mxu0 0.0
    %6316 = vmatprep.subr.mxu0 0.0
    %6317 = vmatpush1.msra.mxu0 0.0
    %6318 = vmatprep.subr.mxu0 0.0
    %6319 = vmatpush1.msra.mxu0 0.0
    %6320 = vmatprep.subr.mxu0 0.0
    %6321 = vmatpush1.msra.mxu0 0.0
    %6322 = vmatprep.mubr.f32.mxu0 0.0
    %6323 = vmatmul.mubr.f32.gmra.mrb[0].mxu0 %v6253
    %v6324 = vpop.f32.mrb[0].mxu0
    %v6325 = vadd.f32 %v6250, %v6324
    %v6326 = vpop.f32.mrb[0].mxu0
    %6327 = vmatprep.mubr.f32.mxu0 0.0
    %6328 = vmatmul.mubr.f32.gmra.mrb[0].mxu0 %v6256
    %v6329 = vpop.f32.mrb[0].mxu0
    %v6330 = vadd.f32 %v6250, %v6329
    %v6331 = vpop.f32.mrb[0].mxu0
    %6332 = vdwg.mxu0
    %6335 = vrot.lane.b32.xlu0 %v6325, 16
    %v6336 = vpop.permute.xlu0 %6335
    %6337 = vrot.lane.b32.xlu0 %v6330, 16
    %v6338 = vpop.permute.xlu0 %6337
    %v6341 = vadd.f32 %v5894, %v6336
    %v6342 = vadd.f32 %v5895, %v6338
    %s6343 = sld [smem:[#allocation2 + $0xe]]
    %v6344 = vstv %s6343
    %v6345 = vmul.f32 %v6341, %v6344
    %v6346 = vmul.f32 %v6342, %v6344
    %v6347 = vadd.f32 %v5900, %v6345
    %v6348 = vadd.f32 %v5901, %v6346
    %s6349 = sld [smem:[#allocation2 + $0x16]]
    %v6350 = vstv %s6349
    %v6351 = vmul.f32 %v6341, %v6350
    %v6352 = vmul.f32 %v6342, %v6350
    %v6353 = vadd.f32 %v5906, %v6351
    %v6354 = vadd.f32 %v5907, %v6352
    %v6355 = vld [vmem:[%s73] sm:$0xff]
    %v6356 = vld [vmem:[%s73 + $0x8] sm:$0xff]
    %v6357 = vld [vmem:[%s73 + $0x10] sm:$0xff]
    %v6358 = vld [vmem:[%s73 + $0x18] sm:$0xff]
    %v6359 = vld [vmem:[%s75] sm:$0x1]
    %6360 = vmatprep.subr.mxu0 0.0
    %6361 = vmatpush1.msra.mxu0 %v6357
    %6362 = vmatprep.subr.mxu0 0.0
    %6363 = vmatpush1.msra.mxu0 0.0
    %6364 = vmatprep.subr.mxu0 0.0
    %6365 = vmatpush1.msra.mxu0 0.0
    %6366 = vmatprep.subr.mxu0 0.0
    %6367 = vmatpush1.msra.mxu0 0.0
    %6368 = vmatprep.subr.mxu0 0.0
    %6369 = vmatpush1.msra.mxu0 0.0
    %6370 = vmatprep.subr.mxu0 0.0
    %6371 = vmatpush1.msra.mxu0 0.0
    %6372 = vmatprep.subr.mxu0 0.0
    %6373 = vmatpush1.msra.mxu0 0.0
    %6374 = vmatprep.subr.mxu0 0.0
    %6375 = vmatpush1.msra.mxu0 0.0
    %6376 = vmatprep.subr.mxu0 0.0
    %6377 = vmatpush1.msra.mxu0 0.0
    %6378 = vmatprep.subr.mxu0 0.0
    %6379 = vmatpush1.msra.mxu0 0.0
    %6380 = vmatprep.subr.mxu0 0.0
    %6381 = vmatpush1.msra.mxu0 0.0
    %6382 = vmatprep.subr.mxu0 0.0
    %6383 = vmatpush1.msra.mxu0 0.0
    %6384 = vmatprep.subr.mxu0 0.0
    %6385 = vmatpush1.msra.mxu0 0.0
    %6386 = vmatprep.subr.mxu0 0.0
    %6387 = vmatpush1.msra.mxu0 0.0
    %6388 = vmatprep.subr.mxu0 0.0
    %6389 = vmatpush1.msra.mxu0 0.0
    %6390 = vmatprep.subr.mxu0 0.0
    %6391 = vmatpush1.msra.mxu0 0.0
    %6392 = vmatprep.subr.mxu0 0.0
    %6393 = vmatpush1.msra.mxu0 0.0
    %6394 = vmatprep.subr.mxu0 0.0
    %6395 = vmatpush1.msra.mxu0 0.0
    %6396 = vmatprep.subr.mxu0 0.0
    %6397 = vmatpush1.msra.mxu0 0.0
    %6398 = vmatprep.subr.mxu0 0.0
    %6399 = vmatpush1.msra.mxu0 0.0
    %6400 = vmatprep.subr.mxu0 0.0
    %6401 = vmatpush1.msra.mxu0 0.0
    %6402 = vmatprep.subr.mxu0 0.0
    %6403 = vmatpush1.msra.mxu0 0.0
    %6404 = vmatprep.subr.mxu0 0.0
    %6405 = vmatpush1.msra.mxu0 0.0
    %6406 = vmatprep.subr.mxu0 0.0
    %6407 = vmatpush1.msra.mxu0 0.0
    %6408 = vmatprep.subr.mxu0 0.0
    %6409 = vmatpush1.msra.mxu0 0.0
    %6410 = vmatprep.subr.mxu0 0.0
    %6411 = vmatpush1.msra.mxu0 0.0
    %6412 = vmatprep.subr.mxu0 0.0
    %6413 = vmatpush1.msra.mxu0 0.0
    %6414 = vmatprep.subr.mxu0 0.0
    %6415 = vmatpush1.msra.mxu0 0.0
    %6416 = vmatprep.subr.mxu0 0.0
    %6417 = vmatpush1.msra.mxu0 0.0
    %6418 = vmatprep.subr.mxu0 0.0
    %6419 = vmatpush1.msra.mxu0 0.0
    %6420 = vmatprep.subr.mxu0 0.0
    %6421 = vmatpush1.msra.mxu0 0.0
    %6422 = vmatprep.subr.mxu0 0.0
    %6423 = vmatpush1.msra.mxu0 0.0
    %6424 = vmatprep.mubr.f32.mxu0 0.0
    %6425 = vmatmul.mubr.f32.gmra.mrb[0].mxu0 %v1225
    %v6426 = vpop.f32.mrb[0].mxu0
    %v6427 = vadd.f32 0.0, %v6426
    %v6428 = vpop.f32.mrb[0].mxu0
    %6429 = vmatprep.mubr.f32.mxu0 0.0
    %6430 = vmatmul.mubr.f32.gmra.mrb[0].mxu0 %v1227
    %v6431 = vpop.f32.mrb[0].mxu0
    %v6432 = vadd.f32 0.0, %v6431
    %v6433 = vpop.f32.mrb[0].mxu0
    %6434 = vdwg.mxu0
    %6435 = vmatprep.subr.mxu0 0.0
    %6436 = vmatpush1.msra.mxu0 %v6355
    %6437 = vmatprep.subr.mxu0 0.0
    %6438 = vmatpush1.msra.mxu0 %v6356
    %6439 = vmatprep.subr.mxu0 0.0
    %6440 = vmatpush1.msra.mxu0 0.0
    %6441 = vmatprep.subr.mxu0 0.0
    %6442 = vmatpush1.msra.mxu0 0.0
    %6443 = vmatprep.subr.mxu0 0.0
    %6444 = vmatpush1.msra.mxu0 0.0
    %6445 = vmatprep.subr.mxu0 0.0
    %6446 = vmatpush1.msra.mxu0 0.0
    %6447 = vmatprep.subr.mxu0 0.0
    %6448 = vmatpush1.msra.mxu0 0.0
    %6449 = vmatprep.subr.mxu0 0.0
    %6450 = vmatpush1.msra.mxu0 0.0
    %6451 = vmatprep.subr.mxu0 0.0
    %6452 = vmatpush1.msra.mxu0 0.0
    %6453 = vmatprep.subr.mxu0 0.0
    %6454 = vmatpush1.msra.mxu0 0.0
    %6455 = vmatprep.subr.mxu0 0.0
    %6456 = vmatpush1.msra.mxu0 0.0
    %6457 = vmatprep.subr.mxu0 0.0
    %6458 = vmatpush1.msra.mxu0 0.0
    %6459 = vmatprep.subr.mxu0 0.0
    %6460 = vmatpush1.msra.mxu0 0.0
    %6461 = vmatprep.subr.mxu0 0.0
    %6462 = vmatpush1.msra.mxu0 0.0
    %6463 = vmatprep.subr.mxu0 0.0
    %6464 = vmatpush1.msra.mxu0 0.0
    %6465 = vmatprep.subr.mxu0 0.0
    %6466 = vmatpush1.msra.mxu0 0.0
    %6467 = vmatprep.subr.mxu0 0.0
    %6468 = vmatpush1.msra.mxu0 0.0
    %6469 = vmatprep.subr.mxu0 0.0
    %6470 = vmatpush1.msra.mxu0 0.0
    %6471 = vmatprep.subr.mxu0 0.0
    %6472 = vmatpush1.msra.mxu0 0.0
    %6473 = vmatprep.subr.mxu0 0.0
    %6474 = vmatpush1.msra.mxu0 0.0
    %6475 = vmatprep.subr.mxu0 0.0
    %6476 = vmatpush1.msra.mxu0 0.0
    %6477 = vmatprep.subr.mxu0 0.0
    %6478 = vmatpush1.msra.mxu0 0.0
    %6479 = vmatprep.subr.mxu0 0.0
    %6480 = vmatpush1.msra.mxu0 0.0
    %6481 = vmatprep.subr.mxu0 0.0
    %6482 = vmatpush1.msra.mxu0 0.0
    %6483 = vmatprep.subr.mxu0 0.0
    %6484 = vmatpush1.msra.mxu0 0.0
    %6485 = vmatprep.subr.mxu0 0.0
    %6486 = vmatpush1.msra.mxu0 0.0
    %6487 = vmatprep.subr.mxu0 0.0
    %6488 = vmatpush1.msra.mxu0 0.0
    %6489 = vmatprep.subr.mxu0 0.0
    %6490 = vmatpush1.msra.mxu0 0.0
    %6491 = vmatprep.subr.mxu0 0.0
    %6492 = vmatpush1.msra.mxu0 0.0
    %6493 = vmatprep.subr.mxu0 0.0
    %6494 = vmatpush1.msra.mxu0 0.0
    %6495 = vmatprep.subr.mxu0 0.0
    %6496 = vmatpush1.msra.mxu0 0.0
    %6497 = vmatprep.subr.mxu0 0.0
    %6498 = vmatpush1.msra.mxu0 0.0
    %6499 = vmatprep.mubr.f32.mxu0 0.0
    %6500 = vmatmul.mubr.f32.gmra.mrb[0].mxu0 %v265
    %v6501 = vpop.f32.mrb[0].mxu0
    %v6502 = vadd.f32 %v6427, %v6501
    %v6503 = vpop.f32.mrb[0].mxu0
    %6504 = vmatprep.mubr.f32.mxu0 0.0
    %6505 = vmatmul.mubr.f32.gmra.mrb[0].mxu0 %v268
    %v6506 = vpop.f32.mrb[0].mxu0
    %v6507 = vadd.f32 %v6432, %v6506
    %v6508 = vpop.f32.mrb[0].mxu0
    %6509 = vdwg.mxu0
    %6510 = vmatprep.subr.mxu0 0.0
    %6511 = vmatpush1.msra.mxu0 %v6358
    %6512 = vmatprep.subr.mxu0 0.0
    %6513 = vmatpush1.msra.mxu0 0.0
    %6514 = vmatprep.subr.mxu0 0.0
    %6515 = vmatpush1.msra.mxu0 0.0
    %6516 = vmatprep.subr.mxu0 0.0
    %6517 = vmatpush1.msra.mxu0 0.0
    %6518 = vmatprep.subr.mxu0 0.0
    %6519 = vmatpush1.msra.mxu0 0.0
    %6520 = vmatprep.subr.mxu0 0.0
    %6521 = vmatpush1.msra.mxu0 0.0
    %6522 = vmatprep.subr.mxu0 0.0
    %6523 = vmatpush1.msra.mxu0 0.0
    %6524 = vmatprep.subr.mxu0 0.0
    %6525 = vmatpush1.msra.mxu0 0.0
    %6526 = vmatprep.subr.mxu0 0.0
    %6527 = vmatpush1.msra.mxu0 0.0
    %6528 = vmatprep.subr.mxu0 0.0
    %6529 = vmatpush1.msra.mxu0 0.0
    %6530 = vmatprep.subr.mxu0 0.0
    %6531 = vmatpush1.msra.mxu0 0.0
    %6532 = vmatprep.subr.mxu0 0.0
    %6533 = vmatpush1.msra.mxu0 0.0
    %6534 = vmatprep.subr.mxu0 0.0
    %6535 = vmatpush1.msra.mxu0 0.0
    %6536 = vmatprep.subr.mxu0 0.0
    %6537 = vmatpush1.msra.mxu0 0.0
    %6538 = vmatprep.subr.mxu0 0.0
    %6539 = vmatpush1.msra.mxu0 0.0
    %6540 = vmatprep.subr.mxu0 0.0
    %6541 = vmatpush1.msra.mxu0 0.0
    %6542 = vmatprep.subr.mxu0 0.0
    %6543 = vmatpush1.msra.mxu0 0.0
    %6544 = vmatprep.subr.mxu0 0.0
    %6545 = vmatpush1.msra.mxu0 0.0
    %6546 = vmatprep.subr.mxu0 0.0
    %6547 = vmatpush1.msra.mxu0 0.0
    %6548 = vmatprep.subr.mxu0 0.0
    %6549 = vmatpush1.msra.mxu0 0.0
    %6550 = vmatprep.subr.mxu0 0.0
    %6551 = vmatpush1.msra.mxu0 0.0
    %6552 = vmatprep.subr.mxu0 0.0
    %6553 = vmatpush1.msra.mxu0 0.0
    %6554 = vmatprep.subr.mxu0 0.0
    %6555 = vmatpush1.msra.mxu0 0.0
    %6556 = vmatprep.subr.mxu0 0.0
    %6557 = vmatpush1.msra.mxu0 0.0
    %6558 = vmatprep.subr.mxu0 0.0
    %6559 = vmatpush1.msra.mxu0 0.0
    %6560 = vmatprep.subr.mxu0 0.0
    %6561 = vmatpush1.msra.mxu0 0.0
    %6562 = vmatprep.subr.mxu0 0.0
    %6563 = vmatpush1.msra.mxu0 0.0
    %6564 = vmatprep.subr.mxu0 0.0
    %6565 = vmatpush1.msra.mxu0 0.0
    %6566 = vmatprep.subr.mxu0 0.0
    %6567 = vmatpush1.msra.mxu0 0.0
    %6568 = vmatprep.subr.mxu0 0.0
    %6569 = vmatpush1.msra.mxu0 0.0
    %6570 = vmatprep.subr.mxu0 0.0
    %6571 = vmatpush1.msra.mxu0 0.0
    %6572 = vmatprep.subr.mxu0 0.0
    %6573 = vmatpush1.msra.mxu0 0.0
    %6574 = vmatprep.mubr.f32.mxu0 0.0
    %6575 = vmatmul.mubr.f32.gmra.mrb[0].mxu0 %v2208
    %v6576 = vpop.f32.mrb[0].mxu0
    %v6577 = vadd.f32 0.0, %v6576
    %v6578 = vpop.f32.mrb[0].mxu0
    %6579 = vmatprep.mubr.f32.mxu0 0.0
    %6580 = vmatmul.mubr.f32.gmra.mrb[0].mxu0 %v2210
    %v6581 = vpop.f32.mrb[0].mxu0
    %v6582 = vadd.f32 0.0, %v6581
    %v6583 = vpop.f32.mrb[0].mxu0
    %6584 = vdwg.mxu0
    %v6585 = vadd.f32 %v6502, %v6577
    %v6586 = vadd.f32 %v6507, %v6582
    %v6588 = vlaneseq
    %v6589 = vshrl.u32 %v6588, 7
    %v6590 = vsub.s32 0, %v6589
    %v6591 = vrot.slane %v6359, %v6590
    %v6593 = vadd.f32 %v6585, %v6591
    %v6594 = vadd.f32 %v6586, %v6591
    %6596 = vrot.lane.b32.xlu0 %v6593, 96
    %v6597 = vpop.permute.xlu0 %6596
    %v6598 = vsel %vm263, %v6593, 0
    %v6600 = vsel %vm263, %v6597, 0
    %6602 = vmatprep.subr.mxu0 0.0
    %6603 = vmatpush1.xpose.msra.mxu0 %v6600
    %6604 = vmatprep.subr.mxu0 0.0
    %6605 = vmatpush1.xpose.msra.mxu0 0.0
    %6606 = vmatprep.subr.mxu0 0.0
    %6607 = vmatpush1.xpose.msra.mxu0 0.0
    %6608 = vmatprep.subr.mxu0 0.0
    %6609 = vmatpush1.xpose.msra.mxu0 0.0
    %6610 = vmatprep.subr.mxu0 0.0
    %6611 = vmatpush1.xpose.msra.mxu0 0.0
    %6612 = vmatprep.subr.mxu0 0.0
    %6613 = vmatpush1.xpose.msra.mxu0 0.0
    %6614 = vmatprep.subr.mxu0 0.0
    %6615 = vmatpush1.xpose.msra.mxu0 0.0
    %6616 = vmatprep.subr.mxu0 0.0
    %6617 = vmatpush1.xpose.msra.mxu0 0.0
    %6618 = vmatprep.subr.mxu0 0.0
    %6619 = vmatpush1.xpose.msra.mxu0 0.0
    %6620 = vmatprep.subr.mxu0 0.0
    %6621 = vmatpush1.xpose.msra.mxu0 0.0
    %6622 = vmatprep.subr.mxu0 0.0
    %6623 = vmatpush1.xpose.msra.mxu0 0.0
    %6624 = vmatprep.subr.mxu0 0.0
    %6625 = vmatpush1.xpose.msra.mxu0 0.0
    %6626 = vmatprep.subr.mxu0 0.0
    %6627 = vmatpush1.xpose.msra.mxu0 0.0
    %6628 = vmatprep.subr.mxu0 0.0
    %6629 = vmatpush1.xpose.msra.mxu0 0.0
    %6630 = vmatprep.subr.mxu0 0.0
    %6631 = vmatpush1.xpose.msra.mxu0 0.0
    %6632 = vmatprep.subr.mxu0 0.0
    %6633 = vmatpush1.xpose.msra.mxu0 0.0
    %6634 = vmatprep.subr.mxu0 0.0
    %6635 = vmatpush1.xpose.msra.mxu0 0.0
    %6636 = vmatprep.subr.mxu0 0.0
    %6637 = vmatpush1.xpose.msra.mxu0 0.0
    %6638 = vmatprep.subr.mxu0 0.0
    %6639 = vmatpush1.xpose.msra.mxu0 0.0
    %6640 = vmatprep.subr.mxu0 0.0
    %6641 = vmatpush1.xpose.msra.mxu0 0.0
    %6642 = vmatprep.subr.mxu0 0.0
    %6643 = vmatpush1.xpose.msra.mxu0 0.0
    %6644 = vmatprep.subr.mxu0 0.0
    %6645 = vmatpush1.xpose.msra.mxu0 0.0
    %6646 = vmatprep.subr.mxu0 0.0
    %6647 = vmatpush1.xpose.msra.mxu0 0.0
    %6648 = vmatprep.subr.mxu0 0.0
    %6649 = vmatpush1.xpose.msra.mxu0 0.0
    %6650 = vmatprep.subr.mxu0 0.0
    %6651 = vmatpush1.xpose.msra.mxu0 0.0
    %6652 = vmatprep.subr.mxu0 0.0
    %6653 = vmatpush1.xpose.msra.mxu0 0.0
    %6654 = vmatprep.subr.mxu0 0.0
    %6655 = vmatpush1.xpose.msra.mxu0 0.0
    %6656 = vmatprep.subr.mxu0 0.0
    %6657 = vmatpush1.xpose.msra.mxu0 0.0
    %6658 = vmatprep.subr.mxu0 0.0
    %6659 = vmatpush1.xpose.msra.mxu0 0.0
    %6660 = vmatprep.subr.mxu0 0.0
    %6661 = vmatpush1.xpose.msra.mxu0 0.0
    %6662 = vmatprep.subr.mxu0 0.0
    %6663 = vmatpush1.xpose.msra.mxu0 0.0
    %6664 = vmatprep.subr.mxu0 0.0
    %6665 = vmatpush1.xpose.msra.mxu0 0.0
    %6666 = vmatprep.mubr.f32.mxu0 0.0
    %6667 = vmatmul.mubr.f32.gmra.mrb[0].mxu0 %v6598
    %v6668 = vpop.f32.mrb[0].mxu0
    %v6669 = vadd.f32 0.0, %v6668
    %v6670 = vpop.f32.mrb[0].mxu0
    %6671 = vdwg.mxu0
    %v6672 = vmul.f32 %v6669, 0.25
    %s6673 = scalar_lea.vmem %s3, 96
    %v6674 = vld [vmem:[%s6673] sm:$0xff]
    %vm6675 = vcmp.eq.f32.partialorder %v6674, 0.0
    %v6676 = vsel %vm6675, -1e+09, %v6672
    %v6677 = vsel %vm348, %v6676, -inf
    %6678 = vmax.xlane.f32.xlu0 %v6677
    %v6679 = vpop.xlane.xlu0 %6678
    %v6680 = vsub.f32 %v6676, %v6679
    %v6681 = vmul.f32 %v6680, 1.442695
    %v6682 = vpow.pop %v6681
    %v6683 = vsel %vm348, %v6682, 0.0
    %6684 = vadd.xlane.f32.xlu0 %v6683
    %v6685 = vpop.xlane.xlu0 %6684
    %v6686 = vrcp.pop %v6685
    %v6687 = vmul.f32 %v6682, %v6686
    %6688 = vrot.lane.b32.xlu0 %v6593, 64
    %v6689 = vpop.permute.xlu0 %6688
    %v6692 = vsel %vm348, %v6687, 0
    %6694 = vmatprep.subr.mxu0 0.0
    %6695 = vmatpush1.msra.mxu0 %v6689
    %6696 = vmatprep.subr.mxu0 0.0
    %6697 = vmatpush1.msra.mxu0 0.0
    %6698 = vmatprep.subr.mxu0 0.0
    %6699 = vmatpush1.msra.mxu0 0.0
    %6700 = vmatprep.subr.mxu0 0.0
    %6701 = vmatpush1.msra.mxu0 0.0
    %6702 = vmatprep.subr.mxu0 0.0
    %6703 = vmatpush1.msra.mxu0 0.0
    %6704 = vmatprep.subr.mxu0 0.0
    %6705 = vmatpush1.msra.mxu0 0.0
    %6706 = vmatprep.subr.mxu0 0.0
    %6707 = vmatpush1.msra.mxu0 0.0
    %6708 = vmatprep.subr.mxu0 0.0
    %6709 = vmatpush1.msra.mxu0 0.0
    %6710 = vmatprep.subr.mxu0 0.0
    %6711 = vmatpush1.msra.mxu0 0.0
    %6712 = vmatprep.subr.mxu0 0.0
    %6713 = vmatpush1.msra.mxu0 0.0
    %6714 = vmatprep.subr.mxu0 0.0
    %6715 = vmatpush1.msra.mxu0 0.0
    %6716 = vmatprep.subr.mxu0 0.0
    %6717 = vmatpush1.msra.mxu0 0.0
    %6718 = vmatprep.subr.mxu0 0.0
    %6719 = vmatpush1.msra.mxu0 0.0
    %6720 = vmatprep.subr.mxu0 0.0
    %6721 = vmatpush1.msra.mxu0 0.0
    %6722 = vmatprep.subr.mxu0 0.0
    %6723 = vmatpush1.msra.mxu0 0.0
    %6724 = vmatprep.subr.mxu0 0.0
    %6725 = vmatpush1.msra.mxu0 0.0
    %6726 = vmatprep.subr.mxu0 0.0
    %6727 = vmatpush1.msra.mxu0 0.0
    %6728 = vmatprep.subr.mxu0 0.0
    %6729 = vmatpush1.msra.mxu0 0.0
    %6730 = vmatprep.subr.mxu0 0.0
    %6731 = vmatpush1.msra.mxu0 0.0
    %6732 = vmatprep.subr.mxu0 0.0
    %6733 = vmatpush1.msra.mxu0 0.0
    %6734 = vmatprep.subr.mxu0 0.0
    %6735 = vmatpush1.msra.mxu0 0.0
    %6736 = vmatprep.subr.mxu0 0.0
    %6737 = vmatpush1.msra.mxu0 0.0
    %6738 = vmatprep.subr.mxu0 0.0
    %6739 = vmatpush1.msra.mxu0 0.0
    %6740 = vmatprep.subr.mxu0 0.0
    %6741 = vmatpush1.msra.mxu0 0.0
    %6742 = vmatprep.subr.mxu0 0.0
    %6743 = vmatpush1.msra.mxu0 0.0
    %6744 = vmatprep.subr.mxu0 0.0
    %6745 = vmatpush1.msra.mxu0 0.0
    %6746 = vmatprep.subr.mxu0 0.0
    %6747 = vmatpush1.msra.mxu0 0.0
    %6748 = vmatprep.subr.mxu0 0.0
    %6749 = vmatpush1.msra.mxu0 0.0
    %6750 = vmatprep.subr.mxu0 0.0
    %6751 = vmatpush1.msra.mxu0 0.0
    %6752 = vmatprep.subr.mxu0 0.0
    %6753 = vmatpush1.msra.mxu0 0.0
    %6754 = vmatprep.subr.mxu0 0.0
    %6755 = vmatpush1.msra.mxu0 0.0
    %6756 = vmatprep.subr.mxu0 0.0
    %6757 = vmatpush1.msra.mxu0 0.0
    %6758 = vmatprep.mubr.f32.mxu0 0.0
    %6759 = vmatmul.mubr.f32.gmra.mrb[0].mxu0 %v6692
    %v6760 = vpop.f32.mrb[0].mxu0
    %v6761 = vadd.f32 0.0, %v6760
    %v6762 = vpop.f32.mrb[0].mxu0
    %6763 = vdwg.mxu0
    %6765 = vrot.lane.b32.xlu0 %v6594, 96
    %v6766 = vpop.permute.xlu0 %6765
    %v6767 = vsel %vm263, %v6594, 0
    %v6769 = vsel %vm263, %v6766, 0
    %6771 = vmatprep.subr.mxu0 0.0
    %6772 = vmatpush1.xpose.msra.mxu0 %v6769
    %6773 = vmatprep.subr.mxu0 0.0
    %6774 = vmatpush1.xpose.msra.mxu0 0.0
    %6775 = vmatprep.subr.mxu0 0.0
    %6776 = vmatpush1.xpose.msra.mxu0 0.0
    %6777 = vmatprep.subr.mxu0 0.0
    %6778 = vmatpush1.xpose.msra.mxu0 0.0
    %6779 = vmatprep.subr.mxu0 0.0
    %6780 = vmatpush1.xpose.msra.mxu0 0.0
    %6781 = vmatprep.subr.mxu0 0.0
    %6782 = vmatpush1.xpose.msra.mxu0 0.0
    %6783 = vmatprep.subr.mxu0 0.0
    %6784 = vmatpush1.xpose.msra.mxu0 0.0
    %6785 = vmatprep.subr.mxu0 0.0
    %6786 = vmatpush1.xpose.msra.mxu0 0.0
    %6787 = vmatprep.subr.mxu0 0.0
    %6788 = vmatpush1.xpose.msra.mxu0 0.0
    %6789 = vmatprep.subr.mxu0 0.0
    %6790 = vmatpush1.xpose.msra.mxu0 0.0
    %6791 = vmatprep.subr.mxu0 0.0
    %6792 = vmatpush1.xpose.msra.mxu0 0.0
    %6793 = vmatprep.subr.mxu0 0.0
    %6794 = vmatpush1.xpose.msra.mxu0 0.0
    %6795 = vmatprep.subr.mxu0 0.0
    %6796 = vmatpush1.xpose.msra.mxu0 0.0
    %6797 = vmatprep.subr.mxu0 0.0
    %6798 = vmatpush1.xpose.msra.mxu0 0.0
    %6799 = vmatprep.subr.mxu0 0.0
    %6800 = vmatpush1.xpose.msra.mxu0 0.0
    %6801 = vmatprep.subr.mxu0 0.0
    %6802 = vmatpush1.xpose.msra.mxu0 0.0
    %6803 = vmatprep.subr.mxu0 0.0
    %6804 = vmatpush1.xpose.msra.mxu0 0.0
    %6805 = vmatprep.subr.mxu0 0.0
    %6806 = vmatpush1.xpose.msra.mxu0 0.0
    %6807 = vmatprep.subr.mxu0 0.0
    %6808 = vmatpush1.xpose.msra.mxu0 0.0
    %6809 = vmatprep.subr.mxu0 0.0
    %6810 = vmatpush1.xpose.msra.mxu0 0.0
    %6811 = vmatprep.subr.mxu0 0.0
    %6812 = vmatpush1.xpose.msra.mxu0 0.0
    %6813 = vmatprep.subr.mxu0 0.0
    %6814 = vmatpush1.xpose.msra.mxu0 0.0
    %6815 = vmatprep.subr.mxu0 0.0
    %6816 = vmatpush1.xpose.msra.mxu0 0.0
    %6817 = vmatprep.subr.mxu0 0.0
    %6818 = vmatpush1.xpose.msra.mxu0 0.0
    %6819 = vmatprep.subr.mxu0 0.0
    %6820 = vmatpush1.xpose.msra.mxu0 0.0
    %6821 = vmatprep.subr.mxu0 0.0
    %6822 = vmatpush1.xpose.msra.mxu0 0.0
    %6823 = vmatprep.subr.mxu0 0.0
    %6824 = vmatpush1.xpose.msra.mxu0 0.0
    %6825 = vmatprep.subr.mxu0 0.0
    %6826 = vmatpush1.xpose.msra.mxu0 0.0
    %6827 = vmatprep.subr.mxu0 0.0
    %6828 = vmatpush1.xpose.msra.mxu0 0.0
    %6829 = vmatprep.subr.mxu0 0.0
    %6830 = vmatpush1.xpose.msra.mxu0 0.0
    %6831 = vmatprep.subr.mxu0 0.0
    %6832 = vmatpush1.xpose.msra.mxu0 0.0
    %6833 = vmatprep.subr.mxu0 0.0
    %6834 = vmatpush1.xpose.msra.mxu0 0.0
    %6835 = vmatprep.mubr.f32.mxu0 0.0
    %6836 = vmatmul.mubr.f32.gmra.mrb[0].mxu0 %v6767
    %v6837 = vpop.f32.mrb[0].mxu0
    %v6838 = vadd.f32 0.0, %v6837
    %v6839 = vpop.f32.mrb[0].mxu0
    %6840 = vdwg.mxu0
    %v6841 = vmul.f32 %v6838, 0.25
    %s6842 = scalar_lea.vmem %s3, 104
    %v6843 = vld [vmem:[%s6842] sm:$0xff]
    %vm6844 = vcmp.eq.f32.partialorder %v6843, 0.0
    %v6845 = vsel %vm6844, -1e+09, %v6841
    %v6846 = vsel %vm348, %v6845, -inf
    %6847 = vmax.xlane.f32.xlu0 %v6846
    %v6848 = vpop.xlane.xlu0 %6847
    %v6849 = vsub.f32 %v6845, %v6848
    %v6850 = vmul.f32 %v6849, 1.442695
    %v6851 = vpow.pop %v6850
    %v6852 = vsel %vm348, %v6851, 0.0
    %6853 = vadd.xlane.f32.xlu0 %v6852
    %v6854 = vpop.xlane.xlu0 %6853
    %v6855 = vrcp.pop %v6854
    %v6856 = vmul.f32 %v6851, %v6855
    %6857 = vrot.lane.b32.xlu0 %v6594, 64
    %v6858 = vpop.permute.xlu0 %6857
    %v6861 = vsel %vm348, %v6856, 0
    %6863 = vmatprep.subr.mxu0 0.0
    %6864 = vmatpush1.msra.mxu0 %v6858
    %6865 = vmatprep.subr.mxu0 0.0
    %6866 = vmatpush1.msra.mxu0 0.0
    %6867 = vmatprep.subr.mxu0 0.0
    %6868 = vmatpush1.msra.mxu0 0.0
    %6869 = vmatprep.subr.mxu0 0.0
    %6870 = vmatpush1.msra.mxu0 0.0
    %6871 = vmatprep.subr.mxu0 0.0
    %6872 = vmatpush1.msra.mxu0 0.0
    %6873 = vmatprep.subr.mxu0 0.0
    %6874 = vmatpush1.msra.mxu0 0.0
    %6875 = vmatprep.subr.mxu0 0.0
    %6876 = vmatpush1.msra.mxu0 0.0
    %6877 = vmatprep.subr.mxu0 0.0
    %6878 = vmatpush1.msra.mxu0 0.0
    %6879 = vmatprep.subr.mxu0 0.0
    %6880 = vmatpush1.msra.mxu0 0.0
    %6881 = vmatprep.subr.mxu0 0.0
    %6882 = vmatpush1.msra.mxu0 0.0
    %6883 = vmatprep.subr.mxu0 0.0
    %6884 = vmatpush1.msra.mxu0 0.0
    %6885 = vmatprep.subr.mxu0 0.0
    %6886 = vmatpush1.msra.mxu0 0.0
    %6887 = vmatprep.subr.mxu0 0.0
    %6888 = vmatpush1.msra.mxu0 0.0
    %6889 = vmatprep.subr.mxu0 0.0
    %6890 = vmatpush1.msra.mxu0 0.0
    %6891 = vmatprep.subr.mxu0 0.0
    %6892 = vmatpush1.msra.mxu0 0.0
    %6893 = vmatprep.subr.mxu0 0.0
    %6894 = vmatpush1.msra.mxu0 0.0
    %6895 = vmatprep.subr.mxu0 0.0
    %6896 = vmatpush1.msra.mxu0 0.0
    %6897 = vmatprep.subr.mxu0 0.0
    %6898 = vmatpush1.msra.mxu0 0.0
    %6899 = vmatprep.subr.mxu0 0.0
    %6900 = vmatpush1.msra.mxu0 0.0
    %6901 = vmatprep.subr.mxu0 0.0
    %6902 = vmatpush1.msra.mxu0 0.0
    %6903 = vmatprep.subr.mxu0 0.0
    %6904 = vmatpush1.msra.mxu0 0.0
    %6905 = vmatprep.subr.mxu0 0.0
    %6906 = vmatpush1.msra.mxu0 0.0
    %6907 = vmatprep.subr.mxu0 0.0
    %6908 = vmatpush1.msra.mxu0 0.0
    %6909 = vmatprep.subr.mxu0 0.0
    %6910 = vmatpush1.msra.mxu0 0.0
    %6911 = vmatprep.subr.mxu0 0.0
    %6912 = vmatpush1.msra.mxu0 0.0
    %6913 = vmatprep.subr.mxu0 0.0
    %6914 = vmatpush1.msra.mxu0 0.0
    %6915 = vmatprep.subr.mxu0 0.0
    %6916 = vmatpush1.msra.mxu0 0.0
    %6917 = vmatprep.subr.mxu0 0.0
    %6918 = vmatpush1.msra.mxu0 0.0
    %6919 = vmatprep.subr.mxu0 0.0
    %6920 = vmatpush1.msra.mxu0 0.0
    %6921 = vmatprep.subr.mxu0 0.0
    %6922 = vmatpush1.msra.mxu0 0.0
    %6923 = vmatprep.subr.mxu0 0.0
    %6924 = vmatpush1.msra.mxu0 0.0
    %6925 = vmatprep.subr.mxu0 0.0
    %6926 = vmatpush1.msra.mxu0 0.0
    %6927 = vmatprep.mubr.f32.mxu0 0.0
    %6928 = vmatmul.mubr.f32.gmra.mrb[0].mxu0 %v6861
    %v6929 = vpop.f32.mrb[0].mxu0
    %v6930 = vadd.f32 0.0, %v6929
    %v6931 = vpop.f32.mrb[0].mxu0
    %6932 = vdwg.mxu0
    %v6933 = vld [vmem:[%s77] sm:$0xff]
    %v6934 = vld [vmem:[%s77 + $0x8] sm:$0xff]
    %v6935 = vld [vmem:[%s79] sm:$0x1]
    %v6937 = vlaneseq
    %v6938 = vshrl.u32 %v6937, 7
    %v6939 = vsub.s32 0, %v6938
    %v6940 = vrot.slane %v6935, %v6939
    %v6943 = vsel %vm263, %v6761, 0
    %v6946 = vsel %vm263, %v6930, 0
    %6948 = vmatprep.subr.mxu0 0.0
    %6949 = vmatpush1.msra.mxu0 %v6933
    %6950 = vmatprep.subr.mxu0 0.0
    %6951 = vmatpush1.msra.mxu0 %v6934
    %6952 = vmatprep.subr.mxu0 0.0
    %6953 = vmatpush1.msra.mxu0 0.0
    %6954 = vmatprep.subr.mxu0 0.0
    %6955 = vmatpush1.msra.mxu0 0.0
    %6956 = vmatprep.subr.mxu0 0.0
    %6957 = vmatpush1.msra.mxu0 0.0
    %6958 = vmatprep.subr.mxu0 0.0
    %6959 = vmatpush1.msra.mxu0 0.0
    %6960 = vmatprep.subr.mxu0 0.0
    %6961 = vmatpush1.msra.mxu0 0.0
    %6962 = vmatprep.subr.mxu0 0.0
    %6963 = vmatpush1.msra.mxu0 0.0
    %6964 = vmatprep.subr.mxu0 0.0
    %6965 = vmatpush1.msra.mxu0 0.0
    %6966 = vmatprep.subr.mxu0 0.0
    %6967 = vmatpush1.msra.mxu0 0.0
    %6968 = vmatprep.subr.mxu0 0.0
    %6969 = vmatpush1.msra.mxu0 0.0
    %6970 = vmatprep.subr.mxu0 0.0
    %6971 = vmatpush1.msra.mxu0 0.0
    %6972 = vmatprep.subr.mxu0 0.0
    %6973 = vmatpush1.msra.mxu0 0.0
    %6974 = vmatprep.subr.mxu0 0.0
    %6975 = vmatpush1.msra.mxu0 0.0
    %6976 = vmatprep.subr.mxu0 0.0
    %6977 = vmatpush1.msra.mxu0 0.0
    %6978 = vmatprep.subr.mxu0 0.0
    %6979 = vmatpush1.msra.mxu0 0.0
    %6980 = vmatprep.subr.mxu0 0.0
    %6981 = vmatpush1.msra.mxu0 0.0
    %6982 = vmatprep.subr.mxu0 0.0
    %6983 = vmatpush1.msra.mxu0 0.0
    %6984 = vmatprep.subr.mxu0 0.0
    %6985 = vmatpush1.msra.mxu0 0.0
    %6986 = vmatprep.subr.mxu0 0.0
    %6987 = vmatpush1.msra.mxu0 0.0
    %6988 = vmatprep.subr.mxu0 0.0
    %6989 = vmatpush1.msra.mxu0 0.0
    %6990 = vmatprep.subr.mxu0 0.0
    %6991 = vmatpush1.msra.mxu0 0.0
    %6992 = vmatprep.subr.mxu0 0.0
    %6993 = vmatpush1.msra.mxu0 0.0
    %6994 = vmatprep.subr.mxu0 0.0
    %6995 = vmatpush1.msra.mxu0 0.0
    %6996 = vmatprep.subr.mxu0 0.0
    %6997 = vmatpush1.msra.mxu0 0.0
    %6998 = vmatprep.subr.mxu0 0.0
    %6999 = vmatpush1.msra.mxu0 0.0
    %7000 = vmatprep.subr.mxu0 0.0
    %7001 = vmatpush1.msra.mxu0 0.0
    %7002 = vmatprep.subr.mxu0 0.0
    %7003 = vmatpush1.msra.mxu0 0.0
    %7004 = vmatprep.subr.mxu0 0.0
    %7005 = vmatpush1.msra.mxu0 0.0
    %7006 = vmatprep.subr.mxu0 0.0
    %7007 = vmatpush1.msra.mxu0 0.0
    %7008 = vmatprep.subr.mxu0 0.0
    %7009 = vmatpush1.msra.mxu0 0.0
    %7010 = vmatprep.subr.mxu0 0.0
    %7011 = vmatpush1.msra.mxu0 0.0
    %7012 = vmatprep.mubr.f32.mxu0 0.0
    %7013 = vmatmul.mubr.f32.gmra.mrb[0].mxu0 %v6943
    %v7014 = vpop.f32.mrb[0].mxu0
    %v7015 = vadd.f32 %v6940, %v7014
    %v7016 = vpop.f32.mrb[0].mxu0
    %7017 = vmatprep.mubr.f32.mxu0 0.0
    %7018 = vmatmul.mubr.f32.gmra.mrb[0].mxu0 %v6946
    %v7019 = vpop.f32.mrb[0].mxu0
    %v7020 = vadd.f32 %v6940, %v7019
    %v7021 = vpop.f32.mrb[0].mxu0
    %7022 = vdwg.mxu0
    %v7023 = vadd.f32 %v192, %v7015
    %v7024 = vadd.f32 %v193, %v7020
    %s7025 = sld [smem:[#allocation2 + $0x3]]
    %v7026 = vstv %s7025
    %v7027 = vmul.f32 %v7023, %v7026
    %v7028 = vmul.f32 %v7024, %v7026
    %v7029 = vadd.f32 %v5280, %v7027
    %v7030 = vadd.f32 %v5281, %v7028
    %s7031 = sld [smem:[#allocation2 + $0xb]]
    %v7032 = vstv %s7031
    %v7033 = vmul.f32 %v7023, %v7032
    %v7034 = vmul.f32 %v7024, %v7032
    %v7035 = vadd.f32 %v6347, %v7033
    %v7036 = vadd.f32 %v6348, %v7034
    %s7037 = sld [smem:[#allocation2 + $0x13]]
    %v7038 = vstv %s7037
    %v7039 = vmul.f32 %v7023, %v7038
    %v7040 = vmul.f32 %v7024, %v7038
    %v7041 = vadd.f32 %v6353, %v7039
    %v7042 = vadd.f32 %v6354, %v7040
    %7043 = vrot.lane.b32.xlu0 %v6593, 112
    %v7044 = vpop.permute.xlu0 %7043
    %7045 = vrot.lane.b32.xlu0 %v6593, 80
    %v7046 = vpop.permute.xlu0 %7045
    %v7047 = vsel %vm263, %v7044, 0
    %v7049 = vsel %vm263, %v7046, 0
    %7051 = vmatprep.subr.mxu0 0.0
    %7052 = vmatpush1.xpose.msra.mxu0 %v7049
    %7053 = vmatprep.subr.mxu0 0.0
    %7054 = vmatpush1.xpose.msra.mxu0 0.0
    %7055 = vmatprep.subr.mxu0 0.0
    %7056 = vmatpush1.xpose.msra.mxu0 0.0
    %7057 = vmatprep.subr.mxu0 0.0
    %7058 = vmatpush1.xpose.msra.mxu0 0.0
    %7059 = vmatprep.subr.mxu0 0.0
    %7060 = vmatpush1.xpose.msra.mxu0 0.0
    %7061 = vmatprep.subr.mxu0 0.0
    %7062 = vmatpush1.xpose.msra.mxu0 0.0
    %7063 = vmatprep.subr.mxu0 0.0
    %7064 = vmatpush1.xpose.msra.mxu0 0.0
    %7065 = vmatprep.subr.mxu0 0.0
    %7066 = vmatpush1.xpose.msra.mxu0 0.0
    %7067 = vmatprep.subr.mxu0 0.0
    %7068 = vmatpush1.xpose.msra.mxu0 0.0
    %7069 = vmatprep.subr.mxu0 0.0
    %7070 = vmatpush1.xpose.msra.mxu0 0.0
    %7071 = vmatprep.subr.mxu0 0.0
    %7072 = vmatpush1.xpose.msra.mxu0 0.0
    %7073 = vmatprep.subr.mxu0 0.0
    %7074 = vmatpush1.xpose.msra.mxu0 0.0
    %7075 = vmatprep.subr.mxu0 0.0
    %7076 = vmatpush1.xpose.msra.mxu0 0.0
    %7077 = vmatprep.subr.mxu0 0.0
    %7078 = vmatpush1.xpose.msra.mxu0 0.0
    %7079 = vmatprep.subr.mxu0 0.0
    %7080 = vmatpush1.xpose.msra.mxu0 0.0
    %7081 = vmatprep.subr.mxu0 0.0
    %7082 = vmatpush1.xpose.msra.mxu0 0.0
    %7083 = vmatprep.subr.mxu0 0.0
    %7084 = vmatpush1.xpose.msra.mxu0 0.0
    %7085 = vmatprep.subr.mxu0 0.0
    %7086 = vmatpush1.xpose.msra.mxu0 0.0
    %7087 = vmatprep.subr.mxu0 0.0
    %7088 = vmatpush1.xpose.msra.mxu0 0.0
    %7089 = vmatprep.subr.mxu0 0.0
    %7090 = vmatpush1.xpose.msra.mxu0 0.0
    %7091 = vmatprep.subr.mxu0 0.0
    %7092 = vmatpush1.xpose.msra.mxu0 0.0
    %7093 = vmatprep.subr.mxu0 0.0
    %7094 = vmatpush1.xpose.msra.mxu0 0.0
    %7095 = vmatprep.subr.mxu0 0.0
    %7096 = vmatpush1.xpose.msra.mxu0 0.0
    %7097 = vmatprep.subr.mxu0 0.0
    %7098 = vmatpush1.xpose.msra.mxu0 0.0
    %7099 = vmatprep.subr.mxu0 0.0
    %7100 = vmatpush1.xpose.msra.mxu0 0.0
    %7101 = vmatprep.subr.mxu0 0.0
    %7102 = vmatpush1.xpose.msra.mxu0 0.0
    %7103 = vmatprep.subr.mxu0 0.0
    %7104 = vmatpush1.xpose.msra.mxu0 0.0
    %7105 = vmatprep.subr.mxu0 0.0
    %7106 = vmatpush1.xpose.msra.mxu0 0.0
    %7107 = vmatprep.subr.mxu0 0.0
    %7108 = vmatpush1.xpose.msra.mxu0 0.0
    %7109 = vmatprep.subr.mxu0 0.0
    %7110 = vmatpush1.xpose.msra.mxu0 0.0
    %7111 = vmatprep.subr.mxu0 0.0
    %7112 = vmatpush1.xpose.msra.mxu0 0.0
    %7113 = vmatprep.subr.mxu0 0.0
    %7114 = vmatpush1.xpose.msra.mxu0 0.0
    %7115 = vmatprep.mubr.f32.mxu0 0.0
    %7116 = vmatmul.mubr.f32.gmra.mrb[0].mxu0 %v7047
    %v7117 = vpop.f32.mrb[0].mxu0
    %v7118 = vadd.f32 0.0, %v7117
    %v7119 = vpop.f32.mrb[0].mxu0
    %7120 = vdwg.mxu0
    %v7121 = vmul.f32 %v7118, 0.25
    %v7122 = vsel %vm6675, -1e+09, %v7121
    %v7123 = vsel %vm348, %v7122, -inf
    %7124 = vmax.xlane.f32.xlu0 %v7123
    %v7125 = vpop.xlane.xlu0 %7124
    %v7126 = vsub.f32 %v7122, %v7125
    %v7127 = vmul.f32 %v7126, 1.442695
    %v7128 = vpow.pop %v7127
    %v7129 = vsel %vm348, %v7128, 0.0
    %7130 = vadd.xlane.f32.xlu0 %v7129
    %v7131 = vpop.xlane.xlu0 %7130
    %v7132 = vrcp.pop %v7131
    %v7133 = vmul.f32 %v7128, %v7132
    %7134 = vrot.lane.b32.xlu0 %v6593, 48
    %v7135 = vpop.permute.xlu0 %7134
    %v7138 = vsel %vm348, %v7133, 0
    %7140 = vmatprep.subr.mxu0 0.0
    %7141 = vmatpush1.msra.mxu0 %v7135
    %7142 = vmatprep.subr.mxu0 0.0
    %7143 = vmatpush1.msra.mxu0 0.0
    %7144 = vmatprep.subr.mxu0 0.0
    %7145 = vmatpush1.msra.mxu0 0.0
    %7146 = vmatprep.subr.mxu0 0.0
    %7147 = vmatpush1.msra.mxu0 0.0
    %7148 = vmatprep.subr.mxu0 0.0
    %7149 = vmatpush1.msra.mxu0 0.0
    %7150 = vmatprep.subr.mxu0 0.0
    %7151 = vmatpush1.msra.mxu0 0.0
    %7152 = vmatprep.subr.mxu0 0.0
    %7153 = vmatpush1.msra.mxu0 0.0
    %7154 = vmatprep.subr.mxu0 0.0
    %7155 = vmatpush1.msra.mxu0 0.0
    %7156 = vmatprep.subr.mxu0 0.0
    %7157 = vmatpush1.msra.mxu0 0.0
    %7158 = vmatprep.subr.mxu0 0.0
    %7159 = vmatpush1.msra.mxu0 0.0
    %7160 = vmatprep.subr.mxu0 0.0
    %7161 = vmatpush1.msra.mxu0 0.0
    %7162 = vmatprep.subr.mxu0 0.0
    %7163 = vmatpush1.msra.mxu0 0.0
    %7164 = vmatprep.subr.mxu0 0.0
    %7165 = vmatpush1.msra.mxu0 0.0
    %7166 = vmatprep.subr.mxu0 0.0
    %7167 = vmatpush1.msra.mxu0 0.0
    %7168 = vmatprep.subr.mxu0 0.0
    %7169 = vmatpush1.msra.mxu0 0.0
    %7170 = vmatprep.subr.mxu0 0.0
    %7171 = vmatpush1.msra.mxu0 0.0
    %7172 = vmatprep.subr.mxu0 0.0
    %7173 = vmatpush1.msra.mxu0 0.0
    %7174 = vmatprep.subr.mxu0 0.0
    %7175 = vmatpush1.msra.mxu0 0.0
    %7176 = vmatprep.subr.mxu0 0.0
    %7177 = vmatpush1.msra.mxu0 0.0
    %7178 = vmatprep.subr.mxu0 0.0
    %7179 = vmatpush1.msra.mxu0 0.0
    %7180 = vmatprep.subr.mxu0 0.0
    %7181 = vmatpush1.msra.mxu0 0.0
    %7182 = vmatprep.subr.mxu0 0.0
    %7183 = vmatpush1.msra.mxu0 0.0
    %7184 = vmatprep.subr.mxu0 0.0
    %7185 = vmatpush1.msra.mxu0 0.0
    %7186 = vmatprep.subr.mxu0 0.0
    %7187 = vmatpush1.msra.mxu0 0.0
    %7188 = vmatprep.subr.mxu0 0.0
    %7189 = vmatpush1.msra.mxu0 0.0
    %7190 = vmatprep.subr.mxu0 0.0
    %7191 = vmatpush1.msra.mxu0 0.0
    %7192 = vmatprep.subr.mxu0 0.0
    %7193 = vmatpush1.msra.mxu0 0.0
    %7194 = vmatprep.subr.mxu0 0.0
    %7195 = vmatpush1.msra.mxu0 0.0
    %7196 = vmatprep.subr.mxu0 0.0
    %7197 = vmatpush1.msra.mxu0 0.0
    %7198 = vmatprep.subr.mxu0 0.0
    %7199 = vmatpush1.msra.mxu0 0.0
    %7200 = vmatprep.subr.mxu0 0.0
    %7201 = vmatpush1.msra.mxu0 0.0
    %7202 = vmatprep.subr.mxu0 0.0
    %7203 = vmatpush1.msra.mxu0 0.0
    %7204 = vmatprep.mubr.f32.mxu0 0.0
    %7205 = vmatmul.mubr.f32.gmra.mrb[0].mxu0 %v7138
    %v7206 = vpop.f32.mrb[0].mxu0
    %v7207 = vadd.f32 0.0, %v7206
    %v7208 = vpop.f32.mrb[0].mxu0
    %7209 = vdwg.mxu0
    %7210 = vrot.lane.b32.xlu0 %v6594, 112
    %v7211 = vpop.permute.xlu0 %7210
    %7212 = vrot.lane.b32.xlu0 %v6594, 80
    %v7213 = vpop.permute.xlu0 %7212
    %v7214 = vsel %vm263, %v7211, 0
    %v7216 = vsel %vm263, %v7213, 0
    %7218 = vmatprep.subr.mxu0 0.0
    %7219 = vmatpush1.xpose.msra.mxu0 %v7216
    %7220 = vmatprep.subr.mxu0 0.0
    %7221 = vmatpush1.xpose.msra.mxu0 0.0
    %7222 = vmatprep.subr.mxu0 0.0
    %7223 = vmatpush1.xpose.msra.mxu0 0.0
    %7224 = vmatprep.subr.mxu0 0.0
    %7225 = vmatpush1.xpose.msra.mxu0 0.0
    %7226 = vmatprep.subr.mxu0 0.0
    %7227 = vmatpush1.xpose.msra.mxu0 0.0
    %7228 = vmatprep.subr.mxu0 0.0
    %7229 = vmatpush1.xpose.msra.mxu0 0.0
    %7230 = vmatprep.subr.mxu0 0.0
    %7231 = vmatpush1.xpose.msra.mxu0 0.0
    %7232 = vmatprep.subr.mxu0 0.0
    %7233 = vmatpush1.xpose.msra.mxu0 0.0
    %7234 = vmatprep.subr.mxu0 0.0
    %7235 = vmatpush1.xpose.msra.mxu0 0.0
    %7236 = vmatprep.subr.mxu0 0.0
    %7237 = vmatpush1.xpose.msra.mxu0 0.0
    %7238 = vmatprep.subr.mxu0 0.0
    %7239 = vmatpush1.xpose.msra.mxu0 0.0
    %7240 = vmatprep.subr.mxu0 0.0
    %7241 = vmatpush1.xpose.msra.mxu0 0.0
    %7242 = vmatprep.subr.mxu0 0.0
    %7243 = vmatpush1.xpose.msra.mxu0 0.0
    %7244 = vmatprep.subr.mxu0 0.0
    %7245 = vmatpush1.xpose.msra.mxu0 0.0
    %7246 = vmatprep.subr.mxu0 0.0
    %7247 = vmatpush1.xpose.msra.mxu0 0.0
    %7248 = vmatprep.subr.mxu0 0.0
    %7249 = vmatpush1.xpose.msra.mxu0 0.0
    %7250 = vmatprep.subr.mxu0 0.0
    %7251 = vmatpush1.xpose.msra.mxu0 0.0
    %7252 = vmatprep.subr.mxu0 0.0
    %7253 = vmatpush1.xpose.msra.mxu0 0.0
    %7254 = vmatprep.subr.mxu0 0.0
    %7255 = vmatpush1.xpose.msra.mxu0 0.0
    %7256 = vmatprep.subr.mxu0 0.0
    %7257 = vmatpush1.xpose.msra.mxu0 0.0
    %7258 = vmatprep.subr.mxu0 0.0
    %7259 = vmatpush1.xpose.msra.mxu0 0.0
    %7260 = vmatprep.subr.mxu0 0.0
    %7261 = vmatpush1.xpose.msra.mxu0 0.0
    %7262 = vmatprep.subr.mxu0 0.0
    %7263 = vmatpush1.xpose.msra.mxu0 0.0
    %7264 = vmatprep.subr.mxu0 0.0
    %7265 = vmatpush1.xpose.msra.mxu0 0.0
    %7266 = vmatprep.subr.mxu0 0.0
    %7267 = vmatpush1.xpose.msra.mxu0 0.0
    %7268 = vmatprep.subr.mxu0 0.0
    %7269 = vmatpush1.xpose.msra.mxu0 0.0
    %7270 = vmatprep.subr.mxu0 0.0
    %7271 = vmatpush1.xpose.msra.mxu0 0.0
    %7272 = vmatprep.subr.mxu0 0.0
    %7273 = vmatpush1.xpose.msra.mxu0 0.0
    %7274 = vmatprep.subr.mxu0 0.0
    %7275 = vmatpush1.xpose.msra.mxu0 0.0
    %7276 = vmatprep.subr.mxu0 0.0
    %7277 = vmatpush1.xpose.msra.mxu0 0.0
    %7278 = vmatprep.subr.mxu0 0.0
    %7279 = vmatpush1.xpose.msra.mxu0 0.0
    %7280 = vmatprep.subr.mxu0 0.0
    %7281 = vmatpush1.xpose.msra.mxu0 0.0
    %7282 = vmatprep.mubr.f32.mxu0 0.0
    %7283 = vmatmul.mubr.f32.gmra.mrb[0].mxu0 %v7214
    %v7284 = vpop.f32.mrb[0].mxu0
    %v7285 = vadd.f32 0.0, %v7284
    %v7286 = vpop.f32.mrb[0].mxu0
    %7287 = vdwg.mxu0
    %v7288 = vmul.f32 %v7285, 0.25
    %v7289 = vsel %vm6844, -1e+09, %v7288
    %v7290 = vsel %vm348, %v7289, -inf
    %7291 = vmax.xlane.f32.xlu0 %v7290
    %v7292 = vpop.xlane.xlu0 %7291
    %v7293 = vsub.f32 %v7289, %v7292
    %v7294 = vmul.f32 %v7293, 1.442695
    %v7295 = vpow.pop %v7294
    %v7296 = vsel %vm348, %v7295, 0.0
    %7297 = vadd.xlane.f32.xlu0 %v7296
    %v7298 = vpop.xlane.xlu0 %7297
    %v7299 = vrcp.pop %v7298
    %v7300 = vmul.f32 %v7295, %v7299
    %7301 = vrot.lane.b32.xlu0 %v6594, 48
    %v7302 = vpop.permute.xlu0 %7301
    %v7305 = vsel %vm348, %v7300, 0
    %7307 = vmatprep.subr.mxu0 0.0
    %7308 = vmatpush1.msra.mxu0 %v7302
    %7309 = vmatprep.subr.mxu0 0.0
    %7310 = vmatpush1.msra.mxu0 0.0
    %7311 = vmatprep.subr.mxu0 0.0
    %7312 = vmatpush1.msra.mxu0 0.0
    %7313 = vmatprep.subr.mxu0 0.0
    %7314 = vmatpush1.msra.mxu0 0.0
    %7315 = vmatprep.subr.mxu0 0.0
    %7316 = vmatpush1.msra.mxu0 0.0
    %7317 = vmatprep.subr.mxu0 0.0
    %7318 = vmatpush1.msra.mxu0 0.0
    %7319 = vmatprep.subr.mxu0 0.0
    %7320 = vmatpush1.msra.mxu0 0.0
    %7321 = vmatprep.subr.mxu0 0.0
    %7322 = vmatpush1.msra.mxu0 0.0
    %7323 = vmatprep.subr.mxu0 0.0
    %7324 = vmatpush1.msra.mxu0 0.0
    %7325 = vmatprep.subr.mxu0 0.0
    %7326 = vmatpush1.msra.mxu0 0.0
    %7327 = vmatprep.subr.mxu0 0.0
    %7328 = vmatpush1.msra.mxu0 0.0
    %7329 = vmatprep.subr.mxu0 0.0
    %7330 = vmatpush1.msra.mxu0 0.0
    %7331 = vmatprep.subr.mxu0 0.0
    %7332 = vmatpush1.msra.mxu0 0.0
    %7333 = vmatprep.subr.mxu0 0.0
    %7334 = vmatpush1.msra.mxu0 0.0
    %7335 = vmatprep.subr.mxu0 0.0
    %7336 = vmatpush1.msra.mxu0 0.0
    %7337 = vmatprep.subr.mxu0 0.0
    %7338 = vmatpush1.msra.mxu0 0.0
    %7339 = vmatprep.subr.mxu0 0.0
    %7340 = vmatpush1.msra.mxu0 0.0
    %7341 = vmatprep.subr.mxu0 0.0
    %7342 = vmatpush1.msra.mxu0 0.0
    %7343 = vmatprep.subr.mxu0 0.0
    %7344 = vmatpush1.msra.mxu0 0.0
    %7345 = vmatprep.subr.mxu0 0.0
    %7346 = vmatpush1.msra.mxu0 0.0
    %7347 = vmatprep.subr.mxu0 0.0
    %7348 = vmatpush1.msra.mxu0 0.0
    %7349 = vmatprep.subr.mxu0 0.0
    %7350 = vmatpush1.msra.mxu0 0.0
    %7351 = vmatprep.subr.mxu0 0.0
    %7352 = vmatpush1.msra.mxu0 0.0
    %7353 = vmatprep.subr.mxu0 0.0
    %7354 = vmatpush1.msra.mxu0 0.0
    %7355 = vmatprep.subr.mxu0 0.0
    %7356 = vmatpush1.msra.mxu0 0.0
    %7357 = vmatprep.subr.mxu0 0.0
    %7358 = vmatpush1.msra.mxu0 0.0
    %7359 = vmatprep.subr.mxu0 0.0
    %7360 = vmatpush1.msra.mxu0 0.0
    %7361 = vmatprep.subr.mxu0 0.0
    %7362 = vmatpush1.msra.mxu0 0.0
    %7363 = vmatprep.subr.mxu0 0.0
    %7364 = vmatpush1.msra.mxu0 0.0
    %7365 = vmatprep.subr.mxu0 0.0
    %7366 = vmatpush1.msra.mxu0 0.0
    %7367 = vmatprep.subr.mxu0 0.0
    %7368 = vmatpush1.msra.mxu0 0.0
    %7369 = vmatprep.subr.mxu0 0.0
    %7370 = vmatpush1.msra.mxu0 0.0
    %7371 = vmatprep.mubr.f32.mxu0 0.0
    %7372 = vmatmul.mubr.f32.gmra.mrb[0].mxu0 %v7305
    %v7373 = vpop.f32.mrb[0].mxu0
    %v7374 = vadd.f32 0.0, %v7373
    %v7375 = vpop.f32.mrb[0].mxu0
    %7376 = vdwg.mxu0
    %s7377 = scalar_lea.vmem %s77, 16
    %v7378 = vld [vmem:[%s7377] sm:$0xff]
    %v7379 = vld [vmem:[%s7377 + $0x8] sm:$0xff]
    %s7380 = scalar_lea.vmem %s79, 1
    %v7381 = vld [vmem:[%s7380] sm:$0x1]
    %v7383 = vlaneseq
    %v7384 = vshrl.u32 %v7383, 7
    %v7385 = vsub.s32 0, %v7384
    %v7386 = vrot.slane %v7381, %v7385
    %v7389 = vsel %vm263, %v7207, 0
    %v7392 = vsel %vm263, %v7374, 0
    %7394 = vmatprep.subr.mxu0 0.0
    %7395 = vmatpush1.msra.mxu0 %v7378
    %7396 = vmatprep.subr.mxu0 0.0
    %7397 = vmatpush1.msra.mxu0 %v7379
    %7398 = vmatprep.subr.mxu0 0.0
    %7399 = vmatpush1.msra.mxu0 0.0
    %7400 = vmatprep.subr.mxu0 0.0
    %7401 = vmatpush1.msra.mxu0 0.0
    %7402 = vmatprep.subr.mxu0 0.0
    %7403 = vmatpush1.msra.mxu0 0.0
    %7404 = vmatprep.subr.mxu0 0.0
    %7405 = vmatpush1.msra.mxu0 0.0
    %7406 = vmatprep.subr.mxu0 0.0
    %7407 = vmatpush1.msra.mxu0 0.0
    %7408 = vmatprep.subr.mxu0 0.0
    %7409 = vmatpush1.msra.mxu0 0.0
    %7410 = vmatprep.subr.mxu0 0.0
    %7411 = vmatpush1.msra.mxu0 0.0
    %7412 = vmatprep.subr.mxu0 0.0
    %7413 = vmatpush1.msra.mxu0 0.0
    %7414 = vmatprep.subr.mxu0 0.0
    %7415 = vmatpush1.msra.mxu0 0.0
    %7416 = vmatprep.subr.mxu0 0.0
    %7417 = vmatpush1.msra.mxu0 0.0
    %7418 = vmatprep.subr.mxu0 0.0
    %7419 = vmatpush1.msra.mxu0 0.0
    %7420 = vmatprep.subr.mxu0 0.0
    %7421 = vmatpush1.msra.mxu0 0.0
    %7422 = vmatprep.subr.mxu0 0.0
    %7423 = vmatpush1.msra.mxu0 0.0
    %7424 = vmatprep.subr.mxu0 0.0
    %7425 = vmatpush1.msra.mxu0 0.0
    %7426 = vmatprep.subr.mxu0 0.0
    %7427 = vmatpush1.msra.mxu0 0.0
    %7428 = vmatprep.subr.mxu0 0.0
    %7429 = vmatpush1.msra.mxu0 0.0
    %7430 = vmatprep.subr.mxu0 0.0
    %7431 = vmatpush1.msra.mxu0 0.0
    %7432 = vmatprep.subr.mxu0 0.0
    %7433 = vmatpush1.msra.mxu0 0.0
    %7434 = vmatprep.subr.mxu0 0.0
    %7435 = vmatpush1.msra.mxu0 0.0
    %7436 = vmatprep.subr.mxu0 0.0
    %7437 = vmatpush1.msra.mxu0 0.0
    %7438 = vmatprep.subr.mxu0 0.0
    %7439 = vmatpush1.msra.mxu0 0.0
    %7440 = vmatprep.subr.mxu0 0.0
    %7441 = vmatpush1.msra.mxu0 0.0
    %7442 = vmatprep.subr.mxu0 0.0
    %7443 = vmatpush1.msra.mxu0 0.0
    %7444 = vmatprep.subr.mxu0 0.0
    %7445 = vmatpush1.msra.mxu0 0.0
    %7446 = vmatprep.subr.mxu0 0.0
    %7447 = vmatpush1.msra.mxu0 0.0
    %7448 = vmatprep.subr.mxu0 0.0
    %7449 = vmatpush1.msra.mxu0 0.0
    %7450 = vmatprep.subr.mxu0 0.0
    %7451 = vmatpush1.msra.mxu0 0.0
    %7452 = vmatprep.subr.mxu0 0.0
    %7453 = vmatpush1.msra.mxu0 0.0
    %7454 = vmatprep.subr.mxu0 0.0
    %7455 = vmatpush1.msra.mxu0 0.0
    %7456 = vmatprep.subr.mxu0 0.0
    %7457 = vmatpush1.msra.mxu0 0.0
    %7458 = vmatprep.mubr.f32.mxu0 0.0
    %7459 = vmatmul.mubr.f32.gmra.mrb[0].mxu0 %v7389
    %v7460 = vpop.f32.mrb[0].mxu0
    %v7461 = vadd.f32 %v7386, %v7460
    %v7462 = vpop.f32.mrb[0].mxu0
    %7463 = vmatprep.mubr.f32.mxu0 0.0
    %7464 = vmatmul.mubr.f32.gmra.mrb[0].mxu0 %v7392
    %v7465 = vpop.f32.mrb[0].mxu0
    %v7466 = vadd.f32 %v7386, %v7465
    %v7467 = vpop.f32.mrb[0].mxu0
    %7468 = vdwg.mxu0
    %v7469 = vadd.f32 %v7023, %v7461
    %v7470 = vadd.f32 %v7024, %v7466
    %s7471 = sld [smem:[#allocation2 + $0x7]]
    %v7472 = vstv %s7471
    %v7473 = vmul.f32 %v7469, %v7472
    %v7474 = vmul.f32 %v7470, %v7472
    %v7475 = vadd.f32 %v7029, %v7473
    %v7476 = vadd.f32 %v7030, %v7474
    %s7477 = sld [smem:[#allocation2 + $0xf]]
    %v7478 = vstv %s7477
    %v7479 = vmul.f32 %v7469, %v7478
    %v7480 = vmul.f32 %v7470, %v7478
    %v7481 = vadd.f32 %v7035, %v7479
    %v7482 = vadd.f32 %v7036, %v7480
    %s7483 = sld [smem:[#allocation2 + $0x17]]
    %v7484 = vstv %s7483
    %v7485 = vmul.f32 %v7469, %v7484
    %v7486 = vmul.f32 %v7470, %v7484
    %v7487 = vadd.f32 %v7041, %v7485
    %v7488 = vadd.f32 %v7042, %v7486
    %s7489 = sld [smem:[#allocation5]]
    %v7490 = vstv %s7489
    %v7491 = vadd.f32 %v7475, %v7490
    %v7492 = vadd.f32 %v7476, %v7490
    %s7493 = sld [smem:[#allocation5 + $0x1]]
    %v7494 = vstv %s7493
    %v7495 = vadd.f32 %v7481, %v7494
    %v7496 = vadd.f32 %v7482, %v7494
    %s7497 = sld [smem:[#allocation5 + $0x2]]
    %v7498 = vstv %s7497
    %v7499 = vadd.f32 %v7487, %v7498
    %v7500 = vadd.f32 %v7488, %v7498
    %v7501 = vsel %vm263, %v7491, 0.0
    %7502 = vadd.xlane.f32.xlu0 %v7501
    %v7503 = vpop.xlane.xlu0 %7502
    %v7504 = vsel %vm263, %v7492, 0.0
    %7505 = vadd.xlane.f32.xlu0 %v7504
    %v7506 = vpop.xlane.xlu0 %7505
    %7509 = vrot.lane.b32.xlu0 %v7495, 112
    %v7510 = vpop.permute.xlu0 %7509
    %7511 = vrot.lane.b32.xlu0 %v7496, 112
    %v7512 = vpop.permute.xlu0 %7511
    %v7515 = vsel %vm348, %v7510, 0.0
    %7516 = vadd.xlane.f32.xlu0 %v7515
    %v7517 = vpop.xlane.xlu0 %7516
    %v7518 = vsel %vm348, %v7512, 0.0
    %7519 = vadd.xlane.f32.xlu0 %v7518
    %v7520 = vpop.xlane.xlu0 %7519
    %v7521 = vadd.f32 %v7503, %v7517
    %v7522 = vadd.f32 %v7506, %v7520
    %7525 = vrot.lane.b32.xlu0 %v7499, 104
    %v7526 = vpop.permute.xlu0 %7525
    %7527 = vrot.lane.b32.xlu0 %v7500, 104
    %v7528 = vpop.permute.xlu0 %7527
    %v7531 = vsel %vm348, %v7526, 0.0
    %7532 = vadd.xlane.f32.xlu0 %v7531
    %v7533 = vpop.xlane.xlu0 %7532
    %v7534 = vsel %vm348, %v7528, 0.0
    %7535 = vadd.xlane.f32.xlu0 %v7534
    %v7536 = vpop.xlane.xlu0 %7535
    %v7537 = vadd.f32 %v7521, %v7533
    %v7538 = vadd.f32 %v7522, %v7536
    %v7539 = vmul.f32 %v7537, 0.03125
    %v7540 = vmul.f32 %v7538, 0.03125
    %v7541 = vsub.f32 %v7491, %v7539
    %v7542 = vsub.f32 %v7492, %v7540
    %v7543 = vmul.f32 %v7541, %v7541
    %v7544 = vmul.f32 %v7542, %v7542
    %v7545 = vsel %vm263, %v7543, 0.0
    %7546 = vadd.xlane.f32.xlu0 %v7545
    %v7547 = vpop.xlane.xlu0 %7546
    %v7548 = vsel %vm263, %v7544, 0.0
    %7549 = vadd.xlane.f32.xlu0 %v7548
    %v7550 = vpop.xlane.xlu0 %7549
    %v7551 = vsub.f32 %v7495, %v7539
    %v7552 = vsub.f32 %v7496, %v7540
    %v7553 = vmul.f32 %v7551, %v7551
    %v7554 = vmul.f32 %v7552, %v7552
    %7557 = vrot.lane.b32.xlu0 %v7553, 112
    %v7558 = vpop.permute.xlu0 %7557
    %7559 = vrot.lane.b32.xlu0 %v7554, 112
    %v7560 = vpop.permute.xlu0 %7559
    %v7563 = vsel %vm348, %v7558, 0.0
    %7564 = vadd.xlane.f32.xlu0 %v7563
    %v7565 = vpop.xlane.xlu0 %7564
    %v7566 = vsel %vm348, %v7560, 0.0
    %7567 = vadd.xlane.f32.xlu0 %v7566
    %v7568 = vpop.xlane.xlu0 %7567
    %v7569 = vadd.f32 %v7547, %v7565
    %v7570 = vadd.f32 %v7550, %v7568
    %v7571 = vsub.f32 %v7499, %v7539
    %v7572 = vsub.f32 %v7500, %v7540
    %v7573 = vmul.f32 %v7571, %v7571
    %v7574 = vmul.f32 %v7572, %v7572
    %7577 = vrot.lane.b32.xlu0 %v7573, 104
    %v7578 = vpop.permute.xlu0 %7577
    %7579 = vrot.lane.b32.xlu0 %v7574, 104
    %v7580 = vpop.permute.xlu0 %7579
    %v7583 = vsel %vm348, %v7578, 0.0
    %7584 = vadd.xlane.f32.xlu0 %v7583
    %v7585 = vpop.xlane.xlu0 %7584
    %v7586 = vsel %vm348, %v7580, 0.0
    %7587 = vadd.xlane.f32.xlu0 %v7586
    %v7588 = vpop.xlane.xlu0 %7587
    %v7589 = vadd.f32 %v7569, %v7585
    %v7590 = vadd.f32 %v7570, %v7588
    %v7591 = vmul.f32 %v7589, 0.032258064
    %v7592 = vmul.f32 %v7590, 0.032258064
    %v7593 = vrsqrt.pop %v7591
    %v7594 = vmul.f32 %v7591, %v7593
    %vm7595 = vcmp.eq.f32.partialorder %v7591, inf
    %v7596 = vsel %vm7595, %v7591, %v7594
    %vm7597 = vcmp.eq.f32.partialorder %v7591, 0.0
    %v7598 = vand.u32 %v7591, 2147483648
    %v7599 = vsel %vm7597, %v7598, %v7596
    %v7600 = vrsqrt.pop %v7592
    %v7601 = vmul.f32 %v7592, %v7600
    %vm7602 = vcmp.eq.f32.partialorder %v7592, inf
    %v7603 = vsel %vm7602, %v7592, %v7601
    %vm7604 = vcmp.eq.f32.partialorder %v7592, 0.0
    %v7605 = vand.u32 %v7592, 2147483648
    %v7606 = vsel %vm7604, %v7605, %v7603
    %v7607 = vadd.f32 %v7599, 1e-06
    %v7608 = vadd.f32 %v7606, 1e-06
    %v7609 = vrcp.pop %v7607
    %v7610 = vrcp.pop %v7608
    %v7611 = vld [vmem:[%s9] sm:$0x1]
    %v7612 = vld [vmem:[%s11] sm:$0x1]
    %v7613 = vld [vmem:[%s13] sm:$0xff]
    %v7614 = vld [vmem:[%s13 + $0x8] sm:$0xff]
    %v7615 = vld [vmem:[%s13 + $0x10] sm:$0xff]
    %v7616 = vld [vmem:[%s13 + $0x18] sm:$0xff]
    %v7618 = vlaneseq
    %v7619 = vshrl.u32 %v7618, 7
    %v7620 = vsub.s32 0, %v7619
    %v7621 = vrot.slane %v7611, %v7620
    %v7623 = vmul.f32 %v7621, %v7541
    %v7624 = vmul.f32 %v7621, %v7542
    %v7625 = vmul.f32 %v7623, %v7609
    %v7626 = vmul.f32 %v7624, %v7610
    %v7628 = vlaneseq
    %v7629 = vshrl.u32 %v7628, 7
    %v7630 = vsub.s32 0, %v7629
    %v7631 = vrot.slane %v7612, %v7630
    %v7633 = vadd.f32 %v7625, %v7631
    %v7634 = vadd.f32 %v7626, %v7631
    %v7635 = vmul.f32 %v7621, %v7551
    %v7636 = vmul.f32 %v7621, %v7552
    %v7637 = vmul.f32 %v7635, %v7609
    %v7638 = vmul.f32 %v7636, %v7610
    %v7639 = vadd.f32 %v7637, %v7631
    %v7640 = vadd.f32 %v7638, %v7631
    %7643 = vrot.lane.b32.xlu0 %v7639, 112
    %v7644 = vpop.permute.xlu0 %7643
    %7645 = vrot.lane.b32.xlu0 %v7640, 112
    %v7646 = vpop.permute.xlu0 %7645
    %v7647 = vsel %vm348, %v7644, 0
    %v7649 = vsel %vm348, %v7646, 0
    %7651 = vmatprep.subr.mxu0 0.0
    %7652 = vmatpush1.msra.mxu0 %v7615
    %7653 = vmatprep.subr.mxu0 0.0
    %7654 = vmatpush1.msra.mxu0 0.0
    %7655 = vmatprep.subr.mxu0 0.0
    %7656 = vmatpush1.msra.mxu0 0.0
    %7657 = vmatprep.subr.mxu0 0.0
    %7658 = vmatpush1.msra.mxu0 0.0
    %7659 = vmatprep.subr.mxu0 0.0
    %7660 = vmatpush1.msra.mxu0 0.0
    %7661 = vmatprep.subr.mxu0 0.0
    %7662 = vmatpush1.msra.mxu0 0.0
    %7663 = vmatprep.subr.mxu0 0.0
    %7664 = vmatpush1.msra.mxu0 0.0
    %7665 = vmatprep.subr.mxu0 0.0
    %7666 = vmatpush1.msra.mxu0 0.0
    %7667 = vmatprep.subr.mxu0 0.0
    %7668 = vmatpush1.msra.mxu0 0.0
    %7669 = vmatprep.subr.mxu0 0.0
    %7670 = vmatpush1.msra.mxu0 0.0
    %7671 = vmatprep.subr.mxu0 0.0
    %7672 = vmatpush1.msra.mxu0 0.0
    %7673 = vmatprep.subr.mxu0 0.0
    %7674 = vmatpush1.msra.mxu0 0.0
    %7675 = vmatprep.subr.mxu0 0.0
    %7676 = vmatpush1.msra.mxu0 0.0
    %7677 = vmatprep.subr.mxu0 0.0
    %7678 = vmatpush1.msra.mxu0 0.0
    %7679 = vmatprep.subr.mxu0 0.0
    %7680 = vmatpush1.msra.mxu0 0.0
    %7681 = vmatprep.subr.mxu0 0.0
    %7682 = vmatpush1.msra.mxu0 0.0
    %7683 = vmatprep.subr.mxu0 0.0
    %7684 = vmatpush1.msra.mxu0 0.0
    %7685 = vmatprep.subr.mxu0 0.0
    %7686 = vmatpush1.msra.mxu0 0.0
    %7687 = vmatprep.subr.mxu0 0.0
    %7688 = vmatpush1.msra.mxu0 0.0
    %7689 = vmatprep.subr.mxu0 0.0
    %7690 = vmatpush1.msra.mxu0 0.0
    %7691 = vmatprep.subr.mxu0 0.0
    %7692 = vmatpush1.msra.mxu0 0.0
    %7693 = vmatprep.subr.mxu0 0.0
    %7694 = vmatpush1.msra.mxu0 0.0
    %7695 = vmatprep.subr.mxu0 0.0
    %7696 = vmatpush1.msra.mxu0 0.0
    %7697 = vmatprep.subr.mxu0 0.0
    %7698 = vmatpush1.msra.mxu0 0.0
    %7699 = vmatprep.subr.mxu0 0.0
    %7700 = vmatpush1.msra.mxu0 0.0
    %7701 = vmatprep.subr.mxu0 0.0
    %7702 = vmatpush1.msra.mxu0 0.0
    %7703 = vmatprep.subr.mxu0 0.0
    %7704 = vmatpush1.msra.mxu0 0.0
    %7705 = vmatprep.subr.mxu0 0.0
    %7706 = vmatpush1.msra.mxu0 0.0
    %7707 = vmatprep.subr.mxu0 0.0
    %7708 = vmatpush1.msra.mxu0 0.0
    %7709 = vmatprep.subr.mxu0 0.0
    %7710 = vmatpush1.msra.mxu0 0.0
    %7711 = vmatprep.subr.mxu0 0.0
    %7712 = vmatpush1.msra.mxu0 0.0
    %7713 = vmatprep.subr.mxu0 0.0
    %7714 = vmatpush1.msra.mxu0 0.0
    %7715 = vmatprep.mubr.f32.mxu0 0.0
    %7716 = vmatmul.mubr.f32.gmra.mrb[0].mxu0 %v7647
    %v7717 = vpop.f32.mrb[0].mxu0
    %v7718 = vadd.f32 0.0, %v7717
    %v7719 = vpop.f32.mrb[0].mxu0
    %7720 = vmatprep.mubr.f32.mxu0 0.0
    %7721 = vmatmul.mubr.f32.gmra.mrb[0].mxu0 %v7649
    %v7722 = vpop.f32.mrb[0].mxu0
    %v7723 = vadd.f32 0.0, %v7722
    %v7724 = vpop.f32.mrb[0].mxu0
    %7725 = vdwg.mxu0
    %v7727 = vsel %vm263, %v7633, 0
    %v7730 = vsel %vm263, %v7634, 0
    %7732 = vmatprep.subr.mxu0 0.0
    %7733 = vmatpush1.msra.mxu0 %v7613
    %7734 = vmatprep.subr.mxu0 0.0
    %7735 = vmatpush1.msra.mxu0 %v7614
    %7736 = vmatprep.subr.mxu0 0.0
    %7737 = vmatpush1.msra.mxu0 0.0
    %7738 = vmatprep.subr.mxu0 0.0
    %7739 = vmatpush1.msra.mxu0 0.0
    %7740 = vmatprep.subr.mxu0 0.0
    %7741 = vmatpush1.msra.mxu0 0.0
    %7742 = vmatprep.subr.mxu0 0.0
    %7743 = vmatpush1.msra.mxu0 0.0
    %7744 = vmatprep.subr.mxu0 0.0
    %7745 = vmatpush1.msra.mxu0 0.0
    %7746 = vmatprep.subr.mxu0 0.0
    %7747 = vmatpush1.msra.mxu0 0.0
    %7748 = vmatprep.subr.mxu0 0.0
    %7749 = vmatpush1.msra.mxu0 0.0
    %7750 = vmatprep.subr.mxu0 0.0
    %7751 = vmatpush1.msra.mxu0 0.0
    %7752 = vmatprep.subr.mxu0 0.0
    %7753 = vmatpush1.msra.mxu0 0.0
    %7754 = vmatprep.subr.mxu0 0.0
    %7755 = vmatpush1.msra.mxu0 0.0
    %7756 = vmatprep.subr.mxu0 0.0
    %7757 = vmatpush1.msra.mxu0 0.0
    %7758 = vmatprep.subr.mxu0 0.0
    %7759 = vmatpush1.msra.mxu0 0.0
    %7760 = vmatprep.subr.mxu0 0.0
    %7761 = vmatpush1.msra.mxu0 0.0
    %7762 = vmatprep.subr.mxu0 0.0
    %7763 = vmatpush1.msra.mxu0 0.0
    %7764 = vmatprep.subr.mxu0 0.0
    %7765 = vmatpush1.msra.mxu0 0.0
    %7766 = vmatprep.subr.mxu0 0.0
    %7767 = vmatpush1.msra.mxu0 0.0
    %7768 = vmatprep.subr.mxu0 0.0
    %7769 = vmatpush1.msra.mxu0 0.0
    %7770 = vmatprep.subr.mxu0 0.0
    %7771 = vmatpush1.msra.mxu0 0.0
    %7772 = vmatprep.subr.mxu0 0.0
    %7773 = vmatpush1.msra.mxu0 0.0
    %7774 = vmatprep.subr.mxu0 0.0
    %7775 = vmatpush1.msra.mxu0 0.0
    %7776 = vmatprep.subr.mxu0 0.0
    %7777 = vmatpush1.msra.mxu0 0.0
    %7778 = vmatprep.subr.mxu0 0.0
    %7779 = vmatpush1.msra.mxu0 0.0
    %7780 = vmatprep.subr.mxu0 0.0
    %7781 = vmatpush1.msra.mxu0 0.0
    %7782 = vmatprep.subr.mxu0 0.0
    %7783 = vmatpush1.msra.mxu0 0.0
    %7784 = vmatprep.subr.mxu0 0.0
    %7785 = vmatpush1.msra.mxu0 0.0
    %7786 = vmatprep.subr.mxu0 0.0
    %7787 = vmatpush1.msra.mxu0 0.0
    %7788 = vmatprep.subr.mxu0 0.0
    %7789 = vmatpush1.msra.mxu0 0.0
    %7790 = vmatprep.subr.mxu0 0.0
    %7791 = vmatpush1.msra.mxu0 0.0
    %7792 = vmatprep.subr.mxu0 0.0
    %7793 = vmatpush1.msra.mxu0 0.0
    %7794 = vmatprep.subr.mxu0 0.0
    %7795 = vmatpush1.msra.mxu0 0.0
    %7796 = vmatprep.mubr.f32.mxu0 0.0
    %7797 = vmatmul.mubr.f32.gmra.mrb[0].mxu0 %v7727
    %v7798 = vpop.f32.mrb[0].mxu0
    %v7799 = vadd.f32 %v7718, %v7798
    %v7800 = vpop.f32.mrb[0].mxu0
    %7801 = vmatprep.mubr.f32.mxu0 0.0
    %7802 = vmatmul.mubr.f32.gmra.mrb[0].mxu0 %v7730
    %v7803 = vpop.f32.mrb[0].mxu0
    %v7804 = vadd.f32 %v7723, %v7803
    %v7805 = vpop.f32.mrb[0].mxu0
    %7806 = vdwg.mxu0
    %v7807 = vmul.f32 %v7621, %v7571
    %v7808 = vmul.f32 %v7621, %v7572
    %v7809 = vmul.f32 %v7807, %v7609
    %v7810 = vmul.f32 %v7808, %v7610
    %v7811 = vadd.f32 %v7809, %v7631
    %v7812 = vadd.f32 %v7810, %v7631
    %7815 = vrot.lane.b32.xlu0 %v7811, 104
    %v7816 = vpop.permute.xlu0 %7815
    %7817 = vrot.lane.b32.xlu0 %v7812, 104
    %v7818 = vpop.permute.xlu0 %7817
    %v7819 = vsel %vm348, %v7816, 0
    %v7821 = vsel %vm348, %v7818, 0
    %7823 = vmatprep.subr.mxu0 0.0
    %7824 = vmatpush1.msra.mxu0 %v7616
    %7825 = vmatprep.subr.mxu0 0.0
    %7826 = vmatpush1.msra.mxu0 0.0
    %7827 = vmatprep.subr.mxu0 0.0
    %7828 = vmatpush1.msra.mxu0 0.0
    %7829 = vmatprep.subr.mxu0 0.0
    %7830 = vmatpush1.msra.mxu0 0.0
    %7831 = vmatprep.subr.mxu0 0.0
    %7832 = vmatpush1.msra.mxu0 0.0
    %7833 = vmatprep.subr.mxu0 0.0
    %7834 = vmatpush1.msra.mxu0 0.0
    %7835 = vmatprep.subr.mxu0 0.0
    %7836 = vmatpush1.msra.mxu0 0.0
    %7837 = vmatprep.subr.mxu0 0.0
    %7838 = vmatpush1.msra.mxu0 0.0
    %7839 = vmatprep.subr.mxu0 0.0
    %7840 = vmatpush1.msra.mxu0 0.0
    %7841 = vmatprep.subr.mxu0 0.0
    %7842 = vmatpush1.msra.mxu0 0.0
    %7843 = vmatprep.subr.mxu0 0.0
    %7844 = vmatpush1.msra.mxu0 0.0
    %7845 = vmatprep.subr.mxu0 0.0
    %7846 = vmatpush1.msra.mxu0 0.0
    %7847 = vmatprep.subr.mxu0 0.0
    %7848 = vmatpush1.msra.mxu0 0.0
    %7849 = vmatprep.subr.mxu0 0.0
    %7850 = vmatpush1.msra.mxu0 0.0
    %7851 = vmatprep.subr.mxu0 0.0
    %7852 = vmatpush1.msra.mxu0 0.0
    %7853 = vmatprep.subr.mxu0 0.0
    %7854 = vmatpush1.msra.mxu0 0.0
    %7855 = vmatprep.subr.mxu0 0.0
    %7856 = vmatpush1.msra.mxu0 0.0
    %7857 = vmatprep.subr.mxu0 0.0
    %7858 = vmatpush1.msra.mxu0 0.0
    %7859 = vmatprep.subr.mxu0 0.0
    %7860 = vmatpush1.msra.mxu0 0.0
    %7861 = vmatprep.subr.mxu0 0.0
    %7862 = vmatpush1.msra.mxu0 0.0
    %7863 = vmatprep.subr.mxu0 0.0
    %7864 = vmatpush1.msra.mxu0 0.0
    %7865 = vmatprep.subr.mxu0 0.0
    %7866 = vmatpush1.msra.mxu0 0.0
    %7867 = vmatprep.subr.mxu0 0.0
    %7868 = vmatpush1.msra.mxu0 0.0
    %7869 = vmatprep.subr.mxu0 0.0
    %7870 = vmatpush1.msra.mxu0 0.0
    %7871 = vmatprep.subr.mxu0 0.0
    %7872 = vmatpush1.msra.mxu0 0.0
    %7873 = vmatprep.subr.mxu0 0.0
    %7874 = vmatpush1.msra.mxu0 0.0
    %7875 = vmatprep.subr.mxu0 0.0
    %7876 = vmatpush1.msra.mxu0 0.0
    %7877 = vmatprep.subr.mxu0 0.0
    %7878 = vmatpush1.msra.mxu0 0.0
    %7879 = vmatprep.subr.mxu0 0.0
    %7880 = vmatpush1.msra.mxu0 0.0
    %7881 = vmatprep.subr.mxu0 0.0
    %7882 = vmatpush1.msra.mxu0 0.0
    %7883 = vmatprep.subr.mxu0 0.0
    %7884 = vmatpush1.msra.mxu0 0.0
    %7885 = vmatprep.subr.mxu0 0.0
    %7886 = vmatpush1.msra.mxu0 0.0
    %7887 = vmatprep.mubr.f32.mxu0 0.0
    %7888 = vmatmul.mubr.f32.gmra.mrb[0].mxu0 %v7819
    %v7889 = vpop.f32.mrb[0].mxu0
    %v7890 = vadd.f32 0.0, %v7889
    %v7891 = vpop.f32.mrb[0].mxu0
    %7892 = vmatprep.mubr.f32.mxu0 0.0
    %7893 = vmatmul.mubr.f32.gmra.mrb[0].mxu0 %v7821
    %v7894 = vpop.f32.mrb[0].mxu0
    %v7895 = vadd.f32 0.0, %v7894
    %v7896 = vpop.f32.mrb[0].mxu0
    %7897 = vdwg.mxu0
    %v7898 = vadd.f32 %v7799, %v7890
    %v7899 = vadd.f32 %v7804, %v7895
    %v7900 = vld [vmem:[%s15] sm:$0x1]
    %v7902 = vlaneseq
    %v7903 = vshrl.u32 %v7902, 7
    %v7904 = vsub.s32 0, %v7903
    %v7905 = vrot.slane %v7900, %v7904
    %v7907 = vadd.f32 %v7898, %v7905
    %v7908 = vadd.f32 %v7899, %v7905
    %v7909 = vmax.f32 %v7907, 0.0
    %v7910 = vmax.f32 %v7908, 0.0
    %v7911 = vld [vmem:[%s17] sm:$0xff]
    %v7912 = vld [vmem:[%s17 + $0x8] sm:$0xff]
    %v7913 = vld [vmem:[%s17 + $0x10] sm:$0xff]
    %v7914 = vld [vmem:[%s17 + $0x18] sm:$0xff]
    %v7915 = vld [vmem:[%s17 + $0x20] sm:$0xff]
    %v7916 = vld [vmem:[%s17 + $0x28] sm:$0xff]
    %v7917 = vld [vmem:[%s17 + $0x30] sm:$0xff]
    %v7918 = vld [vmem:[%s17 + $0x38] sm:$0xff]
    %v7919 = vld [vmem:[%s19] sm:$0x1]
    %v7921 = vlaneseq
    %v7922 = vshrl.u32 %v7921, 7
    %v7923 = vsub.s32 0, %v7922
    %v7924 = vrot.slane %v7919, %v7923
    %vm7926 = vcmask 523264
    %v7928 = vsel %vm7926, %v7909, 0
    %v7931 = vsel %vm7926, %v7910, 0
    %7933 = vmatprep.subr.mxu0 0.0
    %7934 = vmatpush1.msra.mxu0 %v7911
    %7935 = vmatprep.subr.mxu0 0.0
    %7936 = vmatpush1.msra.mxu0 %v7912
    %7937 = vmatprep.subr.mxu0 0.0
    %7938 = vmatpush1.msra.mxu0 %v7913
    %7939 = vmatprep.subr.mxu0 0.0
    %7940 = vmatpush1.msra.mxu0 %v7914
    %7941 = vmatprep.subr.mxu0 0.0
    %7942 = vmatpush1.msra.mxu0 %v7915
    %7943 = vmatprep.subr.mxu0 0.0
    %7944 = vmatpush1.msra.mxu0 %v7916
    %7945 = vmatprep.subr.mxu0 0.0
    %7946 = vmatpush1.msra.mxu0 %v7917
    %7947 = vmatprep.subr.mxu0 0.0
    %7948 = vmatpush1.msra.mxu0 %v7918
    %7949 = vmatprep.subr.mxu0 0.0
    %7950 = vmatpush1.msra.mxu0 0.0
    %7951 = vmatprep.subr.mxu0 0.0
    %7952 = vmatpush1.msra.mxu0 0.0
    %7953 = vmatprep.subr.mxu0 0.0
    %7954 = vmatpush1.msra.mxu0 0.0
    %7955 = vmatprep.subr.mxu0 0.0
    %7956 = vmatpush1.msra.mxu0 0.0
    %7957 = vmatprep.subr.mxu0 0.0
    %7958 = vmatpush1.msra.mxu0 0.0
    %7959 = vmatprep.subr.mxu0 0.0
    %7960 = vmatpush1.msra.mxu0 0.0
    %7961 = vmatprep.subr.mxu0 0.0
    %7962 = vmatpush1.msra.mxu0 0.0
    %7963 = vmatprep.subr.mxu0 0.0
    %7964 = vmatpush1.msra.mxu0 0.0
    %7965 = vmatprep.subr.mxu0 0.0
    %7966 = vmatpush1.msra.mxu0 0.0
    %7967 = vmatprep.subr.mxu0 0.0
    %7968 = vmatpush1.msra.mxu0 0.0
    %7969 = vmatprep.subr.mxu0 0.0
    %7970 = vmatpush1.msra.mxu0 0.0
    %7971 = vmatprep.subr.mxu0 0.0
    %7972 = vmatpush1.msra.mxu0 0.0
    %7973 = vmatprep.subr.mxu0 0.0
    %7974 = vmatpush1.msra.mxu0 0.0
    %7975 = vmatprep.subr.mxu0 0.0
    %7976 = vmatpush1.msra.mxu0 0.0
    %7977 = vmatprep.subr.mxu0 0.0
    %7978 = vmatpush1.msra.mxu0 0.0
    %7979 = vmatprep.subr.mxu0 0.0
    %7980 = vmatpush1.msra.mxu0 0.0
    %7981 = vmatprep.subr.mxu0 0.0
    %7982 = vmatpush1.msra.mxu0 0.0
    %7983 = vmatprep.subr.mxu0 0.0
    %7984 = vmatpush1.msra.mxu0 0.0
    %7985 = vmatprep.subr.mxu0 0.0
    %7986 = vmatpush1.msra.mxu0 0.0
    %7987 = vmatprep.subr.mxu0 0.0
    %7988 = vmatpush1.msra.mxu0 0.0
    %7989 = vmatprep.subr.mxu0 0.0
    %7990 = vmatpush1.msra.mxu0 0.0
    %7991 = vmatprep.subr.mxu0 0.0
    %7992 = vmatpush1.msra.mxu0 0.0
    %7993 = vmatprep.subr.mxu0 0.0
    %7994 = vmatpush1.msra.mxu0 0.0
    %7995 = vmatprep.subr.mxu0 0.0
    %7996 = vmatpush1.msra.mxu0 0.0
    %7997 = vmatprep.mubr.f32.mxu0 0.0
    %7998 = vmatmul.mubr.f32.gmra.mrb[0].mxu0 %v7928
    %v7999 = vpop.f32.mrb[0].mxu0
    %v8000 = vadd.f32 %v7924, %v7999
    %v8001 = vpop.f32.mrb[0].mxu0
    %8002 = vmatprep.mubr.f32.mxu0 0.0
    %8003 = vmatmul.mubr.f32.gmra.mrb[0].mxu0 %v7931
    %v8004 = vpop.f32.mrb[0].mxu0
    %v8005 = vadd.f32 %v7924, %v8004
    %v8006 = vpop.f32.mrb[0].mxu0
    %8007 = vdwg.mxu0
    %v8008 = vadd.f32 %v192, %v8000
    %v8009 = vadd.f32 %v193, %v8005
    %8010 = vst.msk [vmem:[#allocation7] sm:$0xff] %vm196, %v8008
    %8011 = vst.msk [vmem:[#allocation7 + $0x8] sm:$0xff] %vm196, %v8009
    // Predicated region
    $region170: #{_lambda_.1} parent=1 // pred_check
      _
    $region171: #{_lambda_.1} parent=1 // pred_check_branch
      %8013 = sbr.rel (0) target = $region173
    $region172: #{_lambda_.1} parent=1 // pred_region
      %s8015 = ssub.s32 256, 256
      %8016 = vsyncadd [#allocation3], %s8015
      %s8017 = sshll.u32 [#allocation7], 4
      %s8018 = int_to_ptr.vmem [resolvable:$true] %s8017
      %8023 = dma.vmem_to_hbm [thread:$0]  %s8018, 256, %s81, [#allocation3], 128, 128, 8
    $region173: #{_lambda_.1} parent=1 // pred_fallthru
      _
    // Predicated region
    $region174: #{_lambda_.1} parent=1 // pred_check
      _
    $region175: #{_lambda_.1} parent=1 // pred_check_branch
      %8025 = sbr.rel (0) target = $region177
    $region176: #{_lambda_.1} parent=1 // pred_region
      %8026 = dma.done [#allocation3], 256
    $region177: #{_lambda_.1} parent=1 // pred_fallthru
      _
    %8027 = vsyncpa [#allocation3], 1
    %8028 = vsyncpa [#allocation4], 1
    %8029 = vsyncpa [#allocation6], 1

</llo_original>
